<compile_context>
chip_gen: v6e
topology: v6e:2x2x1
jax: 0.10.0
libtpu: 0.0.40
codegen_flags: <defaults>
</compile_context>

<pallas_src>
import jax
import jax.numpy as jnp
from jax.experimental import pallas as pl
from jax.experimental.pallas import tpu as pltpu

EMBED_DIM = 32      # embed_dim (must be divisible by num_heads)
NUM_HEADS = 4
HEAD_DIM = EMBED_DIM // NUM_HEADS
FFN_DIM = 4 * EMBED_DIM
SEQ_LEN = 8
MAX_LEN = 100
VOCAB_SIZE = 50
LN_EPS = 1e-5
MAX_TB = 64         # sequences per grid step (keeps batched tiny-matmul unroll bounded)


def _round_up(x, m):
    return (x + m - 1) // m * m


def _layer_norm(x, gamma, beta):
    # x: (N, D); gamma/beta: (1, D)
    mean = jnp.mean(x, axis=-1, keepdims=True)
    var = jnp.mean((x - mean) ** 2, axis=-1, keepdims=True)
    inv = jax.lax.rsqrt(var + LN_EPS)
    return (x - mean) * inv * gamma + beta


def _encoder_kernel(mask_k_ref, mask_r_ref, x_ref,
                    wqkv_ref, bqkv_ref, wo_ref, bo_ref,
                    g1_ref, be1_ref,
                    w1_ref, b1_ref, w2_ref, b2_ref,
                    g2_ref, be2_ref,
                    out_ref):
    TB, S, D = x_ref.shape
    TBS = TB * S

    x2 = x_ref[...].astype(jnp.float32).reshape(TBS, D)   # (TB*S, D), f32 compute
    mask_k = mask_k_ref[...]                               # (TB, 1, S)  key-padding mask
    mask_r = mask_r_ref[...]                               # (TB, S, 1)  pooling mask

    # ---- fused QKV projection: one (TB*S, D) x (D, 3D) matmul ----
    qkv = jnp.dot(x2, wqkv_ref[...], preferred_element_type=jnp.float32) + bqkv_ref[...]
    qkv3 = qkv.reshape(TB, S, 3 * D)

    scale = 1.0 / jnp.sqrt(jnp.float32(HEAD_DIM))
    neg_bias = (mask_k - 1.0) * 1e9                        # 0 for valid, -1e9 for pad keys

    # ---- multi-head self-attention (TB-batched per head, no lane concat) ----
    attn = jnp.zeros((TBS, D), jnp.float32)
    for h in range(NUM_HEADS):
        lo = h * HEAD_DIM
        q_h = qkv3[:, :, lo:lo + HEAD_DIM]                 # (TB, S, HD)
        k_h = qkv3[:, :, D + lo:D + lo + HEAD_DIM]
        v_h = qkv3[:, :, 2 * D + lo:2 * D + lo + HEAD_DIM]

        s = jnp.einsum('bqd,bkd->bqk', q_h, k_h,
                       preferred_element_type=jnp.float32) * scale   # (TB, S, S)
        s = s + neg_bias
        s = s - jnp.max(s, axis=-1, keepdims=True)
        p = jnp.exp(s)
        p = p * pl.reciprocal(jnp.sum(p, axis=-1, keepdims=True), approx=True)

        o_h = jnp.einsum('bqk,bkd->bqd', p, v_h,
                         preferred_element_type=jnp.float32)          # (TB, S, HD)
        # concat_h(o_h) @ Wo == sum_h o_h @ Wo[h*HD:(h+1)*HD, :]
        attn = attn + jnp.dot(o_h.reshape(TBS, HEAD_DIM),
                              wo_ref[lo:lo + HEAD_DIM, :],
                              preferred_element_type=jnp.float32)
    attn = attn + bo_ref[...]

    # residual + LayerNorm (post-norm)
    h1 = _layer_norm(x2 + attn, g1_ref[...], be1_ref[...])            # (TB*S, D)

    # ---- feed-forward ----
    f = jnp.dot(h1, w1_ref[...], preferred_element_type=jnp.float32) + b1_ref[...]
    f = jnp.maximum(f, 0.0)                                           # ReLU
    f = jnp.dot(f, w2_ref[...], preferred_element_type=jnp.float32) + b2_ref[...]

    h2 = _layer_norm(h1 + f, g2_ref[...], be2_ref[...])               # (TB*S, D)

    # ---- masked mean pooling over the sequence (VPU masked sum) ----
    h2_3 = h2.reshape(TB, S, D)
    pooled = jnp.sum(h2_3 * mask_r, axis=1)                           # (TB, D)
    cnt = jnp.maximum(jnp.sum(mask_r, axis=1), 1.0)                   # (TB, 1)
    out_ref[...] = (pooled * pl.reciprocal(cnt, approx=True)).astype(out_ref.dtype)


def init_params(key):
    ks = jax.random.split(key, 8)

    def w(k, shape, scale=0.02):
        return (scale * jax.random.normal(k, shape)).astype(jnp.float32)

    tok_emb = w(ks[0], (VOCAB_SIZE, EMBED_DIM)).at[0].set(0.0)   # padding_idx = 0
    pos_emb = w(ks[1], (MAX_LEN, EMBED_DIM))

    wq = w(ks[2], (EMBED_DIM, EMBED_DIM))
    wk = w(ks[3], (EMBED_DIM, EMBED_DIM))
    wv = w(ks[4], (EMBED_DIM, EMBED_DIM))

    params = dict(
        tok_emb=tok_emb,
        pos_emb=pos_emb,
        # Q/K/V fused host-side: one (D, 3D) weight, one (1, 3D) bias.
        wqkv=jnp.concatenate([wq, wk, wv], axis=1),
        bqkv=jnp.zeros((1, 3 * EMBED_DIM), jnp.float32),
        wo=w(ks[5], (EMBED_DIM, EMBED_DIM)), bo=jnp.zeros((1, EMBED_DIM), jnp.float32),
        ln1_g=jnp.ones((1, EMBED_DIM), jnp.float32), ln1_b=jnp.zeros((1, EMBED_DIM), jnp.float32),
        w1=w(ks[6], (EMBED_DIM, FFN_DIM)), b1=jnp.zeros((1, FFN_DIM), jnp.float32),
        w2=w(ks[7], (FFN_DIM, EMBED_DIM)), b2=jnp.zeros((1, EMBED_DIM), jnp.float32),
        ln2_g=jnp.ones((1, EMBED_DIM), jnp.float32), ln2_b=jnp.zeros((1, EMBED_DIM), jnp.float32),
    )
    return params


@jax.jit
def text_encoder_forward(captions, params):
    """captions: (B, S) int32 token ids, 0 = padding. Returns (B, EMBED_DIM) float32."""
    B, S = captions.shape
    D = EMBED_DIM

    # Glue: embedding gather + positional embedding (data-dependent gather stays in JAX).
    # TODO(synk): could be fused via PrefetchScalarGridSpec token-id prefetch for very large B.
    x = params["tok_emb"][captions] + params["pos_emb"][:S][None, :, :]   # (B, S, D)
    x = x.astype(jnp.bfloat16)                                            # halve streamed DMA
    mask = (captions != 0).astype(jnp.float32)                            # (B, S)

    # Batch-tile TB sequences per grid step; pad B up to a multiple of TB.
    TB = min(MAX_TB, _round_up(B, 8))
    B_pad = _round_up(B, TB)
    if B_pad != B:
        x = jnp.pad(x, ((0, B_pad - B), (0, 0), (0, 0)))
        mask = jnp.pad(mask, ((0, B_pad - B), (0, 0)))

    mask_k = mask[:, None, :]   # (B_pad, 1, S)  key-padding layout
    mask_r = mask[:, :, None]   # (B_pad, S, 1)  pooling layout (avoids in-kernel relayout)

    def const_spec(shape):
        return pl.BlockSpec(shape, lambda b: (0,) * len(shape))

    grid_spec = pltpu.PrefetchScalarGridSpec(
        num_scalar_prefetch=0,
        grid=(B_pad // TB,),
        in_specs=[
            pl.BlockSpec((TB, 1, S), lambda b: (b, 0, 0)),      # mask (keys)
            pl.BlockSpec((TB, S, 1), lambda b: (b, 0, 0)),      # mask (pooling rows)
            pl.BlockSpec((TB, S, D), lambda b: (b, 0, 0)),      # x
            const_spec((D, 3 * D)), const_spec((1, 3 * D)),     # wqkv, bqkv
            const_spec((D, D)), const_spec((1, D)),             # wo, bo
            const_spec((1, D)), const_spec((1, D)),             # ln1 gamma/beta
            const_spec((D, FFN_DIM)), const_spec((1, FFN_DIM)), # w1, b1
            const_spec((FFN_DIM, D)), const_spec((1, D)),       # w2, b2
            const_spec((1, D)), const_spec((1, D)),             # ln2 gamma/beta
        ],
        out_specs=pl.BlockSpec((TB, D), lambda b: (b, 0)),
    )

    out = pl.pallas_call(
        _encoder_kernel,
        out_shape=jax.ShapeDtypeStruct((B_pad, D), jnp.float32),
        grid_spec=grid_spec,
        compiler_params=pltpu.CompilerParams(
            dimension_semantics=("parallel",)),                 # batch axis independent
    )(
        mask_k, mask_r, x,
        params["wqkv"], params["bqkv"],
        params["wo"], params["bo"],
        params["ln1_g"], params["ln1_b"],
        params["w1"], params["b1"], params["w2"], params["b2"],
        params["ln2_g"], params["ln2_b"],
    )
    return out[:B]


if __name__ == "__main__":
    key = jax.random.PRNGKey(0)
    pkey, ckey = jax.random.split(key)
    params = init_params(pkey)

    B = 2
    captions = jax.random.randint(ckey, (B, SEQ_LEN), minval=1, maxval=VOCAB_SIZE,
                                  dtype=jnp.int32)
    # Introduce some padding (token id 0) at the tail of the second sequence.
    captions = captions.at[1, SEQ_LEN - 3:].set(0)

    out = text_encoder_forward(captions, params)
    jax.block_until_ready(out)
    assert out.shape == (B, EMBED_DIM) and out.dtype == jnp.float32
    assert bool(jnp.all(jnp.isfinite(out)))
    print("KERNEL_OK")
</pallas_src>

<mosaic_0001>
module attributes {stable_mosaic.version = 11 : i64} {
  func.func @_encoder_kernel(%arg0: i32, %arg1: memref<8x1x8xf32, #tpu.memory_space<vmem>>, %arg2: memref<8x8x1xf32, #tpu.memory_space<vmem>>, %arg3: memref<8x8x32xbf16, #tpu.memory_space<vmem>>, %arg4: memref<32x96xf32, #tpu.memory_space<vmem>>, %arg5: memref<1x96xf32, #tpu.memory_space<vmem>>, %arg6: memref<32x32xf32, #tpu.memory_space<vmem>>, %arg7: memref<1x32xf32, #tpu.memory_space<vmem>>, %arg8: memref<1x32xf32, #tpu.memory_space<vmem>>, %arg9: memref<1x32xf32, #tpu.memory_space<vmem>>, %arg10: memref<32x128xf32, #tpu.memory_space<vmem>>, %arg11: memref<1x128xf32, #tpu.memory_space<vmem>>, %arg12: memref<128x32xf32, #tpu.memory_space<vmem>>, %arg13: memref<1x32xf32, #tpu.memory_space<vmem>>, %arg14: memref<1x32xf32, #tpu.memory_space<vmem>>, %arg15: memref<1x32xf32, #tpu.memory_space<vmem>>, %arg16: memref<8x32xf32, #tpu.memory_space<vmem>>) attributes {dimension_semantics = [#tpu.dimension_semantics<parallel>], iteration_bounds = array<i64: 1>, scalar_prefetch = 0 : i64, scratch_operands = 0 : i64, tpu.core_type = #tpu.core_type<tc>, window_params = [{transform_indices = @transform_0, window_bounds = array<i64: 8, 1, 8>}, {transform_indices = @transform_1, window_bounds = array<i64: 8, 8, 1>}, {transform_indices = @transform_2, window_bounds = array<i64: 8, 8, 32>}, {pipeline_mode = #tpu.pipeline_mode<synchronous>, transform_indices = @transform_3, window_bounds = array<i64: 32, 96>}, {pipeline_mode = #tpu.pipeline_mode<synchronous>, transform_indices = @transform_4, window_bounds = array<i64: 1, 96>}, {pipeline_mode = #tpu.pipeline_mode<synchronous>, transform_indices = @transform_5, window_bounds = array<i64: 32, 32>}, {pipeline_mode = #tpu.pipeline_mode<synchronous>, transform_indices = @transform_6, window_bounds = array<i64: 1, 32>}, {pipeline_mode = #tpu.pipeline_mode<synchronous>, transform_indices = @transform_7, window_bounds = array<i64: 1, 32>}, {pipeline_mode = #tpu.pipeline_mode<synchronous>, transform_indices = @transform_8, window_bounds = array<i64: 1, 32>}, {pipeline_mode = #tpu.pipeline_mode<synchronous>, transform_indices = @transform_9, window_bounds = array<i64: 32, 128>}, {pipeline_mode = #tpu.pipeline_mode<synchronous>, transform_indices = @transform_10, window_bounds = array<i64: 1, 128>}, {pipeline_mode = #tpu.pipeline_mode<synchronous>, transform_indices = @transform_11, window_bounds = array<i64: 128, 32>}, {pipeline_mode = #tpu.pipeline_mode<synchronous>, transform_indices = @transform_12, window_bounds = array<i64: 1, 32>}, {pipeline_mode = #tpu.pipeline_mode<synchronous>, transform_indices = @transform_13, window_bounds = array<i64: 1, 32>}, {pipeline_mode = #tpu.pipeline_mode<synchronous>, transform_indices = @transform_14, window_bounds = array<i64: 1, 32>}, {transform_indices = @transform_15, window_bounds = array<i64: 8, 32>}]} {
    %c0 = arith.constant 0 : index
    %c0_0 = arith.constant 0 : index
    %c0_1 = arith.constant 0 : index
    %0 = vector.load %arg3[%c0, %c0_0, %c0_1] : memref<8x8x32xbf16, #tpu.memory_space<vmem>>, vector<8x8x32xbf16>
    %1 = arith.extf %0 : vector<8x8x32xbf16> to vector<8x8x32xf32>
    %2 = vector.shape_cast %1 : vector<8x8x32xf32> to vector<64x32xf32>
    %c0_2 = arith.constant 0 : index
    %c0_3 = arith.constant 0 : index
    %c0_4 = arith.constant 0 : index
    %3 = vector.load %arg1[%c0_2, %c0_3, %c0_4] : memref<8x1x8xf32, #tpu.memory_space<vmem>>, vector<8x1x8xf32>
    %c0_5 = arith.constant 0 : index
    %c0_6 = arith.constant 0 : index
    %c0_7 = arith.constant 0 : index
    %4 = vector.load %arg2[%c0_5, %c0_6, %c0_7] : memref<8x8x1xf32, #tpu.memory_space<vmem>>, vector<8x8x1xf32>
    %c0_8 = arith.constant 0 : index
    %c0_9 = arith.constant 0 : index
    %5 = vector.load %arg4[%c0_8, %c0_9] : memref<32x96xf32, #tpu.memory_space<vmem>>, vector<32x96xf32>
    %cst = arith.constant dense<0.000000e+00> : vector<64x96xf32>
    %6 = tpu.matmul %2, %5, %cst {dimension_numbers = #tpu.dot_dimension_numbers<[1], [0], [0], [1], [0, 0, 1, 1], [], []>} : vector<64x32xf32>, vector<32x96xf32>, vector<64x96xf32> -> vector<64x96xf32>
    %c0_10 = arith.constant 0 : index
    %c0_11 = arith.constant 0 : index
    %7 = vector.load %arg5[%c0_10, %c0_11] : memref<1x96xf32, #tpu.memory_space<vmem>>, vector<1x96xf32>
    %8 = vector.broadcast %7 : vector<1x96xf32> to vector<64x96xf32>
    %9 = arith.addf %6, %8 : vector<64x96xf32>
    %10 = vector.shape_cast %9 : vector<64x96xf32> to vector<8x8x96xf32>
    %cst_12 = arith.constant 8.000000e+00 : f32
    %11 = math.sqrt %cst_12 : f32
    %cst_13 = arith.constant 1.000000e+00 : f32
    %12 = arith.divf %cst_13, %11 : f32
    %cst_14 = arith.constant 1.000000e+00 : f32
    %13 = vector.broadcast %cst_14 : f32 to vector<8x1x8xf32>
    %14 = arith.subf %3, %13 : vector<8x1x8xf32>
    %cst_15 = arith.constant 1.000000e+09 : f32
    %15 = vector.broadcast %cst_15 : f32 to vector<8x1x8xf32>
    %16 = arith.mulf %14, %15 : vector<8x1x8xf32>
    %cst_16 = arith.constant 0.000000e+00 : f32
    %17 = vector.broadcast %cst_16 : f32 to vector<64x32xf32>
    %18 = vector.extract_strided_slice %10 {offsets = [0, 0, 0], sizes = [8, 8, 8], strides = [1, 1, 1]} : vector<8x8x96xf32> to vector<8x8x8xf32>
    %19 = vector.extract_strided_slice %10 {offsets = [0, 0, 32], sizes = [8, 8, 8], strides = [1, 1, 1]} : vector<8x8x96xf32> to vector<8x8x8xf32>
    %20 = vector.extract_strided_slice %10 {offsets = [0, 0, 64], sizes = [8, 8, 8], strides = [1, 1, 1]} : vector<8x8x96xf32> to vector<8x8x8xf32>
    "tpu.trace_start"() <{level = 10 : i32, message = "bqd,bkd->bqk"}> : () -> ()
    %cst_17 = arith.constant dense<0.000000e+00> : vector<8x8x8xf32>
    %21 = tpu.matmul %18, %19, %cst_17 {dimension_numbers = #tpu.dot_dimension_numbers<[2], [2], [1], [1], [0, 0, 0, 1, 1, 1], [0], [0]>} : vector<8x8x8xf32>, vector<8x8x8xf32>, vector<8x8x8xf32> -> vector<8x8x8xf32>
    "tpu.trace_stop"() : () -> ()
    %22 = vector.broadcast %12 : f32 to vector<8x8x8xf32>
    %23 = arith.mulf %21, %22 : vector<8x8x8xf32>
    %24 = vector.broadcast %16 : vector<8x1x8xf32> to vector<8x8x8xf32>
    %25 = arith.addf %23, %24 : vector<8x8x8xf32>
    %cst_18 = arith.constant dense<0xFF800000> : vector<8x8xf32>
    %26 = vector.multi_reduction <maximumf>, %25, %cst_18 [2] : vector<8x8x8xf32> to vector<8x8xf32>
    %27 = vector.shape_cast %26 : vector<8x8xf32> to vector<8x8x1xf32>
    %28 = vector.broadcast %27 : vector<8x8x1xf32> to vector<8x8x8xf32>
    %29 = arith.subf %25, %28 : vector<8x8x8xf32>
    %30 = math.exp %29 : vector<8x8x8xf32>
    %cst_19 = arith.constant dense<0.000000e+00> : vector<8x8xf32>
    %31 = vector.multi_reduction <add>, %30, %cst_19 [2] : vector<8x8x8xf32> to vector<8x8xf32>
    %32 = vector.shape_cast %31 : vector<8x8xf32> to vector<8x8x1xf32>
    %33 = tpu.reciprocal %32 {approx = true} : vector<8x8x1xf32> -> vector<8x8x1xf32>
    %34 = vector.broadcast %33 : vector<8x8x1xf32> to vector<8x8x8xf32>
    %35 = arith.mulf %30, %34 : vector<8x8x8xf32>
    "tpu.trace_start"() <{level = 10 : i32, message = "bqk,bkd->bqd"}> : () -> ()
    %cst_20 = arith.constant dense<0.000000e+00> : vector<8x8x8xf32>
    %36 = tpu.matmul %35, %20, %cst_20 {dimension_numbers = #tpu.dot_dimension_numbers<[2], [1], [1], [2], [0, 0, 0, 1, 1, 2], [0], [0]>} : vector<8x8x8xf32>, vector<8x8x8xf32>, vector<8x8x8xf32> -> vector<8x8x8xf32>
    "tpu.trace_stop"() : () -> ()
    %37 = vector.shape_cast %36 : vector<8x8x8xf32> to vector<64x8xf32>
    %c0_21 = arith.constant 0 : index
    %c0_22 = arith.constant 0 : index
    %38 = vector.load %arg6[%c0_21, %c0_22] : memref<32x32xf32, #tpu.memory_space<vmem>>, vector<8x32xf32>
    %cst_23 = arith.constant dense<0.000000e+00> : vector<64x32xf32>
    %39 = tpu.matmul %37, %38, %cst_23 {dimension_numbers = #tpu.dot_dimension_numbers<[1], [0], [0], [1], [0, 0, 1, 1], [], []>} : vector<64x8xf32>, vector<8x32xf32>, vector<64x32xf32> -> vector<64x32xf32>
    %40 = arith.addf %17, %39 : vector<64x32xf32>
    %41 = vector.extract_strided_slice %10 {offsets = [0, 0, 8], sizes = [8, 8, 8], strides = [1, 1, 1]} : vector<8x8x96xf32> to vector<8x8x8xf32>
    %42 = vector.extract_strided_slice %10 {offsets = [0, 0, 40], sizes = [8, 8, 8], strides = [1, 1, 1]} : vector<8x8x96xf32> to vector<8x8x8xf32>
    %43 = vector.extract_strided_slice %10 {offsets = [0, 0, 72], sizes = [8, 8, 8], strides = [1, 1, 1]} : vector<8x8x96xf32> to vector<8x8x8xf32>
    "tpu.trace_start"() <{level = 10 : i32, message = "bqd,bkd->bqk"}> : () -> ()
    %cst_24 = arith.constant dense<0.000000e+00> : vector<8x8x8xf32>
    %44 = tpu.matmul %41, %42, %cst_24 {dimension_numbers = #tpu.dot_dimension_numbers<[2], [2], [1], [1], [0, 0, 0, 1, 1, 1], [0], [0]>} : vector<8x8x8xf32>, vector<8x8x8xf32>, vector<8x8x8xf32> -> vector<8x8x8xf32>
    "tpu.trace_stop"() : () -> ()
    %45 = vector.broadcast %12 : f32 to vector<8x8x8xf32>
    %46 = arith.mulf %44, %45 : vector<8x8x8xf32>
    %47 = vector.broadcast %16 : vector<8x1x8xf32> to vector<8x8x8xf32>
    %48 = arith.addf %46, %47 : vector<8x8x8xf32>
    %cst_25 = arith.constant dense<0xFF800000> : vector<8x8xf32>
    %49 = vector.multi_reduction <maximumf>, %48, %cst_25 [2] : vector<8x8x8xf32> to vector<8x8xf32>
    %50 = vector.shape_cast %49 : vector<8x8xf32> to vector<8x8x1xf32>
    %51 = vector.broadcast %50 : vector<8x8x1xf32> to vector<8x8x8xf32>
    %52 = arith.subf %48, %51 : vector<8x8x8xf32>
    %53 = math.exp %52 : vector<8x8x8xf32>
    %cst_26 = arith.constant dense<0.000000e+00> : vector<8x8xf32>
    %54 = vector.multi_reduction <add>, %53, %cst_26 [2] : vector<8x8x8xf32> to vector<8x8xf32>
    %55 = vector.shape_cast %54 : vector<8x8xf32> to vector<8x8x1xf32>
    %56 = tpu.reciprocal %55 {approx = true} : vector<8x8x1xf32> -> vector<8x8x1xf32>
    %57 = vector.broadcast %56 : vector<8x8x1xf32> to vector<8x8x8xf32>
    %58 = arith.mulf %53, %57 : vector<8x8x8xf32>
    "tpu.trace_start"() <{level = 10 : i32, message = "bqk,bkd->bqd"}> : () -> ()
    %cst_27 = arith.constant dense<0.000000e+00> : vector<8x8x8xf32>
    %59 = tpu.matmul %58, %43, %cst_27 {dimension_numbers = #tpu.dot_dimension_numbers<[2], [1], [1], [2], [0, 0, 0, 1, 1, 2], [0], [0]>} : vector<8x8x8xf32>, vector<8x8x8xf32>, vector<8x8x8xf32> -> vector<8x8x8xf32>
    "tpu.trace_stop"() : () -> ()
    %60 = vector.shape_cast %59 : vector<8x8x8xf32> to vector<64x8xf32>
    %c8 = arith.constant 8 : index
    %c0_28 = arith.constant 0 : index
    %61 = vector.load %arg6[%c8, %c0_28] : memref<32x32xf32, #tpu.memory_space<vmem>>, vector<8x32xf32>
    %cst_29 = arith.constant dense<0.000000e+00> : vector<64x32xf32>
    %62 = tpu.matmul %60, %61, %cst_29 {dimension_numbers = #tpu.dot_dimension_numbers<[1], [0], [0], [1], [0, 0, 1, 1], [], []>} : vector<64x8xf32>, vector<8x32xf32>, vector<64x32xf32> -> vector<64x32xf32>
    %63 = arith.addf %40, %62 : vector<64x32xf32>
    %64 = vector.extract_strided_slice %10 {offsets = [0, 0, 16], sizes = [8, 8, 8], strides = [1, 1, 1]} : vector<8x8x96xf32> to vector<8x8x8xf32>
    %65 = vector.extract_strided_slice %10 {offsets = [0, 0, 48], sizes = [8, 8, 8], strides = [1, 1, 1]} : vector<8x8x96xf32> to vector<8x8x8xf32>
    %66 = vector.extract_strided_slice %10 {offsets = [0, 0, 80], sizes = [8, 8, 8], strides = [1, 1, 1]} : vector<8x8x96xf32> to vector<8x8x8xf32>
    "tpu.trace_start"() <{level = 10 : i32, message = "bqd,bkd->bqk"}> : () -> ()
    %cst_30 = arith.constant dense<0.000000e+00> : vector<8x8x8xf32>
    %67 = tpu.matmul %64, %65, %cst_30 {dimension_numbers = #tpu.dot_dimension_numbers<[2], [2], [1], [1], [0, 0, 0, 1, 1, 1], [0], [0]>} : vector<8x8x8xf32>, vector<8x8x8xf32>, vector<8x8x8xf32> -> vector<8x8x8xf32>
    "tpu.trace_stop"() : () -> ()
    %68 = vector.broadcast %12 : f32 to vector<8x8x8xf32>
    %69 = arith.mulf %67, %68 : vector<8x8x8xf32>
    %70 = vector.broadcast %16 : vector<8x1x8xf32> to vector<8x8x8xf32>
    %71 = arith.addf %69, %70 : vector<8x8x8xf32>
    %cst_31 = arith.constant dense<0xFF800000> : vector<8x8xf32>
    %72 = vector.multi_reduction <maximumf>, %71, %cst_31 [2] : vector<8x8x8xf32> to vector<8x8xf32>
    %73 = vector.shape_cast %72 : vector<8x8xf32> to vector<8x8x1xf32>
    %74 = vector.broadcast %73 : vector<8x8x1xf32> to vector<8x8x8xf32>
    %75 = arith.subf %71, %74 : vector<8x8x8xf32>
    %76 = math.exp %75 : vector<8x8x8xf32>
    %cst_32 = arith.constant dense<0.000000e+00> : vector<8x8xf32>
    %77 = vector.multi_reduction <add>, %76, %cst_32 [2] : vector<8x8x8xf32> to vector<8x8xf32>
    %78 = vector.shape_cast %77 : vector<8x8xf32> to vector<8x8x1xf32>
    %79 = tpu.reciprocal %78 {approx = true} : vector<8x8x1xf32> -> vector<8x8x1xf32>
    %80 = vector.broadcast %79 : vector<8x8x1xf32> to vector<8x8x8xf32>
    %81 = arith.mulf %76, %80 : vector<8x8x8xf32>
    "tpu.trace_start"() <{level = 10 : i32, message = "bqk,bkd->bqd"}> : () -> ()
    %cst_33 = arith.constant dense<0.000000e+00> : vector<8x8x8xf32>
    %82 = tpu.matmul %81, %66, %cst_33 {dimension_numbers = #tpu.dot_dimension_numbers<[2], [1], [1], [2], [0, 0, 0, 1, 1, 2], [0], [0]>} : vector<8x8x8xf32>, vector<8x8x8xf32>, vector<8x8x8xf32> -> vector<8x8x8xf32>
    "tpu.trace_stop"() : () -> ()
    %83 = vector.shape_cast %82 : vector<8x8x8xf32> to vector<64x8xf32>
    %c16 = arith.constant 16 : index
    %c0_34 = arith.constant 0 : index
    %84 = vector.load %arg6[%c16, %c0_34] : memref<32x32xf32, #tpu.memory_space<vmem>>, vector<8x32xf32>
    %cst_35 = arith.constant dense<0.000000e+00> : vector<64x32xf32>
    %85 = tpu.matmul %83, %84, %cst_35 {dimension_numbers = #tpu.dot_dimension_numbers<[1], [0], [0], [1], [0, 0, 1, 1], [], []>} : vector<64x8xf32>, vector<8x32xf32>, vector<64x32xf32> -> vector<64x32xf32>
    %86 = arith.addf %63, %85 : vector<64x32xf32>
    %87 = vector.extract_strided_slice %10 {offsets = [0, 0, 24], sizes = [8, 8, 8], strides = [1, 1, 1]} : vector<8x8x96xf32> to vector<8x8x8xf32>
    %88 = vector.extract_strided_slice %10 {offsets = [0, 0, 56], sizes = [8, 8, 8], strides = [1, 1, 1]} : vector<8x8x96xf32> to vector<8x8x8xf32>
    %89 = vector.extract_strided_slice %10 {offsets = [0, 0, 88], sizes = [8, 8, 8], strides = [1, 1, 1]} : vector<8x8x96xf32> to vector<8x8x8xf32>
    "tpu.trace_start"() <{level = 10 : i32, message = "bqd,bkd->bqk"}> : () -> ()
    %cst_36 = arith.constant dense<0.000000e+00> : vector<8x8x8xf32>
    %90 = tpu.matmul %87, %88, %cst_36 {dimension_numbers = #tpu.dot_dimension_numbers<[2], [2], [1], [1], [0, 0, 0, 1, 1, 1], [0], [0]>} : vector<8x8x8xf32>, vector<8x8x8xf32>, vector<8x8x8xf32> -> vector<8x8x8xf32>
    "tpu.trace_stop"() : () -> ()
    %91 = vector.broadcast %12 : f32 to vector<8x8x8xf32>
    %92 = arith.mulf %90, %91 : vector<8x8x8xf32>
    %93 = vector.broadcast %16 : vector<8x1x8xf32> to vector<8x8x8xf32>
    %94 = arith.addf %92, %93 : vector<8x8x8xf32>
    %cst_37 = arith.constant dense<0xFF800000> : vector<8x8xf32>
    %95 = vector.multi_reduction <maximumf>, %94, %cst_37 [2] : vector<8x8x8xf32> to vector<8x8xf32>
    %96 = vector.shape_cast %95 : vector<8x8xf32> to vector<8x8x1xf32>
    %97 = vector.broadcast %96 : vector<8x8x1xf32> to vector<8x8x8xf32>
    %98 = arith.subf %94, %97 : vector<8x8x8xf32>
    %99 = math.exp %98 : vector<8x8x8xf32>
    %cst_38 = arith.constant dense<0.000000e+00> : vector<8x8xf32>
    %100 = vector.multi_reduction <add>, %99, %cst_38 [2] : vector<8x8x8xf32> to vector<8x8xf32>
    %101 = vector.shape_cast %100 : vector<8x8xf32> to vector<8x8x1xf32>
    %102 = tpu.reciprocal %101 {approx = true} : vector<8x8x1xf32> -> vector<8x8x1xf32>
    %103 = vector.broadcast %102 : vector<8x8x1xf32> to vector<8x8x8xf32>
    %104 = arith.mulf %99, %103 : vector<8x8x8xf32>
    "tpu.trace_start"() <{level = 10 : i32, message = "bqk,bkd->bqd"}> : () -> ()
    %cst_39 = arith.constant dense<0.000000e+00> : vector<8x8x8xf32>
    %105 = tpu.matmul %104, %89, %cst_39 {dimension_numbers = #tpu.dot_dimension_numbers<[2], [1], [1], [2], [0, 0, 0, 1, 1, 2], [0], [0]>} : vector<8x8x8xf32>, vector<8x8x8xf32>, vector<8x8x8xf32> -> vector<8x8x8xf32>
    "tpu.trace_stop"() : () -> ()
    %106 = vector.shape_cast %105 : vector<8x8x8xf32> to vector<64x8xf32>
    %c24 = arith.constant 24 : index
    %c0_40 = arith.constant 0 : index
    %107 = vector.load %arg6[%c24, %c0_40] : memref<32x32xf32, #tpu.memory_space<vmem>>, vector<8x32xf32>
    %cst_41 = arith.constant dense<0.000000e+00> : vector<64x32xf32>
    %108 = tpu.matmul %106, %107, %cst_41 {dimension_numbers = #tpu.dot_dimension_numbers<[1], [0], [0], [1], [0, 0, 1, 1], [], []>} : vector<64x8xf32>, vector<8x32xf32>, vector<64x32xf32> -> vector<64x32xf32>
    %109 = arith.addf %86, %108 : vector<64x32xf32>
    %c0_42 = arith.constant 0 : index
    %c0_43 = arith.constant 0 : index
    %110 = vector.load %arg7[%c0_42, %c0_43] : memref<1x32xf32, #tpu.memory_space<vmem>>, vector<1x32xf32>
    %111 = vector.broadcast %110 : vector<1x32xf32> to vector<64x32xf32>
    %112 = arith.addf %109, %111 : vector<64x32xf32>
    %113 = arith.addf %2, %112 : vector<64x32xf32>
    %c0_44 = arith.constant 0 : index
    %c0_45 = arith.constant 0 : index
    %114 = vector.load %arg8[%c0_44, %c0_45] : memref<1x32xf32, #tpu.memory_space<vmem>>, vector<1x32xf32>
    %c0_46 = arith.constant 0 : index
    %c0_47 = arith.constant 0 : index
    %115 = vector.load %arg9[%c0_46, %c0_47] : memref<1x32xf32, #tpu.memory_space<vmem>>, vector<1x32xf32>
    %cst_48 = arith.constant dense<0.000000e+00> : vector<64xf32>
    %116 = vector.multi_reduction <add>, %113, %cst_48 [1] : vector<64x32xf32> to vector<64xf32>
    %117 = vector.shape_cast %116 : vector<64xf32> to vector<64x1xf32>
    %cst_49 = arith.constant 3.200000e+01 : f32
    %118 = vector.broadcast %cst_49 : f32 to vector<64x1xf32>
    %119 = arith.divf %117, %118 : vector<64x1xf32>
    %120 = vector.broadcast %119 : vector<64x1xf32> to vector<64x32xf32>
    %121 = arith.subf %113, %120 : vector<64x32xf32>
    %122 = arith.mulf %121, %121 : vector<64x32xf32>
    %cst_50 = arith.constant dense<0.000000e+00> : vector<64xf32>
    %123 = vector.multi_reduction <add>, %122, %cst_50 [1] : vector<64x32xf32> to vector<64xf32>
    %124 = vector.shape_cast %123 : vector<64xf32> to vector<64x1xf32>
    %cst_51 = arith.constant 3.200000e+01 : f32
    %125 = vector.broadcast %cst_51 : f32 to vector<64x1xf32>
    %126 = arith.divf %124, %125 : vector<64x1xf32>
    %cst_52 = arith.constant 9.99999974E-6 : f32
    %127 = vector.broadcast %cst_52 : f32 to vector<64x1xf32>
    %128 = arith.addf %126, %127 : vector<64x1xf32>
    %129 = math.rsqrt %128 : vector<64x1xf32>
    %130 = vector.broadcast %119 : vector<64x1xf32> to vector<64x32xf32>
    %131 = arith.subf %113, %130 : vector<64x32xf32>
    %132 = vector.broadcast %129 : vector<64x1xf32> to vector<64x32xf32>
    %133 = arith.mulf %131, %132 : vector<64x32xf32>
    %134 = vector.broadcast %114 : vector<1x32xf32> to vector<64x32xf32>
    %135 = arith.mulf %133, %134 : vector<64x32xf32>
    %136 = vector.broadcast %115 : vector<1x32xf32> to vector<64x32xf32>
    %137 = arith.addf %135, %136 : vector<64x32xf32>
    %c0_53 = arith.constant 0 : index
    %c0_54 = arith.constant 0 : index
    %138 = vector.load %arg10[%c0_53, %c0_54] : memref<32x128xf32, #tpu.memory_space<vmem>>, vector<32x128xf32>
    %cst_55 = arith.constant dense<0.000000e+00> : vector<64x128xf32>
    %139 = tpu.matmul %137, %138, %cst_55 {dimension_numbers = #tpu.dot_dimension_numbers<[1], [0], [0], [1], [0, 0, 1, 1], [], []>} : vector<64x32xf32>, vector<32x128xf32>, vector<64x128xf32> -> vector<64x128xf32>
    %c0_56 = arith.constant 0 : index
    %c0_57 = arith.constant 0 : index
    %140 = vector.load %arg11[%c0_56, %c0_57] : memref<1x128xf32, #tpu.memory_space<vmem>>, vector<1x128xf32>
    %141 = vector.broadcast %140 : vector<1x128xf32> to vector<64x128xf32>
    %142 = arith.addf %139, %141 : vector<64x128xf32>
    %cst_58 = arith.constant 0.000000e+00 : f32
    %143 = vector.broadcast %cst_58 : f32 to vector<64x128xf32>
    %144 = arith.maximumf %142, %143 : vector<64x128xf32>
    %c0_59 = arith.constant 0 : index
    %c0_60 = arith.constant 0 : index
    %145 = vector.load %arg12[%c0_59, %c0_60] : memref<128x32xf32, #tpu.memory_space<vmem>>, vector<128x32xf32>
    %cst_61 = arith.constant dense<0.000000e+00> : vector<64x32xf32>
    %146 = tpu.matmul %144, %145, %cst_61 {dimension_numbers = #tpu.dot_dimension_numbers<[1], [0], [0], [1], [0, 0, 1, 1], [], []>} : vector<64x128xf32>, vector<128x32xf32>, vector<64x32xf32> -> vector<64x32xf32>
    %c0_62 = arith.constant 0 : index
    %c0_63 = arith.constant 0 : index
    %147 = vector.load %arg13[%c0_62, %c0_63] : memref<1x32xf32, #tpu.memory_space<vmem>>, vector<1x32xf32>
    %148 = vector.broadcast %147 : vector<1x32xf32> to vector<64x32xf32>
    %149 = arith.addf %146, %148 : vector<64x32xf32>
    %150 = arith.addf %137, %149 : vector<64x32xf32>
    %c0_64 = arith.constant 0 : index
    %c0_65 = arith.constant 0 : index
    %151 = vector.load %arg14[%c0_64, %c0_65] : memref<1x32xf32, #tpu.memory_space<vmem>>, vector<1x32xf32>
    %c0_66 = arith.constant 0 : index
    %c0_67 = arith.constant 0 : index
    %152 = vector.load %arg15[%c0_66, %c0_67] : memref<1x32xf32, #tpu.memory_space<vmem>>, vector<1x32xf32>
    %cst_68 = arith.constant dense<0.000000e+00> : vector<64xf32>
    %153 = vector.multi_reduction <add>, %150, %cst_68 [1] : vector<64x32xf32> to vector<64xf32>
    %154 = vector.shape_cast %153 : vector<64xf32> to vector<64x1xf32>
    %cst_69 = arith.constant 3.200000e+01 : f32
    %155 = vector.broadcast %cst_69 : f32 to vector<64x1xf32>
    %156 = arith.divf %154, %155 : vector<64x1xf32>
    %157 = vector.broadcast %156 : vector<64x1xf32> to vector<64x32xf32>
    %158 = arith.subf %150, %157 : vector<64x32xf32>
    %159 = arith.mulf %158, %158 : vector<64x32xf32>
    %cst_70 = arith.constant dense<0.000000e+00> : vector<64xf32>
    %160 = vector.multi_reduction <add>, %159, %cst_70 [1] : vector<64x32xf32> to vector<64xf32>
    %161 = vector.shape_cast %160 : vector<64xf32> to vector<64x1xf32>
    %cst_71 = arith.constant 3.200000e+01 : f32
    %162 = vector.broadcast %cst_71 : f32 to vector<64x1xf32>
    %163 = arith.divf %161, %162 : vector<64x1xf32>
    %cst_72 = arith.constant 9.99999974E-6 : f32
    %164 = vector.broadcast %cst_72 : f32 to vector<64x1xf32>
    %165 = arith.addf %163, %164 : vector<64x1xf32>
    %166 = math.rsqrt %165 : vector<64x1xf32>
    %167 = vector.broadcast %156 : vector<64x1xf32> to vector<64x32xf32>
    %168 = arith.subf %150, %167 : vector<64x32xf32>
    %169 = vector.broadcast %166 : vector<64x1xf32> to vector<64x32xf32>
    %170 = arith.mulf %168, %169 : vector<64x32xf32>
    %171 = vector.broadcast %151 : vector<1x32xf32> to vector<64x32xf32>
    %172 = arith.mulf %170, %171 : vector<64x32xf32>
    %173 = vector.broadcast %152 : vector<1x32xf32> to vector<64x32xf32>
    %174 = arith.addf %172, %173 : vector<64x32xf32>
    %175 = vector.shape_cast %174 : vector<64x32xf32> to vector<8x8x32xf32>
    %176 = vector.broadcast %4 : vector<8x8x1xf32> to vector<8x8x32xf32>
    %177 = arith.mulf %175, %176 : vector<8x8x32xf32>
    %cst_73 = arith.constant dense<0.000000e+00> : vector<8x32xf32>
    %178 = vector.multi_reduction <add>, %177, %cst_73 [1] : vector<8x8x32xf32> to vector<8x32xf32>
    %cst_74 = arith.constant dense<0.000000e+00> : vector<8x1xf32>
    %179 = vector.multi_reduction <add>, %4, %cst_74 [1] : vector<8x8x1xf32> to vector<8x1xf32>
    %cst_75 = arith.constant 1.000000e+00 : f32
    %180 = vector.broadcast %cst_75 : f32 to vector<8x1xf32>
    %181 = arith.maximumf %179, %180 : vector<8x1xf32>
    %182 = tpu.reciprocal %181 {approx = true} : vector<8x1xf32> -> vector<8x1xf32>
    %183 = vector.broadcast %182 : vector<8x1xf32> to vector<8x32xf32>
    %184 = arith.mulf %178, %183 : vector<8x32xf32>
    %c0_76 = arith.constant 0 : index
    %c0_77 = arith.constant 0 : index
    %185 = vector.load %arg16[%c0_76, %c0_77] : memref<8x32xf32, #tpu.memory_space<vmem>>, vector<8x32xf32>
    tpu.vector_store %arg16[%c0_76, %c0_77], %184 {strides = array<i32>} : memref<8x32xf32, #tpu.memory_space<vmem>>, vector<8x32xf32>,
    return
  }
  func.func @transform_0(%arg0: i32) -> (i32, i32, i32) {
    %c0_i32 = arith.constant 0 : i32
    %c0_i32_0 = arith.constant 0 : i32
    %c0_i32_1 = arith.constant 0 : i32
    return %arg0, %c0_i32, %c0_i32_0 : i32, i32, i32
  }
  func.func @transform_1(%arg0: i32) -> (i32, i32, i32) {
    %c0_i32 = arith.constant 0 : i32
    %c0_i32_0 = arith.constant 0 : i32
    %c0_i32_1 = arith.constant 0 : i32
    return %arg0, %c0_i32, %c0_i32_0 : i32, i32, i32
  }
  func.func @transform_2(%arg0: i32) -> (i32, i32, i32) {
    %c0_i32 = arith.constant 0 : i32
    %c0_i32_0 = arith.constant 0 : i32
    %c0_i32_1 = arith.constant 0 : i32
    return %arg0, %c0_i32, %c0_i32_0 : i32, i32, i32
  }
  func.func @transform_3(%arg0: i32) -> (i32, i32) {
    %c0_i32 = arith.constant 0 : i32
    %c0_i32_0 = arith.constant 0 : i32
    %c0_i32_1 = arith.constant 0 : i32
    return %c0_i32, %c0_i32_0 : i32, i32
  }
  func.func @transform_4(%arg0: i32) -> (i32, i32) {
    %c0_i32 = arith.constant 0 : i32
    %c0_i32_0 = arith.constant 0 : i32
    %c0_i32_1 = arith.constant 0 : i32
    return %c0_i32, %c0_i32_0 : i32, i32
  }
  func.func @transform_5(%arg0: i32) -> (i32, i32) {
    %c0_i32 = arith.constant 0 : i32
    %c0_i32_0 = arith.constant 0 : i32
    %c0_i32_1 = arith.constant 0 : i32
    return %c0_i32, %c0_i32_0 : i32, i32
  }
  func.func @transform_6(%arg0: i32) -> (i32, i32) {
    %c0_i32 = arith.constant 0 : i32
    %c0_i32_0 = arith.constant 0 : i32
    %c0_i32_1 = arith.constant 0 : i32
    return %c0_i32, %c0_i32_0 : i32, i32
  }
  func.func @transform_7(%arg0: i32) -> (i32, i32) {
    %c0_i32 = arith.constant 0 : i32
    %c0_i32_0 = arith.constant 0 : i32
    %c0_i32_1 = arith.constant 0 : i32
    return %c0_i32, %c0_i32_0 : i32, i32
  }
  func.func @transform_8(%arg0: i32) -> (i32, i32) {
    %c0_i32 = arith.constant 0 : i32
    %c0_i32_0 = arith.constant 0 : i32
    %c0_i32_1 = arith.constant 0 : i32
    return %c0_i32, %c0_i32_0 : i32, i32
  }
  func.func @transform_9(%arg0: i32) -> (i32, i32) {
    %c0_i32 = arith.constant 0 : i32
    %c0_i32_0 = arith.constant 0 : i32
    %c0_i32_1 = arith.constant 0 : i32
    return %c0_i32, %c0_i32_0 : i32, i32
  }
  func.func @transform_10(%arg0: i32) -> (i32, i32) {
    %c0_i32 = arith.constant 0 : i32
    %c0_i32_0 = arith.constant 0 : i32
    %c0_i32_1 = arith.constant 0 : i32
    return %c0_i32, %c0_i32_0 : i32, i32
  }
  func.func @transform_11(%arg0: i32) -> (i32, i32) {
    %c0_i32 = arith.constant 0 : i32
    %c0_i32_0 = arith.constant 0 : i32
    %c0_i32_1 = arith.constant 0 : i32
    return %c0_i32, %c0_i32_0 : i32, i32
  }
  func.func @transform_12(%arg0: i32) -> (i32, i32) {
    %c0_i32 = arith.constant 0 : i32
    %c0_i32_0 = arith.constant 0 : i32
    %c0_i32_1 = arith.constant 0 : i32
    return %c0_i32, %c0_i32_0 : i32, i32
  }
  func.func @transform_13(%arg0: i32) -> (i32, i32) {
    %c0_i32 = arith.constant 0 : i32
    %c0_i32_0 = arith.constant 0 : i32
    %c0_i32_1 = arith.constant 0 : i32
    return %c0_i32, %c0_i32_0 : i32, i32
  }
  func.func @transform_14(%arg0: i32) -> (i32, i32) {
    %c0_i32 = arith.constant 0 : i32
    %c0_i32_0 = arith.constant 0 : i32
    %c0_i32_1 = arith.constant 0 : i32
    return %c0_i32, %c0_i32_0 : i32, i32
  }
  func.func @transform_15(%arg0: i32) -> (i32, i32) {
    %c0_i32 = arith.constant 0 : i32
    %c0_i32_0 = arith.constant 0 : i32
    return %arg0, %c0_i32 : i32, i32
  }
}

</mosaic_0001>

<llo_original>
// kernel: text_encoder_forward.1
$region0: #{text_encoder_forward.1}
  #allocation0 [shape = 'u32[]', space=smem, size = 0x4, offset = 0x4, fixed_abs, tag = 'smem constant byte address 0x4 - core index']
  #allocation1 [shape = 'u32[144,128]{1,0:T(1,128)}', space=vmem, size = 0x12000, scoped, tag = 'internal scratch']
  %s0 = inlined_call_operand.vmem [shape: f32[8,1,8], index: 0, kind: input, shape index: {}]
  %s1 = inlined_call_operand.vmem [shape: f32[8,8,1], index: 1, kind: input, shape index: {}]
  %s2 = inlined_call_operand.vmem [shape: bf16[8,8,32], index: 2, kind: input, shape index: {}]
  %s3 = inlined_call_operand.vmem [shape: f32[32,96], index: 3, kind: input, shape index: {}]
  %s4 = inlined_call_operand.vmem [shape: f32[1,96], index: 4, kind: input, shape index: {}]
  %s5 = inlined_call_operand.vmem [shape: f32[32,32], index: 5, kind: input, shape index: {}]
  %s6 = inlined_call_operand.vmem [shape: f32[1,32], index: 6, kind: input, shape index: {}]
  %s7 = inlined_call_operand.vmem [shape: f32[1,32], index: 7, kind: input, shape index: {}]
  %s8 = inlined_call_operand.vmem [shape: f32[1,32], index: 8, kind: input, shape index: {}]
  %s9 = inlined_call_operand.vmem [shape: f32[32,128], index: 9, kind: input, shape index: {}]
  %s10 = inlined_call_operand.vmem [shape: f32[1,128], index: 10, kind: input, shape index: {}]
  %s11 = inlined_call_operand.vmem [shape: f32[128,32], index: 11, kind: input, shape index: {}]
  %s12 = inlined_call_operand.vmem [shape: f32[1,32], index: 12, kind: input, shape index: {}]
  %s13 = inlined_call_operand.vmem [shape: f32[1,32], index: 13, kind: input, shape index: {}]
  %s14 = inlined_call_operand.vmem [shape: f32[1,32], index: 14, kind: input, shape index: {}]
  %s15 = inlined_call_operand.vmem [shape: f32[8,32], index: 15, kind: output, shape index: {}]
  %s16 = sld [smem:[#allocation0]]
  $region70: #{text_encoder_forward.1} parent=0
    _
  %s18 = ssub.s32 1, %s16
  %s19 = scalar_select 0, %s18, %s16
  // Predicated region
  $region2: #{text_encoder_forward.1} parent=0 // pred_check
    _
  $region3: #{text_encoder_forward.1} parent=0 // pred_check_branch
    %21 = sbr.rel (0) target = $region5
  $region4: #{text_encoder_forward.1} parent=0 // pred_region
    _
  $region5: #{text_encoder_forward.1} parent=0 // pred_fallthru
    _
  // Predicated region
  $region6: #{text_encoder_forward.1} parent=0 // pred_check
    _
  $region7: #{text_encoder_forward.1} parent=0 // pred_check_branch
    %23 = sbr.rel (0) target = $region9
  $region8: #{text_encoder_forward.1} parent=0 // pred_region
    _
  $region9: #{text_encoder_forward.1} parent=0 // pred_fallthru
    _
  // Predicated region
  $region10: #{text_encoder_forward.1} parent=0 // pred_check
    _
  $region11: #{text_encoder_forward.1} parent=0 // pred_check_branch
    %25 = sbr.rel (0) target = $region13
  $region12: #{text_encoder_forward.1} parent=0 // pred_region
    _
  $region13: #{text_encoder_forward.1} parent=0 // pred_fallthru
    _
  // Predicated region
  $region14: #{text_encoder_forward.1} parent=0 // pred_check
    _
  $region15: #{text_encoder_forward.1} parent=0 // pred_check_branch
    %27 = sbr.rel (0) target = $region17
  $region16: #{text_encoder_forward.1} parent=0 // pred_region
    _
  $region17: #{text_encoder_forward.1} parent=0 // pred_fallthru
    _
  // Predicated region
  $region18: #{text_encoder_forward.1} parent=0 // pred_check
    _
  $region19: #{text_encoder_forward.1} parent=0 // pred_check_branch
    %29 = sbr.rel (0) target = $region21
  $region20: #{text_encoder_forward.1} parent=0 // pred_region
    _
  $region21: #{text_encoder_forward.1} parent=0 // pred_fallthru
    _
  // Predicated region
  $region22: #{text_encoder_forward.1} parent=0 // pred_check
    _
  $region23: #{text_encoder_forward.1} parent=0 // pred_check_branch
    %31 = sbr.rel (0) target = $region25
  $region24: #{text_encoder_forward.1} parent=0 // pred_region
    _
  $region25: #{text_encoder_forward.1} parent=0 // pred_fallthru
    _
  // Predicated region
  $region26: #{text_encoder_forward.1} parent=0 // pred_check
    _
  $region27: #{text_encoder_forward.1} parent=0 // pred_check_branch
    %33 = sbr.rel (0) target = $region29
  $region28: #{text_encoder_forward.1} parent=0 // pred_region
    _
  $region29: #{text_encoder_forward.1} parent=0 // pred_fallthru
    _
  // Predicated region
  $region30: #{text_encoder_forward.1} parent=0 // pred_check
    _
  $region31: #{text_encoder_forward.1} parent=0 // pred_check_branch
    %35 = sbr.rel (0) target = $region33
  $region32: #{text_encoder_forward.1} parent=0 // pred_region
    _
  $region33: #{text_encoder_forward.1} parent=0 // pred_fallthru
    _
  // Predicated region
  $region34: #{text_encoder_forward.1} parent=0 // pred_check
    _
  $region35: #{text_encoder_forward.1} parent=0 // pred_check_branch
    %37 = sbr.rel (0) target = $region37
  $region36: #{text_encoder_forward.1} parent=0 // pred_region
    _
  $region37: #{text_encoder_forward.1} parent=0 // pred_fallthru
    _
  // Predicated region
  $region38: #{text_encoder_forward.1} parent=0 // pred_check
    _
  $region39: #{text_encoder_forward.1} parent=0 // pred_check_branch
    %39 = sbr.rel (0) target = $region41
  $region40: #{text_encoder_forward.1} parent=0 // pred_region
    _
  $region41: #{text_encoder_forward.1} parent=0 // pred_fallthru
    _
  // Predicated region
  $region42: #{text_encoder_forward.1} parent=0 // pred_check
    _
  $region43: #{text_encoder_forward.1} parent=0 // pred_check_branch
    %41 = sbr.rel (0) target = $region45
  $region44: #{text_encoder_forward.1} parent=0 // pred_region
    _
  $region45: #{text_encoder_forward.1} parent=0 // pred_fallthru
    _
  // Predicated region
  $region46: #{text_encoder_forward.1} parent=0 // pred_check
    _
  $region47: #{text_encoder_forward.1} parent=0 // pred_check_branch
    %43 = sbr.rel (0) target = $region49
  $region48: #{text_encoder_forward.1} parent=0 // pred_region
    _
  $region49: #{text_encoder_forward.1} parent=0 // pred_fallthru
    _
  // Predicated region
  $region50: #{text_encoder_forward.1} parent=0 // pred_check
    _
  $region51: #{text_encoder_forward.1} parent=0 // pred_check_branch
    %45 = sbr.rel (0) target = $region53
  $region52: #{text_encoder_forward.1} parent=0 // pred_region
    _
  $region53: #{text_encoder_forward.1} parent=0 // pred_fallthru
    _
  // Predicated region
  $region54: #{text_encoder_forward.1} parent=0 // pred_check
    _
  $region55: #{text_encoder_forward.1} parent=0 // pred_check_branch
    %47 = sbr.rel (0) target = $region57
  $region56: #{text_encoder_forward.1} parent=0 // pred_region
    _
  $region57: #{text_encoder_forward.1} parent=0 // pred_fallthru
    _
  // Predicated region
  $region58: #{text_encoder_forward.1} parent=0 // pred_check
    _
  $region59: #{text_encoder_forward.1} parent=0 // pred_check_branch
    %49 = sbr.rel (0) target = $region61
  $region60: #{text_encoder_forward.1} parent=0 // pred_region
    _
  $region61: #{text_encoder_forward.1} parent=0 // pred_fallthru
    _
  %v50 = vld [vmem:[%s2] sm:$0xf]
  %v51 = vld [vmem:[%s2 + $0x4] sm:$0xf]
  %v52 = vld [vmem:[%s2 + $0x8] sm:$0xf]
  %v53 = vld [vmem:[%s2 + $0xc] sm:$0xf]
  %v54 = vld [vmem:[%s2 + $0x10] sm:$0xf]
  %v55 = vld [vmem:[%s2 + $0x14] sm:$0xf]
  %v56 = vld [vmem:[%s2 + $0x18] sm:$0xf]
  %v57 = vld [vmem:[%s2 + $0x1c] sm:$0xf]
  %v58 = vunpack.c.l.bf16 %v50
  %v59 = vunpack.c.l.bf16 %v51
  %v60 = vunpack.c.l.bf16 %v52
  %v61 = vunpack.c.l.bf16 %v53
  %v62 = vunpack.c.l.bf16 %v54
  %v63 = vunpack.c.l.bf16 %v55
  %v64 = vunpack.c.l.bf16 %v56
  %v65 = vunpack.c.l.bf16 %v57
  %v66 = vld [vmem:[%s0] sm:$0x1]
  %v67 = vld [vmem:[%s0 + $0x1] sm:$0x1]
  %v68 = vld [vmem:[%s0 + $0x2] sm:$0x1]
  %v69 = vld [vmem:[%s0 + $0x3] sm:$0x1]
  %v70 = vld [vmem:[%s0 + $0x4] sm:$0x1]
  %v71 = vld [vmem:[%s0 + $0x5] sm:$0x1]
  %v72 = vld [vmem:[%s0 + $0x6] sm:$0x1]
  %v73 = vld [vmem:[%s0 + $0x7] sm:$0x1]
  %v74 = vld [vmem:[%s1] sm:$0xff]
  %v75 = vld [vmem:[%s1 + $0x8] sm:$0xff]
  %v76 = vld [vmem:[%s1 + $0x10] sm:$0xff]
  %v77 = vld [vmem:[%s1 + $0x18] sm:$0xff]
  %v78 = vld [vmem:[%s1 + $0x20] sm:$0xff]
  %v79 = vld [vmem:[%s1 + $0x28] sm:$0xff]
  %v80 = vld [vmem:[%s1 + $0x30] sm:$0xff]
  %v81 = vld [vmem:[%s1 + $0x38] sm:$0xff]
  %v82 = vld [vmem:[%s3] sm:$0xff]
  %v83 = vld [vmem:[%s3 + $0x8] sm:$0xff]
  %v84 = vld [vmem:[%s3 + $0x10] sm:$0xff]
  %v85 = vld [vmem:[%s3 + $0x18] sm:$0xff]
  %v86 = vld [vmem:[%s4] sm:$0x1]
  %v88 = vlaneseq
  %v89 = vshrl.u32 %v88, 7
  %v90 = vsub.s32 0, %v89
  %v91 = vrot.slane %v86, %v90
  %vm93 = vcmask 261120
  %v95 = vsel %vm93, %v58, 0
  %v98 = vsel %vm93, %v59, 0
  %v101 = vsel %vm93, %v60, 0
  %v104 = vsel %vm93, %v61, 0
  %v107 = vsel %vm93, %v62, 0
  %v110 = vsel %vm93, %v63, 0
  %v113 = vsel %vm93, %v64, 0
  %v116 = vsel %vm93, %v65, 0
  %118 = vmatprep.subr.mxu0 0.0
  %119 = vmatpush1.msra.mxu0 0.0
  %120 = vmatprep.subr.mxu0 0.0
  %121 = vmatpush1.msra.mxu0 0.0
  %122 = vmatprep.subr.mxu0 0.0
  %123 = vmatpush1.msra.mxu0 0.0
  %124 = vmatprep.subr.mxu0 0.0
  %125 = vmatpush1.msra.mxu0 0.0
  %126 = vmatprep.subr.mxu0 0.0
  %127 = vmatpush1.msra.mxu0 0.0
  %128 = vmatprep.subr.mxu0 0.0
  %129 = vmatpush1.msra.mxu0 0.0
  %130 = vmatprep.subr.mxu0 0.0
  %131 = vmatpush1.msra.mxu0 0.0
  %132 = vmatprep.subr.mxu0 0.0
  %133 = vmatpush1.msra.mxu0 0.0
  %134 = vmatprep.subr.mxu0 0.0
  %135 = vmatpush1.msra.mxu0 0.0
  %136 = vmatprep.subr.mxu0 0.0
  %137 = vmatpush1.msra.mxu0 0.0
  %138 = vmatprep.subr.mxu0 0.0
  %139 = vmatpush1.msra.mxu0 0.0
  %140 = vmatprep.subr.mxu0 0.0
  %141 = vmatpush1.msra.mxu0 0.0
  %142 = vmatprep.subr.mxu0 0.0
  %143 = vmatpush1.msra.mxu0 %v85
  %144 = vmatprep.subr.mxu0 0.0
  %145 = vmatpush1.msra.mxu0 %v84
  %146 = vmatprep.subr.mxu0 0.0
  %147 = vmatpush1.msra.mxu0 %v83
  %148 = vmatprep.subr.mxu0 0.0
  %149 = vmatpush1.msra.mxu0 %v82
  %150 = vmatprep.subr.mxu0 0.0
  %151 = vmatpush2.msra.mxu0 0.0
  %152 = vmatprep.subr.mxu0 0.0
  %153 = vmatpush2.msra.mxu0 0.0
  %154 = vmatprep.subr.mxu0 0.0
  %155 = vmatpush2.msra.mxu0 0.0
  %156 = vmatprep.subr.mxu0 0.0
  %157 = vmatpush2.msra.mxu0 0.0
  %158 = vmatprep.subr.mxu0 0.0
  %159 = vmatpush2.msra.mxu0 0.0
  %160 = vmatprep.subr.mxu0 0.0
  %161 = vmatpush2.msra.mxu0 0.0
  %162 = vmatprep.subr.mxu0 0.0
  %163 = vmatpush2.msra.mxu0 0.0
  %164 = vmatprep.subr.mxu0 0.0
  %165 = vmatpush2.msra.mxu0 0.0
  %166 = vmatprep.subr.mxu0 0.0
  %167 = vmatpush2.msra.mxu0 0.0
  %168 = vmatprep.subr.mxu0 0.0
  %169 = vmatpush2.msra.mxu0 0.0
  %170 = vmatprep.subr.mxu0 0.0
  %171 = vmatpush2.msra.mxu0 0.0
  %172 = vmatprep.subr.mxu0 0.0
  %173 = vmatpush2.msra.mxu0 0.0
  %174 = vmatprep.subr.mxu0 0.0
  %175 = vmatpush2.msra.mxu0 0.0
  %176 = vmatprep.subr.mxu0 0.0
  %177 = vmatpush2.msra.mxu0 0.0
  %178 = vmatprep.subr.mxu0 0.0
  %179 = vmatpush2.msra.mxu0 0.0
  %180 = vmatprep.subr.mxu0 0.0
  %181 = vmatpush2.msra.mxu0 0.0
  %182 = vmatprep.mubr.f32.mxu0 0.0
  %183 = vmatmul.mubr.f32.gmra.mxu0 %v95
  %v184 = vpop.f32.mrf.mxu0
  %v185 = vadd.f32 %v91, %v184
  %v186 = vpop.f32.mrf.mxu0
  %187 = vmatprep.mubr.f32.mxu0 0.0
  %188 = vmatmul.mubr.f32.gmra.mxu0 %v98
  %v189 = vpop.f32.mrf.mxu0
  %v190 = vadd.f32 %v91, %v189
  %v191 = vpop.f32.mrf.mxu0
  %192 = vmatprep.mubr.f32.mxu0 0.0
  %193 = vmatmul.mubr.f32.gmra.mxu0 %v101
  %v194 = vpop.f32.mrf.mxu0
  %v195 = vadd.f32 %v91, %v194
  %v196 = vpop.f32.mrf.mxu0
  %197 = vmatprep.mubr.f32.mxu0 0.0
  %198 = vmatmul.mubr.f32.gmra.mxu0 %v104
  %v199 = vpop.f32.mrf.mxu0
  %v200 = vadd.f32 %v91, %v199
  %v201 = vpop.f32.mrf.mxu0
  %202 = vmatprep.mubr.f32.mxu0 0.0
  %203 = vmatmul.mubr.f32.gmra.mxu0 %v107
  %v204 = vpop.f32.mrf.mxu0
  %v205 = vadd.f32 %v91, %v204
  %v206 = vpop.f32.mrf.mxu0
  %207 = vmatprep.mubr.f32.mxu0 0.0
  %208 = vmatmul.mubr.f32.gmra.mxu0 %v110
  %v209 = vpop.f32.mrf.mxu0
  %v210 = vadd.f32 %v91, %v209
  %v211 = vpop.f32.mrf.mxu0
  %212 = vmatprep.mubr.f32.mxu0 0.0
  %213 = vmatmul.mubr.f32.gmra.mxu0 %v113
  %v214 = vpop.f32.mrf.mxu0
  %v215 = vadd.f32 %v91, %v214
  %v216 = vpop.f32.mrf.mxu0
  %217 = vmatprep.mubr.f32.mxu0 0.0
  %218 = vmatmul.mubr.f32.gmra.mxu0 %v116
  %v219 = vpop.f32.mrf.mxu0
  %v220 = vadd.f32 %v91, %v219
  %v221 = vpop.f32.mrf.mxu0
  %222 = vdwg.mxu0
  %v223 = vsub.f32 %v66, 1.0
  %v224 = vsub.f32 %v67, 1.0
  %v225 = vsub.f32 %v68, 1.0
  %v226 = vsub.f32 %v69, 1.0
  %v227 = vsub.f32 %v70, 1.0
  %v228 = vsub.f32 %v71, 1.0
  %v229 = vsub.f32 %v72, 1.0
  %v230 = vsub.f32 %v73, 1.0
  %v231 = vmul.f32 %v223, 1e+09
  %v232 = vmul.f32 %v224, 1e+09
  %v233 = vmul.f32 %v225, 1e+09
  %v234 = vmul.f32 %v226, 1e+09
  %v235 = vmul.f32 %v227, 1e+09
  %v236 = vmul.f32 %v228, 1e+09
  %v237 = vmul.f32 %v229, 1e+09
  %v238 = vmul.f32 %v230, 1e+09
  %240 = vrot.lane.b32.xlu0 %v185, 96
  %v241 = vpop.permute.xlu0 %240
  %vm242 = vcmask 64512
  %v243 = vsel %vm242, %v185, 0
  %v245 = vsel %vm242, %v241, 0
  %247 = vmatprep.subr.mxu0 0.0
  %248 = vmatpush1.xpose.msra.mxu0 0.0
  %249 = vmatprep.subr.mxu0 0.0
  %250 = vmatpush1.xpose.msra.mxu0 0.0
  %251 = vmatprep.subr.mxu0 0.0
  %252 = vmatpush1.xpose.msra.mxu0 0.0
  %253 = vmatprep.subr.mxu0 0.0
  %254 = vmatpush1.xpose.msra.mxu0 0.0
  %255 = vmatprep.subr.mxu0 0.0
  %256 = vmatpush1.xpose.msra.mxu0 0.0
  %257 = vmatprep.subr.mxu0 0.0
  %258 = vmatpush1.xpose.msra.mxu0 0.0
  %259 = vmatprep.subr.mxu0 0.0
  %260 = vmatpush1.xpose.msra.mxu0 0.0
  %261 = vmatprep.subr.mxu0 0.0
  %262 = vmatpush1.xpose.msra.mxu0 0.0
  %263 = vmatprep.subr.mxu0 0.0
  %264 = vmatpush1.xpose.msra.mxu0 0.0
  %265 = vmatprep.subr.mxu0 0.0
  %266 = vmatpush1.xpose.msra.mxu0 0.0
  %267 = vmatprep.subr.mxu0 0.0
  %268 = vmatpush1.xpose.msra.mxu0 0.0
  %269 = vmatprep.subr.mxu0 0.0
  %270 = vmatpush1.xpose.msra.mxu0 0.0
  %271 = vmatprep.subr.mxu0 0.0
  %272 = vmatpush1.xpose.msra.mxu0 0.0
  %273 = vmatprep.subr.mxu0 0.0
  %274 = vmatpush1.xpose.msra.mxu0 0.0
  %275 = vmatprep.subr.mxu0 0.0
  %276 = vmatpush1.xpose.msra.mxu0 0.0
  %277 = vmatprep.subr.mxu0 0.0
  %278 = vmatpush1.xpose.msra.mxu0 %v245
  %279 = vmatprep.subr.mxu0 0.0
  %280 = vmatpush2.xpose.msra.mxu0 0.0
  %281 = vmatprep.subr.mxu0 0.0
  %282 = vmatpush2.xpose.msra.mxu0 0.0
  %283 = vmatprep.subr.mxu0 0.0
  %284 = vmatpush2.xpose.msra.mxu0 0.0
  %285 = vmatprep.subr.mxu0 0.0
  %286 = vmatpush2.xpose.msra.mxu0 0.0
  %287 = vmatprep.subr.mxu0 0.0
  %288 = vmatpush2.xpose.msra.mxu0 0.0
  %289 = vmatprep.subr.mxu0 0.0
  %290 = vmatpush2.xpose.msra.mxu0 0.0
  %291 = vmatprep.subr.mxu0 0.0
  %292 = vmatpush2.xpose.msra.mxu0 0.0
  %293 = vmatprep.subr.mxu0 0.0
  %294 = vmatpush2.xpose.msra.mxu0 0.0
  %295 = vmatprep.subr.mxu0 0.0
  %296 = vmatpush2.xpose.msra.mxu0 0.0
  %297 = vmatprep.subr.mxu0 0.0
  %298 = vmatpush2.xpose.msra.mxu0 0.0
  %299 = vmatprep.subr.mxu0 0.0
  %300 = vmatpush2.xpose.msra.mxu0 0.0
  %301 = vmatprep.subr.mxu0 0.0
  %302 = vmatpush2.xpose.msra.mxu0 0.0
  %303 = vmatprep.subr.mxu0 0.0
  %304 = vmatpush2.xpose.msra.mxu0 0.0
  %305 = vmatprep.subr.mxu0 0.0
  %306 = vmatpush2.xpose.msra.mxu0 0.0
  %307 = vmatprep.subr.mxu0 0.0
  %308 = vmatpush2.xpose.msra.mxu0 0.0
  %309 = vmatprep.subr.mxu0 0.0
  %310 = vmatpush2.xpose.msra.mxu0 0.0
  %311 = vmatprep.mubr.f32.mxu0 0.0
  %312 = vmatmul.mubr.f32.gmra.mxu0 %v243
  %v313 = vpop.f32.mrf.mxu0
  %v314 = vadd.f32 0.0, %v313
  %v315 = vpop.f32.mrf.mxu0
  %316 = vdwg.mxu0
  %318 = vrot.lane.b32.xlu0 %v190, 96
  %v319 = vpop.permute.xlu0 %318
  %v320 = vsel %vm242, %v190, 0
  %v322 = vsel %vm242, %v319, 0
  %324 = vmatprep.subr.mxu0 0.0
  %325 = vmatpush1.xpose.msra.mxu0 0.0
  %326 = vmatprep.subr.mxu0 0.0
  %327 = vmatpush1.xpose.msra.mxu0 0.0
  %328 = vmatprep.subr.mxu0 0.0
  %329 = vmatpush1.xpose.msra.mxu0 0.0
  %330 = vmatprep.subr.mxu0 0.0
  %331 = vmatpush1.xpose.msra.mxu0 0.0
  %332 = vmatprep.subr.mxu0 0.0
  %333 = vmatpush1.xpose.msra.mxu0 0.0
  %334 = vmatprep.subr.mxu0 0.0
  %335 = vmatpush1.xpose.msra.mxu0 0.0
  %336 = vmatprep.subr.mxu0 0.0
  %337 = vmatpush1.xpose.msra.mxu0 0.0
  %338 = vmatprep.subr.mxu0 0.0
  %339 = vmatpush1.xpose.msra.mxu0 0.0
  %340 = vmatprep.subr.mxu0 0.0
  %341 = vmatpush1.xpose.msra.mxu0 0.0
  %342 = vmatprep.subr.mxu0 0.0
  %343 = vmatpush1.xpose.msra.mxu0 0.0
  %344 = vmatprep.subr.mxu0 0.0
  %345 = vmatpush1.xpose.msra.mxu0 0.0
  %346 = vmatprep.subr.mxu0 0.0
  %347 = vmatpush1.xpose.msra.mxu0 0.0
  %348 = vmatprep.subr.mxu0 0.0
  %349 = vmatpush1.xpose.msra.mxu0 0.0
  %350 = vmatprep.subr.mxu0 0.0
  %351 = vmatpush1.xpose.msra.mxu0 0.0
  %352 = vmatprep.subr.mxu0 0.0
  %353 = vmatpush1.xpose.msra.mxu0 0.0
  %354 = vmatprep.subr.mxu0 0.0
  %355 = vmatpush1.xpose.msra.mxu0 %v322
  %356 = vmatprep.subr.mxu0 0.0
  %357 = vmatpush2.xpose.msra.mxu0 0.0
  %358 = vmatprep.subr.mxu0 0.0
  %359 = vmatpush2.xpose.msra.mxu0 0.0
  %360 = vmatprep.subr.mxu0 0.0
  %361 = vmatpush2.xpose.msra.mxu0 0.0
  %362 = vmatprep.subr.mxu0 0.0
  %363 = vmatpush2.xpose.msra.mxu0 0.0
  %364 = vmatprep.subr.mxu0 0.0
  %365 = vmatpush2.xpose.msra.mxu0 0.0
  %366 = vmatprep.subr.mxu0 0.0
  %367 = vmatpush2.xpose.msra.mxu0 0.0
  %368 = vmatprep.subr.mxu0 0.0
  %369 = vmatpush2.xpose.msra.mxu0 0.0
  %370 = vmatprep.subr.mxu0 0.0
  %371 = vmatpush2.xpose.msra.mxu0 0.0
  %372 = vmatprep.subr.mxu0 0.0
  %373 = vmatpush2.xpose.msra.mxu0 0.0
  %374 = vmatprep.subr.mxu0 0.0
  %375 = vmatpush2.xpose.msra.mxu0 0.0
  %376 = vmatprep.subr.mxu0 0.0
  %377 = vmatpush2.xpose.msra.mxu0 0.0
  %378 = vmatprep.subr.mxu0 0.0
  %379 = vmatpush2.xpose.msra.mxu0 0.0
  %380 = vmatprep.subr.mxu0 0.0
  %381 = vmatpush2.xpose.msra.mxu0 0.0
  %382 = vmatprep.subr.mxu0 0.0
  %383 = vmatpush2.xpose.msra.mxu0 0.0
  %384 = vmatprep.subr.mxu0 0.0
  %385 = vmatpush2.xpose.msra.mxu0 0.0
  %386 = vmatprep.subr.mxu0 0.0
  %387 = vmatpush2.xpose.msra.mxu0 0.0
  %388 = vmatprep.mubr.f32.mxu0 0.0
  %389 = vmatmul.mubr.f32.gmra.mxu0 %v320
  %v390 = vpop.f32.mrf.mxu0
  %v391 = vadd.f32 0.0, %v390
  %v392 = vpop.f32.mrf.mxu0
  %393 = vdwg.mxu0
  %395 = vrot.lane.b32.xlu0 %v195, 96
  %v396 = vpop.permute.xlu0 %395
  %v397 = vsel %vm242, %v195, 0
  %v399 = vsel %vm242, %v396, 0
  %401 = vmatprep.subr.mxu0 0.0
  %402 = vmatpush1.xpose.msra.mxu0 0.0
  %403 = vmatprep.subr.mxu0 0.0
  %404 = vmatpush1.xpose.msra.mxu0 0.0
  %405 = vmatprep.subr.mxu0 0.0
  %406 = vmatpush1.xpose.msra.mxu0 0.0
  %407 = vmatprep.subr.mxu0 0.0
  %408 = vmatpush1.xpose.msra.mxu0 0.0
  %409 = vmatprep.subr.mxu0 0.0
  %410 = vmatpush1.xpose.msra.mxu0 0.0
  %411 = vmatprep.subr.mxu0 0.0
  %412 = vmatpush1.xpose.msra.mxu0 0.0
  %413 = vmatprep.subr.mxu0 0.0
  %414 = vmatpush1.xpose.msra.mxu0 0.0
  %415 = vmatprep.subr.mxu0 0.0
  %416 = vmatpush1.xpose.msra.mxu0 0.0
  %417 = vmatprep.subr.mxu0 0.0
  %418 = vmatpush1.xpose.msra.mxu0 0.0
  %419 = vmatprep.subr.mxu0 0.0
  %420 = vmatpush1.xpose.msra.mxu0 0.0
  %421 = vmatprep.subr.mxu0 0.0
  %422 = vmatpush1.xpose.msra.mxu0 0.0
  %423 = vmatprep.subr.mxu0 0.0
  %424 = vmatpush1.xpose.msra.mxu0 0.0
  %425 = vmatprep.subr.mxu0 0.0
  %426 = vmatpush1.xpose.msra.mxu0 0.0
  %427 = vmatprep.subr.mxu0 0.0
  %428 = vmatpush1.xpose.msra.mxu0 0.0
  %429 = vmatprep.subr.mxu0 0.0
  %430 = vmatpush1.xpose.msra.mxu0 0.0
  %431 = vmatprep.subr.mxu0 0.0
  %432 = vmatpush1.xpose.msra.mxu0 %v399
  %433 = vmatprep.subr.mxu0 0.0
  %434 = vmatpush2.xpose.msra.mxu0 0.0
  %435 = vmatprep.subr.mxu0 0.0
  %436 = vmatpush2.xpose.msra.mxu0 0.0
  %437 = vmatprep.subr.mxu0 0.0
  %438 = vmatpush2.xpose.msra.mxu0 0.0
  %439 = vmatprep.subr.mxu0 0.0
  %440 = vmatpush2.xpose.msra.mxu0 0.0
  %441 = vmatprep.subr.mxu0 0.0
  %442 = vmatpush2.xpose.msra.mxu0 0.0
  %443 = vmatprep.subr.mxu0 0.0
  %444 = vmatpush2.xpose.msra.mxu0 0.0
  %445 = vmatprep.subr.mxu0 0.0
  %446 = vmatpush2.xpose.msra.mxu0 0.0
  %447 = vmatprep.subr.mxu0 0.0
  %448 = vmatpush2.xpose.msra.mxu0 0.0
  %449 = vmatprep.subr.mxu0 0.0
  %450 = vmatpush2.xpose.msra.mxu0 0.0
  %451 = vmatprep.subr.mxu0 0.0
  %452 = vmatpush2.xpose.msra.mxu0 0.0
  %453 = vmatprep.subr.mxu0 0.0
  %454 = vmatpush2.xpose.msra.mxu0 0.0
  %455 = vmatprep.subr.mxu0 0.0
  %456 = vmatpush2.xpose.msra.mxu0 0.0
  %457 = vmatprep.subr.mxu0 0.0
  %458 = vmatpush2.xpose.msra.mxu0 0.0
  %459 = vmatprep.subr.mxu0 0.0
  %460 = vmatpush2.xpose.msra.mxu0 0.0
  %461 = vmatprep.subr.mxu0 0.0
  %462 = vmatpush2.xpose.msra.mxu0 0.0
  %463 = vmatprep.subr.mxu0 0.0
  %464 = vmatpush2.xpose.msra.mxu0 0.0
  %465 = vmatprep.mubr.f32.mxu0 0.0
  %466 = vmatmul.mubr.f32.gmra.mxu0 %v397
  %v467 = vpop.f32.mrf.mxu0
  %v468 = vadd.f32 0.0, %v467
  %v469 = vpop.f32.mrf.mxu0
  %470 = vdwg.mxu0
  %472 = vrot.lane.b32.xlu0 %v200, 96
  %v473 = vpop.permute.xlu0 %472
  %v474 = vsel %vm242, %v200, 0
  %v476 = vsel %vm242, %v473, 0
  %478 = vmatprep.subr.mxu0 0.0
  %479 = vmatpush1.xpose.msra.mxu0 0.0
  %480 = vmatprep.subr.mxu0 0.0
  %481 = vmatpush1.xpose.msra.mxu0 0.0
  %482 = vmatprep.subr.mxu0 0.0
  %483 = vmatpush1.xpose.msra.mxu0 0.0
  %484 = vmatprep.subr.mxu0 0.0
  %485 = vmatpush1.xpose.msra.mxu0 0.0
  %486 = vmatprep.subr.mxu0 0.0
  %487 = vmatpush1.xpose.msra.mxu0 0.0
  %488 = vmatprep.subr.mxu0 0.0
  %489 = vmatpush1.xpose.msra.mxu0 0.0
  %490 = vmatprep.subr.mxu0 0.0
  %491 = vmatpush1.xpose.msra.mxu0 0.0
  %492 = vmatprep.subr.mxu0 0.0
  %493 = vmatpush1.xpose.msra.mxu0 0.0
  %494 = vmatprep.subr.mxu0 0.0
  %495 = vmatpush1.xpose.msra.mxu0 0.0
  %496 = vmatprep.subr.mxu0 0.0
  %497 = vmatpush1.xpose.msra.mxu0 0.0
  %498 = vmatprep.subr.mxu0 0.0
  %499 = vmatpush1.xpose.msra.mxu0 0.0
  %500 = vmatprep.subr.mxu0 0.0
  %501 = vmatpush1.xpose.msra.mxu0 0.0
  %502 = vmatprep.subr.mxu0 0.0
  %503 = vmatpush1.xpose.msra.mxu0 0.0
  %504 = vmatprep.subr.mxu0 0.0
  %505 = vmatpush1.xpose.msra.mxu0 0.0
  %506 = vmatprep.subr.mxu0 0.0
  %507 = vmatpush1.xpose.msra.mxu0 0.0
  %508 = vmatprep.subr.mxu0 0.0
  %509 = vmatpush1.xpose.msra.mxu0 %v476
  %510 = vmatprep.subr.mxu0 0.0
  %511 = vmatpush2.xpose.msra.mxu0 0.0
  %512 = vmatprep.subr.mxu0 0.0
  %513 = vmatpush2.xpose.msra.mxu0 0.0
  %514 = vmatprep.subr.mxu0 0.0
  %515 = vmatpush2.xpose.msra.mxu0 0.0
  %516 = vmatprep.subr.mxu0 0.0
  %517 = vmatpush2.xpose.msra.mxu0 0.0
  %518 = vmatprep.subr.mxu0 0.0
  %519 = vmatpush2.xpose.msra.mxu0 0.0
  %520 = vmatprep.subr.mxu0 0.0
  %521 = vmatpush2.xpose.msra.mxu0 0.0
  %522 = vmatprep.subr.mxu0 0.0
  %523 = vmatpush2.xpose.msra.mxu0 0.0
  %524 = vmatprep.subr.mxu0 0.0
  %525 = vmatpush2.xpose.msra.mxu0 0.0
  %526 = vmatprep.subr.mxu0 0.0
  %527 = vmatpush2.xpose.msra.mxu0 0.0
  %528 = vmatprep.subr.mxu0 0.0
  %529 = vmatpush2.xpose.msra.mxu0 0.0
  %530 = vmatprep.subr.mxu0 0.0
  %531 = vmatpush2.xpose.msra.mxu0 0.0
  %532 = vmatprep.subr.mxu0 0.0
  %533 = vmatpush2.xpose.msra.mxu0 0.0
  %534 = vmatprep.subr.mxu0 0.0
  %535 = vmatpush2.xpose.msra.mxu0 0.0
  %536 = vmatprep.subr.mxu0 0.0
  %537 = vmatpush2.xpose.msra.mxu0 0.0
  %538 = vmatprep.subr.mxu0 0.0
  %539 = vmatpush2.xpose.msra.mxu0 0.0
  %540 = vmatprep.subr.mxu0 0.0
  %541 = vmatpush2.xpose.msra.mxu0 0.0
  %542 = vmatprep.mubr.f32.mxu0 0.0
  %543 = vmatmul.mubr.f32.gmra.mxu0 %v474
  %v544 = vpop.f32.mrf.mxu0
  %v545 = vadd.f32 0.0, %v544
  %v546 = vpop.f32.mrf.mxu0
  %547 = vdwg.mxu0
  %549 = vrot.lane.b32.xlu0 %v205, 96
  %v550 = vpop.permute.xlu0 %549
  %v551 = vsel %vm242, %v205, 0
  %v553 = vsel %vm242, %v550, 0
  %555 = vmatprep.subr.mxu0 0.0
  %556 = vmatpush1.xpose.msra.mxu0 0.0
  %557 = vmatprep.subr.mxu0 0.0
  %558 = vmatpush1.xpose.msra.mxu0 0.0
  %559 = vmatprep.subr.mxu0 0.0
  %560 = vmatpush1.xpose.msra.mxu0 0.0
  %561 = vmatprep.subr.mxu0 0.0
  %562 = vmatpush1.xpose.msra.mxu0 0.0
  %563 = vmatprep.subr.mxu0 0.0
  %564 = vmatpush1.xpose.msra.mxu0 0.0
  %565 = vmatprep.subr.mxu0 0.0
  %566 = vmatpush1.xpose.msra.mxu0 0.0
  %567 = vmatprep.subr.mxu0 0.0
  %568 = vmatpush1.xpose.msra.mxu0 0.0
  %569 = vmatprep.subr.mxu0 0.0
  %570 = vmatpush1.xpose.msra.mxu0 0.0
  %571 = vmatprep.subr.mxu0 0.0
  %572 = vmatpush1.xpose.msra.mxu0 0.0
  %573 = vmatprep.subr.mxu0 0.0
  %574 = vmatpush1.xpose.msra.mxu0 0.0
  %575 = vmatprep.subr.mxu0 0.0
  %576 = vmatpush1.xpose.msra.mxu0 0.0
  %577 = vmatprep.subr.mxu0 0.0
  %578 = vmatpush1.xpose.msra.mxu0 0.0
  %579 = vmatprep.subr.mxu0 0.0
  %580 = vmatpush1.xpose.msra.mxu0 0.0
  %581 = vmatprep.subr.mxu0 0.0
  %582 = vmatpush1.xpose.msra.mxu0 0.0
  %583 = vmatprep.subr.mxu0 0.0
  %584 = vmatpush1.xpose.msra.mxu0 0.0
  %585 = vmatprep.subr.mxu0 0.0
  %586 = vmatpush1.xpose.msra.mxu0 %v553
  %587 = vmatprep.subr.mxu0 0.0
  %588 = vmatpush2.xpose.msra.mxu0 0.0
  %589 = vmatprep.subr.mxu0 0.0
  %590 = vmatpush2.xpose.msra.mxu0 0.0
  %591 = vmatprep.subr.mxu0 0.0
  %592 = vmatpush2.xpose.msra.mxu0 0.0
  %593 = vmatprep.subr.mxu0 0.0
  %594 = vmatpush2.xpose.msra.mxu0 0.0
  %595 = vmatprep.subr.mxu0 0.0
  %596 = vmatpush2.xpose.msra.mxu0 0.0
  %597 = vmatprep.subr.mxu0 0.0
  %598 = vmatpush2.xpose.msra.mxu0 0.0
  %599 = vmatprep.subr.mxu0 0.0
  %600 = vmatpush2.xpose.msra.mxu0 0.0
  %601 = vmatprep.subr.mxu0 0.0
  %602 = vmatpush2.xpose.msra.mxu0 0.0
  %603 = vmatprep.subr.mxu0 0.0
  %604 = vmatpush2.xpose.msra.mxu0 0.0
  %605 = vmatprep.subr.mxu0 0.0
  %606 = vmatpush2.xpose.msra.mxu0 0.0
  %607 = vmatprep.subr.mxu0 0.0
  %608 = vmatpush2.xpose.msra.mxu0 0.0
  %609 = vmatprep.subr.mxu0 0.0
  %610 = vmatpush2.xpose.msra.mxu0 0.0
  %611 = vmatprep.subr.mxu0 0.0
  %612 = vmatpush2.xpose.msra.mxu0 0.0
  %613 = vmatprep.subr.mxu0 0.0
  %614 = vmatpush2.xpose.msra.mxu0 0.0
  %615 = vmatprep.subr.mxu0 0.0
  %616 = vmatpush2.xpose.msra.mxu0 0.0
  %617 = vmatprep.subr.mxu0 0.0
  %618 = vmatpush2.xpose.msra.mxu0 0.0
  %619 = vmatprep.mubr.f32.mxu0 0.0
  %620 = vmatmul.mubr.f32.gmra.mxu0 %v551
  %v621 = vpop.f32.mrf.mxu0
  %v622 = vadd.f32 0.0, %v621
  %v623 = vpop.f32.mrf.mxu0
  %624 = vdwg.mxu0
  %626 = vrot.lane.b32.xlu0 %v210, 96
  %v627 = vpop.permute.xlu0 %626
  %v628 = vsel %vm242, %v210, 0
  %v630 = vsel %vm242, %v627, 0
  %632 = vmatprep.subr.mxu0 0.0
  %633 = vmatpush1.xpose.msra.mxu0 0.0
  %634 = vmatprep.subr.mxu0 0.0
  %635 = vmatpush1.xpose.msra.mxu0 0.0
  %636 = vmatprep.subr.mxu0 0.0
  %637 = vmatpush1.xpose.msra.mxu0 0.0
  %638 = vmatprep.subr.mxu0 0.0
  %639 = vmatpush1.xpose.msra.mxu0 0.0
  %640 = vmatprep.subr.mxu0 0.0
  %641 = vmatpush1.xpose.msra.mxu0 0.0
  %642 = vmatprep.subr.mxu0 0.0
  %643 = vmatpush1.xpose.msra.mxu0 0.0
  %644 = vmatprep.subr.mxu0 0.0
  %645 = vmatpush1.xpose.msra.mxu0 0.0
  %646 = vmatprep.subr.mxu0 0.0
  %647 = vmatpush1.xpose.msra.mxu0 0.0
  %648 = vmatprep.subr.mxu0 0.0
  %649 = vmatpush1.xpose.msra.mxu0 0.0
  %650 = vmatprep.subr.mxu0 0.0
  %651 = vmatpush1.xpose.msra.mxu0 0.0
  %652 = vmatprep.subr.mxu0 0.0
  %653 = vmatpush1.xpose.msra.mxu0 0.0
  %654 = vmatprep.subr.mxu0 0.0
  %655 = vmatpush1.xpose.msra.mxu0 0.0
  %656 = vmatprep.subr.mxu0 0.0
  %657 = vmatpush1.xpose.msra.mxu0 0.0
  %658 = vmatprep.subr.mxu0 0.0
  %659 = vmatpush1.xpose.msra.mxu0 0.0
  %660 = vmatprep.subr.mxu0 0.0
  %661 = vmatpush1.xpose.msra.mxu0 0.0
  %662 = vmatprep.subr.mxu0 0.0
  %663 = vmatpush1.xpose.msra.mxu0 %v630
  %664 = vmatprep.subr.mxu0 0.0
  %665 = vmatpush2.xpose.msra.mxu0 0.0
  %666 = vmatprep.subr.mxu0 0.0
  %667 = vmatpush2.xpose.msra.mxu0 0.0
  %668 = vmatprep.subr.mxu0 0.0
  %669 = vmatpush2.xpose.msra.mxu0 0.0
  %670 = vmatprep.subr.mxu0 0.0
  %671 = vmatpush2.xpose.msra.mxu0 0.0
  %672 = vmatprep.subr.mxu0 0.0
  %673 = vmatpush2.xpose.msra.mxu0 0.0
  %674 = vmatprep.subr.mxu0 0.0
  %675 = vmatpush2.xpose.msra.mxu0 0.0
  %676 = vmatprep.subr.mxu0 0.0
  %677 = vmatpush2.xpose.msra.mxu0 0.0
  %678 = vmatprep.subr.mxu0 0.0
  %679 = vmatpush2.xpose.msra.mxu0 0.0
  %680 = vmatprep.subr.mxu0 0.0
  %681 = vmatpush2.xpose.msra.mxu0 0.0
  %682 = vmatprep.subr.mxu0 0.0
  %683 = vmatpush2.xpose.msra.mxu0 0.0
  %684 = vmatprep.subr.mxu0 0.0
  %685 = vmatpush2.xpose.msra.mxu0 0.0
  %686 = vmatprep.subr.mxu0 0.0
  %687 = vmatpush2.xpose.msra.mxu0 0.0
  %688 = vmatprep.subr.mxu0 0.0
  %689 = vmatpush2.xpose.msra.mxu0 0.0
  %690 = vmatprep.subr.mxu0 0.0
  %691 = vmatpush2.xpose.msra.mxu0 0.0
  %692 = vmatprep.subr.mxu0 0.0
  %693 = vmatpush2.xpose.msra.mxu0 0.0
  %694 = vmatprep.subr.mxu0 0.0
  %695 = vmatpush2.xpose.msra.mxu0 0.0
  %696 = vmatprep.mubr.f32.mxu0 0.0
  %697 = vmatmul.mubr.f32.gmra.mxu0 %v628
  %v698 = vpop.f32.mrf.mxu0
  %v699 = vadd.f32 0.0, %v698
  %v700 = vpop.f32.mrf.mxu0
  %701 = vdwg.mxu0
  %703 = vrot.lane.b32.xlu0 %v215, 96
  %v704 = vpop.permute.xlu0 %703
  %v705 = vsel %vm242, %v215, 0
  %v707 = vsel %vm242, %v704, 0
  %709 = vmatprep.subr.mxu0 0.0
  %710 = vmatpush1.xpose.msra.mxu0 0.0
  %711 = vmatprep.subr.mxu0 0.0
  %712 = vmatpush1.xpose.msra.mxu0 0.0
  %713 = vmatprep.subr.mxu0 0.0
  %714 = vmatpush1.xpose.msra.mxu0 0.0
  %715 = vmatprep.subr.mxu0 0.0
  %716 = vmatpush1.xpose.msra.mxu0 0.0
  %717 = vmatprep.subr.mxu0 0.0
  %718 = vmatpush1.xpose.msra.mxu0 0.0
  %719 = vmatprep.subr.mxu0 0.0
  %720 = vmatpush1.xpose.msra.mxu0 0.0
  %721 = vmatprep.subr.mxu0 0.0
  %722 = vmatpush1.xpose.msra.mxu0 0.0
  %723 = vmatprep.subr.mxu0 0.0
  %724 = vmatpush1.xpose.msra.mxu0 0.0
  %725 = vmatprep.subr.mxu0 0.0
  %726 = vmatpush1.xpose.msra.mxu0 0.0
  %727 = vmatprep.subr.mxu0 0.0
  %728 = vmatpush1.xpose.msra.mxu0 0.0
  %729 = vmatprep.subr.mxu0 0.0
  %730 = vmatpush1.xpose.msra.mxu0 0.0
  %731 = vmatprep.subr.mxu0 0.0
  %732 = vmatpush1.xpose.msra.mxu0 0.0
  %733 = vmatprep.subr.mxu0 0.0
  %734 = vmatpush1.xpose.msra.mxu0 0.0
  %735 = vmatprep.subr.mxu0 0.0
  %736 = vmatpush1.xpose.msra.mxu0 0.0
  %737 = vmatprep.subr.mxu0 0.0
  %738 = vmatpush1.xpose.msra.mxu0 0.0
  %739 = vmatprep.subr.mxu0 0.0
  %740 = vmatpush1.xpose.msra.mxu0 %v707
  %741 = vmatprep.subr.mxu0 0.0
  %742 = vmatpush2.xpose.msra.mxu0 0.0
  %743 = vmatprep.subr.mxu0 0.0
  %744 = vmatpush2.xpose.msra.mxu0 0.0
  %745 = vmatprep.subr.mxu0 0.0
  %746 = vmatpush2.xpose.msra.mxu0 0.0
  %747 = vmatprep.subr.mxu0 0.0
  %748 = vmatpush2.xpose.msra.mxu0 0.0
  %749 = vmatprep.subr.mxu0 0.0
  %750 = vmatpush2.xpose.msra.mxu0 0.0
  %751 = vmatprep.subr.mxu0 0.0
  %752 = vmatpush2.xpose.msra.mxu0 0.0
  %753 = vmatprep.subr.mxu0 0.0
  %754 = vmatpush2.xpose.msra.mxu0 0.0
  %755 = vmatprep.subr.mxu0 0.0
  %756 = vmatpush2.xpose.msra.mxu0 0.0
  %757 = vmatprep.subr.mxu0 0.0
  %758 = vmatpush2.xpose.msra.mxu0 0.0
  %759 = vmatprep.subr.mxu0 0.0
  %760 = vmatpush2.xpose.msra.mxu0 0.0
  %761 = vmatprep.subr.mxu0 0.0
  %762 = vmatpush2.xpose.msra.mxu0 0.0
  %763 = vmatprep.subr.mxu0 0.0
  %764 = vmatpush2.xpose.msra.mxu0 0.0
  %765 = vmatprep.subr.mxu0 0.0
  %766 = vmatpush2.xpose.msra.mxu0 0.0
  %767 = vmatprep.subr.mxu0 0.0
  %768 = vmatpush2.xpose.msra.mxu0 0.0
  %769 = vmatprep.subr.mxu0 0.0
  %770 = vmatpush2.xpose.msra.mxu0 0.0
  %771 = vmatprep.subr.mxu0 0.0
  %772 = vmatpush2.xpose.msra.mxu0 0.0
  %773 = vmatprep.mubr.f32.mxu0 0.0
  %774 = vmatmul.mubr.f32.gmra.mxu0 %v705
  %v775 = vpop.f32.mrf.mxu0
  %v776 = vadd.f32 0.0, %v775
  %v777 = vpop.f32.mrf.mxu0
  %778 = vdwg.mxu0
  %780 = vrot.lane.b32.xlu0 %v220, 96
  %v781 = vpop.permute.xlu0 %780
  %v782 = vsel %vm242, %v220, 0
  %v784 = vsel %vm242, %v781, 0
  %786 = vmatprep.subr.mxu0 0.0
  %787 = vmatpush1.xpose.msra.mxu0 0.0
  %788 = vmatprep.subr.mxu0 0.0
  %789 = vmatpush1.xpose.msra.mxu0 0.0
  %790 = vmatprep.subr.mxu0 0.0
  %791 = vmatpush1.xpose.msra.mxu0 0.0
  %792 = vmatprep.subr.mxu0 0.0
  %793 = vmatpush1.xpose.msra.mxu0 0.0
  %794 = vmatprep.subr.mxu0 0.0
  %795 = vmatpush1.xpose.msra.mxu0 0.0
  %796 = vmatprep.subr.mxu0 0.0
  %797 = vmatpush1.xpose.msra.mxu0 0.0
  %798 = vmatprep.subr.mxu0 0.0
  %799 = vmatpush1.xpose.msra.mxu0 0.0
  %800 = vmatprep.subr.mxu0 0.0
  %801 = vmatpush1.xpose.msra.mxu0 0.0
  %802 = vmatprep.subr.mxu0 0.0
  %803 = vmatpush1.xpose.msra.mxu0 0.0
  %804 = vmatprep.subr.mxu0 0.0
  %805 = vmatpush1.xpose.msra.mxu0 0.0
  %806 = vmatprep.subr.mxu0 0.0
  %807 = vmatpush1.xpose.msra.mxu0 0.0
  %808 = vmatprep.subr.mxu0 0.0
  %809 = vmatpush1.xpose.msra.mxu0 0.0
  %810 = vmatprep.subr.mxu0 0.0
  %811 = vmatpush1.xpose.msra.mxu0 0.0
  %812 = vmatprep.subr.mxu0 0.0
  %813 = vmatpush1.xpose.msra.mxu0 0.0
  %814 = vmatprep.subr.mxu0 0.0
  %815 = vmatpush1.xpose.msra.mxu0 0.0
  %816 = vmatprep.subr.mxu0 0.0
  %817 = vmatpush1.xpose.msra.mxu0 %v784
  %818 = vmatprep.subr.mxu0 0.0
  %819 = vmatpush2.xpose.msra.mxu0 0.0
  %820 = vmatprep.subr.mxu0 0.0
  %821 = vmatpush2.xpose.msra.mxu0 0.0
  %822 = vmatprep.subr.mxu0 0.0
  %823 = vmatpush2.xpose.msra.mxu0 0.0
  %824 = vmatprep.subr.mxu0 0.0
  %825 = vmatpush2.xpose.msra.mxu0 0.0
  %826 = vmatprep.subr.mxu0 0.0
  %827 = vmatpush2.xpose.msra.mxu0 0.0
  %828 = vmatprep.subr.mxu0 0.0
  %829 = vmatpush2.xpose.msra.mxu0 0.0
  %830 = vmatprep.subr.mxu0 0.0
  %831 = vmatpush2.xpose.msra.mxu0 0.0
  %832 = vmatprep.subr.mxu0 0.0
  %833 = vmatpush2.xpose.msra.mxu0 0.0
  %834 = vmatprep.subr.mxu0 0.0
  %835 = vmatpush2.xpose.msra.mxu0 0.0
  %836 = vmatprep.subr.mxu0 0.0
  %837 = vmatpush2.xpose.msra.mxu0 0.0
  %838 = vmatprep.subr.mxu0 0.0
  %839 = vmatpush2.xpose.msra.mxu0 0.0
  %840 = vmatprep.subr.mxu0 0.0
  %841 = vmatpush2.xpose.msra.mxu0 0.0
  %842 = vmatprep.subr.mxu0 0.0
  %843 = vmatpush2.xpose.msra.mxu0 0.0
  %844 = vmatprep.subr.mxu0 0.0
  %845 = vmatpush2.xpose.msra.mxu0 0.0
  %846 = vmatprep.subr.mxu0 0.0
  %847 = vmatpush2.xpose.msra.mxu0 0.0
  %848 = vmatprep.subr.mxu0 0.0
  %849 = vmatpush2.xpose.msra.mxu0 0.0
  %850 = vmatprep.mubr.f32.mxu0 0.0
  %851 = vmatmul.mubr.f32.gmra.mxu0 %v782
  %v852 = vpop.f32.mrf.mxu0
  %v853 = vadd.f32 0.0, %v852
  %v854 = vpop.f32.mrf.mxu0
  %855 = vdwg.mxu0
  %v856 = vmul.f32 %v314, 0.35355338
  %v857 = vmul.f32 %v391, 0.35355338
  %v858 = vmul.f32 %v468, 0.35355338
  %v859 = vmul.f32 %v545, 0.35355338
  %v860 = vmul.f32 %v622, 0.35355338
  %v861 = vmul.f32 %v699, 0.35355338
  %v862 = vmul.f32 %v776, 0.35355338
  %v863 = vmul.f32 %v853, 0.35355338
  %v872 = vlaneseq
  %v873 = vshrl.u32 %v872, 7
  %v874 = vsub.s32 0, %v873
  %v875 = vrot.slane %v231, %v874
  %v876 = vlaneseq
  %v877 = vshrl.u32 %v876, 7
  %v878 = vsub.s32 0, %v877
  %v879 = vrot.slane %v232, %v878
  %v880 = vlaneseq
  %v881 = vshrl.u32 %v880, 7
  %v882 = vsub.s32 0, %v881
  %v883 = vrot.slane %v233, %v882
  %v884 = vlaneseq
  %v885 = vshrl.u32 %v884, 7
  %v886 = vsub.s32 0, %v885
  %v887 = vrot.slane %v234, %v886
  %v888 = vlaneseq
  %v889 = vshrl.u32 %v888, 7
  %v890 = vsub.s32 0, %v889
  %v891 = vrot.slane %v235, %v890
  %v892 = vlaneseq
  %v893 = vshrl.u32 %v892, 7
  %v894 = vsub.s32 0, %v893
  %v895 = vrot.slane %v236, %v894
  %v896 = vlaneseq
  %v897 = vshrl.u32 %v896, 7
  %v898 = vsub.s32 0, %v897
  %v899 = vrot.slane %v237, %v898
  %v900 = vlaneseq
  %v901 = vshrl.u32 %v900, 7
  %v902 = vsub.s32 0, %v901
  %v903 = vrot.slane %v238, %v902
  %v912 = vadd.f32 %v856, %v875
  %v913 = vadd.f32 %v857, %v879
  %v914 = vadd.f32 %v858, %v883
  %v915 = vadd.f32 %v859, %v887
  %v916 = vadd.f32 %v860, %v891
  %v917 = vadd.f32 %v861, %v895
  %v918 = vadd.f32 %v862, %v899
  %v919 = vadd.f32 %v863, %v903
  %v920 = vsel %vm242, %v912, -inf
  %921 = vmax.xlane.f32.xlu0 %v920
  %v922 = vpop.xlane.xlu0 %921
  %v923 = vsel %vm242, %v913, -inf
  %924 = vmax.xlane.f32.xlu0 %v923
  %v925 = vpop.xlane.xlu0 %924
  %v926 = vsel %vm242, %v914, -inf
  %927 = vmax.xlane.f32.xlu0 %v926
  %v928 = vpop.xlane.xlu0 %927
  %v929 = vsel %vm242, %v915, -inf
  %930 = vmax.xlane.f32.xlu0 %v929
  %v931 = vpop.xlane.xlu0 %930
  %v932 = vsel %vm242, %v916, -inf
  %933 = vmax.xlane.f32.xlu0 %v932
  %v934 = vpop.xlane.xlu0 %933
  %v935 = vsel %vm242, %v917, -inf
  %936 = vmax.xlane.f32.xlu0 %v935
  %v937 = vpop.xlane.xlu0 %936
  %v938 = vsel %vm242, %v918, -inf
  %939 = vmax.xlane.f32.xlu0 %v938
  %v940 = vpop.xlane.xlu0 %939
  %v941 = vsel %vm242, %v919, -inf
  %942 = vmax.xlane.f32.xlu0 %v941
  %v943 = vpop.xlane.xlu0 %942
  %v944 = vsub.f32 %v912, %v922
  %v945 = vsub.f32 %v913, %v925
  %v946 = vsub.f32 %v914, %v928
  %v947 = vsub.f32 %v915, %v931
  %v948 = vsub.f32 %v916, %v934
  %v949 = vsub.f32 %v917, %v937
  %v950 = vsub.f32 %v918, %v940
  %v951 = vsub.f32 %v919, %v943
  %v952 = vmul.f32 %v944, 1.442695
  %v953 = vpow.pop %v952
  %v954 = vmul.f32 %v945, 1.442695
  %v955 = vpow.pop %v954
  %v956 = vmul.f32 %v946, 1.442695
  %v957 = vpow.pop %v956
  %v958 = vmul.f32 %v947, 1.442695
  %v959 = vpow.pop %v958
  %v960 = vmul.f32 %v948, 1.442695
  %v961 = vpow.pop %v960
  %v962 = vmul.f32 %v949, 1.442695
  %v963 = vpow.pop %v962
  %v964 = vmul.f32 %v950, 1.442695
  %v965 = vpow.pop %v964
  %v966 = vmul.f32 %v951, 1.442695
  %v967 = vpow.pop %v966
  %v968 = vsel %vm242, %v953, 0.0
  %969 = vadd.xlane.f32.xlu0 %v968
  %v970 = vpop.xlane.xlu0 %969
  %v971 = vsel %vm242, %v955, 0.0
  %972 = vadd.xlane.f32.xlu0 %v971
  %v973 = vpop.xlane.xlu0 %972
  %v974 = vsel %vm242, %v957, 0.0
  %975 = vadd.xlane.f32.xlu0 %v974
  %v976 = vpop.xlane.xlu0 %975
  %v977 = vsel %vm242, %v959, 0.0
  %978 = vadd.xlane.f32.xlu0 %v977
  %v979 = vpop.xlane.xlu0 %978
  %v980 = vsel %vm242, %v961, 0.0
  %981 = vadd.xlane.f32.xlu0 %v980
  %v982 = vpop.xlane.xlu0 %981
  %v983 = vsel %vm242, %v963, 0.0
  %984 = vadd.xlane.f32.xlu0 %v983
  %v985 = vpop.xlane.xlu0 %984
  %v986 = vsel %vm242, %v965, 0.0
  %987 = vadd.xlane.f32.xlu0 %v986
  %v988 = vpop.xlane.xlu0 %987
  %v989 = vsel %vm242, %v967, 0.0
  %990 = vadd.xlane.f32.xlu0 %v989
  %v991 = vpop.xlane.xlu0 %990
  %v992 = vrcp.pop %v970
  %v993 = vrcp.pop %v973
  %v994 = vrcp.pop %v976
  %v995 = vrcp.pop %v979
  %v996 = vrcp.pop %v982
  %v997 = vrcp.pop %v985
  %v998 = vrcp.pop %v988
  %v999 = vrcp.pop %v991
  %v1000 = vmul.f32 %v953, %v992
  %v1001 = vmul.f32 %v955, %v993
  %v1002 = vmul.f32 %v957, %v994
  %v1003 = vmul.f32 %v959, %v995
  %v1004 = vmul.f32 %v961, %v996
  %v1005 = vmul.f32 %v963, %v997
  %v1006 = vmul.f32 %v965, %v998
  %v1007 = vmul.f32 %v967, %v999
  %1008 = vrot.lane.b32.xlu0 %v185, 64
  %v1009 = vpop.permute.xlu0 %1008
  %v1012 = vsel %vm242, %v1000, 0
  %1014 = vmatprep.subr.mxu0 0.0
  %1015 = vmatpush1.msra.mxu0 0.0
  %1016 = vmatprep.subr.mxu0 0.0
  %1017 = vmatpush1.msra.mxu0 0.0
  %1018 = vmatprep.subr.mxu0 0.0
  %1019 = vmatpush1.msra.mxu0 0.0
  %1020 = vmatprep.subr.mxu0 0.0
  %1021 = vmatpush1.msra.mxu0 0.0
  %1022 = vmatprep.subr.mxu0 0.0
  %1023 = vmatpush1.msra.mxu0 0.0
  %1024 = vmatprep.subr.mxu0 0.0
  %1025 = vmatpush1.msra.mxu0 0.0
  %1026 = vmatprep.subr.mxu0 0.0
  %1027 = vmatpush1.msra.mxu0 0.0
  %1028 = vmatprep.subr.mxu0 0.0
  %1029 = vmatpush1.msra.mxu0 0.0
  %1030 = vmatprep.subr.mxu0 0.0
  %1031 = vmatpush1.msra.mxu0 0.0
  %1032 = vmatprep.subr.mxu0 0.0
  %1033 = vmatpush1.msra.mxu0 0.0
  %1034 = vmatprep.subr.mxu0 0.0
  %1035 = vmatpush1.msra.mxu0 0.0
  %1036 = vmatprep.subr.mxu0 0.0
  %1037 = vmatpush1.msra.mxu0 0.0
  %1038 = vmatprep.subr.mxu0 0.0
  %1039 = vmatpush1.msra.mxu0 0.0
  %1040 = vmatprep.subr.mxu0 0.0
  %1041 = vmatpush1.msra.mxu0 0.0
  %1042 = vmatprep.subr.mxu0 0.0
  %1043 = vmatpush1.msra.mxu0 0.0
  %1044 = vmatprep.subr.mxu0 0.0
  %1045 = vmatpush1.msra.mxu0 %v1009
  %1046 = vmatprep.subr.mxu0 0.0
  %1047 = vmatpush2.msra.mxu0 0.0
  %1048 = vmatprep.subr.mxu0 0.0
  %1049 = vmatpush2.msra.mxu0 0.0
  %1050 = vmatprep.subr.mxu0 0.0
  %1051 = vmatpush2.msra.mxu0 0.0
  %1052 = vmatprep.subr.mxu0 0.0
  %1053 = vmatpush2.msra.mxu0 0.0
  %1054 = vmatprep.subr.mxu0 0.0
  %1055 = vmatpush2.msra.mxu0 0.0
  %1056 = vmatprep.subr.mxu0 0.0
  %1057 = vmatpush2.msra.mxu0 0.0
  %1058 = vmatprep.subr.mxu0 0.0
  %1059 = vmatpush2.msra.mxu0 0.0
  %1060 = vmatprep.subr.mxu0 0.0
  %1061 = vmatpush2.msra.mxu0 0.0
  %1062 = vmatprep.subr.mxu0 0.0
  %1063 = vmatpush2.msra.mxu0 0.0
  %1064 = vmatprep.subr.mxu0 0.0
  %1065 = vmatpush2.msra.mxu0 0.0
  %1066 = vmatprep.subr.mxu0 0.0
  %1067 = vmatpush2.msra.mxu0 0.0
  %1068 = vmatprep.subr.mxu0 0.0
  %1069 = vmatpush2.msra.mxu0 0.0
  %1070 = vmatprep.subr.mxu0 0.0
  %1071 = vmatpush2.msra.mxu0 0.0
  %1072 = vmatprep.subr.mxu0 0.0
  %1073 = vmatpush2.msra.mxu0 0.0
  %1074 = vmatprep.subr.mxu0 0.0
  %1075 = vmatpush2.msra.mxu0 0.0
  %1076 = vmatprep.subr.mxu0 0.0
  %1077 = vmatpush2.msra.mxu0 0.0
  %1078 = vmatprep.mubr.f32.mxu0 0.0
  %1079 = vmatmul.mubr.f32.gmra.mxu0 %v1012
  %v1080 = vpop.f32.mrf.mxu0
  %v1081 = vadd.f32 0.0, %v1080
  %v1082 = vpop.f32.mrf.mxu0
  %1083 = vdwg.mxu0
  %1084 = vrot.lane.b32.xlu0 %v190, 64
  %v1085 = vpop.permute.xlu0 %1084
  %v1088 = vsel %vm242, %v1001, 0
  %1090 = vmatprep.subr.mxu0 0.0
  %1091 = vmatpush1.msra.mxu0 0.0
  %1092 = vmatprep.subr.mxu0 0.0
  %1093 = vmatpush1.msra.mxu0 0.0
  %1094 = vmatprep.subr.mxu0 0.0
  %1095 = vmatpush1.msra.mxu0 0.0
  %1096 = vmatprep.subr.mxu0 0.0
  %1097 = vmatpush1.msra.mxu0 0.0
  %1098 = vmatprep.subr.mxu0 0.0
  %1099 = vmatpush1.msra.mxu0 0.0
  %1100 = vmatprep.subr.mxu0 0.0
  %1101 = vmatpush1.msra.mxu0 0.0
  %1102 = vmatprep.subr.mxu0 0.0
  %1103 = vmatpush1.msra.mxu0 0.0
  %1104 = vmatprep.subr.mxu0 0.0
  %1105 = vmatpush1.msra.mxu0 0.0
  %1106 = vmatprep.subr.mxu0 0.0
  %1107 = vmatpush1.msra.mxu0 0.0
  %1108 = vmatprep.subr.mxu0 0.0
  %1109 = vmatpush1.msra.mxu0 0.0
  %1110 = vmatprep.subr.mxu0 0.0
  %1111 = vmatpush1.msra.mxu0 0.0
  %1112 = vmatprep.subr.mxu0 0.0
  %1113 = vmatpush1.msra.mxu0 0.0
  %1114 = vmatprep.subr.mxu0 0.0
  %1115 = vmatpush1.msra.mxu0 0.0
  %1116 = vmatprep.subr.mxu0 0.0
  %1117 = vmatpush1.msra.mxu0 0.0
  %1118 = vmatprep.subr.mxu0 0.0
  %1119 = vmatpush1.msra.mxu0 0.0
  %1120 = vmatprep.subr.mxu0 0.0
  %1121 = vmatpush1.msra.mxu0 %v1085
  %1122 = vmatprep.subr.mxu0 0.0
  %1123 = vmatpush2.msra.mxu0 0.0
  %1124 = vmatprep.subr.mxu0 0.0
  %1125 = vmatpush2.msra.mxu0 0.0
  %1126 = vmatprep.subr.mxu0 0.0
  %1127 = vmatpush2.msra.mxu0 0.0
  %1128 = vmatprep.subr.mxu0 0.0
  %1129 = vmatpush2.msra.mxu0 0.0
  %1130 = vmatprep.subr.mxu0 0.0
  %1131 = vmatpush2.msra.mxu0 0.0
  %1132 = vmatprep.subr.mxu0 0.0
  %1133 = vmatpush2.msra.mxu0 0.0
  %1134 = vmatprep.subr.mxu0 0.0
  %1135 = vmatpush2.msra.mxu0 0.0
  %1136 = vmatprep.subr.mxu0 0.0
  %1137 = vmatpush2.msra.mxu0 0.0
  %1138 = vmatprep.subr.mxu0 0.0
  %1139 = vmatpush2.msra.mxu0 0.0
  %1140 = vmatprep.subr.mxu0 0.0
  %1141 = vmatpush2.msra.mxu0 0.0
  %1142 = vmatprep.subr.mxu0 0.0
  %1143 = vmatpush2.msra.mxu0 0.0
  %1144 = vmatprep.subr.mxu0 0.0
  %1145 = vmatpush2.msra.mxu0 0.0
  %1146 = vmatprep.subr.mxu0 0.0
  %1147 = vmatpush2.msra.mxu0 0.0
  %1148 = vmatprep.subr.mxu0 0.0
  %1149 = vmatpush2.msra.mxu0 0.0
  %1150 = vmatprep.subr.mxu0 0.0
  %1151 = vmatpush2.msra.mxu0 0.0
  %1152 = vmatprep.subr.mxu0 0.0
  %1153 = vmatpush2.msra.mxu0 0.0
  %1154 = vmatprep.mubr.f32.mxu0 0.0
  %1155 = vmatmul.mubr.f32.gmra.mxu0 %v1088
  %v1156 = vpop.f32.mrf.mxu0
  %v1157 = vadd.f32 0.0, %v1156
  %v1158 = vpop.f32.mrf.mxu0
  %1159 = vdwg.mxu0
  %1160 = vrot.lane.b32.xlu0 %v195, 64
  %v1161 = vpop.permute.xlu0 %1160
  %v1164 = vsel %vm242, %v1002, 0
  %1166 = vmatprep.subr.mxu0 0.0
  %1167 = vmatpush1.msra.mxu0 0.0
  %1168 = vmatprep.subr.mxu0 0.0
  %1169 = vmatpush1.msra.mxu0 0.0
  %1170 = vmatprep.subr.mxu0 0.0
  %1171 = vmatpush1.msra.mxu0 0.0
  %1172 = vmatprep.subr.mxu0 0.0
  %1173 = vmatpush1.msra.mxu0 0.0
  %1174 = vmatprep.subr.mxu0 0.0
  %1175 = vmatpush1.msra.mxu0 0.0
  %1176 = vmatprep.subr.mxu0 0.0
  %1177 = vmatpush1.msra.mxu0 0.0
  %1178 = vmatprep.subr.mxu0 0.0
  %1179 = vmatpush1.msra.mxu0 0.0
  %1180 = vmatprep.subr.mxu0 0.0
  %1181 = vmatpush1.msra.mxu0 0.0
  %1182 = vmatprep.subr.mxu0 0.0
  %1183 = vmatpush1.msra.mxu0 0.0
  %1184 = vmatprep.subr.mxu0 0.0
  %1185 = vmatpush1.msra.mxu0 0.0
  %1186 = vmatprep.subr.mxu0 0.0
  %1187 = vmatpush1.msra.mxu0 0.0
  %1188 = vmatprep.subr.mxu0 0.0
  %1189 = vmatpush1.msra.mxu0 0.0
  %1190 = vmatprep.subr.mxu0 0.0
  %1191 = vmatpush1.msra.mxu0 0.0
  %1192 = vmatprep.subr.mxu0 0.0
  %1193 = vmatpush1.msra.mxu0 0.0
  %1194 = vmatprep.subr.mxu0 0.0
  %1195 = vmatpush1.msra.mxu0 0.0
  %1196 = vmatprep.subr.mxu0 0.0
  %1197 = vmatpush1.msra.mxu0 %v1161
  %1198 = vmatprep.subr.mxu0 0.0
  %1199 = vmatpush2.msra.mxu0 0.0
  %1200 = vmatprep.subr.mxu0 0.0
  %1201 = vmatpush2.msra.mxu0 0.0
  %1202 = vmatprep.subr.mxu0 0.0
  %1203 = vmatpush2.msra.mxu0 0.0
  %1204 = vmatprep.subr.mxu0 0.0
  %1205 = vmatpush2.msra.mxu0 0.0
  %1206 = vmatprep.subr.mxu0 0.0
  %1207 = vmatpush2.msra.mxu0 0.0
  %1208 = vmatprep.subr.mxu0 0.0
  %1209 = vmatpush2.msra.mxu0 0.0
  %1210 = vmatprep.subr.mxu0 0.0
  %1211 = vmatpush2.msra.mxu0 0.0
  %1212 = vmatprep.subr.mxu0 0.0
  %1213 = vmatpush2.msra.mxu0 0.0
  %1214 = vmatprep.subr.mxu0 0.0
  %1215 = vmatpush2.msra.mxu0 0.0
  %1216 = vmatprep.subr.mxu0 0.0
  %1217 = vmatpush2.msra.mxu0 0.0
  %1218 = vmatprep.subr.mxu0 0.0
  %1219 = vmatpush2.msra.mxu0 0.0
  %1220 = vmatprep.subr.mxu0 0.0
  %1221 = vmatpush2.msra.mxu0 0.0
  %1222 = vmatprep.subr.mxu0 0.0
  %1223 = vmatpush2.msra.mxu0 0.0
  %1224 = vmatprep.subr.mxu0 0.0
  %1225 = vmatpush2.msra.mxu0 0.0
  %1226 = vmatprep.subr.mxu0 0.0
  %1227 = vmatpush2.msra.mxu0 0.0
  %1228 = vmatprep.subr.mxu0 0.0
  %1229 = vmatpush2.msra.mxu0 0.0
  %1230 = vmatprep.mubr.f32.mxu0 0.0
  %1231 = vmatmul.mubr.f32.gmra.mxu0 %v1164
  %v1232 = vpop.f32.mrf.mxu0
  %v1233 = vadd.f32 0.0, %v1232
  %v1234 = vpop.f32.mrf.mxu0
  %1235 = vdwg.mxu0
  %1236 = vrot.lane.b32.xlu0 %v200, 64
  %v1237 = vpop.permute.xlu0 %1236
  %v1240 = vsel %vm242, %v1003, 0
  %1242 = vmatprep.subr.mxu0 0.0
  %1243 = vmatpush1.msra.mxu0 0.0
  %1244 = vmatprep.subr.mxu0 0.0
  %1245 = vmatpush1.msra.mxu0 0.0
  %1246 = vmatprep.subr.mxu0 0.0
  %1247 = vmatpush1.msra.mxu0 0.0
  %1248 = vmatprep.subr.mxu0 0.0
  %1249 = vmatpush1.msra.mxu0 0.0
  %1250 = vmatprep.subr.mxu0 0.0
  %1251 = vmatpush1.msra.mxu0 0.0
  %1252 = vmatprep.subr.mxu0 0.0
  %1253 = vmatpush1.msra.mxu0 0.0
  %1254 = vmatprep.subr.mxu0 0.0
  %1255 = vmatpush1.msra.mxu0 0.0
  %1256 = vmatprep.subr.mxu0 0.0
  %1257 = vmatpush1.msra.mxu0 0.0
  %1258 = vmatprep.subr.mxu0 0.0
  %1259 = vmatpush1.msra.mxu0 0.0
  %1260 = vmatprep.subr.mxu0 0.0
  %1261 = vmatpush1.msra.mxu0 0.0
  %1262 = vmatprep.subr.mxu0 0.0
  %1263 = vmatpush1.msra.mxu0 0.0
  %1264 = vmatprep.subr.mxu0 0.0
  %1265 = vmatpush1.msra.mxu0 0.0
  %1266 = vmatprep.subr.mxu0 0.0
  %1267 = vmatpush1.msra.mxu0 0.0
  %1268 = vmatprep.subr.mxu0 0.0
  %1269 = vmatpush1.msra.mxu0 0.0
  %1270 = vmatprep.subr.mxu0 0.0
  %1271 = vmatpush1.msra.mxu0 0.0
  %1272 = vmatprep.subr.mxu0 0.0
  %1273 = vmatpush1.msra.mxu0 %v1237
  %1274 = vmatprep.subr.mxu0 0.0
  %1275 = vmatpush2.msra.mxu0 0.0
  %1276 = vmatprep.subr.mxu0 0.0
  %1277 = vmatpush2.msra.mxu0 0.0
  %1278 = vmatprep.subr.mxu0 0.0
  %1279 = vmatpush2.msra.mxu0 0.0
  %1280 = vmatprep.subr.mxu0 0.0
  %1281 = vmatpush2.msra.mxu0 0.0
  %1282 = vmatprep.subr.mxu0 0.0
  %1283 = vmatpush2.msra.mxu0 0.0
  %1284 = vmatprep.subr.mxu0 0.0
  %1285 = vmatpush2.msra.mxu0 0.0
  %1286 = vmatprep.subr.mxu0 0.0
  %1287 = vmatpush2.msra.mxu0 0.0
  %1288 = vmatprep.subr.mxu0 0.0
  %1289 = vmatpush2.msra.mxu0 0.0
  %1290 = vmatprep.subr.mxu0 0.0
  %1291 = vmatpush2.msra.mxu0 0.0
  %1292 = vmatprep.subr.mxu0 0.0
  %1293 = vmatpush2.msra.mxu0 0.0
  %1294 = vmatprep.subr.mxu0 0.0
  %1295 = vmatpush2.msra.mxu0 0.0
  %1296 = vmatprep.subr.mxu0 0.0
  %1297 = vmatpush2.msra.mxu0 0.0
  %1298 = vmatprep.subr.mxu0 0.0
  %1299 = vmatpush2.msra.mxu0 0.0
  %1300 = vmatprep.subr.mxu0 0.0
  %1301 = vmatpush2.msra.mxu0 0.0
  %1302 = vmatprep.subr.mxu0 0.0
  %1303 = vmatpush2.msra.mxu0 0.0
  %1304 = vmatprep.subr.mxu0 0.0
  %1305 = vmatpush2.msra.mxu0 0.0
  %1306 = vmatprep.mubr.f32.mxu0 0.0
  %1307 = vmatmul.mubr.f32.gmra.mxu0 %v1240
  %v1308 = vpop.f32.mrf.mxu0
  %v1309 = vadd.f32 0.0, %v1308
  %v1310 = vpop.f32.mrf.mxu0
  %1311 = vdwg.mxu0
  %1312 = vrot.lane.b32.xlu0 %v205, 64
  %v1313 = vpop.permute.xlu0 %1312
  %v1316 = vsel %vm242, %v1004, 0
  %1318 = vmatprep.subr.mxu0 0.0
  %1319 = vmatpush1.msra.mxu0 0.0
  %1320 = vmatprep.subr.mxu0 0.0
  %1321 = vmatpush1.msra.mxu0 0.0
  %1322 = vmatprep.subr.mxu0 0.0
  %1323 = vmatpush1.msra.mxu0 0.0
  %1324 = vmatprep.subr.mxu0 0.0
  %1325 = vmatpush1.msra.mxu0 0.0
  %1326 = vmatprep.subr.mxu0 0.0
  %1327 = vmatpush1.msra.mxu0 0.0
  %1328 = vmatprep.subr.mxu0 0.0
  %1329 = vmatpush1.msra.mxu0 0.0
  %1330 = vmatprep.subr.mxu0 0.0
  %1331 = vmatpush1.msra.mxu0 0.0
  %1332 = vmatprep.subr.mxu0 0.0
  %1333 = vmatpush1.msra.mxu0 0.0
  %1334 = vmatprep.subr.mxu0 0.0
  %1335 = vmatpush1.msra.mxu0 0.0
  %1336 = vmatprep.subr.mxu0 0.0
  %1337 = vmatpush1.msra.mxu0 0.0
  %1338 = vmatprep.subr.mxu0 0.0
  %1339 = vmatpush1.msra.mxu0 0.0
  %1340 = vmatprep.subr.mxu0 0.0
  %1341 = vmatpush1.msra.mxu0 0.0
  %1342 = vmatprep.subr.mxu0 0.0
  %1343 = vmatpush1.msra.mxu0 0.0
  %1344 = vmatprep.subr.mxu0 0.0
  %1345 = vmatpush1.msra.mxu0 0.0
  %1346 = vmatprep.subr.mxu0 0.0
  %1347 = vmatpush1.msra.mxu0 0.0
  %1348 = vmatprep.subr.mxu0 0.0
  %1349 = vmatpush1.msra.mxu0 %v1313
  %1350 = vmatprep.subr.mxu0 0.0
  %1351 = vmatpush2.msra.mxu0 0.0
  %1352 = vmatprep.subr.mxu0 0.0
  %1353 = vmatpush2.msra.mxu0 0.0
  %1354 = vmatprep.subr.mxu0 0.0
  %1355 = vmatpush2.msra.mxu0 0.0
  %1356 = vmatprep.subr.mxu0 0.0
  %1357 = vmatpush2.msra.mxu0 0.0
  %1358 = vmatprep.subr.mxu0 0.0
  %1359 = vmatpush2.msra.mxu0 0.0
  %1360 = vmatprep.subr.mxu0 0.0
  %1361 = vmatpush2.msra.mxu0 0.0
  %1362 = vmatprep.subr.mxu0 0.0
  %1363 = vmatpush2.msra.mxu0 0.0
  %1364 = vmatprep.subr.mxu0 0.0
  %1365 = vmatpush2.msra.mxu0 0.0
  %1366 = vmatprep.subr.mxu0 0.0
  %1367 = vmatpush2.msra.mxu0 0.0
  %1368 = vmatprep.subr.mxu0 0.0
  %1369 = vmatpush2.msra.mxu0 0.0
  %1370 = vmatprep.subr.mxu0 0.0
  %1371 = vmatpush2.msra.mxu0 0.0
  %1372 = vmatprep.subr.mxu0 0.0
  %1373 = vmatpush2.msra.mxu0 0.0
  %1374 = vmatprep.subr.mxu0 0.0
  %1375 = vmatpush2.msra.mxu0 0.0
  %1376 = vmatprep.subr.mxu0 0.0
  %1377 = vmatpush2.msra.mxu0 0.0
  %1378 = vmatprep.subr.mxu0 0.0
  %1379 = vmatpush2.msra.mxu0 0.0
  %1380 = vmatprep.subr.mxu0 0.0
  %1381 = vmatpush2.msra.mxu0 0.0
  %1382 = vmatprep.mubr.f32.mxu0 0.0
  %1383 = vmatmul.mubr.f32.gmra.mxu0 %v1316
  %v1384 = vpop.f32.mrf.mxu0
  %v1385 = vadd.f32 0.0, %v1384
  %v1386 = vpop.f32.mrf.mxu0
  %1387 = vdwg.mxu0
  %1388 = vrot.lane.b32.xlu0 %v210, 64
  %v1389 = vpop.permute.xlu0 %1388
  %v1392 = vsel %vm242, %v1005, 0
  %1394 = vmatprep.subr.mxu0 0.0
  %1395 = vmatpush1.msra.mxu0 0.0
  %1396 = vmatprep.subr.mxu0 0.0
  %1397 = vmatpush1.msra.mxu0 0.0
  %1398 = vmatprep.subr.mxu0 0.0
  %1399 = vmatpush1.msra.mxu0 0.0
  %1400 = vmatprep.subr.mxu0 0.0
  %1401 = vmatpush1.msra.mxu0 0.0
  %1402 = vmatprep.subr.mxu0 0.0
  %1403 = vmatpush1.msra.mxu0 0.0
  %1404 = vmatprep.subr.mxu0 0.0
  %1405 = vmatpush1.msra.mxu0 0.0
  %1406 = vmatprep.subr.mxu0 0.0
  %1407 = vmatpush1.msra.mxu0 0.0
  %1408 = vmatprep.subr.mxu0 0.0
  %1409 = vmatpush1.msra.mxu0 0.0
  %1410 = vmatprep.subr.mxu0 0.0
  %1411 = vmatpush1.msra.mxu0 0.0
  %1412 = vmatprep.subr.mxu0 0.0
  %1413 = vmatpush1.msra.mxu0 0.0
  %1414 = vmatprep.subr.mxu0 0.0
  %1415 = vmatpush1.msra.mxu0 0.0
  %1416 = vmatprep.subr.mxu0 0.0
  %1417 = vmatpush1.msra.mxu0 0.0
  %1418 = vmatprep.subr.mxu0 0.0
  %1419 = vmatpush1.msra.mxu0 0.0
  %1420 = vmatprep.subr.mxu0 0.0
  %1421 = vmatpush1.msra.mxu0 0.0
  %1422 = vmatprep.subr.mxu0 0.0
  %1423 = vmatpush1.msra.mxu0 0.0
  %1424 = vmatprep.subr.mxu0 0.0
  %1425 = vmatpush1.msra.mxu0 %v1389
  %1426 = vmatprep.subr.mxu0 0.0
  %1427 = vmatpush2.msra.mxu0 0.0
  %1428 = vmatprep.subr.mxu0 0.0
  %1429 = vmatpush2.msra.mxu0 0.0
  %1430 = vmatprep.subr.mxu0 0.0
  %1431 = vmatpush2.msra.mxu0 0.0
  %1432 = vmatprep.subr.mxu0 0.0
  %1433 = vmatpush2.msra.mxu0 0.0
  %1434 = vmatprep.subr.mxu0 0.0
  %1435 = vmatpush2.msra.mxu0 0.0
  %1436 = vmatprep.subr.mxu0 0.0
  %1437 = vmatpush2.msra.mxu0 0.0
  %1438 = vmatprep.subr.mxu0 0.0
  %1439 = vmatpush2.msra.mxu0 0.0
  %1440 = vmatprep.subr.mxu0 0.0
  %1441 = vmatpush2.msra.mxu0 0.0
  %1442 = vmatprep.subr.mxu0 0.0
  %1443 = vmatpush2.msra.mxu0 0.0
  %1444 = vmatprep.subr.mxu0 0.0
  %1445 = vmatpush2.msra.mxu0 0.0
  %1446 = vmatprep.subr.mxu0 0.0
  %1447 = vmatpush2.msra.mxu0 0.0
  %1448 = vmatprep.subr.mxu0 0.0
  %1449 = vmatpush2.msra.mxu0 0.0
  %1450 = vmatprep.subr.mxu0 0.0
  %1451 = vmatpush2.msra.mxu0 0.0
  %1452 = vmatprep.subr.mxu0 0.0
  %1453 = vmatpush2.msra.mxu0 0.0
  %1454 = vmatprep.subr.mxu0 0.0
  %1455 = vmatpush2.msra.mxu0 0.0
  %1456 = vmatprep.subr.mxu0 0.0
  %1457 = vmatpush2.msra.mxu0 0.0
  %1458 = vmatprep.mubr.f32.mxu0 0.0
  %1459 = vmatmul.mubr.f32.gmra.mxu0 %v1392
  %v1460 = vpop.f32.mrf.mxu0
  %v1461 = vadd.f32 0.0, %v1460
  %v1462 = vpop.f32.mrf.mxu0
  %1463 = vdwg.mxu0
  %1464 = vrot.lane.b32.xlu0 %v215, 64
  %v1465 = vpop.permute.xlu0 %1464
  %v1468 = vsel %vm242, %v1006, 0
  %1470 = vmatprep.subr.mxu0 0.0
  %1471 = vmatpush1.msra.mxu0 0.0
  %1472 = vmatprep.subr.mxu0 0.0
  %1473 = vmatpush1.msra.mxu0 0.0
  %1474 = vmatprep.subr.mxu0 0.0
  %1475 = vmatpush1.msra.mxu0 0.0
  %1476 = vmatprep.subr.mxu0 0.0
  %1477 = vmatpush1.msra.mxu0 0.0
  %1478 = vmatprep.subr.mxu0 0.0
  %1479 = vmatpush1.msra.mxu0 0.0
  %1480 = vmatprep.subr.mxu0 0.0
  %1481 = vmatpush1.msra.mxu0 0.0
  %1482 = vmatprep.subr.mxu0 0.0
  %1483 = vmatpush1.msra.mxu0 0.0
  %1484 = vmatprep.subr.mxu0 0.0
  %1485 = vmatpush1.msra.mxu0 0.0
  %1486 = vmatprep.subr.mxu0 0.0
  %1487 = vmatpush1.msra.mxu0 0.0
  %1488 = vmatprep.subr.mxu0 0.0
  %1489 = vmatpush1.msra.mxu0 0.0
  %1490 = vmatprep.subr.mxu0 0.0
  %1491 = vmatpush1.msra.mxu0 0.0
  %1492 = vmatprep.subr.mxu0 0.0
  %1493 = vmatpush1.msra.mxu0 0.0
  %1494 = vmatprep.subr.mxu0 0.0
  %1495 = vmatpush1.msra.mxu0 0.0
  %1496 = vmatprep.subr.mxu0 0.0
  %1497 = vmatpush1.msra.mxu0 0.0
  %1498 = vmatprep.subr.mxu0 0.0
  %1499 = vmatpush1.msra.mxu0 0.0
  %1500 = vmatprep.subr.mxu0 0.0
  %1501 = vmatpush1.msra.mxu0 %v1465
  %1502 = vmatprep.subr.mxu0 0.0
  %1503 = vmatpush2.msra.mxu0 0.0
  %1504 = vmatprep.subr.mxu0 0.0
  %1505 = vmatpush2.msra.mxu0 0.0
  %1506 = vmatprep.subr.mxu0 0.0
  %1507 = vmatpush2.msra.mxu0 0.0
  %1508 = vmatprep.subr.mxu0 0.0
  %1509 = vmatpush2.msra.mxu0 0.0
  %1510 = vmatprep.subr.mxu0 0.0
  %1511 = vmatpush2.msra.mxu0 0.0
  %1512 = vmatprep.subr.mxu0 0.0
  %1513 = vmatpush2.msra.mxu0 0.0
  %1514 = vmatprep.subr.mxu0 0.0
  %1515 = vmatpush2.msra.mxu0 0.0
  %1516 = vmatprep.subr.mxu0 0.0
  %1517 = vmatpush2.msra.mxu0 0.0
  %1518 = vmatprep.subr.mxu0 0.0
  %1519 = vmatpush2.msra.mxu0 0.0
  %1520 = vmatprep.subr.mxu0 0.0
  %1521 = vmatpush2.msra.mxu0 0.0
  %1522 = vmatprep.subr.mxu0 0.0
  %1523 = vmatpush2.msra.mxu0 0.0
  %1524 = vmatprep.subr.mxu0 0.0
  %1525 = vmatpush2.msra.mxu0 0.0
  %1526 = vmatprep.subr.mxu0 0.0
  %1527 = vmatpush2.msra.mxu0 0.0
  %1528 = vmatprep.subr.mxu0 0.0
  %1529 = vmatpush2.msra.mxu0 0.0
  %1530 = vmatprep.subr.mxu0 0.0
  %1531 = vmatpush2.msra.mxu0 0.0
  %1532 = vmatprep.subr.mxu0 0.0
  %1533 = vmatpush2.msra.mxu0 0.0
  %1534 = vmatprep.mubr.f32.mxu0 0.0
  %1535 = vmatmul.mubr.f32.gmra.mxu0 %v1468
  %v1536 = vpop.f32.mrf.mxu0
  %v1537 = vadd.f32 0.0, %v1536
  %v1538 = vpop.f32.mrf.mxu0
  %1539 = vdwg.mxu0
  %1540 = vrot.lane.b32.xlu0 %v220, 64
  %v1541 = vpop.permute.xlu0 %1540
  %v1544 = vsel %vm242, %v1007, 0
  %1546 = vmatprep.subr.mxu0 0.0
  %1547 = vmatpush1.msra.mxu0 0.0
  %1548 = vmatprep.subr.mxu0 0.0
  %1549 = vmatpush1.msra.mxu0 0.0
  %1550 = vmatprep.subr.mxu0 0.0
  %1551 = vmatpush1.msra.mxu0 0.0
  %1552 = vmatprep.subr.mxu0 0.0
  %1553 = vmatpush1.msra.mxu0 0.0
  %1554 = vmatprep.subr.mxu0 0.0
  %1555 = vmatpush1.msra.mxu0 0.0
  %1556 = vmatprep.subr.mxu0 0.0
  %1557 = vmatpush1.msra.mxu0 0.0
  %1558 = vmatprep.subr.mxu0 0.0
  %1559 = vmatpush1.msra.mxu0 0.0
  %1560 = vmatprep.subr.mxu0 0.0
  %1561 = vmatpush1.msra.mxu0 0.0
  %1562 = vmatprep.subr.mxu0 0.0
  %1563 = vmatpush1.msra.mxu0 0.0
  %1564 = vmatprep.subr.mxu0 0.0
  %1565 = vmatpush1.msra.mxu0 0.0
  %1566 = vmatprep.subr.mxu0 0.0
  %1567 = vmatpush1.msra.mxu0 0.0
  %1568 = vmatprep.subr.mxu0 0.0
  %1569 = vmatpush1.msra.mxu0 0.0
  %1570 = vmatprep.subr.mxu0 0.0
  %1571 = vmatpush1.msra.mxu0 0.0
  %1572 = vmatprep.subr.mxu0 0.0
  %1573 = vmatpush1.msra.mxu0 0.0
  %1574 = vmatprep.subr.mxu0 0.0
  %1575 = vmatpush1.msra.mxu0 0.0
  %1576 = vmatprep.subr.mxu0 0.0
  %1577 = vmatpush1.msra.mxu0 %v1541
  %1578 = vmatprep.subr.mxu0 0.0
  %1579 = vmatpush2.msra.mxu0 0.0
  %1580 = vmatprep.subr.mxu0 0.0
  %1581 = vmatpush2.msra.mxu0 0.0
  %1582 = vmatprep.subr.mxu0 0.0
  %1583 = vmatpush2.msra.mxu0 0.0
  %1584 = vmatprep.subr.mxu0 0.0
  %1585 = vmatpush2.msra.mxu0 0.0
  %1586 = vmatprep.subr.mxu0 0.0
  %1587 = vmatpush2.msra.mxu0 0.0
  %1588 = vmatprep.subr.mxu0 0.0
  %1589 = vmatpush2.msra.mxu0 0.0
  %1590 = vmatprep.subr.mxu0 0.0
  %1591 = vmatpush2.msra.mxu0 0.0
  %1592 = vmatprep.subr.mxu0 0.0
  %1593 = vmatpush2.msra.mxu0 0.0
  %1594 = vmatprep.subr.mxu0 0.0
  %1595 = vmatpush2.msra.mxu0 0.0
  %1596 = vmatprep.subr.mxu0 0.0
  %1597 = vmatpush2.msra.mxu0 0.0
  %1598 = vmatprep.subr.mxu0 0.0
  %1599 = vmatpush2.msra.mxu0 0.0
  %1600 = vmatprep.subr.mxu0 0.0
  %1601 = vmatpush2.msra.mxu0 0.0
  %1602 = vmatprep.subr.mxu0 0.0
  %1603 = vmatpush2.msra.mxu0 0.0
  %1604 = vmatprep.subr.mxu0 0.0
  %1605 = vmatpush2.msra.mxu0 0.0
  %1606 = vmatprep.subr.mxu0 0.0
  %1607 = vmatpush2.msra.mxu0 0.0
  %1608 = vmatprep.subr.mxu0 0.0
  %1609 = vmatpush2.msra.mxu0 0.0
  %1610 = vmatprep.mubr.f32.mxu0 0.0
  %1611 = vmatmul.mubr.f32.gmra.mxu0 %v1544
  %v1612 = vpop.f32.mrf.mxu0
  %v1613 = vadd.f32 0.0, %v1612
  %v1614 = vpop.f32.mrf.mxu0
  %1615 = vdwg.mxu0
  %v1616 = vld [vmem:[%s5] sm:$0xff]
  %1617 = vrot.lane.b32.xlu0 %v185, 120
  %v1618 = vpop.permute.xlu0 %1617
  %1619 = vrot.lane.b32.xlu0 %v185, 88
  %v1620 = vpop.permute.xlu0 %1619
  %v1621 = vsel %vm242, %v1618, 0
  %v1623 = vsel %vm242, %v1620, 0
  %1625 = vmatprep.subr.mxu0 0.0
  %1626 = vmatpush1.xpose.msra.mxu0 0.0
  %1627 = vmatprep.subr.mxu0 0.0
  %1628 = vmatpush1.xpose.msra.mxu0 0.0
  %1629 = vmatprep.subr.mxu0 0.0
  %1630 = vmatpush1.xpose.msra.mxu0 0.0
  %1631 = vmatprep.subr.mxu0 0.0
  %1632 = vmatpush1.xpose.msra.mxu0 0.0
  %1633 = vmatprep.subr.mxu0 0.0
  %1634 = vmatpush1.xpose.msra.mxu0 0.0
  %1635 = vmatprep.subr.mxu0 0.0
  %1636 = vmatpush1.xpose.msra.mxu0 0.0
  %1637 = vmatprep.subr.mxu0 0.0
  %1638 = vmatpush1.xpose.msra.mxu0 0.0
  %1639 = vmatprep.subr.mxu0 0.0
  %1640 = vmatpush1.xpose.msra.mxu0 0.0
  %1641 = vmatprep.subr.mxu0 0.0
  %1642 = vmatpush1.xpose.msra.mxu0 0.0
  %1643 = vmatprep.subr.mxu0 0.0
  %1644 = vmatpush1.xpose.msra.mxu0 0.0
  %1645 = vmatprep.subr.mxu0 0.0
  %1646 = vmatpush1.xpose.msra.mxu0 0.0
  %1647 = vmatprep.subr.mxu0 0.0
  %1648 = vmatpush1.xpose.msra.mxu0 0.0
  %1649 = vmatprep.subr.mxu0 0.0
  %1650 = vmatpush1.xpose.msra.mxu0 0.0
  %1651 = vmatprep.subr.mxu0 0.0
  %1652 = vmatpush1.xpose.msra.mxu0 0.0
  %1653 = vmatprep.subr.mxu0 0.0
  %1654 = vmatpush1.xpose.msra.mxu0 0.0
  %1655 = vmatprep.subr.mxu0 0.0
  %1656 = vmatpush1.xpose.msra.mxu0 %v1623
  %1657 = vmatprep.subr.mxu0 0.0
  %1658 = vmatpush2.xpose.msra.mxu0 0.0
  %1659 = vmatprep.subr.mxu0 0.0
  %1660 = vmatpush2.xpose.msra.mxu0 0.0
  %1661 = vmatprep.subr.mxu0 0.0
  %1662 = vmatpush2.xpose.msra.mxu0 0.0
  %1663 = vmatprep.subr.mxu0 0.0
  %1664 = vmatpush2.xpose.msra.mxu0 0.0
  %1665 = vmatprep.subr.mxu0 0.0
  %1666 = vmatpush2.xpose.msra.mxu0 0.0
  %1667 = vmatprep.subr.mxu0 0.0
  %1668 = vmatpush2.xpose.msra.mxu0 0.0
  %1669 = vmatprep.subr.mxu0 0.0
  %1670 = vmatpush2.xpose.msra.mxu0 0.0
  %1671 = vmatprep.subr.mxu0 0.0
  %1672 = vmatpush2.xpose.msra.mxu0 0.0
  %1673 = vmatprep.subr.mxu0 0.0
  %1674 = vmatpush2.xpose.msra.mxu0 0.0
  %1675 = vmatprep.subr.mxu0 0.0
  %1676 = vmatpush2.xpose.msra.mxu0 0.0
  %1677 = vmatprep.subr.mxu0 0.0
  %1678 = vmatpush2.xpose.msra.mxu0 0.0
  %1679 = vmatprep.subr.mxu0 0.0
  %1680 = vmatpush2.xpose.msra.mxu0 0.0
  %1681 = vmatprep.subr.mxu0 0.0
  %1682 = vmatpush2.xpose.msra.mxu0 0.0
  %1683 = vmatprep.subr.mxu0 0.0
  %1684 = vmatpush2.xpose.msra.mxu0 0.0
  %1685 = vmatprep.subr.mxu0 0.0
  %1686 = vmatpush2.xpose.msra.mxu0 0.0
  %1687 = vmatprep.subr.mxu0 0.0
  %1688 = vmatpush2.xpose.msra.mxu0 0.0
  %1689 = vmatprep.mubr.f32.mxu0 0.0
  %1690 = vmatmul.mubr.f32.gmra.mxu0 %v1621
  %v1691 = vpop.f32.mrf.mxu0
  %v1692 = vadd.f32 0.0, %v1691
  %v1693 = vpop.f32.mrf.mxu0
  %1694 = vdwg.mxu0
  %1695 = vrot.lane.b32.xlu0 %v190, 120
  %v1696 = vpop.permute.xlu0 %1695
  %1697 = vrot.lane.b32.xlu0 %v190, 88
  %v1698 = vpop.permute.xlu0 %1697
  %v1699 = vsel %vm242, %v1696, 0
  %v1701 = vsel %vm242, %v1698, 0
  %1703 = vmatprep.subr.mxu0 0.0
  %1704 = vmatpush1.xpose.msra.mxu0 0.0
  %1705 = vmatprep.subr.mxu0 0.0
  %1706 = vmatpush1.xpose.msra.mxu0 0.0
  %1707 = vmatprep.subr.mxu0 0.0
  %1708 = vmatpush1.xpose.msra.mxu0 0.0
  %1709 = vmatprep.subr.mxu0 0.0
  %1710 = vmatpush1.xpose.msra.mxu0 0.0
  %1711 = vmatprep.subr.mxu0 0.0
  %1712 = vmatpush1.xpose.msra.mxu0 0.0
  %1713 = vmatprep.subr.mxu0 0.0
  %1714 = vmatpush1.xpose.msra.mxu0 0.0
  %1715 = vmatprep.subr.mxu0 0.0
  %1716 = vmatpush1.xpose.msra.mxu0 0.0
  %1717 = vmatprep.subr.mxu0 0.0
  %1718 = vmatpush1.xpose.msra.mxu0 0.0
  %1719 = vmatprep.subr.mxu0 0.0
  %1720 = vmatpush1.xpose.msra.mxu0 0.0
  %1721 = vmatprep.subr.mxu0 0.0
  %1722 = vmatpush1.xpose.msra.mxu0 0.0
  %1723 = vmatprep.subr.mxu0 0.0
  %1724 = vmatpush1.xpose.msra.mxu0 0.0
  %1725 = vmatprep.subr.mxu0 0.0
  %1726 = vmatpush1.xpose.msra.mxu0 0.0
  %1727 = vmatprep.subr.mxu0 0.0
  %1728 = vmatpush1.xpose.msra.mxu0 0.0
  %1729 = vmatprep.subr.mxu0 0.0
  %1730 = vmatpush1.xpose.msra.mxu0 0.0
  %1731 = vmatprep.subr.mxu0 0.0
  %1732 = vmatpush1.xpose.msra.mxu0 0.0
  %1733 = vmatprep.subr.mxu0 0.0
  %1734 = vmatpush1.xpose.msra.mxu0 %v1701
  %1735 = vmatprep.subr.mxu0 0.0
  %1736 = vmatpush2.xpose.msra.mxu0 0.0
  %1737 = vmatprep.subr.mxu0 0.0
  %1738 = vmatpush2.xpose.msra.mxu0 0.0
  %1739 = vmatprep.subr.mxu0 0.0
  %1740 = vmatpush2.xpose.msra.mxu0 0.0
  %1741 = vmatprep.subr.mxu0 0.0
  %1742 = vmatpush2.xpose.msra.mxu0 0.0
  %1743 = vmatprep.subr.mxu0 0.0
  %1744 = vmatpush2.xpose.msra.mxu0 0.0
  %1745 = vmatprep.subr.mxu0 0.0
  %1746 = vmatpush2.xpose.msra.mxu0 0.0
  %1747 = vmatprep.subr.mxu0 0.0
  %1748 = vmatpush2.xpose.msra.mxu0 0.0
  %1749 = vmatprep.subr.mxu0 0.0
  %1750 = vmatpush2.xpose.msra.mxu0 0.0
  %1751 = vmatprep.subr.mxu0 0.0
  %1752 = vmatpush2.xpose.msra.mxu0 0.0
  %1753 = vmatprep.subr.mxu0 0.0
  %1754 = vmatpush2.xpose.msra.mxu0 0.0
  %1755 = vmatprep.subr.mxu0 0.0
  %1756 = vmatpush2.xpose.msra.mxu0 0.0
  %1757 = vmatprep.subr.mxu0 0.0
  %1758 = vmatpush2.xpose.msra.mxu0 0.0
  %1759 = vmatprep.subr.mxu0 0.0
  %1760 = vmatpush2.xpose.msra.mxu0 0.0
  %1761 = vmatprep.subr.mxu0 0.0
  %1762 = vmatpush2.xpose.msra.mxu0 0.0
  %1763 = vmatprep.subr.mxu0 0.0
  %1764 = vmatpush2.xpose.msra.mxu0 0.0
  %1765 = vmatprep.subr.mxu0 0.0
  %1766 = vmatpush2.xpose.msra.mxu0 0.0
  %1767 = vmatprep.mubr.f32.mxu0 0.0
  %1768 = vmatmul.mubr.f32.gmra.mxu0 %v1699
  %v1769 = vpop.f32.mrf.mxu0
  %v1770 = vadd.f32 0.0, %v1769
  %v1771 = vpop.f32.mrf.mxu0
  %1772 = vdwg.mxu0
  %1773 = vrot.lane.b32.xlu0 %v195, 120
  %v1774 = vpop.permute.xlu0 %1773
  %1775 = vrot.lane.b32.xlu0 %v195, 88
  %v1776 = vpop.permute.xlu0 %1775
  %v1777 = vsel %vm242, %v1774, 0
  %v1779 = vsel %vm242, %v1776, 0
  %1781 = vmatprep.subr.mxu0 0.0
  %1782 = vmatpush1.xpose.msra.mxu0 0.0
  %1783 = vmatprep.subr.mxu0 0.0
  %1784 = vmatpush1.xpose.msra.mxu0 0.0
  %1785 = vmatprep.subr.mxu0 0.0
  %1786 = vmatpush1.xpose.msra.mxu0 0.0
  %1787 = vmatprep.subr.mxu0 0.0
  %1788 = vmatpush1.xpose.msra.mxu0 0.0
  %1789 = vmatprep.subr.mxu0 0.0
  %1790 = vmatpush1.xpose.msra.mxu0 0.0
  %1791 = vmatprep.subr.mxu0 0.0
  %1792 = vmatpush1.xpose.msra.mxu0 0.0
  %1793 = vmatprep.subr.mxu0 0.0
  %1794 = vmatpush1.xpose.msra.mxu0 0.0
  %1795 = vmatprep.subr.mxu0 0.0
  %1796 = vmatpush1.xpose.msra.mxu0 0.0
  %1797 = vmatprep.subr.mxu0 0.0
  %1798 = vmatpush1.xpose.msra.mxu0 0.0
  %1799 = vmatprep.subr.mxu0 0.0
  %1800 = vmatpush1.xpose.msra.mxu0 0.0
  %1801 = vmatprep.subr.mxu0 0.0
  %1802 = vmatpush1.xpose.msra.mxu0 0.0
  %1803 = vmatprep.subr.mxu0 0.0
  %1804 = vmatpush1.xpose.msra.mxu0 0.0
  %1805 = vmatprep.subr.mxu0 0.0
  %1806 = vmatpush1.xpose.msra.mxu0 0.0
  %1807 = vmatprep.subr.mxu0 0.0
  %1808 = vmatpush1.xpose.msra.mxu0 0.0
  %1809 = vmatprep.subr.mxu0 0.0
  %1810 = vmatpush1.xpose.msra.mxu0 0.0
  %1811 = vmatprep.subr.mxu0 0.0
  %1812 = vmatpush1.xpose.msra.mxu0 %v1779
  %1813 = vmatprep.subr.mxu0 0.0
  %1814 = vmatpush2.xpose.msra.mxu0 0.0
  %1815 = vmatprep.subr.mxu0 0.0
  %1816 = vmatpush2.xpose.msra.mxu0 0.0
  %1817 = vmatprep.subr.mxu0 0.0
  %1818 = vmatpush2.xpose.msra.mxu0 0.0
  %1819 = vmatprep.subr.mxu0 0.0
  %1820 = vmatpush2.xpose.msra.mxu0 0.0
  %1821 = vmatprep.subr.mxu0 0.0
  %1822 = vmatpush2.xpose.msra.mxu0 0.0
  %1823 = vmatprep.subr.mxu0 0.0
  %1824 = vmatpush2.xpose.msra.mxu0 0.0
  %1825 = vmatprep.subr.mxu0 0.0
  %1826 = vmatpush2.xpose.msra.mxu0 0.0
  %1827 = vmatprep.subr.mxu0 0.0
  %1828 = vmatpush2.xpose.msra.mxu0 0.0
  %1829 = vmatprep.subr.mxu0 0.0
  %1830 = vmatpush2.xpose.msra.mxu0 0.0
  %1831 = vmatprep.subr.mxu0 0.0
  %1832 = vmatpush2.xpose.msra.mxu0 0.0
  %1833 = vmatprep.subr.mxu0 0.0
  %1834 = vmatpush2.xpose.msra.mxu0 0.0
  %1835 = vmatprep.subr.mxu0 0.0
  %1836 = vmatpush2.xpose.msra.mxu0 0.0
  %1837 = vmatprep.subr.mxu0 0.0
  %1838 = vmatpush2.xpose.msra.mxu0 0.0
  %1839 = vmatprep.subr.mxu0 0.0
  %1840 = vmatpush2.xpose.msra.mxu0 0.0
  %1841 = vmatprep.subr.mxu0 0.0
  %1842 = vmatpush2.xpose.msra.mxu0 0.0
  %1843 = vmatprep.subr.mxu0 0.0
  %1844 = vmatpush2.xpose.msra.mxu0 0.0
  %1845 = vmatprep.mubr.f32.mxu0 0.0
  %1846 = vmatmul.mubr.f32.gmra.mxu0 %v1777
  %v1847 = vpop.f32.mrf.mxu0
  %v1848 = vadd.f32 0.0, %v1847
  %v1849 = vpop.f32.mrf.mxu0
  %1850 = vdwg.mxu0
  %1851 = vrot.lane.b32.xlu0 %v200, 120
  %v1852 = vpop.permute.xlu0 %1851
  %1853 = vrot.lane.b32.xlu0 %v200, 88
  %v1854 = vpop.permute.xlu0 %1853
  %v1855 = vsel %vm242, %v1852, 0
  %v1857 = vsel %vm242, %v1854, 0
  %1859 = vmatprep.subr.mxu0 0.0
  %1860 = vmatpush1.xpose.msra.mxu0 0.0
  %1861 = vmatprep.subr.mxu0 0.0
  %1862 = vmatpush1.xpose.msra.mxu0 0.0
  %1863 = vmatprep.subr.mxu0 0.0
  %1864 = vmatpush1.xpose.msra.mxu0 0.0
  %1865 = vmatprep.subr.mxu0 0.0
  %1866 = vmatpush1.xpose.msra.mxu0 0.0
  %1867 = vmatprep.subr.mxu0 0.0
  %1868 = vmatpush1.xpose.msra.mxu0 0.0
  %1869 = vmatprep.subr.mxu0 0.0
  %1870 = vmatpush1.xpose.msra.mxu0 0.0
  %1871 = vmatprep.subr.mxu0 0.0
  %1872 = vmatpush1.xpose.msra.mxu0 0.0
  %1873 = vmatprep.subr.mxu0 0.0
  %1874 = vmatpush1.xpose.msra.mxu0 0.0
  %1875 = vmatprep.subr.mxu0 0.0
  %1876 = vmatpush1.xpose.msra.mxu0 0.0
  %1877 = vmatprep.subr.mxu0 0.0
  %1878 = vmatpush1.xpose.msra.mxu0 0.0
  %1879 = vmatprep.subr.mxu0 0.0
  %1880 = vmatpush1.xpose.msra.mxu0 0.0
  %1881 = vmatprep.subr.mxu0 0.0
  %1882 = vmatpush1.xpose.msra.mxu0 0.0
  %1883 = vmatprep.subr.mxu0 0.0
  %1884 = vmatpush1.xpose.msra.mxu0 0.0
  %1885 = vmatprep.subr.mxu0 0.0
  %1886 = vmatpush1.xpose.msra.mxu0 0.0
  %1887 = vmatprep.subr.mxu0 0.0
  %1888 = vmatpush1.xpose.msra.mxu0 0.0
  %1889 = vmatprep.subr.mxu0 0.0
  %1890 = vmatpush1.xpose.msra.mxu0 %v1857
  %1891 = vmatprep.subr.mxu0 0.0
  %1892 = vmatpush2.xpose.msra.mxu0 0.0
  %1893 = vmatprep.subr.mxu0 0.0
  %1894 = vmatpush2.xpose.msra.mxu0 0.0
  %1895 = vmatprep.subr.mxu0 0.0
  %1896 = vmatpush2.xpose.msra.mxu0 0.0
  %1897 = vmatprep.subr.mxu0 0.0
  %1898 = vmatpush2.xpose.msra.mxu0 0.0
  %1899 = vmatprep.subr.mxu0 0.0
  %1900 = vmatpush2.xpose.msra.mxu0 0.0
  %1901 = vmatprep.subr.mxu0 0.0
  %1902 = vmatpush2.xpose.msra.mxu0 0.0
  %1903 = vmatprep.subr.mxu0 0.0
  %1904 = vmatpush2.xpose.msra.mxu0 0.0
  %1905 = vmatprep.subr.mxu0 0.0
  %1906 = vmatpush2.xpose.msra.mxu0 0.0
  %1907 = vmatprep.subr.mxu0 0.0
  %1908 = vmatpush2.xpose.msra.mxu0 0.0
  %1909 = vmatprep.subr.mxu0 0.0
  %1910 = vmatpush2.xpose.msra.mxu0 0.0
  %1911 = vmatprep.subr.mxu0 0.0
  %1912 = vmatpush2.xpose.msra.mxu0 0.0
  %1913 = vmatprep.subr.mxu0 0.0
  %1914 = vmatpush2.xpose.msra.mxu0 0.0
  %1915 = vmatprep.subr.mxu0 0.0
  %1916 = vmatpush2.xpose.msra.mxu0 0.0
  %1917 = vmatprep.subr.mxu0 0.0
  %1918 = vmatpush2.xpose.msra.mxu0 0.0
  %1919 = vmatprep.subr.mxu0 0.0
  %1920 = vmatpush2.xpose.msra.mxu0 0.0
  %1921 = vmatprep.subr.mxu0 0.0
  %1922 = vmatpush2.xpose.msra.mxu0 0.0
  %1923 = vmatprep.mubr.f32.mxu0 0.0
  %1924 = vmatmul.mubr.f32.gmra.mxu0 %v1855
  %v1925 = vpop.f32.mrf.mxu0
  %v1926 = vadd.f32 0.0, %v1925
  %v1927 = vpop.f32.mrf.mxu0
  %1928 = vdwg.mxu0
  %1929 = vrot.lane.b32.xlu0 %v205, 120
  %v1930 = vpop.permute.xlu0 %1929
  %1931 = vrot.lane.b32.xlu0 %v205, 88
  %v1932 = vpop.permute.xlu0 %1931
  %v1933 = vsel %vm242, %v1930, 0
  %v1935 = vsel %vm242, %v1932, 0
  %1937 = vmatprep.subr.mxu0 0.0
  %1938 = vmatpush1.xpose.msra.mxu0 0.0
  %1939 = vmatprep.subr.mxu0 0.0
  %1940 = vmatpush1.xpose.msra.mxu0 0.0
  %1941 = vmatprep.subr.mxu0 0.0
  %1942 = vmatpush1.xpose.msra.mxu0 0.0
  %1943 = vmatprep.subr.mxu0 0.0
  %1944 = vmatpush1.xpose.msra.mxu0 0.0
  %1945 = vmatprep.subr.mxu0 0.0
  %1946 = vmatpush1.xpose.msra.mxu0 0.0
  %1947 = vmatprep.subr.mxu0 0.0
  %1948 = vmatpush1.xpose.msra.mxu0 0.0
  %1949 = vmatprep.subr.mxu0 0.0
  %1950 = vmatpush1.xpose.msra.mxu0 0.0
  %1951 = vmatprep.subr.mxu0 0.0
  %1952 = vmatpush1.xpose.msra.mxu0 0.0
  %1953 = vmatprep.subr.mxu0 0.0
  %1954 = vmatpush1.xpose.msra.mxu0 0.0
  %1955 = vmatprep.subr.mxu0 0.0
  %1956 = vmatpush1.xpose.msra.mxu0 0.0
  %1957 = vmatprep.subr.mxu0 0.0
  %1958 = vmatpush1.xpose.msra.mxu0 0.0
  %1959 = vmatprep.subr.mxu0 0.0
  %1960 = vmatpush1.xpose.msra.mxu0 0.0
  %1961 = vmatprep.subr.mxu0 0.0
  %1962 = vmatpush1.xpose.msra.mxu0 0.0
  %1963 = vmatprep.subr.mxu0 0.0
  %1964 = vmatpush1.xpose.msra.mxu0 0.0
  %1965 = vmatprep.subr.mxu0 0.0
  %1966 = vmatpush1.xpose.msra.mxu0 0.0
  %1967 = vmatprep.subr.mxu0 0.0
  %1968 = vmatpush1.xpose.msra.mxu0 %v1935
  %1969 = vmatprep.subr.mxu0 0.0
  %1970 = vmatpush2.xpose.msra.mxu0 0.0
  %1971 = vmatprep.subr.mxu0 0.0
  %1972 = vmatpush2.xpose.msra.mxu0 0.0
  %1973 = vmatprep.subr.mxu0 0.0
  %1974 = vmatpush2.xpose.msra.mxu0 0.0
  %1975 = vmatprep.subr.mxu0 0.0
  %1976 = vmatpush2.xpose.msra.mxu0 0.0
  %1977 = vmatprep.subr.mxu0 0.0
  %1978 = vmatpush2.xpose.msra.mxu0 0.0
  %1979 = vmatprep.subr.mxu0 0.0
  %1980 = vmatpush2.xpose.msra.mxu0 0.0
  %1981 = vmatprep.subr.mxu0 0.0
  %1982 = vmatpush2.xpose.msra.mxu0 0.0
  %1983 = vmatprep.subr.mxu0 0.0
  %1984 = vmatpush2.xpose.msra.mxu0 0.0
  %1985 = vmatprep.subr.mxu0 0.0
  %1986 = vmatpush2.xpose.msra.mxu0 0.0
  %1987 = vmatprep.subr.mxu0 0.0
  %1988 = vmatpush2.xpose.msra.mxu0 0.0
  %1989 = vmatprep.subr.mxu0 0.0
  %1990 = vmatpush2.xpose.msra.mxu0 0.0
  %1991 = vmatprep.subr.mxu0 0.0
  %1992 = vmatpush2.xpose.msra.mxu0 0.0
  %1993 = vmatprep.subr.mxu0 0.0
  %1994 = vmatpush2.xpose.msra.mxu0 0.0
  %1995 = vmatprep.subr.mxu0 0.0
  %1996 = vmatpush2.xpose.msra.mxu0 0.0
  %1997 = vmatprep.subr.mxu0 0.0
  %1998 = vmatpush2.xpose.msra.mxu0 0.0
  %1999 = vmatprep.subr.mxu0 0.0
  %2000 = vmatpush2.xpose.msra.mxu0 0.0
  %2001 = vmatprep.mubr.f32.mxu0 0.0
  %2002 = vmatmul.mubr.f32.gmra.mxu0 %v1933
  %v2003 = vpop.f32.mrf.mxu0
  %v2004 = vadd.f32 0.0, %v2003
  %v2005 = vpop.f32.mrf.mxu0
  %2006 = vdwg.mxu0
  %2007 = vrot.lane.b32.xlu0 %v210, 120
  %v2008 = vpop.permute.xlu0 %2007
  %2009 = vrot.lane.b32.xlu0 %v210, 88
  %v2010 = vpop.permute.xlu0 %2009
  %v2011 = vsel %vm242, %v2008, 0
  %v2013 = vsel %vm242, %v2010, 0
  %2015 = vmatprep.subr.mxu0 0.0
  %2016 = vmatpush1.xpose.msra.mxu0 0.0
  %2017 = vmatprep.subr.mxu0 0.0
  %2018 = vmatpush1.xpose.msra.mxu0 0.0
  %2019 = vmatprep.subr.mxu0 0.0
  %2020 = vmatpush1.xpose.msra.mxu0 0.0
  %2021 = vmatprep.subr.mxu0 0.0
  %2022 = vmatpush1.xpose.msra.mxu0 0.0
  %2023 = vmatprep.subr.mxu0 0.0
  %2024 = vmatpush1.xpose.msra.mxu0 0.0
  %2025 = vmatprep.subr.mxu0 0.0
  %2026 = vmatpush1.xpose.msra.mxu0 0.0
  %2027 = vmatprep.subr.mxu0 0.0
  %2028 = vmatpush1.xpose.msra.mxu0 0.0
  %2029 = vmatprep.subr.mxu0 0.0
  %2030 = vmatpush1.xpose.msra.mxu0 0.0
  %2031 = vmatprep.subr.mxu0 0.0
  %2032 = vmatpush1.xpose.msra.mxu0 0.0
  %2033 = vmatprep.subr.mxu0 0.0
  %2034 = vmatpush1.xpose.msra.mxu0 0.0
  %2035 = vmatprep.subr.mxu0 0.0
  %2036 = vmatpush1.xpose.msra.mxu0 0.0
  %2037 = vmatprep.subr.mxu0 0.0
  %2038 = vmatpush1.xpose.msra.mxu0 0.0
  %2039 = vmatprep.subr.mxu0 0.0
  %2040 = vmatpush1.xpose.msra.mxu0 0.0
  %2041 = vmatprep.subr.mxu0 0.0
  %2042 = vmatpush1.xpose.msra.mxu0 0.0
  %2043 = vmatprep.subr.mxu0 0.0
  %2044 = vmatpush1.xpose.msra.mxu0 0.0
  %2045 = vmatprep.subr.mxu0 0.0
  %2046 = vmatpush1.xpose.msra.mxu0 %v2013
  %2047 = vmatprep.subr.mxu0 0.0
  %2048 = vmatpush2.xpose.msra.mxu0 0.0
  %2049 = vmatprep.subr.mxu0 0.0
  %2050 = vmatpush2.xpose.msra.mxu0 0.0
  %2051 = vmatprep.subr.mxu0 0.0
  %2052 = vmatpush2.xpose.msra.mxu0 0.0
  %2053 = vmatprep.subr.mxu0 0.0
  %2054 = vmatpush2.xpose.msra.mxu0 0.0
  %2055 = vmatprep.subr.mxu0 0.0
  %2056 = vmatpush2.xpose.msra.mxu0 0.0
  %2057 = vmatprep.subr.mxu0 0.0
  %2058 = vmatpush2.xpose.msra.mxu0 0.0
  %2059 = vmatprep.subr.mxu0 0.0
  %2060 = vmatpush2.xpose.msra.mxu0 0.0
  %2061 = vmatprep.subr.mxu0 0.0
  %2062 = vmatpush2.xpose.msra.mxu0 0.0
  %2063 = vmatprep.subr.mxu0 0.0
  %2064 = vmatpush2.xpose.msra.mxu0 0.0
  %2065 = vmatprep.subr.mxu0 0.0
  %2066 = vmatpush2.xpose.msra.mxu0 0.0
  %2067 = vmatprep.subr.mxu0 0.0
  %2068 = vmatpush2.xpose.msra.mxu0 0.0
  %2069 = vmatprep.subr.mxu0 0.0
  %2070 = vmatpush2.xpose.msra.mxu0 0.0
  %2071 = vmatprep.subr.mxu0 0.0
  %2072 = vmatpush2.xpose.msra.mxu0 0.0
  %2073 = vmatprep.subr.mxu0 0.0
  %2074 = vmatpush2.xpose.msra.mxu0 0.0
  %2075 = vmatprep.subr.mxu0 0.0
  %2076 = vmatpush2.xpose.msra.mxu0 0.0
  %2077 = vmatprep.subr.mxu0 0.0
  %2078 = vmatpush2.xpose.msra.mxu0 0.0
  %2079 = vmatprep.mubr.f32.mxu0 0.0
  %2080 = vmatmul.mubr.f32.gmra.mxu0 %v2011
  %v2081 = vpop.f32.mrf.mxu0
  %v2082 = vadd.f32 0.0, %v2081
  %v2083 = vpop.f32.mrf.mxu0
  %2084 = vdwg.mxu0
  %2085 = vrot.lane.b32.xlu0 %v215, 120
  %v2086 = vpop.permute.xlu0 %2085
  %2087 = vrot.lane.b32.xlu0 %v215, 88
  %v2088 = vpop.permute.xlu0 %2087
  %v2089 = vsel %vm242, %v2086, 0
  %v2091 = vsel %vm242, %v2088, 0
  %2093 = vmatprep.subr.mxu0 0.0
  %2094 = vmatpush1.xpose.msra.mxu0 0.0
  %2095 = vmatprep.subr.mxu0 0.0
  %2096 = vmatpush1.xpose.msra.mxu0 0.0
  %2097 = vmatprep.subr.mxu0 0.0
  %2098 = vmatpush1.xpose.msra.mxu0 0.0
  %2099 = vmatprep.subr.mxu0 0.0
  %2100 = vmatpush1.xpose.msra.mxu0 0.0
  %2101 = vmatprep.subr.mxu0 0.0
  %2102 = vmatpush1.xpose.msra.mxu0 0.0
  %2103 = vmatprep.subr.mxu0 0.0
  %2104 = vmatpush1.xpose.msra.mxu0 0.0
  %2105 = vmatprep.subr.mxu0 0.0
  %2106 = vmatpush1.xpose.msra.mxu0 0.0
  %2107 = vmatprep.subr.mxu0 0.0
  %2108 = vmatpush1.xpose.msra.mxu0 0.0
  %2109 = vmatprep.subr.mxu0 0.0
  %2110 = vmatpush1.xpose.msra.mxu0 0.0
  %2111 = vmatprep.subr.mxu0 0.0
  %2112 = vmatpush1.xpose.msra.mxu0 0.0
  %2113 = vmatprep.subr.mxu0 0.0
  %2114 = vmatpush1.xpose.msra.mxu0 0.0
  %2115 = vmatprep.subr.mxu0 0.0
  %2116 = vmatpush1.xpose.msra.mxu0 0.0
  %2117 = vmatprep.subr.mxu0 0.0
  %2118 = vmatpush1.xpose.msra.mxu0 0.0
  %2119 = vmatprep.subr.mxu0 0.0
  %2120 = vmatpush1.xpose.msra.mxu0 0.0
  %2121 = vmatprep.subr.mxu0 0.0
  %2122 = vmatpush1.xpose.msra.mxu0 0.0
  %2123 = vmatprep.subr.mxu0 0.0
  %2124 = vmatpush1.xpose.msra.mxu0 %v2091
  %2125 = vmatprep.subr.mxu0 0.0
  %2126 = vmatpush2.xpose.msra.mxu0 0.0
  %2127 = vmatprep.subr.mxu0 0.0
  %2128 = vmatpush2.xpose.msra.mxu0 0.0
  %2129 = vmatprep.subr.mxu0 0.0
  %2130 = vmatpush2.xpose.msra.mxu0 0.0
  %2131 = vmatprep.subr.mxu0 0.0
  %2132 = vmatpush2.xpose.msra.mxu0 0.0
  %2133 = vmatprep.subr.mxu0 0.0
  %2134 = vmatpush2.xpose.msra.mxu0 0.0
  %2135 = vmatprep.subr.mxu0 0.0
  %2136 = vmatpush2.xpose.msra.mxu0 0.0
  %2137 = vmatprep.subr.mxu0 0.0
  %2138 = vmatpush2.xpose.msra.mxu0 0.0
  %2139 = vmatprep.subr.mxu0 0.0
  %2140 = vmatpush2.xpose.msra.mxu0 0.0
  %2141 = vmatprep.subr.mxu0 0.0
  %2142 = vmatpush2.xpose.msra.mxu0 0.0
  %2143 = vmatprep.subr.mxu0 0.0
  %2144 = vmatpush2.xpose.msra.mxu0 0.0
  %2145 = vmatprep.subr.mxu0 0.0
  %2146 = vmatpush2.xpose.msra.mxu0 0.0
  %2147 = vmatprep.subr.mxu0 0.0
  %2148 = vmatpush2.xpose.msra.mxu0 0.0
  %2149 = vmatprep.subr.mxu0 0.0
  %2150 = vmatpush2.xpose.msra.mxu0 0.0
  %2151 = vmatprep.subr.mxu0 0.0
  %2152 = vmatpush2.xpose.msra.mxu0 0.0
  %2153 = vmatprep.subr.mxu0 0.0
  %2154 = vmatpush2.xpose.msra.mxu0 0.0
  %2155 = vmatprep.subr.mxu0 0.0
  %2156 = vmatpush2.xpose.msra.mxu0 0.0
  %2157 = vmatprep.mubr.f32.mxu0 0.0
  %2158 = vmatmul.mubr.f32.gmra.mxu0 %v2089
  %v2159 = vpop.f32.mrf.mxu0
  %v2160 = vadd.f32 0.0, %v2159
  %v2161 = vpop.f32.mrf.mxu0
  %2162 = vdwg.mxu0
  %2163 = vrot.lane.b32.xlu0 %v220, 120
  %v2164 = vpop.permute.xlu0 %2163
  %2165 = vrot.lane.b32.xlu0 %v220, 88
  %v2166 = vpop.permute.xlu0 %2165
  %v2167 = vsel %vm242, %v2164, 0
  %v2169 = vsel %vm242, %v2166, 0
  %2171 = vmatprep.subr.mxu0 0.0
  %2172 = vmatpush1.xpose.msra.mxu0 0.0
  %2173 = vmatprep.subr.mxu0 0.0
  %2174 = vmatpush1.xpose.msra.mxu0 0.0
  %2175 = vmatprep.subr.mxu0 0.0
  %2176 = vmatpush1.xpose.msra.mxu0 0.0
  %2177 = vmatprep.subr.mxu0 0.0
  %2178 = vmatpush1.xpose.msra.mxu0 0.0
  %2179 = vmatprep.subr.mxu0 0.0
  %2180 = vmatpush1.xpose.msra.mxu0 0.0
  %2181 = vmatprep.subr.mxu0 0.0
  %2182 = vmatpush1.xpose.msra.mxu0 0.0
  %2183 = vmatprep.subr.mxu0 0.0
  %2184 = vmatpush1.xpose.msra.mxu0 0.0
  %2185 = vmatprep.subr.mxu0 0.0
  %2186 = vmatpush1.xpose.msra.mxu0 0.0
  %2187 = vmatprep.subr.mxu0 0.0
  %2188 = vmatpush1.xpose.msra.mxu0 0.0
  %2189 = vmatprep.subr.mxu0 0.0
  %2190 = vmatpush1.xpose.msra.mxu0 0.0
  %2191 = vmatprep.subr.mxu0 0.0
  %2192 = vmatpush1.xpose.msra.mxu0 0.0
  %2193 = vmatprep.subr.mxu0 0.0
  %2194 = vmatpush1.xpose.msra.mxu0 0.0
  %2195 = vmatprep.subr.mxu0 0.0
  %2196 = vmatpush1.xpose.msra.mxu0 0.0
  %2197 = vmatprep.subr.mxu0 0.0
  %2198 = vmatpush1.xpose.msra.mxu0 0.0
  %2199 = vmatprep.subr.mxu0 0.0
  %2200 = vmatpush1.xpose.msra.mxu0 0.0
  %2201 = vmatprep.subr.mxu0 0.0
  %2202 = vmatpush1.xpose.msra.mxu0 %v2169
  %2203 = vmatprep.subr.mxu0 0.0
  %2204 = vmatpush2.xpose.msra.mxu0 0.0
  %2205 = vmatprep.subr.mxu0 0.0
  %2206 = vmatpush2.xpose.msra.mxu0 0.0
  %2207 = vmatprep.subr.mxu0 0.0
  %2208 = vmatpush2.xpose.msra.mxu0 0.0
  %2209 = vmatprep.subr.mxu0 0.0
  %2210 = vmatpush2.xpose.msra.mxu0 0.0
  %2211 = vmatprep.subr.mxu0 0.0
  %2212 = vmatpush2.xpose.msra.mxu0 0.0
  %2213 = vmatprep.subr.mxu0 0.0
  %2214 = vmatpush2.xpose.msra.mxu0 0.0
  %2215 = vmatprep.subr.mxu0 0.0
  %2216 = vmatpush2.xpose.msra.mxu0 0.0
  %2217 = vmatprep.subr.mxu0 0.0
  %2218 = vmatpush2.xpose.msra.mxu0 0.0
  %2219 = vmatprep.subr.mxu0 0.0
  %2220 = vmatpush2.xpose.msra.mxu0 0.0
  %2221 = vmatprep.subr.mxu0 0.0
  %2222 = vmatpush2.xpose.msra.mxu0 0.0
  %2223 = vmatprep.subr.mxu0 0.0
  %2224 = vmatpush2.xpose.msra.mxu0 0.0
  %2225 = vmatprep.subr.mxu0 0.0
  %2226 = vmatpush2.xpose.msra.mxu0 0.0
  %2227 = vmatprep.subr.mxu0 0.0
  %2228 = vmatpush2.xpose.msra.mxu0 0.0
  %2229 = vmatprep.subr.mxu0 0.0
  %2230 = vmatpush2.xpose.msra.mxu0 0.0
  %2231 = vmatprep.subr.mxu0 0.0
  %2232 = vmatpush2.xpose.msra.mxu0 0.0
  %2233 = vmatprep.subr.mxu0 0.0
  %2234 = vmatpush2.xpose.msra.mxu0 0.0
  %2235 = vmatprep.mubr.f32.mxu0 0.0
  %2236 = vmatmul.mubr.f32.gmra.mxu0 %v2167
  %v2237 = vpop.f32.mrf.mxu0
  %v2238 = vadd.f32 0.0, %v2237
  %v2239 = vpop.f32.mrf.mxu0
  %2240 = vdwg.mxu0
  %v2241 = vmul.f32 %v1692, 0.35355338
  %v2242 = vmul.f32 %v1770, 0.35355338
  %v2243 = vmul.f32 %v1848, 0.35355338
  %v2244 = vmul.f32 %v1926, 0.35355338
  %v2245 = vmul.f32 %v2004, 0.35355338
  %v2246 = vmul.f32 %v2082, 0.35355338
  %v2247 = vmul.f32 %v2160, 0.35355338
  %v2248 = vmul.f32 %v2238, 0.35355338
  %v2249 = vadd.f32 %v2241, %v875
  %v2250 = vadd.f32 %v2242, %v879
  %v2251 = vadd.f32 %v2243, %v883
  %v2252 = vadd.f32 %v2244, %v887
  %v2253 = vadd.f32 %v2245, %v891
  %v2254 = vadd.f32 %v2246, %v895
  %v2255 = vadd.f32 %v2247, %v899
  %v2256 = vadd.f32 %v2248, %v903
  %v2257 = vsel %vm242, %v2249, -inf
  %2258 = vmax.xlane.f32.xlu0 %v2257
  %v2259 = vpop.xlane.xlu0 %2258
  %v2260 = vsel %vm242, %v2250, -inf
  %2261 = vmax.xlane.f32.xlu0 %v2260
  %v2262 = vpop.xlane.xlu0 %2261
  %v2263 = vsel %vm242, %v2251, -inf
  %2264 = vmax.xlane.f32.xlu0 %v2263
  %v2265 = vpop.xlane.xlu0 %2264
  %v2266 = vsel %vm242, %v2252, -inf
  %2267 = vmax.xlane.f32.xlu0 %v2266
  %v2268 = vpop.xlane.xlu0 %2267
  %v2269 = vsel %vm242, %v2253, -inf
  %2270 = vmax.xlane.f32.xlu0 %v2269
  %v2271 = vpop.xlane.xlu0 %2270
  %v2272 = vsel %vm242, %v2254, -inf
  %2273 = vmax.xlane.f32.xlu0 %v2272
  %v2274 = vpop.xlane.xlu0 %2273
  %v2275 = vsel %vm242, %v2255, -inf
  %2276 = vmax.xlane.f32.xlu0 %v2275
  %v2277 = vpop.xlane.xlu0 %2276
  %v2278 = vsel %vm242, %v2256, -inf
  %2279 = vmax.xlane.f32.xlu0 %v2278
  %v2280 = vpop.xlane.xlu0 %2279
  %v2281 = vsub.f32 %v2249, %v2259
  %v2282 = vsub.f32 %v2250, %v2262
  %v2283 = vsub.f32 %v2251, %v2265
  %v2284 = vsub.f32 %v2252, %v2268
  %v2285 = vsub.f32 %v2253, %v2271
  %v2286 = vsub.f32 %v2254, %v2274
  %v2287 = vsub.f32 %v2255, %v2277
  %v2288 = vsub.f32 %v2256, %v2280
  %v2289 = vmul.f32 %v2281, 1.442695
  %v2290 = vpow.pop %v2289
  %v2291 = vmul.f32 %v2282, 1.442695
  %v2292 = vpow.pop %v2291
  %v2293 = vmul.f32 %v2283, 1.442695
  %v2294 = vpow.pop %v2293
  %v2295 = vmul.f32 %v2284, 1.442695
  %v2296 = vpow.pop %v2295
  %v2297 = vmul.f32 %v2285, 1.442695
  %v2298 = vpow.pop %v2297
  %v2299 = vmul.f32 %v2286, 1.442695
  %v2300 = vpow.pop %v2299
  %v2301 = vmul.f32 %v2287, 1.442695
  %v2302 = vpow.pop %v2301
  %v2303 = vmul.f32 %v2288, 1.442695
  %v2304 = vpow.pop %v2303
  %v2305 = vsel %vm242, %v2290, 0.0
  %2306 = vadd.xlane.f32.xlu0 %v2305
  %v2307 = vpop.xlane.xlu0 %2306
  %v2308 = vsel %vm242, %v2292, 0.0
  %2309 = vadd.xlane.f32.xlu0 %v2308
  %v2310 = vpop.xlane.xlu0 %2309
  %v2311 = vsel %vm242, %v2294, 0.0
  %2312 = vadd.xlane.f32.xlu0 %v2311
  %v2313 = vpop.xlane.xlu0 %2312
  %v2314 = vsel %vm242, %v2296, 0.0
  %2315 = vadd.xlane.f32.xlu0 %v2314
  %v2316 = vpop.xlane.xlu0 %2315
  %v2317 = vsel %vm242, %v2298, 0.0
  %2318 = vadd.xlane.f32.xlu0 %v2317
  %v2319 = vpop.xlane.xlu0 %2318
  %v2320 = vsel %vm242, %v2300, 0.0
  %2321 = vadd.xlane.f32.xlu0 %v2320
  %v2322 = vpop.xlane.xlu0 %2321
  %v2323 = vsel %vm242, %v2302, 0.0
  %2324 = vadd.xlane.f32.xlu0 %v2323
  %v2325 = vpop.xlane.xlu0 %2324
  %v2326 = vsel %vm242, %v2304, 0.0
  %2327 = vadd.xlane.f32.xlu0 %v2326
  %v2328 = vpop.xlane.xlu0 %2327
  %v2329 = vrcp.pop %v2307
  %v2330 = vrcp.pop %v2310
  %v2331 = vrcp.pop %v2313
  %v2332 = vrcp.pop %v2316
  %v2333 = vrcp.pop %v2319
  %v2334 = vrcp.pop %v2322
  %v2335 = vrcp.pop %v2325
  %v2336 = vrcp.pop %v2328
  %v2337 = vmul.f32 %v2290, %v2329
  %v2338 = vmul.f32 %v2292, %v2330
  %v2339 = vmul.f32 %v2294, %v2331
  %v2340 = vmul.f32 %v2296, %v2332
  %v2341 = vmul.f32 %v2298, %v2333
  %v2342 = vmul.f32 %v2300, %v2334
  %v2343 = vmul.f32 %v2302, %v2335
  %v2344 = vmul.f32 %v2304, %v2336
  %2345 = vrot.lane.b32.xlu0 %v185, 56
  %v2346 = vpop.permute.xlu0 %2345
  %v2349 = vsel %vm242, %v2337, 0
  %2351 = vmatprep.subr.mxu0 0.0
  %2352 = vmatpush1.msra.mxu0 0.0
  %2353 = vmatprep.subr.mxu0 0.0
  %2354 = vmatpush1.msra.mxu0 0.0
  %2355 = vmatprep.subr.mxu0 0.0
  %2356 = vmatpush1.msra.mxu0 0.0
  %2357 = vmatprep.subr.mxu0 0.0
  %2358 = vmatpush1.msra.mxu0 0.0
  %2359 = vmatprep.subr.mxu0 0.0
  %2360 = vmatpush1.msra.mxu0 0.0
  %2361 = vmatprep.subr.mxu0 0.0
  %2362 = vmatpush1.msra.mxu0 0.0
  %2363 = vmatprep.subr.mxu0 0.0
  %2364 = vmatpush1.msra.mxu0 0.0
  %2365 = vmatprep.subr.mxu0 0.0
  %2366 = vmatpush1.msra.mxu0 0.0
  %2367 = vmatprep.subr.mxu0 0.0
  %2368 = vmatpush1.msra.mxu0 0.0
  %2369 = vmatprep.subr.mxu0 0.0
  %2370 = vmatpush1.msra.mxu0 0.0
  %2371 = vmatprep.subr.mxu0 0.0
  %2372 = vmatpush1.msra.mxu0 0.0
  %2373 = vmatprep.subr.mxu0 0.0
  %2374 = vmatpush1.msra.mxu0 0.0
  %2375 = vmatprep.subr.mxu0 0.0
  %2376 = vmatpush1.msra.mxu0 0.0
  %2377 = vmatprep.subr.mxu0 0.0
  %2378 = vmatpush1.msra.mxu0 0.0
  %2379 = vmatprep.subr.mxu0 0.0
  %2380 = vmatpush1.msra.mxu0 0.0
  %2381 = vmatprep.subr.mxu0 0.0
  %2382 = vmatpush1.msra.mxu0 %v2346
  %2383 = vmatprep.subr.mxu0 0.0
  %2384 = vmatpush2.msra.mxu0 0.0
  %2385 = vmatprep.subr.mxu0 0.0
  %2386 = vmatpush2.msra.mxu0 0.0
  %2387 = vmatprep.subr.mxu0 0.0
  %2388 = vmatpush2.msra.mxu0 0.0
  %2389 = vmatprep.subr.mxu0 0.0
  %2390 = vmatpush2.msra.mxu0 0.0
  %2391 = vmatprep.subr.mxu0 0.0
  %2392 = vmatpush2.msra.mxu0 0.0
  %2393 = vmatprep.subr.mxu0 0.0
  %2394 = vmatpush2.msra.mxu0 0.0
  %2395 = vmatprep.subr.mxu0 0.0
  %2396 = vmatpush2.msra.mxu0 0.0
  %2397 = vmatprep.subr.mxu0 0.0
  %2398 = vmatpush2.msra.mxu0 0.0
  %2399 = vmatprep.subr.mxu0 0.0
  %2400 = vmatpush2.msra.mxu0 0.0
  %2401 = vmatprep.subr.mxu0 0.0
  %2402 = vmatpush2.msra.mxu0 0.0
  %2403 = vmatprep.subr.mxu0 0.0
  %2404 = vmatpush2.msra.mxu0 0.0
  %2405 = vmatprep.subr.mxu0 0.0
  %2406 = vmatpush2.msra.mxu0 0.0
  %2407 = vmatprep.subr.mxu0 0.0
  %2408 = vmatpush2.msra.mxu0 0.0
  %2409 = vmatprep.subr.mxu0 0.0
  %2410 = vmatpush2.msra.mxu0 0.0
  %2411 = vmatprep.subr.mxu0 0.0
  %2412 = vmatpush2.msra.mxu0 0.0
  %2413 = vmatprep.subr.mxu0 0.0
  %2414 = vmatpush2.msra.mxu0 0.0
  %2415 = vmatprep.mubr.f32.mxu0 0.0
  %2416 = vmatmul.mubr.f32.gmra.mxu0 %v2349
  %v2417 = vpop.f32.mrf.mxu0
  %v2418 = vadd.f32 0.0, %v2417
  %v2419 = vpop.f32.mrf.mxu0
  %2420 = vdwg.mxu0
  %2421 = vrot.lane.b32.xlu0 %v190, 56
  %v2422 = vpop.permute.xlu0 %2421
  %v2425 = vsel %vm242, %v2338, 0
  %2427 = vmatprep.subr.mxu0 0.0
  %2428 = vmatpush1.msra.mxu0 0.0
  %2429 = vmatprep.subr.mxu0 0.0
  %2430 = vmatpush1.msra.mxu0 0.0
  %2431 = vmatprep.subr.mxu0 0.0
  %2432 = vmatpush1.msra.mxu0 0.0
  %2433 = vmatprep.subr.mxu0 0.0
  %2434 = vmatpush1.msra.mxu0 0.0
  %2435 = vmatprep.subr.mxu0 0.0
  %2436 = vmatpush1.msra.mxu0 0.0
  %2437 = vmatprep.subr.mxu0 0.0
  %2438 = vmatpush1.msra.mxu0 0.0
  %2439 = vmatprep.subr.mxu0 0.0
  %2440 = vmatpush1.msra.mxu0 0.0
  %2441 = vmatprep.subr.mxu0 0.0
  %2442 = vmatpush1.msra.mxu0 0.0
  %2443 = vmatprep.subr.mxu0 0.0
  %2444 = vmatpush1.msra.mxu0 0.0
  %2445 = vmatprep.subr.mxu0 0.0
  %2446 = vmatpush1.msra.mxu0 0.0
  %2447 = vmatprep.subr.mxu0 0.0
  %2448 = vmatpush1.msra.mxu0 0.0
  %2449 = vmatprep.subr.mxu0 0.0
  %2450 = vmatpush1.msra.mxu0 0.0
  %2451 = vmatprep.subr.mxu0 0.0
  %2452 = vmatpush1.msra.mxu0 0.0
  %2453 = vmatprep.subr.mxu0 0.0
  %2454 = vmatpush1.msra.mxu0 0.0
  %2455 = vmatprep.subr.mxu0 0.0
  %2456 = vmatpush1.msra.mxu0 0.0
  %2457 = vmatprep.subr.mxu0 0.0
  %2458 = vmatpush1.msra.mxu0 %v2422
  %2459 = vmatprep.subr.mxu0 0.0
  %2460 = vmatpush2.msra.mxu0 0.0
  %2461 = vmatprep.subr.mxu0 0.0
  %2462 = vmatpush2.msra.mxu0 0.0
  %2463 = vmatprep.subr.mxu0 0.0
  %2464 = vmatpush2.msra.mxu0 0.0
  %2465 = vmatprep.subr.mxu0 0.0
  %2466 = vmatpush2.msra.mxu0 0.0
  %2467 = vmatprep.subr.mxu0 0.0
  %2468 = vmatpush2.msra.mxu0 0.0
  %2469 = vmatprep.subr.mxu0 0.0
  %2470 = vmatpush2.msra.mxu0 0.0
  %2471 = vmatprep.subr.mxu0 0.0
  %2472 = vmatpush2.msra.mxu0 0.0
  %2473 = vmatprep.subr.mxu0 0.0
  %2474 = vmatpush2.msra.mxu0 0.0
  %2475 = vmatprep.subr.mxu0 0.0
  %2476 = vmatpush2.msra.mxu0 0.0
  %2477 = vmatprep.subr.mxu0 0.0
  %2478 = vmatpush2.msra.mxu0 0.0
  %2479 = vmatprep.subr.mxu0 0.0
  %2480 = vmatpush2.msra.mxu0 0.0
  %2481 = vmatprep.subr.mxu0 0.0
  %2482 = vmatpush2.msra.mxu0 0.0
  %2483 = vmatprep.subr.mxu0 0.0
  %2484 = vmatpush2.msra.mxu0 0.0
  %2485 = vmatprep.subr.mxu0 0.0
  %2486 = vmatpush2.msra.mxu0 0.0
  %2487 = vmatprep.subr.mxu0 0.0
  %2488 = vmatpush2.msra.mxu0 0.0
  %2489 = vmatprep.subr.mxu0 0.0
  %2490 = vmatpush2.msra.mxu0 0.0
  %2491 = vmatprep.mubr.f32.mxu0 0.0
  %2492 = vmatmul.mubr.f32.gmra.mxu0 %v2425
  %v2493 = vpop.f32.mrf.mxu0
  %v2494 = vadd.f32 0.0, %v2493
  %v2495 = vpop.f32.mrf.mxu0
  %2496 = vdwg.mxu0
  %2497 = vrot.lane.b32.xlu0 %v195, 56
  %v2498 = vpop.permute.xlu0 %2497
  %v2501 = vsel %vm242, %v2339, 0
  %2503 = vmatprep.subr.mxu0 0.0
  %2504 = vmatpush1.msra.mxu0 0.0
  %2505 = vmatprep.subr.mxu0 0.0
  %2506 = vmatpush1.msra.mxu0 0.0
  %2507 = vmatprep.subr.mxu0 0.0
  %2508 = vmatpush1.msra.mxu0 0.0
  %2509 = vmatprep.subr.mxu0 0.0
  %2510 = vmatpush1.msra.mxu0 0.0
  %2511 = vmatprep.subr.mxu0 0.0
  %2512 = vmatpush1.msra.mxu0 0.0
  %2513 = vmatprep.subr.mxu0 0.0
  %2514 = vmatpush1.msra.mxu0 0.0
  %2515 = vmatprep.subr.mxu0 0.0
  %2516 = vmatpush1.msra.mxu0 0.0
  %2517 = vmatprep.subr.mxu0 0.0
  %2518 = vmatpush1.msra.mxu0 0.0
  %2519 = vmatprep.subr.mxu0 0.0
  %2520 = vmatpush1.msra.mxu0 0.0
  %2521 = vmatprep.subr.mxu0 0.0
  %2522 = vmatpush1.msra.mxu0 0.0
  %2523 = vmatprep.subr.mxu0 0.0
  %2524 = vmatpush1.msra.mxu0 0.0
  %2525 = vmatprep.subr.mxu0 0.0
  %2526 = vmatpush1.msra.mxu0 0.0
  %2527 = vmatprep.subr.mxu0 0.0
  %2528 = vmatpush1.msra.mxu0 0.0
  %2529 = vmatprep.subr.mxu0 0.0
  %2530 = vmatpush1.msra.mxu0 0.0
  %2531 = vmatprep.subr.mxu0 0.0
  %2532 = vmatpush1.msra.mxu0 0.0
  %2533 = vmatprep.subr.mxu0 0.0
  %2534 = vmatpush1.msra.mxu0 %v2498
  %2535 = vmatprep.subr.mxu0 0.0
  %2536 = vmatpush2.msra.mxu0 0.0
  %2537 = vmatprep.subr.mxu0 0.0
  %2538 = vmatpush2.msra.mxu0 0.0
  %2539 = vmatprep.subr.mxu0 0.0
  %2540 = vmatpush2.msra.mxu0 0.0
  %2541 = vmatprep.subr.mxu0 0.0
  %2542 = vmatpush2.msra.mxu0 0.0
  %2543 = vmatprep.subr.mxu0 0.0
  %2544 = vmatpush2.msra.mxu0 0.0
  %2545 = vmatprep.subr.mxu0 0.0
  %2546 = vmatpush2.msra.mxu0 0.0
  %2547 = vmatprep.subr.mxu0 0.0
  %2548 = vmatpush2.msra.mxu0 0.0
  %2549 = vmatprep.subr.mxu0 0.0
  %2550 = vmatpush2.msra.mxu0 0.0
  %2551 = vmatprep.subr.mxu0 0.0
  %2552 = vmatpush2.msra.mxu0 0.0
  %2553 = vmatprep.subr.mxu0 0.0
  %2554 = vmatpush2.msra.mxu0 0.0
  %2555 = vmatprep.subr.mxu0 0.0
  %2556 = vmatpush2.msra.mxu0 0.0
  %2557 = vmatprep.subr.mxu0 0.0
  %2558 = vmatpush2.msra.mxu0 0.0
  %2559 = vmatprep.subr.mxu0 0.0
  %2560 = vmatpush2.msra.mxu0 0.0
  %2561 = vmatprep.subr.mxu0 0.0
  %2562 = vmatpush2.msra.mxu0 0.0
  %2563 = vmatprep.subr.mxu0 0.0
  %2564 = vmatpush2.msra.mxu0 0.0
  %2565 = vmatprep.subr.mxu0 0.0
  %2566 = vmatpush2.msra.mxu0 0.0
  %2567 = vmatprep.mubr.f32.mxu0 0.0
  %2568 = vmatmul.mubr.f32.gmra.mxu0 %v2501
  %v2569 = vpop.f32.mrf.mxu0
  %v2570 = vadd.f32 0.0, %v2569
  %v2571 = vpop.f32.mrf.mxu0
  %2572 = vdwg.mxu0
  %2573 = vrot.lane.b32.xlu0 %v200, 56
  %v2574 = vpop.permute.xlu0 %2573
  %v2577 = vsel %vm242, %v2340, 0
  %2579 = vmatprep.subr.mxu0 0.0
  %2580 = vmatpush1.msra.mxu0 0.0
  %2581 = vmatprep.subr.mxu0 0.0
  %2582 = vmatpush1.msra.mxu0 0.0
  %2583 = vmatprep.subr.mxu0 0.0
  %2584 = vmatpush1.msra.mxu0 0.0
  %2585 = vmatprep.subr.mxu0 0.0
  %2586 = vmatpush1.msra.mxu0 0.0
  %2587 = vmatprep.subr.mxu0 0.0
  %2588 = vmatpush1.msra.mxu0 0.0
  %2589 = vmatprep.subr.mxu0 0.0
  %2590 = vmatpush1.msra.mxu0 0.0
  %2591 = vmatprep.subr.mxu0 0.0
  %2592 = vmatpush1.msra.mxu0 0.0
  %2593 = vmatprep.subr.mxu0 0.0
  %2594 = vmatpush1.msra.mxu0 0.0
  %2595 = vmatprep.subr.mxu0 0.0
  %2596 = vmatpush1.msra.mxu0 0.0
  %2597 = vmatprep.subr.mxu0 0.0
  %2598 = vmatpush1.msra.mxu0 0.0
  %2599 = vmatprep.subr.mxu0 0.0
  %2600 = vmatpush1.msra.mxu0 0.0
  %2601 = vmatprep.subr.mxu0 0.0
  %2602 = vmatpush1.msra.mxu0 0.0
  %2603 = vmatprep.subr.mxu0 0.0
  %2604 = vmatpush1.msra.mxu0 0.0
  %2605 = vmatprep.subr.mxu0 0.0
  %2606 = vmatpush1.msra.mxu0 0.0
  %2607 = vmatprep.subr.mxu0 0.0
  %2608 = vmatpush1.msra.mxu0 0.0
  %2609 = vmatprep.subr.mxu0 0.0
  %2610 = vmatpush1.msra.mxu0 %v2574
  %2611 = vmatprep.subr.mxu0 0.0
  %2612 = vmatpush2.msra.mxu0 0.0
  %2613 = vmatprep.subr.mxu0 0.0
  %2614 = vmatpush2.msra.mxu0 0.0
  %2615 = vmatprep.subr.mxu0 0.0
  %2616 = vmatpush2.msra.mxu0 0.0
  %2617 = vmatprep.subr.mxu0 0.0
  %2618 = vmatpush2.msra.mxu0 0.0
  %2619 = vmatprep.subr.mxu0 0.0
  %2620 = vmatpush2.msra.mxu0 0.0
  %2621 = vmatprep.subr.mxu0 0.0
  %2622 = vmatpush2.msra.mxu0 0.0
  %2623 = vmatprep.subr.mxu0 0.0
  %2624 = vmatpush2.msra.mxu0 0.0
  %2625 = vmatprep.subr.mxu0 0.0
  %2626 = vmatpush2.msra.mxu0 0.0
  %2627 = vmatprep.subr.mxu0 0.0
  %2628 = vmatpush2.msra.mxu0 0.0
  %2629 = vmatprep.subr.mxu0 0.0
  %2630 = vmatpush2.msra.mxu0 0.0
  %2631 = vmatprep.subr.mxu0 0.0
  %2632 = vmatpush2.msra.mxu0 0.0
  %2633 = vmatprep.subr.mxu0 0.0
  %2634 = vmatpush2.msra.mxu0 0.0
  %2635 = vmatprep.subr.mxu0 0.0
  %2636 = vmatpush2.msra.mxu0 0.0
  %2637 = vmatprep.subr.mxu0 0.0
  %2638 = vmatpush2.msra.mxu0 0.0
  %2639 = vmatprep.subr.mxu0 0.0
  %2640 = vmatpush2.msra.mxu0 0.0
  %2641 = vmatprep.subr.mxu0 0.0
  %2642 = vmatpush2.msra.mxu0 0.0
  %2643 = vmatprep.mubr.f32.mxu0 0.0
  %2644 = vmatmul.mubr.f32.gmra.mxu0 %v2577
  %v2645 = vpop.f32.mrf.mxu0
  %v2646 = vadd.f32 0.0, %v2645
  %v2647 = vpop.f32.mrf.mxu0
  %2648 = vdwg.mxu0
  %2649 = vrot.lane.b32.xlu0 %v205, 56
  %v2650 = vpop.permute.xlu0 %2649
  %v2653 = vsel %vm242, %v2341, 0
  %2655 = vmatprep.subr.mxu0 0.0
  %2656 = vmatpush1.msra.mxu0 0.0
  %2657 = vmatprep.subr.mxu0 0.0
  %2658 = vmatpush1.msra.mxu0 0.0
  %2659 = vmatprep.subr.mxu0 0.0
  %2660 = vmatpush1.msra.mxu0 0.0
  %2661 = vmatprep.subr.mxu0 0.0
  %2662 = vmatpush1.msra.mxu0 0.0
  %2663 = vmatprep.subr.mxu0 0.0
  %2664 = vmatpush1.msra.mxu0 0.0
  %2665 = vmatprep.subr.mxu0 0.0
  %2666 = vmatpush1.msra.mxu0 0.0
  %2667 = vmatprep.subr.mxu0 0.0
  %2668 = vmatpush1.msra.mxu0 0.0
  %2669 = vmatprep.subr.mxu0 0.0
  %2670 = vmatpush1.msra.mxu0 0.0
  %2671 = vmatprep.subr.mxu0 0.0
  %2672 = vmatpush1.msra.mxu0 0.0
  %2673 = vmatprep.subr.mxu0 0.0
  %2674 = vmatpush1.msra.mxu0 0.0
  %2675 = vmatprep.subr.mxu0 0.0
  %2676 = vmatpush1.msra.mxu0 0.0
  %2677 = vmatprep.subr.mxu0 0.0
  %2678 = vmatpush1.msra.mxu0 0.0
  %2679 = vmatprep.subr.mxu0 0.0
  %2680 = vmatpush1.msra.mxu0 0.0
  %2681 = vmatprep.subr.mxu0 0.0
  %2682 = vmatpush1.msra.mxu0 0.0
  %2683 = vmatprep.subr.mxu0 0.0
  %2684 = vmatpush1.msra.mxu0 0.0
  %2685 = vmatprep.subr.mxu0 0.0
  %2686 = vmatpush1.msra.mxu0 %v2650
  %2687 = vmatprep.subr.mxu0 0.0
  %2688 = vmatpush2.msra.mxu0 0.0
  %2689 = vmatprep.subr.mxu0 0.0
  %2690 = vmatpush2.msra.mxu0 0.0
  %2691 = vmatprep.subr.mxu0 0.0
  %2692 = vmatpush2.msra.mxu0 0.0
  %2693 = vmatprep.subr.mxu0 0.0
  %2694 = vmatpush2.msra.mxu0 0.0
  %2695 = vmatprep.subr.mxu0 0.0
  %2696 = vmatpush2.msra.mxu0 0.0
  %2697 = vmatprep.subr.mxu0 0.0
  %2698 = vmatpush2.msra.mxu0 0.0
  %2699 = vmatprep.subr.mxu0 0.0
  %2700 = vmatpush2.msra.mxu0 0.0
  %2701 = vmatprep.subr.mxu0 0.0
  %2702 = vmatpush2.msra.mxu0 0.0
  %2703 = vmatprep.subr.mxu0 0.0
  %2704 = vmatpush2.msra.mxu0 0.0
  %2705 = vmatprep.subr.mxu0 0.0
  %2706 = vmatpush2.msra.mxu0 0.0
  %2707 = vmatprep.subr.mxu0 0.0
  %2708 = vmatpush2.msra.mxu0 0.0
  %2709 = vmatprep.subr.mxu0 0.0
  %2710 = vmatpush2.msra.mxu0 0.0
  %2711 = vmatprep.subr.mxu0 0.0
  %2712 = vmatpush2.msra.mxu0 0.0
  %2713 = vmatprep.subr.mxu0 0.0
  %2714 = vmatpush2.msra.mxu0 0.0
  %2715 = vmatprep.subr.mxu0 0.0
  %2716 = vmatpush2.msra.mxu0 0.0
  %2717 = vmatprep.subr.mxu0 0.0
  %2718 = vmatpush2.msra.mxu0 0.0
  %2719 = vmatprep.mubr.f32.mxu0 0.0
  %2720 = vmatmul.mubr.f32.gmra.mxu0 %v2653
  %v2721 = vpop.f32.mrf.mxu0
  %v2722 = vadd.f32 0.0, %v2721
  %v2723 = vpop.f32.mrf.mxu0
  %2724 = vdwg.mxu0
  %2725 = vrot.lane.b32.xlu0 %v210, 56
  %v2726 = vpop.permute.xlu0 %2725
  %v2729 = vsel %vm242, %v2342, 0
  %2731 = vmatprep.subr.mxu0 0.0
  %2732 = vmatpush1.msra.mxu0 0.0
  %2733 = vmatprep.subr.mxu0 0.0
  %2734 = vmatpush1.msra.mxu0 0.0
  %2735 = vmatprep.subr.mxu0 0.0
  %2736 = vmatpush1.msra.mxu0 0.0
  %2737 = vmatprep.subr.mxu0 0.0
  %2738 = vmatpush1.msra.mxu0 0.0
  %2739 = vmatprep.subr.mxu0 0.0
  %2740 = vmatpush1.msra.mxu0 0.0
  %2741 = vmatprep.subr.mxu0 0.0
  %2742 = vmatpush1.msra.mxu0 0.0
  %2743 = vmatprep.subr.mxu0 0.0
  %2744 = vmatpush1.msra.mxu0 0.0
  %2745 = vmatprep.subr.mxu0 0.0
  %2746 = vmatpush1.msra.mxu0 0.0
  %2747 = vmatprep.subr.mxu0 0.0
  %2748 = vmatpush1.msra.mxu0 0.0
  %2749 = vmatprep.subr.mxu0 0.0
  %2750 = vmatpush1.msra.mxu0 0.0
  %2751 = vmatprep.subr.mxu0 0.0
  %2752 = vmatpush1.msra.mxu0 0.0
  %2753 = vmatprep.subr.mxu0 0.0
  %2754 = vmatpush1.msra.mxu0 0.0
  %2755 = vmatprep.subr.mxu0 0.0
  %2756 = vmatpush1.msra.mxu0 0.0
  %2757 = vmatprep.subr.mxu0 0.0
  %2758 = vmatpush1.msra.mxu0 0.0
  %2759 = vmatprep.subr.mxu0 0.0
  %2760 = vmatpush1.msra.mxu0 0.0
  %2761 = vmatprep.subr.mxu0 0.0
  %2762 = vmatpush1.msra.mxu0 %v2726
  %2763 = vmatprep.subr.mxu0 0.0
  %2764 = vmatpush2.msra.mxu0 0.0
  %2765 = vmatprep.subr.mxu0 0.0
  %2766 = vmatpush2.msra.mxu0 0.0
  %2767 = vmatprep.subr.mxu0 0.0
  %2768 = vmatpush2.msra.mxu0 0.0
  %2769 = vmatprep.subr.mxu0 0.0
  %2770 = vmatpush2.msra.mxu0 0.0
  %2771 = vmatprep.subr.mxu0 0.0
  %2772 = vmatpush2.msra.mxu0 0.0
  %2773 = vmatprep.subr.mxu0 0.0
  %2774 = vmatpush2.msra.mxu0 0.0
  %2775 = vmatprep.subr.mxu0 0.0
  %2776 = vmatpush2.msra.mxu0 0.0
  %2777 = vmatprep.subr.mxu0 0.0
  %2778 = vmatpush2.msra.mxu0 0.0
  %2779 = vmatprep.subr.mxu0 0.0
  %2780 = vmatpush2.msra.mxu0 0.0
  %2781 = vmatprep.subr.mxu0 0.0
  %2782 = vmatpush2.msra.mxu0 0.0
  %2783 = vmatprep.subr.mxu0 0.0
  %2784 = vmatpush2.msra.mxu0 0.0
  %2785 = vmatprep.subr.mxu0 0.0
  %2786 = vmatpush2.msra.mxu0 0.0
  %2787 = vmatprep.subr.mxu0 0.0
  %2788 = vmatpush2.msra.mxu0 0.0
  %2789 = vmatprep.subr.mxu0 0.0
  %2790 = vmatpush2.msra.mxu0 0.0
  %2791 = vmatprep.subr.mxu0 0.0
  %2792 = vmatpush2.msra.mxu0 0.0
  %2793 = vmatprep.subr.mxu0 0.0
  %2794 = vmatpush2.msra.mxu0 0.0
  %2795 = vmatprep.mubr.f32.mxu0 0.0
  %2796 = vmatmul.mubr.f32.gmra.mxu0 %v2729
  %v2797 = vpop.f32.mrf.mxu0
  %v2798 = vadd.f32 0.0, %v2797
  %v2799 = vpop.f32.mrf.mxu0
  %2800 = vdwg.mxu0
  %2801 = vrot.lane.b32.xlu0 %v215, 56
  %v2802 = vpop.permute.xlu0 %2801
  %v2805 = vsel %vm242, %v2343, 0
  %2807 = vmatprep.subr.mxu0 0.0
  %2808 = vmatpush1.msra.mxu0 0.0
  %2809 = vmatprep.subr.mxu0 0.0
  %2810 = vmatpush1.msra.mxu0 0.0
  %2811 = vmatprep.subr.mxu0 0.0
  %2812 = vmatpush1.msra.mxu0 0.0
  %2813 = vmatprep.subr.mxu0 0.0
  %2814 = vmatpush1.msra.mxu0 0.0
  %2815 = vmatprep.subr.mxu0 0.0
  %2816 = vmatpush1.msra.mxu0 0.0
  %2817 = vmatprep.subr.mxu0 0.0
  %2818 = vmatpush1.msra.mxu0 0.0
  %2819 = vmatprep.subr.mxu0 0.0
  %2820 = vmatpush1.msra.mxu0 0.0
  %2821 = vmatprep.subr.mxu0 0.0
  %2822 = vmatpush1.msra.mxu0 0.0
  %2823 = vmatprep.subr.mxu0 0.0
  %2824 = vmatpush1.msra.mxu0 0.0
  %2825 = vmatprep.subr.mxu0 0.0
  %2826 = vmatpush1.msra.mxu0 0.0
  %2827 = vmatprep.subr.mxu0 0.0
  %2828 = vmatpush1.msra.mxu0 0.0
  %2829 = vmatprep.subr.mxu0 0.0
  %2830 = vmatpush1.msra.mxu0 0.0
  %2831 = vmatprep.subr.mxu0 0.0
  %2832 = vmatpush1.msra.mxu0 0.0
  %2833 = vmatprep.subr.mxu0 0.0
  %2834 = vmatpush1.msra.mxu0 0.0
  %2835 = vmatprep.subr.mxu0 0.0
  %2836 = vmatpush1.msra.mxu0 0.0
  %2837 = vmatprep.subr.mxu0 0.0
  %2838 = vmatpush1.msra.mxu0 %v2802
  %2839 = vmatprep.subr.mxu0 0.0
  %2840 = vmatpush2.msra.mxu0 0.0
  %2841 = vmatprep.subr.mxu0 0.0
  %2842 = vmatpush2.msra.mxu0 0.0
  %2843 = vmatprep.subr.mxu0 0.0
  %2844 = vmatpush2.msra.mxu0 0.0
  %2845 = vmatprep.subr.mxu0 0.0
  %2846 = vmatpush2.msra.mxu0 0.0
  %2847 = vmatprep.subr.mxu0 0.0
  %2848 = vmatpush2.msra.mxu0 0.0
  %2849 = vmatprep.subr.mxu0 0.0
  %2850 = vmatpush2.msra.mxu0 0.0
  %2851 = vmatprep.subr.mxu0 0.0
  %2852 = vmatpush2.msra.mxu0 0.0
  %2853 = vmatprep.subr.mxu0 0.0
  %2854 = vmatpush2.msra.mxu0 0.0
  %2855 = vmatprep.subr.mxu0 0.0
  %2856 = vmatpush2.msra.mxu0 0.0
  %2857 = vmatprep.subr.mxu0 0.0
  %2858 = vmatpush2.msra.mxu0 0.0
  %2859 = vmatprep.subr.mxu0 0.0
  %2860 = vmatpush2.msra.mxu0 0.0
  %2861 = vmatprep.subr.mxu0 0.0
  %2862 = vmatpush2.msra.mxu0 0.0
  %2863 = vmatprep.subr.mxu0 0.0
  %2864 = vmatpush2.msra.mxu0 0.0
  %2865 = vmatprep.subr.mxu0 0.0
  %2866 = vmatpush2.msra.mxu0 0.0
  %2867 = vmatprep.subr.mxu0 0.0
  %2868 = vmatpush2.msra.mxu0 0.0
  %2869 = vmatprep.subr.mxu0 0.0
  %2870 = vmatpush2.msra.mxu0 0.0
  %2871 = vmatprep.mubr.f32.mxu0 0.0
  %2872 = vmatmul.mubr.f32.gmra.mxu0 %v2805
  %v2873 = vpop.f32.mrf.mxu0
  %v2874 = vadd.f32 0.0, %v2873
  %v2875 = vpop.f32.mrf.mxu0
  %2876 = vdwg.mxu0
  %2877 = vrot.lane.b32.xlu0 %v220, 56
  %v2878 = vpop.permute.xlu0 %2877
  %v2881 = vsel %vm242, %v2344, 0
  %2883 = vmatprep.subr.mxu0 0.0
  %2884 = vmatpush1.msra.mxu0 0.0
  %2885 = vmatprep.subr.mxu0 0.0
  %2886 = vmatpush1.msra.mxu0 0.0
  %2887 = vmatprep.subr.mxu0 0.0
  %2888 = vmatpush1.msra.mxu0 0.0
  %2889 = vmatprep.subr.mxu0 0.0
  %2890 = vmatpush1.msra.mxu0 0.0
  %2891 = vmatprep.subr.mxu0 0.0
  %2892 = vmatpush1.msra.mxu0 0.0
  %2893 = vmatprep.subr.mxu0 0.0
  %2894 = vmatpush1.msra.mxu0 0.0
  %2895 = vmatprep.subr.mxu0 0.0
  %2896 = vmatpush1.msra.mxu0 0.0
  %2897 = vmatprep.subr.mxu0 0.0
  %2898 = vmatpush1.msra.mxu0 0.0
  %2899 = vmatprep.subr.mxu0 0.0
  %2900 = vmatpush1.msra.mxu0 0.0
  %2901 = vmatprep.subr.mxu0 0.0
  %2902 = vmatpush1.msra.mxu0 0.0
  %2903 = vmatprep.subr.mxu0 0.0
  %2904 = vmatpush1.msra.mxu0 0.0
  %2905 = vmatprep.subr.mxu0 0.0
  %2906 = vmatpush1.msra.mxu0 0.0
  %2907 = vmatprep.subr.mxu0 0.0
  %2908 = vmatpush1.msra.mxu0 0.0
  %2909 = vmatprep.subr.mxu0 0.0
  %2910 = vmatpush1.msra.mxu0 0.0
  %2911 = vmatprep.subr.mxu0 0.0
  %2912 = vmatpush1.msra.mxu0 0.0
  %2913 = vmatprep.subr.mxu0 0.0
  %2914 = vmatpush1.msra.mxu0 %v2878
  %2915 = vmatprep.subr.mxu0 0.0
  %2916 = vmatpush2.msra.mxu0 0.0
  %2917 = vmatprep.subr.mxu0 0.0
  %2918 = vmatpush2.msra.mxu0 0.0
  %2919 = vmatprep.subr.mxu0 0.0
  %2920 = vmatpush2.msra.mxu0 0.0
  %2921 = vmatprep.subr.mxu0 0.0
  %2922 = vmatpush2.msra.mxu0 0.0
  %2923 = vmatprep.subr.mxu0 0.0
  %2924 = vmatpush2.msra.mxu0 0.0
  %2925 = vmatprep.subr.mxu0 0.0
  %2926 = vmatpush2.msra.mxu0 0.0
  %2927 = vmatprep.subr.mxu0 0.0
  %2928 = vmatpush2.msra.mxu0 0.0
  %2929 = vmatprep.subr.mxu0 0.0
  %2930 = vmatpush2.msra.mxu0 0.0
  %2931 = vmatprep.subr.mxu0 0.0
  %2932 = vmatpush2.msra.mxu0 0.0
  %2933 = vmatprep.subr.mxu0 0.0
  %2934 = vmatpush2.msra.mxu0 0.0
  %2935 = vmatprep.subr.mxu0 0.0
  %2936 = vmatpush2.msra.mxu0 0.0
  %2937 = vmatprep.subr.mxu0 0.0
  %2938 = vmatpush2.msra.mxu0 0.0
  %2939 = vmatprep.subr.mxu0 0.0
  %2940 = vmatpush2.msra.mxu0 0.0
  %2941 = vmatprep.subr.mxu0 0.0
  %2942 = vmatpush2.msra.mxu0 0.0
  %2943 = vmatprep.subr.mxu0 0.0
  %2944 = vmatpush2.msra.mxu0 0.0
  %2945 = vmatprep.subr.mxu0 0.0
  %2946 = vmatpush2.msra.mxu0 0.0
  %2947 = vmatprep.mubr.f32.mxu0 0.0
  %2948 = vmatmul.mubr.f32.gmra.mxu0 %v2881
  %v2949 = vpop.f32.mrf.mxu0
  %v2950 = vadd.f32 0.0, %v2949
  %v2951 = vpop.f32.mrf.mxu0
  %2952 = vdwg.mxu0
  %v2953 = vld [vmem:[%s5 + $0x8] sm:$0xff]
  %v2955 = vsel %vm242, %v2418, 0
  %v2958 = vsel %vm242, %v2494, 0
  %v2961 = vsel %vm242, %v2570, 0
  %v2964 = vsel %vm242, %v2646, 0
  %v2967 = vsel %vm242, %v2722, 0
  %v2970 = vsel %vm242, %v2798, 0
  %v2973 = vsel %vm242, %v2874, 0
  %v2976 = vsel %vm242, %v2950, 0
  %2978 = vmatprep.subr.mxu0 0.0
  %2979 = vmatpush1.msra.mxu0 0.0
  %2980 = vmatprep.subr.mxu0 0.0
  %2981 = vmatpush1.msra.mxu0 0.0
  %2982 = vmatprep.subr.mxu0 0.0
  %2983 = vmatpush1.msra.mxu0 0.0
  %2984 = vmatprep.subr.mxu0 0.0
  %2985 = vmatpush1.msra.mxu0 0.0
  %2986 = vmatprep.subr.mxu0 0.0
  %2987 = vmatpush1.msra.mxu0 0.0
  %2988 = vmatprep.subr.mxu0 0.0
  %2989 = vmatpush1.msra.mxu0 0.0
  %2990 = vmatprep.subr.mxu0 0.0
  %2991 = vmatpush1.msra.mxu0 0.0
  %2992 = vmatprep.subr.mxu0 0.0
  %2993 = vmatpush1.msra.mxu0 0.0
  %2994 = vmatprep.subr.mxu0 0.0
  %2995 = vmatpush1.msra.mxu0 0.0
  %2996 = vmatprep.subr.mxu0 0.0
  %2997 = vmatpush1.msra.mxu0 0.0
  %2998 = vmatprep.subr.mxu0 0.0
  %2999 = vmatpush1.msra.mxu0 0.0
  %3000 = vmatprep.subr.mxu0 0.0
  %3001 = vmatpush1.msra.mxu0 0.0
  %3002 = vmatprep.subr.mxu0 0.0
  %3003 = vmatpush1.msra.mxu0 0.0
  %3004 = vmatprep.subr.mxu0 0.0
  %3005 = vmatpush1.msra.mxu0 0.0
  %3006 = vmatprep.subr.mxu0 0.0
  %3007 = vmatpush1.msra.mxu0 0.0
  %3008 = vmatprep.subr.mxu0 0.0
  %3009 = vmatpush1.msra.mxu0 %v2953
  %3010 = vmatprep.subr.mxu0 0.0
  %3011 = vmatpush2.msra.mxu0 0.0
  %3012 = vmatprep.subr.mxu0 0.0
  %3013 = vmatpush2.msra.mxu0 0.0
  %3014 = vmatprep.subr.mxu0 0.0
  %3015 = vmatpush2.msra.mxu0 0.0
  %3016 = vmatprep.subr.mxu0 0.0
  %3017 = vmatpush2.msra.mxu0 0.0
  %3018 = vmatprep.subr.mxu0 0.0
  %3019 = vmatpush2.msra.mxu0 0.0
  %3020 = vmatprep.subr.mxu0 0.0
  %3021 = vmatpush2.msra.mxu0 0.0
  %3022 = vmatprep.subr.mxu0 0.0
  %3023 = vmatpush2.msra.mxu0 0.0
  %3024 = vmatprep.subr.mxu0 0.0
  %3025 = vmatpush2.msra.mxu0 0.0
  %3026 = vmatprep.subr.mxu0 0.0
  %3027 = vmatpush2.msra.mxu0 0.0
  %3028 = vmatprep.subr.mxu0 0.0
  %3029 = vmatpush2.msra.mxu0 0.0
  %3030 = vmatprep.subr.mxu0 0.0
  %3031 = vmatpush2.msra.mxu0 0.0
  %3032 = vmatprep.subr.mxu0 0.0
  %3033 = vmatpush2.msra.mxu0 0.0
  %3034 = vmatprep.subr.mxu0 0.0
  %3035 = vmatpush2.msra.mxu0 0.0
  %3036 = vmatprep.subr.mxu0 0.0
  %3037 = vmatpush2.msra.mxu0 0.0
  %3038 = vmatprep.subr.mxu0 0.0
  %3039 = vmatpush2.msra.mxu0 0.0
  %3040 = vmatprep.subr.mxu0 0.0
  %3041 = vmatpush2.msra.mxu0 0.0
  %3042 = vmatprep.mubr.f32.mxu0 0.0
  %3043 = vmatmul.mubr.f32.gmra.mxu0 %v2955
  %v3044 = vpop.f32.mrf.mxu0
  %v3045 = vadd.f32 0.0, %v3044
  %v3046 = vpop.f32.mrf.mxu0
  %3047 = vmatprep.mubr.f32.mxu0 0.0
  %3048 = vmatmul.mubr.f32.gmra.mxu0 %v2958
  %v3049 = vpop.f32.mrf.mxu0
  %v3050 = vadd.f32 0.0, %v3049
  %v3051 = vpop.f32.mrf.mxu0
  %3052 = vmatprep.mubr.f32.mxu0 0.0
  %3053 = vmatmul.mubr.f32.gmra.mxu0 %v2961
  %v3054 = vpop.f32.mrf.mxu0
  %v3055 = vadd.f32 0.0, %v3054
  %v3056 = vpop.f32.mrf.mxu0
  %3057 = vmatprep.mubr.f32.mxu0 0.0
  %3058 = vmatmul.mubr.f32.gmra.mxu0 %v2964
  %v3059 = vpop.f32.mrf.mxu0
  %v3060 = vadd.f32 0.0, %v3059
  %v3061 = vpop.f32.mrf.mxu0
  %3062 = vmatprep.mubr.f32.mxu0 0.0
  %3063 = vmatmul.mubr.f32.gmra.mxu0 %v2967
  %v3064 = vpop.f32.mrf.mxu0
  %v3065 = vadd.f32 0.0, %v3064
  %v3066 = vpop.f32.mrf.mxu0
  %3067 = vmatprep.mubr.f32.mxu0 0.0
  %3068 = vmatmul.mubr.f32.gmra.mxu0 %v2970
  %v3069 = vpop.f32.mrf.mxu0
  %v3070 = vadd.f32 0.0, %v3069
  %v3071 = vpop.f32.mrf.mxu0
  %3072 = vmatprep.mubr.f32.mxu0 0.0
  %3073 = vmatmul.mubr.f32.gmra.mxu0 %v2973
  %v3074 = vpop.f32.mrf.mxu0
  %v3075 = vadd.f32 0.0, %v3074
  %v3076 = vpop.f32.mrf.mxu0
  %3077 = vmatprep.mubr.f32.mxu0 0.0
  %3078 = vmatmul.mubr.f32.gmra.mxu0 %v2976
  %v3079 = vpop.f32.mrf.mxu0
  %v3080 = vadd.f32 0.0, %v3079
  %v3081 = vpop.f32.mrf.mxu0
  %3082 = vdwg.mxu0
  %v3084 = vsel %vm242, %v1081, 0
  %v3087 = vsel %vm242, %v1157, 0
  %v3090 = vsel %vm242, %v1233, 0
  %v3093 = vsel %vm242, %v1309, 0
  %v3096 = vsel %vm242, %v1385, 0
  %v3099 = vsel %vm242, %v1461, 0
  %v3102 = vsel %vm242, %v1537, 0
  %v3105 = vsel %vm242, %v1613, 0
  %3107 = vmatprep.subr.mxu0 0.0
  %3108 = vmatpush1.msra.mxu0 0.0
  %3109 = vmatprep.subr.mxu0 0.0
  %3110 = vmatpush1.msra.mxu0 0.0
  %3111 = vmatprep.subr.mxu0 0.0
  %3112 = vmatpush1.msra.mxu0 0.0
  %3113 = vmatprep.subr.mxu0 0.0
  %3114 = vmatpush1.msra.mxu0 0.0
  %3115 = vmatprep.subr.mxu0 0.0
  %3116 = vmatpush1.msra.mxu0 0.0
  %3117 = vmatprep.subr.mxu0 0.0
  %3118 = vmatpush1.msra.mxu0 0.0
  %3119 = vmatprep.subr.mxu0 0.0
  %3120 = vmatpush1.msra.mxu0 0.0
  %3121 = vmatprep.subr.mxu0 0.0
  %3122 = vmatpush1.msra.mxu0 0.0
  %3123 = vmatprep.subr.mxu0 0.0
  %3124 = vmatpush1.msra.mxu0 0.0
  %3125 = vmatprep.subr.mxu0 0.0
  %3126 = vmatpush1.msra.mxu0 0.0
  %3127 = vmatprep.subr.mxu0 0.0
  %3128 = vmatpush1.msra.mxu0 0.0
  %3129 = vmatprep.subr.mxu0 0.0
  %3130 = vmatpush1.msra.mxu0 0.0
  %3131 = vmatprep.subr.mxu0 0.0
  %3132 = vmatpush1.msra.mxu0 0.0
  %3133 = vmatprep.subr.mxu0 0.0
  %3134 = vmatpush1.msra.mxu0 0.0
  %3135 = vmatprep.subr.mxu0 0.0
  %3136 = vmatpush1.msra.mxu0 0.0
  %3137 = vmatprep.subr.mxu0 0.0
  %3138 = vmatpush1.msra.mxu0 %v1616
  %3139 = vmatprep.subr.mxu0 0.0
  %3140 = vmatpush2.msra.mxu0 0.0
  %3141 = vmatprep.subr.mxu0 0.0
  %3142 = vmatpush2.msra.mxu0 0.0
  %3143 = vmatprep.subr.mxu0 0.0
  %3144 = vmatpush2.msra.mxu0 0.0
  %3145 = vmatprep.subr.mxu0 0.0
  %3146 = vmatpush2.msra.mxu0 0.0
  %3147 = vmatprep.subr.mxu0 0.0
  %3148 = vmatpush2.msra.mxu0 0.0
  %3149 = vmatprep.subr.mxu0 0.0
  %3150 = vmatpush2.msra.mxu0 0.0
  %3151 = vmatprep.subr.mxu0 0.0
  %3152 = vmatpush2.msra.mxu0 0.0
  %3153 = vmatprep.subr.mxu0 0.0
  %3154 = vmatpush2.msra.mxu0 0.0
  %3155 = vmatprep.subr.mxu0 0.0
  %3156 = vmatpush2.msra.mxu0 0.0
  %3157 = vmatprep.subr.mxu0 0.0
  %3158 = vmatpush2.msra.mxu0 0.0
  %3159 = vmatprep.subr.mxu0 0.0
  %3160 = vmatpush2.msra.mxu0 0.0
  %3161 = vmatprep.subr.mxu0 0.0
  %3162 = vmatpush2.msra.mxu0 0.0
  %3163 = vmatprep.subr.mxu0 0.0
  %3164 = vmatpush2.msra.mxu0 0.0
  %3165 = vmatprep.subr.mxu0 0.0
  %3166 = vmatpush2.msra.mxu0 0.0
  %3167 = vmatprep.subr.mxu0 0.0
  %3168 = vmatpush2.msra.mxu0 0.0
  %3169 = vmatprep.subr.mxu0 0.0
  %3170 = vmatpush2.msra.mxu0 0.0
  %3171 = vmatprep.mubr.f32.mxu0 0.0
  %3172 = vmatmul.mubr.f32.gmra.mxu0 %v3084
  %v3173 = vpop.f32.mrf.mxu0
  %v3174 = vadd.f32 %v3045, %v3173
  %v3175 = vpop.f32.mrf.mxu0
  %3176 = vmatprep.mubr.f32.mxu0 0.0
  %3177 = vmatmul.mubr.f32.gmra.mxu0 %v3087
  %v3178 = vpop.f32.mrf.mxu0
  %v3179 = vadd.f32 %v3050, %v3178
  %v3180 = vpop.f32.mrf.mxu0
  %3181 = vmatprep.mubr.f32.mxu0 0.0
  %3182 = vmatmul.mubr.f32.gmra.mxu0 %v3090
  %v3183 = vpop.f32.mrf.mxu0
  %v3184 = vadd.f32 %v3055, %v3183
  %v3185 = vpop.f32.mrf.mxu0
  %3186 = vmatprep.mubr.f32.mxu0 0.0
  %3187 = vmatmul.mubr.f32.gmra.mxu0 %v3093
  %v3188 = vpop.f32.mrf.mxu0
  %v3189 = vadd.f32 %v3060, %v3188
  %v3190 = vpop.f32.mrf.mxu0
  %3191 = vmatprep.mubr.f32.mxu0 0.0
  %3192 = vmatmul.mubr.f32.gmra.mxu0 %v3096
  %v3193 = vpop.f32.mrf.mxu0
  %v3194 = vadd.f32 %v3065, %v3193
  %v3195 = vpop.f32.mrf.mxu0
  %3196 = vmatprep.mubr.f32.mxu0 0.0
  %3197 = vmatmul.mubr.f32.gmra.mxu0 %v3099
  %v3198 = vpop.f32.mrf.mxu0
  %v3199 = vadd.f32 %v3070, %v3198
  %v3200 = vpop.f32.mrf.mxu0
  %3201 = vmatprep.mubr.f32.mxu0 0.0
  %3202 = vmatmul.mubr.f32.gmra.mxu0 %v3102
  %v3203 = vpop.f32.mrf.mxu0
  %v3204 = vadd.f32 %v3075, %v3203
  %v3205 = vpop.f32.mrf.mxu0
  %3206 = vmatprep.mubr.f32.mxu0 0.0
  %3207 = vmatmul.mubr.f32.gmra.mxu0 %v3105
  %v3208 = vpop.f32.mrf.mxu0
  %v3209 = vadd.f32 %v3080, %v3208
  %v3210 = vpop.f32.mrf.mxu0
  %3211 = vdwg.mxu0
  %3212 = vrot.lane.b32.xlu0 %v185, 112
  %v3213 = vpop.permute.xlu0 %3212
  %3214 = vrot.lane.b32.xlu0 %v185, 80
  %v3215 = vpop.permute.xlu0 %3214
  %v3216 = vsel %vm242, %v3213, 0
  %v3218 = vsel %vm242, %v3215, 0
  %3220 = vmatprep.subr.mxu0 0.0
  %3221 = vmatpush1.xpose.msra.mxu0 0.0
  %3222 = vmatprep.subr.mxu0 0.0
  %3223 = vmatpush1.xpose.msra.mxu0 0.0
  %3224 = vmatprep.subr.mxu0 0.0
  %3225 = vmatpush1.xpose.msra.mxu0 0.0
  %3226 = vmatprep.subr.mxu0 0.0
  %3227 = vmatpush1.xpose.msra.mxu0 0.0
  %3228 = vmatprep.subr.mxu0 0.0
  %3229 = vmatpush1.xpose.msra.mxu0 0.0
  %3230 = vmatprep.subr.mxu0 0.0
  %3231 = vmatpush1.xpose.msra.mxu0 0.0
  %3232 = vmatprep.subr.mxu0 0.0
  %3233 = vmatpush1.xpose.msra.mxu0 0.0
  %3234 = vmatprep.subr.mxu0 0.0
  %3235 = vmatpush1.xpose.msra.mxu0 0.0
  %3236 = vmatprep.subr.mxu0 0.0
  %3237 = vmatpush1.xpose.msra.mxu0 0.0
  %3238 = vmatprep.subr.mxu0 0.0
  %3239 = vmatpush1.xpose.msra.mxu0 0.0
  %3240 = vmatprep.subr.mxu0 0.0
  %3241 = vmatpush1.xpose.msra.mxu0 0.0
  %3242 = vmatprep.subr.mxu0 0.0
  %3243 = vmatpush1.xpose.msra.mxu0 0.0
  %3244 = vmatprep.subr.mxu0 0.0
  %3245 = vmatpush1.xpose.msra.mxu0 0.0
  %3246 = vmatprep.subr.mxu0 0.0
  %3247 = vmatpush1.xpose.msra.mxu0 0.0
  %3248 = vmatprep.subr.mxu0 0.0
  %3249 = vmatpush1.xpose.msra.mxu0 0.0
  %3250 = vmatprep.subr.mxu0 0.0
  %3251 = vmatpush1.xpose.msra.mxu0 %v3218
  %3252 = vmatprep.subr.mxu0 0.0
  %3253 = vmatpush2.xpose.msra.mxu0 0.0
  %3254 = vmatprep.subr.mxu0 0.0
  %3255 = vmatpush2.xpose.msra.mxu0 0.0
  %3256 = vmatprep.subr.mxu0 0.0
  %3257 = vmatpush2.xpose.msra.mxu0 0.0
  %3258 = vmatprep.subr.mxu0 0.0
  %3259 = vmatpush2.xpose.msra.mxu0 0.0
  %3260 = vmatprep.subr.mxu0 0.0
  %3261 = vmatpush2.xpose.msra.mxu0 0.0
  %3262 = vmatprep.subr.mxu0 0.0
  %3263 = vmatpush2.xpose.msra.mxu0 0.0
  %3264 = vmatprep.subr.mxu0 0.0
  %3265 = vmatpush2.xpose.msra.mxu0 0.0
  %3266 = vmatprep.subr.mxu0 0.0
  %3267 = vmatpush2.xpose.msra.mxu0 0.0
  %3268 = vmatprep.subr.mxu0 0.0
  %3269 = vmatpush2.xpose.msra.mxu0 0.0
  %3270 = vmatprep.subr.mxu0 0.0
  %3271 = vmatpush2.xpose.msra.mxu0 0.0
  %3272 = vmatprep.subr.mxu0 0.0
  %3273 = vmatpush2.xpose.msra.mxu0 0.0
  %3274 = vmatprep.subr.mxu0 0.0
  %3275 = vmatpush2.xpose.msra.mxu0 0.0
  %3276 = vmatprep.subr.mxu0 0.0
  %3277 = vmatpush2.xpose.msra.mxu0 0.0
  %3278 = vmatprep.subr.mxu0 0.0
  %3279 = vmatpush2.xpose.msra.mxu0 0.0
  %3280 = vmatprep.subr.mxu0 0.0
  %3281 = vmatpush2.xpose.msra.mxu0 0.0
  %3282 = vmatprep.subr.mxu0 0.0
  %3283 = vmatpush2.xpose.msra.mxu0 0.0
  %3284 = vmatprep.mubr.f32.mxu0 0.0
  %3285 = vmatmul.mubr.f32.gmra.mxu0 %v3216
  %v3286 = vpop.f32.mrf.mxu0
  %v3287 = vadd.f32 0.0, %v3286
  %v3288 = vpop.f32.mrf.mxu0
  %3289 = vdwg.mxu0
  %3290 = vrot.lane.b32.xlu0 %v190, 112
  %v3291 = vpop.permute.xlu0 %3290
  %3292 = vrot.lane.b32.xlu0 %v190, 80
  %v3293 = vpop.permute.xlu0 %3292
  %v3294 = vsel %vm242, %v3291, 0
  %v3296 = vsel %vm242, %v3293, 0
  %3298 = vmatprep.subr.mxu0 0.0
  %3299 = vmatpush1.xpose.msra.mxu0 0.0
  %3300 = vmatprep.subr.mxu0 0.0
  %3301 = vmatpush1.xpose.msra.mxu0 0.0
  %3302 = vmatprep.subr.mxu0 0.0
  %3303 = vmatpush1.xpose.msra.mxu0 0.0
  %3304 = vmatprep.subr.mxu0 0.0
  %3305 = vmatpush1.xpose.msra.mxu0 0.0
  %3306 = vmatprep.subr.mxu0 0.0
  %3307 = vmatpush1.xpose.msra.mxu0 0.0
  %3308 = vmatprep.subr.mxu0 0.0
  %3309 = vmatpush1.xpose.msra.mxu0 0.0
  %3310 = vmatprep.subr.mxu0 0.0
  %3311 = vmatpush1.xpose.msra.mxu0 0.0
  %3312 = vmatprep.subr.mxu0 0.0
  %3313 = vmatpush1.xpose.msra.mxu0 0.0
  %3314 = vmatprep.subr.mxu0 0.0
  %3315 = vmatpush1.xpose.msra.mxu0 0.0
  %3316 = vmatprep.subr.mxu0 0.0
  %3317 = vmatpush1.xpose.msra.mxu0 0.0
  %3318 = vmatprep.subr.mxu0 0.0
  %3319 = vmatpush1.xpose.msra.mxu0 0.0
  %3320 = vmatprep.subr.mxu0 0.0
  %3321 = vmatpush1.xpose.msra.mxu0 0.0
  %3322 = vmatprep.subr.mxu0 0.0
  %3323 = vmatpush1.xpose.msra.mxu0 0.0
  %3324 = vmatprep.subr.mxu0 0.0
  %3325 = vmatpush1.xpose.msra.mxu0 0.0
  %3326 = vmatprep.subr.mxu0 0.0
  %3327 = vmatpush1.xpose.msra.mxu0 0.0
  %3328 = vmatprep.subr.mxu0 0.0
  %3329 = vmatpush1.xpose.msra.mxu0 %v3296
  %3330 = vmatprep.subr.mxu0 0.0
  %3331 = vmatpush2.xpose.msra.mxu0 0.0
  %3332 = vmatprep.subr.mxu0 0.0
  %3333 = vmatpush2.xpose.msra.mxu0 0.0
  %3334 = vmatprep.subr.mxu0 0.0
  %3335 = vmatpush2.xpose.msra.mxu0 0.0
  %3336 = vmatprep.subr.mxu0 0.0
  %3337 = vmatpush2.xpose.msra.mxu0 0.0
  %3338 = vmatprep.subr.mxu0 0.0
  %3339 = vmatpush2.xpose.msra.mxu0 0.0
  %3340 = vmatprep.subr.mxu0 0.0
  %3341 = vmatpush2.xpose.msra.mxu0 0.0
  %3342 = vmatprep.subr.mxu0 0.0
  %3343 = vmatpush2.xpose.msra.mxu0 0.0
  %3344 = vmatprep.subr.mxu0 0.0
  %3345 = vmatpush2.xpose.msra.mxu0 0.0
  %3346 = vmatprep.subr.mxu0 0.0
  %3347 = vmatpush2.xpose.msra.mxu0 0.0
  %3348 = vmatprep.subr.mxu0 0.0
  %3349 = vmatpush2.xpose.msra.mxu0 0.0
  %3350 = vmatprep.subr.mxu0 0.0
  %3351 = vmatpush2.xpose.msra.mxu0 0.0
  %3352 = vmatprep.subr.mxu0 0.0
  %3353 = vmatpush2.xpose.msra.mxu0 0.0
  %3354 = vmatprep.subr.mxu0 0.0
  %3355 = vmatpush2.xpose.msra.mxu0 0.0
  %3356 = vmatprep.subr.mxu0 0.0
  %3357 = vmatpush2.xpose.msra.mxu0 0.0
  %3358 = vmatprep.subr.mxu0 0.0
  %3359 = vmatpush2.xpose.msra.mxu0 0.0
  %3360 = vmatprep.subr.mxu0 0.0
  %3361 = vmatpush2.xpose.msra.mxu0 0.0
  %3362 = vmatprep.mubr.f32.mxu0 0.0
  %3363 = vmatmul.mubr.f32.gmra.mxu0 %v3294
  %v3364 = vpop.f32.mrf.mxu0
  %v3365 = vadd.f32 0.0, %v3364
  %v3366 = vpop.f32.mrf.mxu0
  %3367 = vdwg.mxu0
  %3368 = vrot.lane.b32.xlu0 %v195, 112
  %v3369 = vpop.permute.xlu0 %3368
  %3370 = vrot.lane.b32.xlu0 %v195, 80
  %v3371 = vpop.permute.xlu0 %3370
  %v3372 = vsel %vm242, %v3369, 0
  %v3374 = vsel %vm242, %v3371, 0
  %3376 = vmatprep.subr.mxu0 0.0
  %3377 = vmatpush1.xpose.msra.mxu0 0.0
  %3378 = vmatprep.subr.mxu0 0.0
  %3379 = vmatpush1.xpose.msra.mxu0 0.0
  %3380 = vmatprep.subr.mxu0 0.0
  %3381 = vmatpush1.xpose.msra.mxu0 0.0
  %3382 = vmatprep.subr.mxu0 0.0
  %3383 = vmatpush1.xpose.msra.mxu0 0.0
  %3384 = vmatprep.subr.mxu0 0.0
  %3385 = vmatpush1.xpose.msra.mxu0 0.0
  %3386 = vmatprep.subr.mxu0 0.0
  %3387 = vmatpush1.xpose.msra.mxu0 0.0
  %3388 = vmatprep.subr.mxu0 0.0
  %3389 = vmatpush1.xpose.msra.mxu0 0.0
  %3390 = vmatprep.subr.mxu0 0.0
  %3391 = vmatpush1.xpose.msra.mxu0 0.0
  %3392 = vmatprep.subr.mxu0 0.0
  %3393 = vmatpush1.xpose.msra.mxu0 0.0
  %3394 = vmatprep.subr.mxu0 0.0
  %3395 = vmatpush1.xpose.msra.mxu0 0.0
  %3396 = vmatprep.subr.mxu0 0.0
  %3397 = vmatpush1.xpose.msra.mxu0 0.0
  %3398 = vmatprep.subr.mxu0 0.0
  %3399 = vmatpush1.xpose.msra.mxu0 0.0
  %3400 = vmatprep.subr.mxu0 0.0
  %3401 = vmatpush1.xpose.msra.mxu0 0.0
  %3402 = vmatprep.subr.mxu0 0.0
  %3403 = vmatpush1.xpose.msra.mxu0 0.0
  %3404 = vmatprep.subr.mxu0 0.0
  %3405 = vmatpush1.xpose.msra.mxu0 0.0
  %3406 = vmatprep.subr.mxu0 0.0
  %3407 = vmatpush1.xpose.msra.mxu0 %v3374
  %3408 = vmatprep.subr.mxu0 0.0
  %3409 = vmatpush2.xpose.msra.mxu0 0.0
  %3410 = vmatprep.subr.mxu0 0.0
  %3411 = vmatpush2.xpose.msra.mxu0 0.0
  %3412 = vmatprep.subr.mxu0 0.0
  %3413 = vmatpush2.xpose.msra.mxu0 0.0
  %3414 = vmatprep.subr.mxu0 0.0
  %3415 = vmatpush2.xpose.msra.mxu0 0.0
  %3416 = vmatprep.subr.mxu0 0.0
  %3417 = vmatpush2.xpose.msra.mxu0 0.0
  %3418 = vmatprep.subr.mxu0 0.0
  %3419 = vmatpush2.xpose.msra.mxu0 0.0
  %3420 = vmatprep.subr.mxu0 0.0
  %3421 = vmatpush2.xpose.msra.mxu0 0.0
  %3422 = vmatprep.subr.mxu0 0.0
  %3423 = vmatpush2.xpose.msra.mxu0 0.0
  %3424 = vmatprep.subr.mxu0 0.0
  %3425 = vmatpush2.xpose.msra.mxu0 0.0
  %3426 = vmatprep.subr.mxu0 0.0
  %3427 = vmatpush2.xpose.msra.mxu0 0.0
  %3428 = vmatprep.subr.mxu0 0.0
  %3429 = vmatpush2.xpose.msra.mxu0 0.0
  %3430 = vmatprep.subr.mxu0 0.0
  %3431 = vmatpush2.xpose.msra.mxu0 0.0
  %3432 = vmatprep.subr.mxu0 0.0
  %3433 = vmatpush2.xpose.msra.mxu0 0.0
  %3434 = vmatprep.subr.mxu0 0.0
  %3435 = vmatpush2.xpose.msra.mxu0 0.0
  %3436 = vmatprep.subr.mxu0 0.0
  %3437 = vmatpush2.xpose.msra.mxu0 0.0
  %3438 = vmatprep.subr.mxu0 0.0
  %3439 = vmatpush2.xpose.msra.mxu0 0.0
  %3440 = vmatprep.mubr.f32.mxu0 0.0
  %3441 = vmatmul.mubr.f32.gmra.mxu0 %v3372
  %v3442 = vpop.f32.mrf.mxu0
  %v3443 = vadd.f32 0.0, %v3442
  %v3444 = vpop.f32.mrf.mxu0
  %3445 = vdwg.mxu0
  %3446 = vrot.lane.b32.xlu0 %v200, 112
  %v3447 = vpop.permute.xlu0 %3446
  %3448 = vrot.lane.b32.xlu0 %v200, 80
  %v3449 = vpop.permute.xlu0 %3448
  %v3450 = vsel %vm242, %v3447, 0
  %v3452 = vsel %vm242, %v3449, 0
  %3454 = vmatprep.subr.mxu0 0.0
  %3455 = vmatpush1.xpose.msra.mxu0 0.0
  %3456 = vmatprep.subr.mxu0 0.0
  %3457 = vmatpush1.xpose.msra.mxu0 0.0
  %3458 = vmatprep.subr.mxu0 0.0
  %3459 = vmatpush1.xpose.msra.mxu0 0.0
  %3460 = vmatprep.subr.mxu0 0.0
  %3461 = vmatpush1.xpose.msra.mxu0 0.0
  %3462 = vmatprep.subr.mxu0 0.0
  %3463 = vmatpush1.xpose.msra.mxu0 0.0
  %3464 = vmatprep.subr.mxu0 0.0
  %3465 = vmatpush1.xpose.msra.mxu0 0.0
  %3466 = vmatprep.subr.mxu0 0.0
  %3467 = vmatpush1.xpose.msra.mxu0 0.0
  %3468 = vmatprep.subr.mxu0 0.0
  %3469 = vmatpush1.xpose.msra.mxu0 0.0
  %3470 = vmatprep.subr.mxu0 0.0
  %3471 = vmatpush1.xpose.msra.mxu0 0.0
  %3472 = vmatprep.subr.mxu0 0.0
  %3473 = vmatpush1.xpose.msra.mxu0 0.0
  %3474 = vmatprep.subr.mxu0 0.0
  %3475 = vmatpush1.xpose.msra.mxu0 0.0
  %3476 = vmatprep.subr.mxu0 0.0
  %3477 = vmatpush1.xpose.msra.mxu0 0.0
  %3478 = vmatprep.subr.mxu0 0.0
  %3479 = vmatpush1.xpose.msra.mxu0 0.0
  %3480 = vmatprep.subr.mxu0 0.0
  %3481 = vmatpush1.xpose.msra.mxu0 0.0
  %3482 = vmatprep.subr.mxu0 0.0
  %3483 = vmatpush1.xpose.msra.mxu0 0.0
  %3484 = vmatprep.subr.mxu0 0.0
  %3485 = vmatpush1.xpose.msra.mxu0 %v3452
  %3486 = vmatprep.subr.mxu0 0.0
  %3487 = vmatpush2.xpose.msra.mxu0 0.0
  %3488 = vmatprep.subr.mxu0 0.0
  %3489 = vmatpush2.xpose.msra.mxu0 0.0
  %3490 = vmatprep.subr.mxu0 0.0
  %3491 = vmatpush2.xpose.msra.mxu0 0.0
  %3492 = vmatprep.subr.mxu0 0.0
  %3493 = vmatpush2.xpose.msra.mxu0 0.0
  %3494 = vmatprep.subr.mxu0 0.0
  %3495 = vmatpush2.xpose.msra.mxu0 0.0
  %3496 = vmatprep.subr.mxu0 0.0
  %3497 = vmatpush2.xpose.msra.mxu0 0.0
  %3498 = vmatprep.subr.mxu0 0.0
  %3499 = vmatpush2.xpose.msra.mxu0 0.0
  %3500 = vmatprep.subr.mxu0 0.0
  %3501 = vmatpush2.xpose.msra.mxu0 0.0
  %3502 = vmatprep.subr.mxu0 0.0
  %3503 = vmatpush2.xpose.msra.mxu0 0.0
  %3504 = vmatprep.subr.mxu0 0.0
  %3505 = vmatpush2.xpose.msra.mxu0 0.0
  %3506 = vmatprep.subr.mxu0 0.0
  %3507 = vmatpush2.xpose.msra.mxu0 0.0
  %3508 = vmatprep.subr.mxu0 0.0
  %3509 = vmatpush2.xpose.msra.mxu0 0.0
  %3510 = vmatprep.subr.mxu0 0.0
  %3511 = vmatpush2.xpose.msra.mxu0 0.0
  %3512 = vmatprep.subr.mxu0 0.0
  %3513 = vmatpush2.xpose.msra.mxu0 0.0
  %3514 = vmatprep.subr.mxu0 0.0
  %3515 = vmatpush2.xpose.msra.mxu0 0.0
  %3516 = vmatprep.subr.mxu0 0.0
  %3517 = vmatpush2.xpose.msra.mxu0 0.0
  %3518 = vmatprep.mubr.f32.mxu0 0.0
  %3519 = vmatmul.mubr.f32.gmra.mxu0 %v3450
  %v3520 = vpop.f32.mrf.mxu0
  %v3521 = vadd.f32 0.0, %v3520
  %v3522 = vpop.f32.mrf.mxu0
  %3523 = vdwg.mxu0
  %3524 = vrot.lane.b32.xlu0 %v205, 112
  %v3525 = vpop.permute.xlu0 %3524
  %3526 = vrot.lane.b32.xlu0 %v205, 80
  %v3527 = vpop.permute.xlu0 %3526
  %v3528 = vsel %vm242, %v3525, 0
  %v3530 = vsel %vm242, %v3527, 0
  %3532 = vmatprep.subr.mxu0 0.0
  %3533 = vmatpush1.xpose.msra.mxu0 0.0
  %3534 = vmatprep.subr.mxu0 0.0
  %3535 = vmatpush1.xpose.msra.mxu0 0.0
  %3536 = vmatprep.subr.mxu0 0.0
  %3537 = vmatpush1.xpose.msra.mxu0 0.0
  %3538 = vmatprep.subr.mxu0 0.0
  %3539 = vmatpush1.xpose.msra.mxu0 0.0
  %3540 = vmatprep.subr.mxu0 0.0
  %3541 = vmatpush1.xpose.msra.mxu0 0.0
  %3542 = vmatprep.subr.mxu0 0.0
  %3543 = vmatpush1.xpose.msra.mxu0 0.0
  %3544 = vmatprep.subr.mxu0 0.0
  %3545 = vmatpush1.xpose.msra.mxu0 0.0
  %3546 = vmatprep.subr.mxu0 0.0
  %3547 = vmatpush1.xpose.msra.mxu0 0.0
  %3548 = vmatprep.subr.mxu0 0.0
  %3549 = vmatpush1.xpose.msra.mxu0 0.0
  %3550 = vmatprep.subr.mxu0 0.0
  %3551 = vmatpush1.xpose.msra.mxu0 0.0
  %3552 = vmatprep.subr.mxu0 0.0
  %3553 = vmatpush1.xpose.msra.mxu0 0.0
  %3554 = vmatprep.subr.mxu0 0.0
  %3555 = vmatpush1.xpose.msra.mxu0 0.0
  %3556 = vmatprep.subr.mxu0 0.0
  %3557 = vmatpush1.xpose.msra.mxu0 0.0
  %3558 = vmatprep.subr.mxu0 0.0
  %3559 = vmatpush1.xpose.msra.mxu0 0.0
  %3560 = vmatprep.subr.mxu0 0.0
  %3561 = vmatpush1.xpose.msra.mxu0 0.0
  %3562 = vmatprep.subr.mxu0 0.0
  %3563 = vmatpush1.xpose.msra.mxu0 %v3530
  %3564 = vmatprep.subr.mxu0 0.0
  %3565 = vmatpush2.xpose.msra.mxu0 0.0
  %3566 = vmatprep.subr.mxu0 0.0
  %3567 = vmatpush2.xpose.msra.mxu0 0.0
  %3568 = vmatprep.subr.mxu0 0.0
  %3569 = vmatpush2.xpose.msra.mxu0 0.0
  %3570 = vmatprep.subr.mxu0 0.0
  %3571 = vmatpush2.xpose.msra.mxu0 0.0
  %3572 = vmatprep.subr.mxu0 0.0
  %3573 = vmatpush2.xpose.msra.mxu0 0.0
  %3574 = vmatprep.subr.mxu0 0.0
  %3575 = vmatpush2.xpose.msra.mxu0 0.0
  %3576 = vmatprep.subr.mxu0 0.0
  %3577 = vmatpush2.xpose.msra.mxu0 0.0
  %3578 = vmatprep.subr.mxu0 0.0
  %3579 = vmatpush2.xpose.msra.mxu0 0.0
  %3580 = vmatprep.subr.mxu0 0.0
  %3581 = vmatpush2.xpose.msra.mxu0 0.0
  %3582 = vmatprep.subr.mxu0 0.0
  %3583 = vmatpush2.xpose.msra.mxu0 0.0
  %3584 = vmatprep.subr.mxu0 0.0
  %3585 = vmatpush2.xpose.msra.mxu0 0.0
  %3586 = vmatprep.subr.mxu0 0.0
  %3587 = vmatpush2.xpose.msra.mxu0 0.0
  %3588 = vmatprep.subr.mxu0 0.0
  %3589 = vmatpush2.xpose.msra.mxu0 0.0
  %3590 = vmatprep.subr.mxu0 0.0
  %3591 = vmatpush2.xpose.msra.mxu0 0.0
  %3592 = vmatprep.subr.mxu0 0.0
  %3593 = vmatpush2.xpose.msra.mxu0 0.0
  %3594 = vmatprep.subr.mxu0 0.0
  %3595 = vmatpush2.xpose.msra.mxu0 0.0
  %3596 = vmatprep.mubr.f32.mxu0 0.0
  %3597 = vmatmul.mubr.f32.gmra.mxu0 %v3528
  %v3598 = vpop.f32.mrf.mxu0
  %v3599 = vadd.f32 0.0, %v3598
  %v3600 = vpop.f32.mrf.mxu0
  %3601 = vdwg.mxu0
  %3602 = vrot.lane.b32.xlu0 %v210, 112
  %v3603 = vpop.permute.xlu0 %3602
  %3604 = vrot.lane.b32.xlu0 %v210, 80
  %v3605 = vpop.permute.xlu0 %3604
  %v3606 = vsel %vm242, %v3603, 0
  %v3608 = vsel %vm242, %v3605, 0
  %3610 = vmatprep.subr.mxu0 0.0
  %3611 = vmatpush1.xpose.msra.mxu0 0.0
  %3612 = vmatprep.subr.mxu0 0.0
  %3613 = vmatpush1.xpose.msra.mxu0 0.0
  %3614 = vmatprep.subr.mxu0 0.0
  %3615 = vmatpush1.xpose.msra.mxu0 0.0
  %3616 = vmatprep.subr.mxu0 0.0
  %3617 = vmatpush1.xpose.msra.mxu0 0.0
  %3618 = vmatprep.subr.mxu0 0.0
  %3619 = vmatpush1.xpose.msra.mxu0 0.0
  %3620 = vmatprep.subr.mxu0 0.0
  %3621 = vmatpush1.xpose.msra.mxu0 0.0
  %3622 = vmatprep.subr.mxu0 0.0
  %3623 = vmatpush1.xpose.msra.mxu0 0.0
  %3624 = vmatprep.subr.mxu0 0.0
  %3625 = vmatpush1.xpose.msra.mxu0 0.0
  %3626 = vmatprep.subr.mxu0 0.0
  %3627 = vmatpush1.xpose.msra.mxu0 0.0
  %3628 = vmatprep.subr.mxu0 0.0
  %3629 = vmatpush1.xpose.msra.mxu0 0.0
  %3630 = vmatprep.subr.mxu0 0.0
  %3631 = vmatpush1.xpose.msra.mxu0 0.0
  %3632 = vmatprep.subr.mxu0 0.0
  %3633 = vmatpush1.xpose.msra.mxu0 0.0
  %3634 = vmatprep.subr.mxu0 0.0
  %3635 = vmatpush1.xpose.msra.mxu0 0.0
  %3636 = vmatprep.subr.mxu0 0.0
  %3637 = vmatpush1.xpose.msra.mxu0 0.0
  %3638 = vmatprep.subr.mxu0 0.0
  %3639 = vmatpush1.xpose.msra.mxu0 0.0
  %3640 = vmatprep.subr.mxu0 0.0
  %3641 = vmatpush1.xpose.msra.mxu0 %v3608
  %3642 = vmatprep.subr.mxu0 0.0
  %3643 = vmatpush2.xpose.msra.mxu0 0.0
  %3644 = vmatprep.subr.mxu0 0.0
  %3645 = vmatpush2.xpose.msra.mxu0 0.0
  %3646 = vmatprep.subr.mxu0 0.0
  %3647 = vmatpush2.xpose.msra.mxu0 0.0
  %3648 = vmatprep.subr.mxu0 0.0
  %3649 = vmatpush2.xpose.msra.mxu0 0.0
  %3650 = vmatprep.subr.mxu0 0.0
  %3651 = vmatpush2.xpose.msra.mxu0 0.0
  %3652 = vmatprep.subr.mxu0 0.0
  %3653 = vmatpush2.xpose.msra.mxu0 0.0
  %3654 = vmatprep.subr.mxu0 0.0
  %3655 = vmatpush2.xpose.msra.mxu0 0.0
  %3656 = vmatprep.subr.mxu0 0.0
  %3657 = vmatpush2.xpose.msra.mxu0 0.0
  %3658 = vmatprep.subr.mxu0 0.0
  %3659 = vmatpush2.xpose.msra.mxu0 0.0
  %3660 = vmatprep.subr.mxu0 0.0
  %3661 = vmatpush2.xpose.msra.mxu0 0.0
  %3662 = vmatprep.subr.mxu0 0.0
  %3663 = vmatpush2.xpose.msra.mxu0 0.0
  %3664 = vmatprep.subr.mxu0 0.0
  %3665 = vmatpush2.xpose.msra.mxu0 0.0
  %3666 = vmatprep.subr.mxu0 0.0
  %3667 = vmatpush2.xpose.msra.mxu0 0.0
  %3668 = vmatprep.subr.mxu0 0.0
  %3669 = vmatpush2.xpose.msra.mxu0 0.0
  %3670 = vmatprep.subr.mxu0 0.0
  %3671 = vmatpush2.xpose.msra.mxu0 0.0
  %3672 = vmatprep.subr.mxu0 0.0
  %3673 = vmatpush2.xpose.msra.mxu0 0.0
  %3674 = vmatprep.mubr.f32.mxu0 0.0
  %3675 = vmatmul.mubr.f32.gmra.mxu0 %v3606
  %v3676 = vpop.f32.mrf.mxu0
  %v3677 = vadd.f32 0.0, %v3676
  %v3678 = vpop.f32.mrf.mxu0
  %3679 = vdwg.mxu0
  %3680 = vrot.lane.b32.xlu0 %v215, 112
  %v3681 = vpop.permute.xlu0 %3680
  %3682 = vrot.lane.b32.xlu0 %v215, 80
  %v3683 = vpop.permute.xlu0 %3682
  %v3684 = vsel %vm242, %v3681, 0
  %v3686 = vsel %vm242, %v3683, 0
  %3688 = vmatprep.subr.mxu0 0.0
  %3689 = vmatpush1.xpose.msra.mxu0 0.0
  %3690 = vmatprep.subr.mxu0 0.0
  %3691 = vmatpush1.xpose.msra.mxu0 0.0
  %3692 = vmatprep.subr.mxu0 0.0
  %3693 = vmatpush1.xpose.msra.mxu0 0.0
  %3694 = vmatprep.subr.mxu0 0.0
  %3695 = vmatpush1.xpose.msra.mxu0 0.0
  %3696 = vmatprep.subr.mxu0 0.0
  %3697 = vmatpush1.xpose.msra.mxu0 0.0
  %3698 = vmatprep.subr.mxu0 0.0
  %3699 = vmatpush1.xpose.msra.mxu0 0.0
  %3700 = vmatprep.subr.mxu0 0.0
  %3701 = vmatpush1.xpose.msra.mxu0 0.0
  %3702 = vmatprep.subr.mxu0 0.0
  %3703 = vmatpush1.xpose.msra.mxu0 0.0
  %3704 = vmatprep.subr.mxu0 0.0
  %3705 = vmatpush1.xpose.msra.mxu0 0.0
  %3706 = vmatprep.subr.mxu0 0.0
  %3707 = vmatpush1.xpose.msra.mxu0 0.0
  %3708 = vmatprep.subr.mxu0 0.0
  %3709 = vmatpush1.xpose.msra.mxu0 0.0
  %3710 = vmatprep.subr.mxu0 0.0
  %3711 = vmatpush1.xpose.msra.mxu0 0.0
  %3712 = vmatprep.subr.mxu0 0.0
  %3713 = vmatpush1.xpose.msra.mxu0 0.0
  %3714 = vmatprep.subr.mxu0 0.0
  %3715 = vmatpush1.xpose.msra.mxu0 0.0
  %3716 = vmatprep.subr.mxu0 0.0
  %3717 = vmatpush1.xpose.msra.mxu0 0.0
  %3718 = vmatprep.subr.mxu0 0.0
  %3719 = vmatpush1.xpose.msra.mxu0 %v3686
  %3720 = vmatprep.subr.mxu0 0.0
  %3721 = vmatpush2.xpose.msra.mxu0 0.0
  %3722 = vmatprep.subr.mxu0 0.0
  %3723 = vmatpush2.xpose.msra.mxu0 0.0
  %3724 = vmatprep.subr.mxu0 0.0
  %3725 = vmatpush2.xpose.msra.mxu0 0.0
  %3726 = vmatprep.subr.mxu0 0.0
  %3727 = vmatpush2.xpose.msra.mxu0 0.0
  %3728 = vmatprep.subr.mxu0 0.0
  %3729 = vmatpush2.xpose.msra.mxu0 0.0
  %3730 = vmatprep.subr.mxu0 0.0
  %3731 = vmatpush2.xpose.msra.mxu0 0.0
  %3732 = vmatprep.subr.mxu0 0.0
  %3733 = vmatpush2.xpose.msra.mxu0 0.0
  %3734 = vmatprep.subr.mxu0 0.0
  %3735 = vmatpush2.xpose.msra.mxu0 0.0
  %3736 = vmatprep.subr.mxu0 0.0
  %3737 = vmatpush2.xpose.msra.mxu0 0.0
  %3738 = vmatprep.subr.mxu0 0.0
  %3739 = vmatpush2.xpose.msra.mxu0 0.0
  %3740 = vmatprep.subr.mxu0 0.0
  %3741 = vmatpush2.xpose.msra.mxu0 0.0
  %3742 = vmatprep.subr.mxu0 0.0
  %3743 = vmatpush2.xpose.msra.mxu0 0.0
  %3744 = vmatprep.subr.mxu0 0.0
  %3745 = vmatpush2.xpose.msra.mxu0 0.0
  %3746 = vmatprep.subr.mxu0 0.0
  %3747 = vmatpush2.xpose.msra.mxu0 0.0
  %3748 = vmatprep.subr.mxu0 0.0
  %3749 = vmatpush2.xpose.msra.mxu0 0.0
  %3750 = vmatprep.subr.mxu0 0.0
  %3751 = vmatpush2.xpose.msra.mxu0 0.0
  %3752 = vmatprep.mubr.f32.mxu0 0.0
  %3753 = vmatmul.mubr.f32.gmra.mxu0 %v3684
  %v3754 = vpop.f32.mrf.mxu0
  %v3755 = vadd.f32 0.0, %v3754
  %v3756 = vpop.f32.mrf.mxu0
  %3757 = vdwg.mxu0
  %3758 = vrot.lane.b32.xlu0 %v220, 112
  %v3759 = vpop.permute.xlu0 %3758
  %3760 = vrot.lane.b32.xlu0 %v220, 80
  %v3761 = vpop.permute.xlu0 %3760
  %v3762 = vsel %vm242, %v3759, 0
  %v3764 = vsel %vm242, %v3761, 0
  %3766 = vmatprep.subr.mxu0 0.0
  %3767 = vmatpush1.xpose.msra.mxu0 0.0
  %3768 = vmatprep.subr.mxu0 0.0
  %3769 = vmatpush1.xpose.msra.mxu0 0.0
  %3770 = vmatprep.subr.mxu0 0.0
  %3771 = vmatpush1.xpose.msra.mxu0 0.0
  %3772 = vmatprep.subr.mxu0 0.0
  %3773 = vmatpush1.xpose.msra.mxu0 0.0
  %3774 = vmatprep.subr.mxu0 0.0
  %3775 = vmatpush1.xpose.msra.mxu0 0.0
  %3776 = vmatprep.subr.mxu0 0.0
  %3777 = vmatpush1.xpose.msra.mxu0 0.0
  %3778 = vmatprep.subr.mxu0 0.0
  %3779 = vmatpush1.xpose.msra.mxu0 0.0
  %3780 = vmatprep.subr.mxu0 0.0
  %3781 = vmatpush1.xpose.msra.mxu0 0.0
  %3782 = vmatprep.subr.mxu0 0.0
  %3783 = vmatpush1.xpose.msra.mxu0 0.0
  %3784 = vmatprep.subr.mxu0 0.0
  %3785 = vmatpush1.xpose.msra.mxu0 0.0
  %3786 = vmatprep.subr.mxu0 0.0
  %3787 = vmatpush1.xpose.msra.mxu0 0.0
  %3788 = vmatprep.subr.mxu0 0.0
  %3789 = vmatpush1.xpose.msra.mxu0 0.0
  %3790 = vmatprep.subr.mxu0 0.0
  %3791 = vmatpush1.xpose.msra.mxu0 0.0
  %3792 = vmatprep.subr.mxu0 0.0
  %3793 = vmatpush1.xpose.msra.mxu0 0.0
  %3794 = vmatprep.subr.mxu0 0.0
  %3795 = vmatpush1.xpose.msra.mxu0 0.0
  %3796 = vmatprep.subr.mxu0 0.0
  %3797 = vmatpush1.xpose.msra.mxu0 %v3764
  %3798 = vmatprep.subr.mxu0 0.0
  %3799 = vmatpush2.xpose.msra.mxu0 0.0
  %3800 = vmatprep.subr.mxu0 0.0
  %3801 = vmatpush2.xpose.msra.mxu0 0.0
  %3802 = vmatprep.subr.mxu0 0.0
  %3803 = vmatpush2.xpose.msra.mxu0 0.0
  %3804 = vmatprep.subr.mxu0 0.0
  %3805 = vmatpush2.xpose.msra.mxu0 0.0
  %3806 = vmatprep.subr.mxu0 0.0
  %3807 = vmatpush2.xpose.msra.mxu0 0.0
  %3808 = vmatprep.subr.mxu0 0.0
  %3809 = vmatpush2.xpose.msra.mxu0 0.0
  %3810 = vmatprep.subr.mxu0 0.0
  %3811 = vmatpush2.xpose.msra.mxu0 0.0
  %3812 = vmatprep.subr.mxu0 0.0
  %3813 = vmatpush2.xpose.msra.mxu0 0.0
  %3814 = vmatprep.subr.mxu0 0.0
  %3815 = vmatpush2.xpose.msra.mxu0 0.0
  %3816 = vmatprep.subr.mxu0 0.0
  %3817 = vmatpush2.xpose.msra.mxu0 0.0
  %3818 = vmatprep.subr.mxu0 0.0
  %3819 = vmatpush2.xpose.msra.mxu0 0.0
  %3820 = vmatprep.subr.mxu0 0.0
  %3821 = vmatpush2.xpose.msra.mxu0 0.0
  %3822 = vmatprep.subr.mxu0 0.0
  %3823 = vmatpush2.xpose.msra.mxu0 0.0
  %3824 = vmatprep.subr.mxu0 0.0
  %3825 = vmatpush2.xpose.msra.mxu0 0.0
  %3826 = vmatprep.subr.mxu0 0.0
  %3827 = vmatpush2.xpose.msra.mxu0 0.0
  %3828 = vmatprep.subr.mxu0 0.0
  %3829 = vmatpush2.xpose.msra.mxu0 0.0
  %3830 = vmatprep.mubr.f32.mxu0 0.0
  %3831 = vmatmul.mubr.f32.gmra.mxu0 %v3762
  %v3832 = vpop.f32.mrf.mxu0
  %v3833 = vadd.f32 0.0, %v3832
  %v3834 = vpop.f32.mrf.mxu0
  %3835 = vdwg.mxu0
  %v3836 = vmul.f32 %v3287, 0.35355338
  %v3837 = vmul.f32 %v3365, 0.35355338
  %v3838 = vmul.f32 %v3443, 0.35355338
  %v3839 = vmul.f32 %v3521, 0.35355338
  %v3840 = vmul.f32 %v3599, 0.35355338
  %v3841 = vmul.f32 %v3677, 0.35355338
  %v3842 = vmul.f32 %v3755, 0.35355338
  %v3843 = vmul.f32 %v3833, 0.35355338
  %v3844 = vadd.f32 %v3836, %v875
  %v3845 = vadd.f32 %v3837, %v879
  %v3846 = vadd.f32 %v3838, %v883
  %v3847 = vadd.f32 %v3839, %v887
  %v3848 = vadd.f32 %v3840, %v891
  %v3849 = vadd.f32 %v3841, %v895
  %v3850 = vadd.f32 %v3842, %v899
  %v3851 = vadd.f32 %v3843, %v903
  %v3852 = vsel %vm242, %v3844, -inf
  %3853 = vmax.xlane.f32.xlu0 %v3852
  %v3854 = vpop.xlane.xlu0 %3853
  %v3855 = vsel %vm242, %v3845, -inf
  %3856 = vmax.xlane.f32.xlu0 %v3855
  %v3857 = vpop.xlane.xlu0 %3856
  %v3858 = vsel %vm242, %v3846, -inf
  %3859 = vmax.xlane.f32.xlu0 %v3858
  %v3860 = vpop.xlane.xlu0 %3859
  %v3861 = vsel %vm242, %v3847, -inf
  %3862 = vmax.xlane.f32.xlu0 %v3861
  %v3863 = vpop.xlane.xlu0 %3862
  %v3864 = vsel %vm242, %v3848, -inf
  %3865 = vmax.xlane.f32.xlu0 %v3864
  %v3866 = vpop.xlane.xlu0 %3865
  %v3867 = vsel %vm242, %v3849, -inf
  %3868 = vmax.xlane.f32.xlu0 %v3867
  %v3869 = vpop.xlane.xlu0 %3868
  %v3870 = vsel %vm242, %v3850, -inf
  %3871 = vmax.xlane.f32.xlu0 %v3870
  %v3872 = vpop.xlane.xlu0 %3871
  %v3873 = vsel %vm242, %v3851, -inf
  %3874 = vmax.xlane.f32.xlu0 %v3873
  %v3875 = vpop.xlane.xlu0 %3874
  %v3876 = vsub.f32 %v3844, %v3854
  %v3877 = vsub.f32 %v3845, %v3857
  %v3878 = vsub.f32 %v3846, %v3860
  %v3879 = vsub.f32 %v3847, %v3863
  %v3880 = vsub.f32 %v3848, %v3866
  %v3881 = vsub.f32 %v3849, %v3869
  %v3882 = vsub.f32 %v3850, %v3872
  %v3883 = vsub.f32 %v3851, %v3875
  %v3884 = vmul.f32 %v3876, 1.442695
  %v3885 = vpow.pop %v3884
  %v3886 = vmul.f32 %v3877, 1.442695
  %v3887 = vpow.pop %v3886
  %v3888 = vmul.f32 %v3878, 1.442695
  %v3889 = vpow.pop %v3888
  %v3890 = vmul.f32 %v3879, 1.442695
  %v3891 = vpow.pop %v3890
  %v3892 = vmul.f32 %v3880, 1.442695
  %v3893 = vpow.pop %v3892
  %v3894 = vmul.f32 %v3881, 1.442695
  %v3895 = vpow.pop %v3894
  %v3896 = vmul.f32 %v3882, 1.442695
  %v3897 = vpow.pop %v3896
  %v3898 = vmul.f32 %v3883, 1.442695
  %v3899 = vpow.pop %v3898
  %v3900 = vsel %vm242, %v3885, 0.0
  %3901 = vadd.xlane.f32.xlu0 %v3900
  %v3902 = vpop.xlane.xlu0 %3901
  %v3903 = vsel %vm242, %v3887, 0.0
  %3904 = vadd.xlane.f32.xlu0 %v3903
  %v3905 = vpop.xlane.xlu0 %3904
  %v3906 = vsel %vm242, %v3889, 0.0
  %3907 = vadd.xlane.f32.xlu0 %v3906
  %v3908 = vpop.xlane.xlu0 %3907
  %v3909 = vsel %vm242, %v3891, 0.0
  %3910 = vadd.xlane.f32.xlu0 %v3909
  %v3911 = vpop.xlane.xlu0 %3910
  %v3912 = vsel %vm242, %v3893, 0.0
  %3913 = vadd.xlane.f32.xlu0 %v3912
  %v3914 = vpop.xlane.xlu0 %3913
  %v3915 = vsel %vm242, %v3895, 0.0
  %3916 = vadd.xlane.f32.xlu0 %v3915
  %v3917 = vpop.xlane.xlu0 %3916
  %v3918 = vsel %vm242, %v3897, 0.0
  %3919 = vadd.xlane.f32.xlu0 %v3918
  %v3920 = vpop.xlane.xlu0 %3919
  %v3921 = vsel %vm242, %v3899, 0.0
  %3922 = vadd.xlane.f32.xlu0 %v3921
  %v3923 = vpop.xlane.xlu0 %3922
  %v3924 = vrcp.pop %v3902
  %v3925 = vrcp.pop %v3905
  %v3926 = vrcp.pop %v3908
  %v3927 = vrcp.pop %v3911
  %v3928 = vrcp.pop %v3914
  %v3929 = vrcp.pop %v3917
  %v3930 = vrcp.pop %v3920
  %v3931 = vrcp.pop %v3923
  %v3932 = vmul.f32 %v3885, %v3924
  %v3933 = vmul.f32 %v3887, %v3925
  %v3934 = vmul.f32 %v3889, %v3926
  %v3935 = vmul.f32 %v3891, %v3927
  %v3936 = vmul.f32 %v3893, %v3928
  %v3937 = vmul.f32 %v3895, %v3929
  %v3938 = vmul.f32 %v3897, %v3930
  %v3939 = vmul.f32 %v3899, %v3931
  %3940 = vrot.lane.b32.xlu0 %v185, 48
  %v3941 = vpop.permute.xlu0 %3940
  %v3944 = vsel %vm242, %v3932, 0
  %3946 = vmatprep.subr.mxu0 0.0
  %3947 = vmatpush1.msra.mxu0 0.0
  %3948 = vmatprep.subr.mxu0 0.0
  %3949 = vmatpush1.msra.mxu0 0.0
  %3950 = vmatprep.subr.mxu0 0.0
  %3951 = vmatpush1.msra.mxu0 0.0
  %3952 = vmatprep.subr.mxu0 0.0
  %3953 = vmatpush1.msra.mxu0 0.0
  %3954 = vmatprep.subr.mxu0 0.0
  %3955 = vmatpush1.msra.mxu0 0.0
  %3956 = vmatprep.subr.mxu0 0.0
  %3957 = vmatpush1.msra.mxu0 0.0
  %3958 = vmatprep.subr.mxu0 0.0
  %3959 = vmatpush1.msra.mxu0 0.0
  %3960 = vmatprep.subr.mxu0 0.0
  %3961 = vmatpush1.msra.mxu0 0.0
  %3962 = vmatprep.subr.mxu0 0.0
  %3963 = vmatpush1.msra.mxu0 0.0
  %3964 = vmatprep.subr.mxu0 0.0
  %3965 = vmatpush1.msra.mxu0 0.0
  %3966 = vmatprep.subr.mxu0 0.0
  %3967 = vmatpush1.msra.mxu0 0.0
  %3968 = vmatprep.subr.mxu0 0.0
  %3969 = vmatpush1.msra.mxu0 0.0
  %3970 = vmatprep.subr.mxu0 0.0
  %3971 = vmatpush1.msra.mxu0 0.0
  %3972 = vmatprep.subr.mxu0 0.0
  %3973 = vmatpush1.msra.mxu0 0.0
  %3974 = vmatprep.subr.mxu0 0.0
  %3975 = vmatpush1.msra.mxu0 0.0
  %3976 = vmatprep.subr.mxu0 0.0
  %3977 = vmatpush1.msra.mxu0 %v3941
  %3978 = vmatprep.subr.mxu0 0.0
  %3979 = vmatpush2.msra.mxu0 0.0
  %3980 = vmatprep.subr.mxu0 0.0
  %3981 = vmatpush2.msra.mxu0 0.0
  %3982 = vmatprep.subr.mxu0 0.0
  %3983 = vmatpush2.msra.mxu0 0.0
  %3984 = vmatprep.subr.mxu0 0.0
  %3985 = vmatpush2.msra.mxu0 0.0
  %3986 = vmatprep.subr.mxu0 0.0
  %3987 = vmatpush2.msra.mxu0 0.0
  %3988 = vmatprep.subr.mxu0 0.0
  %3989 = vmatpush2.msra.mxu0 0.0
  %3990 = vmatprep.subr.mxu0 0.0
  %3991 = vmatpush2.msra.mxu0 0.0
  %3992 = vmatprep.subr.mxu0 0.0
  %3993 = vmatpush2.msra.mxu0 0.0
  %3994 = vmatprep.subr.mxu0 0.0
  %3995 = vmatpush2.msra.mxu0 0.0
  %3996 = vmatprep.subr.mxu0 0.0
  %3997 = vmatpush2.msra.mxu0 0.0
  %3998 = vmatprep.subr.mxu0 0.0
  %3999 = vmatpush2.msra.mxu0 0.0
  %4000 = vmatprep.subr.mxu0 0.0
  %4001 = vmatpush2.msra.mxu0 0.0
  %4002 = vmatprep.subr.mxu0 0.0
  %4003 = vmatpush2.msra.mxu0 0.0
  %4004 = vmatprep.subr.mxu0 0.0
  %4005 = vmatpush2.msra.mxu0 0.0
  %4006 = vmatprep.subr.mxu0 0.0
  %4007 = vmatpush2.msra.mxu0 0.0
  %4008 = vmatprep.subr.mxu0 0.0
  %4009 = vmatpush2.msra.mxu0 0.0
  %4010 = vmatprep.mubr.f32.mxu0 0.0
  %4011 = vmatmul.mubr.f32.gmra.mxu0 %v3944
  %v4012 = vpop.f32.mrf.mxu0
  %v4013 = vadd.f32 0.0, %v4012
  %v4014 = vpop.f32.mrf.mxu0
  %4015 = vdwg.mxu0
  %4016 = vrot.lane.b32.xlu0 %v190, 48
  %v4017 = vpop.permute.xlu0 %4016
  %v4020 = vsel %vm242, %v3933, 0
  %4022 = vmatprep.subr.mxu0 0.0
  %4023 = vmatpush1.msra.mxu0 0.0
  %4024 = vmatprep.subr.mxu0 0.0
  %4025 = vmatpush1.msra.mxu0 0.0
  %4026 = vmatprep.subr.mxu0 0.0
  %4027 = vmatpush1.msra.mxu0 0.0
  %4028 = vmatprep.subr.mxu0 0.0
  %4029 = vmatpush1.msra.mxu0 0.0
  %4030 = vmatprep.subr.mxu0 0.0
  %4031 = vmatpush1.msra.mxu0 0.0
  %4032 = vmatprep.subr.mxu0 0.0
  %4033 = vmatpush1.msra.mxu0 0.0
  %4034 = vmatprep.subr.mxu0 0.0
  %4035 = vmatpush1.msra.mxu0 0.0
  %4036 = vmatprep.subr.mxu0 0.0
  %4037 = vmatpush1.msra.mxu0 0.0
  %4038 = vmatprep.subr.mxu0 0.0
  %4039 = vmatpush1.msra.mxu0 0.0
  %4040 = vmatprep.subr.mxu0 0.0
  %4041 = vmatpush1.msra.mxu0 0.0
  %4042 = vmatprep.subr.mxu0 0.0
  %4043 = vmatpush1.msra.mxu0 0.0
  %4044 = vmatprep.subr.mxu0 0.0
  %4045 = vmatpush1.msra.mxu0 0.0
  %4046 = vmatprep.subr.mxu0 0.0
  %4047 = vmatpush1.msra.mxu0 0.0
  %4048 = vmatprep.subr.mxu0 0.0
  %4049 = vmatpush1.msra.mxu0 0.0
  %4050 = vmatprep.subr.mxu0 0.0
  %4051 = vmatpush1.msra.mxu0 0.0
  %4052 = vmatprep.subr.mxu0 0.0
  %4053 = vmatpush1.msra.mxu0 %v4017
  %4054 = vmatprep.subr.mxu0 0.0
  %4055 = vmatpush2.msra.mxu0 0.0
  %4056 = vmatprep.subr.mxu0 0.0
  %4057 = vmatpush2.msra.mxu0 0.0
  %4058 = vmatprep.subr.mxu0 0.0
  %4059 = vmatpush2.msra.mxu0 0.0
  %4060 = vmatprep.subr.mxu0 0.0
  %4061 = vmatpush2.msra.mxu0 0.0
  %4062 = vmatprep.subr.mxu0 0.0
  %4063 = vmatpush2.msra.mxu0 0.0
  %4064 = vmatprep.subr.mxu0 0.0
  %4065 = vmatpush2.msra.mxu0 0.0
  %4066 = vmatprep.subr.mxu0 0.0
  %4067 = vmatpush2.msra.mxu0 0.0
  %4068 = vmatprep.subr.mxu0 0.0
  %4069 = vmatpush2.msra.mxu0 0.0
  %4070 = vmatprep.subr.mxu0 0.0
  %4071 = vmatpush2.msra.mxu0 0.0
  %4072 = vmatprep.subr.mxu0 0.0
  %4073 = vmatpush2.msra.mxu0 0.0
  %4074 = vmatprep.subr.mxu0 0.0
  %4075 = vmatpush2.msra.mxu0 0.0
  %4076 = vmatprep.subr.mxu0 0.0
  %4077 = vmatpush2.msra.mxu0 0.0
  %4078 = vmatprep.subr.mxu0 0.0
  %4079 = vmatpush2.msra.mxu0 0.0
  %4080 = vmatprep.subr.mxu0 0.0
  %4081 = vmatpush2.msra.mxu0 0.0
  %4082 = vmatprep.subr.mxu0 0.0
  %4083 = vmatpush2.msra.mxu0 0.0
  %4084 = vmatprep.subr.mxu0 0.0
  %4085 = vmatpush2.msra.mxu0 0.0
  %4086 = vmatprep.mubr.f32.mxu0 0.0
  %4087 = vmatmul.mubr.f32.gmra.mxu0 %v4020
  %v4088 = vpop.f32.mrf.mxu0
  %v4089 = vadd.f32 0.0, %v4088
  %v4090 = vpop.f32.mrf.mxu0
  %4091 = vdwg.mxu0
  %4092 = vrot.lane.b32.xlu0 %v195, 48
  %v4093 = vpop.permute.xlu0 %4092
  %v4096 = vsel %vm242, %v3934, 0
  %4098 = vmatprep.subr.mxu0 0.0
  %4099 = vmatpush1.msra.mxu0 0.0
  %4100 = vmatprep.subr.mxu0 0.0
  %4101 = vmatpush1.msra.mxu0 0.0
  %4102 = vmatprep.subr.mxu0 0.0
  %4103 = vmatpush1.msra.mxu0 0.0
  %4104 = vmatprep.subr.mxu0 0.0
  %4105 = vmatpush1.msra.mxu0 0.0
  %4106 = vmatprep.subr.mxu0 0.0
  %4107 = vmatpush1.msra.mxu0 0.0
  %4108 = vmatprep.subr.mxu0 0.0
  %4109 = vmatpush1.msra.mxu0 0.0
  %4110 = vmatprep.subr.mxu0 0.0
  %4111 = vmatpush1.msra.mxu0 0.0
  %4112 = vmatprep.subr.mxu0 0.0
  %4113 = vmatpush1.msra.mxu0 0.0
  %4114 = vmatprep.subr.mxu0 0.0
  %4115 = vmatpush1.msra.mxu0 0.0
  %4116 = vmatprep.subr.mxu0 0.0
  %4117 = vmatpush1.msra.mxu0 0.0
  %4118 = vmatprep.subr.mxu0 0.0
  %4119 = vmatpush1.msra.mxu0 0.0
  %4120 = vmatprep.subr.mxu0 0.0
  %4121 = vmatpush1.msra.mxu0 0.0
  %4122 = vmatprep.subr.mxu0 0.0
  %4123 = vmatpush1.msra.mxu0 0.0
  %4124 = vmatprep.subr.mxu0 0.0
  %4125 = vmatpush1.msra.mxu0 0.0
  %4126 = vmatprep.subr.mxu0 0.0
  %4127 = vmatpush1.msra.mxu0 0.0
  %4128 = vmatprep.subr.mxu0 0.0
  %4129 = vmatpush1.msra.mxu0 %v4093
  %4130 = vmatprep.subr.mxu0 0.0
  %4131 = vmatpush2.msra.mxu0 0.0
  %4132 = vmatprep.subr.mxu0 0.0
  %4133 = vmatpush2.msra.mxu0 0.0
  %4134 = vmatprep.subr.mxu0 0.0
  %4135 = vmatpush2.msra.mxu0 0.0
  %4136 = vmatprep.subr.mxu0 0.0
  %4137 = vmatpush2.msra.mxu0 0.0
  %4138 = vmatprep.subr.mxu0 0.0
  %4139 = vmatpush2.msra.mxu0 0.0
  %4140 = vmatprep.subr.mxu0 0.0
  %4141 = vmatpush2.msra.mxu0 0.0
  %4142 = vmatprep.subr.mxu0 0.0
  %4143 = vmatpush2.msra.mxu0 0.0
  %4144 = vmatprep.subr.mxu0 0.0
  %4145 = vmatpush2.msra.mxu0 0.0
  %4146 = vmatprep.subr.mxu0 0.0
  %4147 = vmatpush2.msra.mxu0 0.0
  %4148 = vmatprep.subr.mxu0 0.0
  %4149 = vmatpush2.msra.mxu0 0.0
  %4150 = vmatprep.subr.mxu0 0.0
  %4151 = vmatpush2.msra.mxu0 0.0
  %4152 = vmatprep.subr.mxu0 0.0
  %4153 = vmatpush2.msra.mxu0 0.0
  %4154 = vmatprep.subr.mxu0 0.0
  %4155 = vmatpush2.msra.mxu0 0.0
  %4156 = vmatprep.subr.mxu0 0.0
  %4157 = vmatpush2.msra.mxu0 0.0
  %4158 = vmatprep.subr.mxu0 0.0
  %4159 = vmatpush2.msra.mxu0 0.0
  %4160 = vmatprep.subr.mxu0 0.0
  %4161 = vmatpush2.msra.mxu0 0.0
  %4162 = vmatprep.mubr.f32.mxu0 0.0
  %4163 = vmatmul.mubr.f32.gmra.mxu0 %v4096
  %v4164 = vpop.f32.mrf.mxu0
  %v4165 = vadd.f32 0.0, %v4164
  %v4166 = vpop.f32.mrf.mxu0
  %4167 = vdwg.mxu0
  %4168 = vrot.lane.b32.xlu0 %v200, 48
  %v4169 = vpop.permute.xlu0 %4168
  %v4172 = vsel %vm242, %v3935, 0
  %4174 = vmatprep.subr.mxu0 0.0
  %4175 = vmatpush1.msra.mxu0 0.0
  %4176 = vmatprep.subr.mxu0 0.0
  %4177 = vmatpush1.msra.mxu0 0.0
  %4178 = vmatprep.subr.mxu0 0.0
  %4179 = vmatpush1.msra.mxu0 0.0
  %4180 = vmatprep.subr.mxu0 0.0
  %4181 = vmatpush1.msra.mxu0 0.0
  %4182 = vmatprep.subr.mxu0 0.0
  %4183 = vmatpush1.msra.mxu0 0.0
  %4184 = vmatprep.subr.mxu0 0.0
  %4185 = vmatpush1.msra.mxu0 0.0
  %4186 = vmatprep.subr.mxu0 0.0
  %4187 = vmatpush1.msra.mxu0 0.0
  %4188 = vmatprep.subr.mxu0 0.0
  %4189 = vmatpush1.msra.mxu0 0.0
  %4190 = vmatprep.subr.mxu0 0.0
  %4191 = vmatpush1.msra.mxu0 0.0
  %4192 = vmatprep.subr.mxu0 0.0
  %4193 = vmatpush1.msra.mxu0 0.0
  %4194 = vmatprep.subr.mxu0 0.0
  %4195 = vmatpush1.msra.mxu0 0.0
  %4196 = vmatprep.subr.mxu0 0.0
  %4197 = vmatpush1.msra.mxu0 0.0
  %4198 = vmatprep.subr.mxu0 0.0
  %4199 = vmatpush1.msra.mxu0 0.0
  %4200 = vmatprep.subr.mxu0 0.0
  %4201 = vmatpush1.msra.mxu0 0.0
  %4202 = vmatprep.subr.mxu0 0.0
  %4203 = vmatpush1.msra.mxu0 0.0
  %4204 = vmatprep.subr.mxu0 0.0
  %4205 = vmatpush1.msra.mxu0 %v4169
  %4206 = vmatprep.subr.mxu0 0.0
  %4207 = vmatpush2.msra.mxu0 0.0
  %4208 = vmatprep.subr.mxu0 0.0
  %4209 = vmatpush2.msra.mxu0 0.0
  %4210 = vmatprep.subr.mxu0 0.0
  %4211 = vmatpush2.msra.mxu0 0.0
  %4212 = vmatprep.subr.mxu0 0.0
  %4213 = vmatpush2.msra.mxu0 0.0
  %4214 = vmatprep.subr.mxu0 0.0
  %4215 = vmatpush2.msra.mxu0 0.0
  %4216 = vmatprep.subr.mxu0 0.0
  %4217 = vmatpush2.msra.mxu0 0.0
  %4218 = vmatprep.subr.mxu0 0.0
  %4219 = vmatpush2.msra.mxu0 0.0
  %4220 = vmatprep.subr.mxu0 0.0
  %4221 = vmatpush2.msra.mxu0 0.0
  %4222 = vmatprep.subr.mxu0 0.0
  %4223 = vmatpush2.msra.mxu0 0.0
  %4224 = vmatprep.subr.mxu0 0.0
  %4225 = vmatpush2.msra.mxu0 0.0
  %4226 = vmatprep.subr.mxu0 0.0
  %4227 = vmatpush2.msra.mxu0 0.0
  %4228 = vmatprep.subr.mxu0 0.0
  %4229 = vmatpush2.msra.mxu0 0.0
  %4230 = vmatprep.subr.mxu0 0.0
  %4231 = vmatpush2.msra.mxu0 0.0
  %4232 = vmatprep.subr.mxu0 0.0
  %4233 = vmatpush2.msra.mxu0 0.0
  %4234 = vmatprep.subr.mxu0 0.0
  %4235 = vmatpush2.msra.mxu0 0.0
  %4236 = vmatprep.subr.mxu0 0.0
  %4237 = vmatpush2.msra.mxu0 0.0
  %4238 = vmatprep.mubr.f32.mxu0 0.0
  %4239 = vmatmul.mubr.f32.gmra.mxu0 %v4172
  %v4240 = vpop.f32.mrf.mxu0
  %v4241 = vadd.f32 0.0, %v4240
  %v4242 = vpop.f32.mrf.mxu0
  %4243 = vdwg.mxu0
  %4244 = vrot.lane.b32.xlu0 %v205, 48
  %v4245 = vpop.permute.xlu0 %4244
  %v4248 = vsel %vm242, %v3936, 0
  %4250 = vmatprep.subr.mxu0 0.0
  %4251 = vmatpush1.msra.mxu0 0.0
  %4252 = vmatprep.subr.mxu0 0.0
  %4253 = vmatpush1.msra.mxu0 0.0
  %4254 = vmatprep.subr.mxu0 0.0
  %4255 = vmatpush1.msra.mxu0 0.0
  %4256 = vmatprep.subr.mxu0 0.0
  %4257 = vmatpush1.msra.mxu0 0.0
  %4258 = vmatprep.subr.mxu0 0.0
  %4259 = vmatpush1.msra.mxu0 0.0
  %4260 = vmatprep.subr.mxu0 0.0
  %4261 = vmatpush1.msra.mxu0 0.0
  %4262 = vmatprep.subr.mxu0 0.0
  %4263 = vmatpush1.msra.mxu0 0.0
  %4264 = vmatprep.subr.mxu0 0.0
  %4265 = vmatpush1.msra.mxu0 0.0
  %4266 = vmatprep.subr.mxu0 0.0
  %4267 = vmatpush1.msra.mxu0 0.0
  %4268 = vmatprep.subr.mxu0 0.0
  %4269 = vmatpush1.msra.mxu0 0.0
  %4270 = vmatprep.subr.mxu0 0.0
  %4271 = vmatpush1.msra.mxu0 0.0
  %4272 = vmatprep.subr.mxu0 0.0
  %4273 = vmatpush1.msra.mxu0 0.0
  %4274 = vmatprep.subr.mxu0 0.0
  %4275 = vmatpush1.msra.mxu0 0.0
  %4276 = vmatprep.subr.mxu0 0.0
  %4277 = vmatpush1.msra.mxu0 0.0
  %4278 = vmatprep.subr.mxu0 0.0
  %4279 = vmatpush1.msra.mxu0 0.0
  %4280 = vmatprep.subr.mxu0 0.0
  %4281 = vmatpush1.msra.mxu0 %v4245
  %4282 = vmatprep.subr.mxu0 0.0
  %4283 = vmatpush2.msra.mxu0 0.0
  %4284 = vmatprep.subr.mxu0 0.0
  %4285 = vmatpush2.msra.mxu0 0.0
  %4286 = vmatprep.subr.mxu0 0.0
  %4287 = vmatpush2.msra.mxu0 0.0
  %4288 = vmatprep.subr.mxu0 0.0
  %4289 = vmatpush2.msra.mxu0 0.0
  %4290 = vmatprep.subr.mxu0 0.0
  %4291 = vmatpush2.msra.mxu0 0.0
  %4292 = vmatprep.subr.mxu0 0.0
  %4293 = vmatpush2.msra.mxu0 0.0
  %4294 = vmatprep.subr.mxu0 0.0
  %4295 = vmatpush2.msra.mxu0 0.0
  %4296 = vmatprep.subr.mxu0 0.0
  %4297 = vmatpush2.msra.mxu0 0.0
  %4298 = vmatprep.subr.mxu0 0.0
  %4299 = vmatpush2.msra.mxu0 0.0
  %4300 = vmatprep.subr.mxu0 0.0
  %4301 = vmatpush2.msra.mxu0 0.0
  %4302 = vmatprep.subr.mxu0 0.0
  %4303 = vmatpush2.msra.mxu0 0.0
  %4304 = vmatprep.subr.mxu0 0.0
  %4305 = vmatpush2.msra.mxu0 0.0
  %4306 = vmatprep.subr.mxu0 0.0
  %4307 = vmatpush2.msra.mxu0 0.0
  %4308 = vmatprep.subr.mxu0 0.0
  %4309 = vmatpush2.msra.mxu0 0.0
  %4310 = vmatprep.subr.mxu0 0.0
  %4311 = vmatpush2.msra.mxu0 0.0
  %4312 = vmatprep.subr.mxu0 0.0
  %4313 = vmatpush2.msra.mxu0 0.0
  %4314 = vmatprep.mubr.f32.mxu0 0.0
  %4315 = vmatmul.mubr.f32.gmra.mxu0 %v4248
  %v4316 = vpop.f32.mrf.mxu0
  %v4317 = vadd.f32 0.0, %v4316
  %v4318 = vpop.f32.mrf.mxu0
  %4319 = vdwg.mxu0
  %4320 = vrot.lane.b32.xlu0 %v210, 48
  %v4321 = vpop.permute.xlu0 %4320
  %v4324 = vsel %vm242, %v3937, 0
  %4326 = vmatprep.subr.mxu0 0.0
  %4327 = vmatpush1.msra.mxu0 0.0
  %4328 = vmatprep.subr.mxu0 0.0
  %4329 = vmatpush1.msra.mxu0 0.0
  %4330 = vmatprep.subr.mxu0 0.0
  %4331 = vmatpush1.msra.mxu0 0.0
  %4332 = vmatprep.subr.mxu0 0.0
  %4333 = vmatpush1.msra.mxu0 0.0
  %4334 = vmatprep.subr.mxu0 0.0
  %4335 = vmatpush1.msra.mxu0 0.0
  %4336 = vmatprep.subr.mxu0 0.0
  %4337 = vmatpush1.msra.mxu0 0.0
  %4338 = vmatprep.subr.mxu0 0.0
  %4339 = vmatpush1.msra.mxu0 0.0
  %4340 = vmatprep.subr.mxu0 0.0
  %4341 = vmatpush1.msra.mxu0 0.0
  %4342 = vmatprep.subr.mxu0 0.0
  %4343 = vmatpush1.msra.mxu0 0.0
  %4344 = vmatprep.subr.mxu0 0.0
  %4345 = vmatpush1.msra.mxu0 0.0
  %4346 = vmatprep.subr.mxu0 0.0
  %4347 = vmatpush1.msra.mxu0 0.0
  %4348 = vmatprep.subr.mxu0 0.0
  %4349 = vmatpush1.msra.mxu0 0.0
  %4350 = vmatprep.subr.mxu0 0.0
  %4351 = vmatpush1.msra.mxu0 0.0
  %4352 = vmatprep.subr.mxu0 0.0
  %4353 = vmatpush1.msra.mxu0 0.0
  %4354 = vmatprep.subr.mxu0 0.0
  %4355 = vmatpush1.msra.mxu0 0.0
  %4356 = vmatprep.subr.mxu0 0.0
  %4357 = vmatpush1.msra.mxu0 %v4321
  %4358 = vmatprep.subr.mxu0 0.0
  %4359 = vmatpush2.msra.mxu0 0.0
  %4360 = vmatprep.subr.mxu0 0.0
  %4361 = vmatpush2.msra.mxu0 0.0
  %4362 = vmatprep.subr.mxu0 0.0
  %4363 = vmatpush2.msra.mxu0 0.0
  %4364 = vmatprep.subr.mxu0 0.0
  %4365 = vmatpush2.msra.mxu0 0.0
  %4366 = vmatprep.subr.mxu0 0.0
  %4367 = vmatpush2.msra.mxu0 0.0
  %4368 = vmatprep.subr.mxu0 0.0
  %4369 = vmatpush2.msra.mxu0 0.0
  %4370 = vmatprep.subr.mxu0 0.0
  %4371 = vmatpush2.msra.mxu0 0.0
  %4372 = vmatprep.subr.mxu0 0.0
  %4373 = vmatpush2.msra.mxu0 0.0
  %4374 = vmatprep.subr.mxu0 0.0
  %4375 = vmatpush2.msra.mxu0 0.0
  %4376 = vmatprep.subr.mxu0 0.0
  %4377 = vmatpush2.msra.mxu0 0.0
  %4378 = vmatprep.subr.mxu0 0.0
  %4379 = vmatpush2.msra.mxu0 0.0
  %4380 = vmatprep.subr.mxu0 0.0
  %4381 = vmatpush2.msra.mxu0 0.0
  %4382 = vmatprep.subr.mxu0 0.0
  %4383 = vmatpush2.msra.mxu0 0.0
  %4384 = vmatprep.subr.mxu0 0.0
  %4385 = vmatpush2.msra.mxu0 0.0
  %4386 = vmatprep.subr.mxu0 0.0
  %4387 = vmatpush2.msra.mxu0 0.0
  %4388 = vmatprep.subr.mxu0 0.0
  %4389 = vmatpush2.msra.mxu0 0.0
  %4390 = vmatprep.mubr.f32.mxu0 0.0
  %4391 = vmatmul.mubr.f32.gmra.mxu0 %v4324
  %v4392 = vpop.f32.mrf.mxu0
  %v4393 = vadd.f32 0.0, %v4392
  %v4394 = vpop.f32.mrf.mxu0
  %4395 = vdwg.mxu0
  %4396 = vrot.lane.b32.xlu0 %v215, 48
  %v4397 = vpop.permute.xlu0 %4396
  %v4400 = vsel %vm242, %v3938, 0
  %4402 = vmatprep.subr.mxu0 0.0
  %4403 = vmatpush1.msra.mxu0 0.0
  %4404 = vmatprep.subr.mxu0 0.0
  %4405 = vmatpush1.msra.mxu0 0.0
  %4406 = vmatprep.subr.mxu0 0.0
  %4407 = vmatpush1.msra.mxu0 0.0
  %4408 = vmatprep.subr.mxu0 0.0
  %4409 = vmatpush1.msra.mxu0 0.0
  %4410 = vmatprep.subr.mxu0 0.0
  %4411 = vmatpush1.msra.mxu0 0.0
  %4412 = vmatprep.subr.mxu0 0.0
  %4413 = vmatpush1.msra.mxu0 0.0
  %4414 = vmatprep.subr.mxu0 0.0
  %4415 = vmatpush1.msra.mxu0 0.0
  %4416 = vmatprep.subr.mxu0 0.0
  %4417 = vmatpush1.msra.mxu0 0.0
  %4418 = vmatprep.subr.mxu0 0.0
  %4419 = vmatpush1.msra.mxu0 0.0
  %4420 = vmatprep.subr.mxu0 0.0
  %4421 = vmatpush1.msra.mxu0 0.0
  %4422 = vmatprep.subr.mxu0 0.0
  %4423 = vmatpush1.msra.mxu0 0.0
  %4424 = vmatprep.subr.mxu0 0.0
  %4425 = vmatpush1.msra.mxu0 0.0
  %4426 = vmatprep.subr.mxu0 0.0
  %4427 = vmatpush1.msra.mxu0 0.0
  %4428 = vmatprep.subr.mxu0 0.0
  %4429 = vmatpush1.msra.mxu0 0.0
  %4430 = vmatprep.subr.mxu0 0.0
  %4431 = vmatpush1.msra.mxu0 0.0
  %4432 = vmatprep.subr.mxu0 0.0
  %4433 = vmatpush1.msra.mxu0 %v4397
  %4434 = vmatprep.subr.mxu0 0.0
  %4435 = vmatpush2.msra.mxu0 0.0
  %4436 = vmatprep.subr.mxu0 0.0
  %4437 = vmatpush2.msra.mxu0 0.0
  %4438 = vmatprep.subr.mxu0 0.0
  %4439 = vmatpush2.msra.mxu0 0.0
  %4440 = vmatprep.subr.mxu0 0.0
  %4441 = vmatpush2.msra.mxu0 0.0
  %4442 = vmatprep.subr.mxu0 0.0
  %4443 = vmatpush2.msra.mxu0 0.0
  %4444 = vmatprep.subr.mxu0 0.0
  %4445 = vmatpush2.msra.mxu0 0.0
  %4446 = vmatprep.subr.mxu0 0.0
  %4447 = vmatpush2.msra.mxu0 0.0
  %4448 = vmatprep.subr.mxu0 0.0
  %4449 = vmatpush2.msra.mxu0 0.0
  %4450 = vmatprep.subr.mxu0 0.0
  %4451 = vmatpush2.msra.mxu0 0.0
  %4452 = vmatprep.subr.mxu0 0.0
  %4453 = vmatpush2.msra.mxu0 0.0
  %4454 = vmatprep.subr.mxu0 0.0
  %4455 = vmatpush2.msra.mxu0 0.0
  %4456 = vmatprep.subr.mxu0 0.0
  %4457 = vmatpush2.msra.mxu0 0.0
  %4458 = vmatprep.subr.mxu0 0.0
  %4459 = vmatpush2.msra.mxu0 0.0
  %4460 = vmatprep.subr.mxu0 0.0
  %4461 = vmatpush2.msra.mxu0 0.0
  %4462 = vmatprep.subr.mxu0 0.0
  %4463 = vmatpush2.msra.mxu0 0.0
  %4464 = vmatprep.subr.mxu0 0.0
  %4465 = vmatpush2.msra.mxu0 0.0
  %4466 = vmatprep.mubr.f32.mxu0 0.0
  %4467 = vmatmul.mubr.f32.gmra.mxu0 %v4400
  %v4468 = vpop.f32.mrf.mxu0
  %v4469 = vadd.f32 0.0, %v4468
  %v4470 = vpop.f32.mrf.mxu0
  %4471 = vdwg.mxu0
  %4472 = vrot.lane.b32.xlu0 %v220, 48
  %v4473 = vpop.permute.xlu0 %4472
  %v4476 = vsel %vm242, %v3939, 0
  %4478 = vmatprep.subr.mxu0 0.0
  %4479 = vmatpush1.msra.mxu0 0.0
  %4480 = vmatprep.subr.mxu0 0.0
  %4481 = vmatpush1.msra.mxu0 0.0
  %4482 = vmatprep.subr.mxu0 0.0
  %4483 = vmatpush1.msra.mxu0 0.0
  %4484 = vmatprep.subr.mxu0 0.0
  %4485 = vmatpush1.msra.mxu0 0.0
  %4486 = vmatprep.subr.mxu0 0.0
  %4487 = vmatpush1.msra.mxu0 0.0
  %4488 = vmatprep.subr.mxu0 0.0
  %4489 = vmatpush1.msra.mxu0 0.0
  %4490 = vmatprep.subr.mxu0 0.0
  %4491 = vmatpush1.msra.mxu0 0.0
  %4492 = vmatprep.subr.mxu0 0.0
  %4493 = vmatpush1.msra.mxu0 0.0
  %4494 = vmatprep.subr.mxu0 0.0
  %4495 = vmatpush1.msra.mxu0 0.0
  %4496 = vmatprep.subr.mxu0 0.0
  %4497 = vmatpush1.msra.mxu0 0.0
  %4498 = vmatprep.subr.mxu0 0.0
  %4499 = vmatpush1.msra.mxu0 0.0
  %4500 = vmatprep.subr.mxu0 0.0
  %4501 = vmatpush1.msra.mxu0 0.0
  %4502 = vmatprep.subr.mxu0 0.0
  %4503 = vmatpush1.msra.mxu0 0.0
  %4504 = vmatprep.subr.mxu0 0.0
  %4505 = vmatpush1.msra.mxu0 0.0
  %4506 = vmatprep.subr.mxu0 0.0
  %4507 = vmatpush1.msra.mxu0 0.0
  %4508 = vmatprep.subr.mxu0 0.0
  %4509 = vmatpush1.msra.mxu0 %v4473
  %4510 = vmatprep.subr.mxu0 0.0
  %4511 = vmatpush2.msra.mxu0 0.0
  %4512 = vmatprep.subr.mxu0 0.0
  %4513 = vmatpush2.msra.mxu0 0.0
  %4514 = vmatprep.subr.mxu0 0.0
  %4515 = vmatpush2.msra.mxu0 0.0
  %4516 = vmatprep.subr.mxu0 0.0
  %4517 = vmatpush2.msra.mxu0 0.0
  %4518 = vmatprep.subr.mxu0 0.0
  %4519 = vmatpush2.msra.mxu0 0.0
  %4520 = vmatprep.subr.mxu0 0.0
  %4521 = vmatpush2.msra.mxu0 0.0
  %4522 = vmatprep.subr.mxu0 0.0
  %4523 = vmatpush2.msra.mxu0 0.0
  %4524 = vmatprep.subr.mxu0 0.0
  %4525 = vmatpush2.msra.mxu0 0.0
  %4526 = vmatprep.subr.mxu0 0.0
  %4527 = vmatpush2.msra.mxu0 0.0
  %4528 = vmatprep.subr.mxu0 0.0
  %4529 = vmatpush2.msra.mxu0 0.0
  %4530 = vmatprep.subr.mxu0 0.0
  %4531 = vmatpush2.msra.mxu0 0.0
  %4532 = vmatprep.subr.mxu0 0.0
  %4533 = vmatpush2.msra.mxu0 0.0
  %4534 = vmatprep.subr.mxu0 0.0
  %4535 = vmatpush2.msra.mxu0 0.0
  %4536 = vmatprep.subr.mxu0 0.0
  %4537 = vmatpush2.msra.mxu0 0.0
  %4538 = vmatprep.subr.mxu0 0.0
  %4539 = vmatpush2.msra.mxu0 0.0
  %4540 = vmatprep.subr.mxu0 0.0
  %4541 = vmatpush2.msra.mxu0 0.0
  %4542 = vmatprep.mubr.f32.mxu0 0.0
  %4543 = vmatmul.mubr.f32.gmra.mxu0 %v4476
  %v4544 = vpop.f32.mrf.mxu0
  %v4545 = vadd.f32 0.0, %v4544
  %v4546 = vpop.f32.mrf.mxu0
  %4547 = vdwg.mxu0
  %v4548 = vld [vmem:[%s5 + $0x10] sm:$0xff]
  %v4550 = vsel %vm242, %v4013, 0
  %v4553 = vsel %vm242, %v4089, 0
  %v4556 = vsel %vm242, %v4165, 0
  %v4559 = vsel %vm242, %v4241, 0
  %v4562 = vsel %vm242, %v4317, 0
  %v4565 = vsel %vm242, %v4393, 0
  %v4568 = vsel %vm242, %v4469, 0
  %v4571 = vsel %vm242, %v4545, 0
  %4573 = vmatprep.subr.mxu0 0.0
  %4574 = vmatpush1.msra.mxu0 0.0
  %4575 = vmatprep.subr.mxu0 0.0
  %4576 = vmatpush1.msra.mxu0 0.0
  %4577 = vmatprep.subr.mxu0 0.0
  %4578 = vmatpush1.msra.mxu0 0.0
  %4579 = vmatprep.subr.mxu0 0.0
  %4580 = vmatpush1.msra.mxu0 0.0
  %4581 = vmatprep.subr.mxu0 0.0
  %4582 = vmatpush1.msra.mxu0 0.0
  %4583 = vmatprep.subr.mxu0 0.0
  %4584 = vmatpush1.msra.mxu0 0.0
  %4585 = vmatprep.subr.mxu0 0.0
  %4586 = vmatpush1.msra.mxu0 0.0
  %4587 = vmatprep.subr.mxu0 0.0
  %4588 = vmatpush1.msra.mxu0 0.0
  %4589 = vmatprep.subr.mxu0 0.0
  %4590 = vmatpush1.msra.mxu0 0.0
  %4591 = vmatprep.subr.mxu0 0.0
  %4592 = vmatpush1.msra.mxu0 0.0
  %4593 = vmatprep.subr.mxu0 0.0
  %4594 = vmatpush1.msra.mxu0 0.0
  %4595 = vmatprep.subr.mxu0 0.0
  %4596 = vmatpush1.msra.mxu0 0.0
  %4597 = vmatprep.subr.mxu0 0.0
  %4598 = vmatpush1.msra.mxu0 0.0
  %4599 = vmatprep.subr.mxu0 0.0
  %4600 = vmatpush1.msra.mxu0 0.0
  %4601 = vmatprep.subr.mxu0 0.0
  %4602 = vmatpush1.msra.mxu0 0.0
  %4603 = vmatprep.subr.mxu0 0.0
  %4604 = vmatpush1.msra.mxu0 %v4548
  %4605 = vmatprep.subr.mxu0 0.0
  %4606 = vmatpush2.msra.mxu0 0.0
  %4607 = vmatprep.subr.mxu0 0.0
  %4608 = vmatpush2.msra.mxu0 0.0
  %4609 = vmatprep.subr.mxu0 0.0
  %4610 = vmatpush2.msra.mxu0 0.0
  %4611 = vmatprep.subr.mxu0 0.0
  %4612 = vmatpush2.msra.mxu0 0.0
  %4613 = vmatprep.subr.mxu0 0.0
  %4614 = vmatpush2.msra.mxu0 0.0
  %4615 = vmatprep.subr.mxu0 0.0
  %4616 = vmatpush2.msra.mxu0 0.0
  %4617 = vmatprep.subr.mxu0 0.0
  %4618 = vmatpush2.msra.mxu0 0.0
  %4619 = vmatprep.subr.mxu0 0.0
  %4620 = vmatpush2.msra.mxu0 0.0
  %4621 = vmatprep.subr.mxu0 0.0
  %4622 = vmatpush2.msra.mxu0 0.0
  %4623 = vmatprep.subr.mxu0 0.0
  %4624 = vmatpush2.msra.mxu0 0.0
  %4625 = vmatprep.subr.mxu0 0.0
  %4626 = vmatpush2.msra.mxu0 0.0
  %4627 = vmatprep.subr.mxu0 0.0
  %4628 = vmatpush2.msra.mxu0 0.0
  %4629 = vmatprep.subr.mxu0 0.0
  %4630 = vmatpush2.msra.mxu0 0.0
  %4631 = vmatprep.subr.mxu0 0.0
  %4632 = vmatpush2.msra.mxu0 0.0
  %4633 = vmatprep.subr.mxu0 0.0
  %4634 = vmatpush2.msra.mxu0 0.0
  %4635 = vmatprep.subr.mxu0 0.0
  %4636 = vmatpush2.msra.mxu0 0.0
  %4637 = vmatprep.mubr.f32.mxu0 0.0
  %4638 = vmatmul.mubr.f32.gmra.mxu0 %v4550
  %v4639 = vpop.f32.mrf.mxu0
  %v4640 = vadd.f32 0.0, %v4639
  %v4641 = vpop.f32.mrf.mxu0
  %4642 = vmatprep.mubr.f32.mxu0 0.0
  %4643 = vmatmul.mubr.f32.gmra.mxu0 %v4553
  %v4644 = vpop.f32.mrf.mxu0
  %v4645 = vadd.f32 0.0, %v4644
  %v4646 = vpop.f32.mrf.mxu0
  %4647 = vmatprep.mubr.f32.mxu0 0.0
  %4648 = vmatmul.mubr.f32.gmra.mxu0 %v4556
  %v4649 = vpop.f32.mrf.mxu0
  %v4650 = vadd.f32 0.0, %v4649
  %v4651 = vpop.f32.mrf.mxu0
  %4652 = vmatprep.mubr.f32.mxu0 0.0
  %4653 = vmatmul.mubr.f32.gmra.mxu0 %v4559
  %v4654 = vpop.f32.mrf.mxu0
  %v4655 = vadd.f32 0.0, %v4654
  %v4656 = vpop.f32.mrf.mxu0
  %4657 = vmatprep.mubr.f32.mxu0 0.0
  %4658 = vmatmul.mubr.f32.gmra.mxu0 %v4562
  %v4659 = vpop.f32.mrf.mxu0
  %v4660 = vadd.f32 0.0, %v4659
  %v4661 = vpop.f32.mrf.mxu0
  %4662 = vmatprep.mubr.f32.mxu0 0.0
  %4663 = vmatmul.mubr.f32.gmra.mxu0 %v4565
  %v4664 = vpop.f32.mrf.mxu0
  %v4665 = vadd.f32 0.0, %v4664
  %v4666 = vpop.f32.mrf.mxu0
  %4667 = vmatprep.mubr.f32.mxu0 0.0
  %4668 = vmatmul.mubr.f32.gmra.mxu0 %v4568
  %v4669 = vpop.f32.mrf.mxu0
  %v4670 = vadd.f32 0.0, %v4669
  %v4671 = vpop.f32.mrf.mxu0
  %4672 = vmatprep.mubr.f32.mxu0 0.0
  %4673 = vmatmul.mubr.f32.gmra.mxu0 %v4571
  %v4674 = vpop.f32.mrf.mxu0
  %v4675 = vadd.f32 0.0, %v4674
  %v4676 = vpop.f32.mrf.mxu0
  %4677 = vdwg.mxu0
  %v4678 = vadd.f32 %v3174, %v4640
  %v4679 = vadd.f32 %v3179, %v4645
  %v4680 = vadd.f32 %v3184, %v4650
  %v4681 = vadd.f32 %v3189, %v4655
  %v4682 = vadd.f32 %v3194, %v4660
  %v4683 = vadd.f32 %v3199, %v4665
  %v4684 = vadd.f32 %v3204, %v4670
  %v4685 = vadd.f32 %v3209, %v4675
  %4686 = vrot.lane.b32.xlu0 %v185, 104
  %v4687 = vpop.permute.xlu0 %4686
  %4688 = vrot.lane.b32.xlu0 %v185, 72
  %v4689 = vpop.permute.xlu0 %4688
  %v4690 = vsel %vm242, %v4687, 0
  %v4692 = vsel %vm242, %v4689, 0
  %4694 = vmatprep.subr.mxu0 0.0
  %4695 = vmatpush1.xpose.msra.mxu0 0.0
  %4696 = vmatprep.subr.mxu0 0.0
  %4697 = vmatpush1.xpose.msra.mxu0 0.0
  %4698 = vmatprep.subr.mxu0 0.0
  %4699 = vmatpush1.xpose.msra.mxu0 0.0
  %4700 = vmatprep.subr.mxu0 0.0
  %4701 = vmatpush1.xpose.msra.mxu0 0.0
  %4702 = vmatprep.subr.mxu0 0.0
  %4703 = vmatpush1.xpose.msra.mxu0 0.0
  %4704 = vmatprep.subr.mxu0 0.0
  %4705 = vmatpush1.xpose.msra.mxu0 0.0
  %4706 = vmatprep.subr.mxu0 0.0
  %4707 = vmatpush1.xpose.msra.mxu0 0.0
  %4708 = vmatprep.subr.mxu0 0.0
  %4709 = vmatpush1.xpose.msra.mxu0 0.0
  %4710 = vmatprep.subr.mxu0 0.0
  %4711 = vmatpush1.xpose.msra.mxu0 0.0
  %4712 = vmatprep.subr.mxu0 0.0
  %4713 = vmatpush1.xpose.msra.mxu0 0.0
  %4714 = vmatprep.subr.mxu0 0.0
  %4715 = vmatpush1.xpose.msra.mxu0 0.0
  %4716 = vmatprep.subr.mxu0 0.0
  %4717 = vmatpush1.xpose.msra.mxu0 0.0
  %4718 = vmatprep.subr.mxu0 0.0
  %4719 = vmatpush1.xpose.msra.mxu0 0.0
  %4720 = vmatprep.subr.mxu0 0.0
  %4721 = vmatpush1.xpose.msra.mxu0 0.0
  %4722 = vmatprep.subr.mxu0 0.0
  %4723 = vmatpush1.xpose.msra.mxu0 0.0
  %4724 = vmatprep.subr.mxu0 0.0
  %4725 = vmatpush1.xpose.msra.mxu0 %v4692
  %4726 = vmatprep.subr.mxu0 0.0
  %4727 = vmatpush2.xpose.msra.mxu0 0.0
  %4728 = vmatprep.subr.mxu0 0.0
  %4729 = vmatpush2.xpose.msra.mxu0 0.0
  %4730 = vmatprep.subr.mxu0 0.0
  %4731 = vmatpush2.xpose.msra.mxu0 0.0
  %4732 = vmatprep.subr.mxu0 0.0
  %4733 = vmatpush2.xpose.msra.mxu0 0.0
  %4734 = vmatprep.subr.mxu0 0.0
  %4735 = vmatpush2.xpose.msra.mxu0 0.0
  %4736 = vmatprep.subr.mxu0 0.0
  %4737 = vmatpush2.xpose.msra.mxu0 0.0
  %4738 = vmatprep.subr.mxu0 0.0
  %4739 = vmatpush2.xpose.msra.mxu0 0.0
  %4740 = vmatprep.subr.mxu0 0.0
  %4741 = vmatpush2.xpose.msra.mxu0 0.0
  %4742 = vmatprep.subr.mxu0 0.0
  %4743 = vmatpush2.xpose.msra.mxu0 0.0
  %4744 = vmatprep.subr.mxu0 0.0
  %4745 = vmatpush2.xpose.msra.mxu0 0.0
  %4746 = vmatprep.subr.mxu0 0.0
  %4747 = vmatpush2.xpose.msra.mxu0 0.0
  %4748 = vmatprep.subr.mxu0 0.0
  %4749 = vmatpush2.xpose.msra.mxu0 0.0
  %4750 = vmatprep.subr.mxu0 0.0
  %4751 = vmatpush2.xpose.msra.mxu0 0.0
  %4752 = vmatprep.subr.mxu0 0.0
  %4753 = vmatpush2.xpose.msra.mxu0 0.0
  %4754 = vmatprep.subr.mxu0 0.0
  %4755 = vmatpush2.xpose.msra.mxu0 0.0
  %4756 = vmatprep.subr.mxu0 0.0
  %4757 = vmatpush2.xpose.msra.mxu0 0.0
  %4758 = vmatprep.mubr.f32.mxu0 0.0
  %4759 = vmatmul.mubr.f32.gmra.mxu0 %v4690
  %v4760 = vpop.f32.mrf.mxu0
  %v4761 = vadd.f32 0.0, %v4760
  %v4762 = vpop.f32.mrf.mxu0
  %4763 = vdwg.mxu0
  %4764 = vrot.lane.b32.xlu0 %v190, 104
  %v4765 = vpop.permute.xlu0 %4764
  %4766 = vrot.lane.b32.xlu0 %v190, 72
  %v4767 = vpop.permute.xlu0 %4766
  %v4768 = vsel %vm242, %v4765, 0
  %v4770 = vsel %vm242, %v4767, 0
  %4772 = vmatprep.subr.mxu0 0.0
  %4773 = vmatpush1.xpose.msra.mxu0 0.0
  %4774 = vmatprep.subr.mxu0 0.0
  %4775 = vmatpush1.xpose.msra.mxu0 0.0
  %4776 = vmatprep.subr.mxu0 0.0
  %4777 = vmatpush1.xpose.msra.mxu0 0.0
  %4778 = vmatprep.subr.mxu0 0.0
  %4779 = vmatpush1.xpose.msra.mxu0 0.0
  %4780 = vmatprep.subr.mxu0 0.0
  %4781 = vmatpush1.xpose.msra.mxu0 0.0
  %4782 = vmatprep.subr.mxu0 0.0
  %4783 = vmatpush1.xpose.msra.mxu0 0.0
  %4784 = vmatprep.subr.mxu0 0.0
  %4785 = vmatpush1.xpose.msra.mxu0 0.0
  %4786 = vmatprep.subr.mxu0 0.0
  %4787 = vmatpush1.xpose.msra.mxu0 0.0
  %4788 = vmatprep.subr.mxu0 0.0
  %4789 = vmatpush1.xpose.msra.mxu0 0.0
  %4790 = vmatprep.subr.mxu0 0.0
  %4791 = vmatpush1.xpose.msra.mxu0 0.0
  %4792 = vmatprep.subr.mxu0 0.0
  %4793 = vmatpush1.xpose.msra.mxu0 0.0
  %4794 = vmatprep.subr.mxu0 0.0
  %4795 = vmatpush1.xpose.msra.mxu0 0.0
  %4796 = vmatprep.subr.mxu0 0.0
  %4797 = vmatpush1.xpose.msra.mxu0 0.0
  %4798 = vmatprep.subr.mxu0 0.0
  %4799 = vmatpush1.xpose.msra.mxu0 0.0
  %4800 = vmatprep.subr.mxu0 0.0
  %4801 = vmatpush1.xpose.msra.mxu0 0.0
  %4802 = vmatprep.subr.mxu0 0.0
  %4803 = vmatpush1.xpose.msra.mxu0 %v4770
  %4804 = vmatprep.subr.mxu0 0.0
  %4805 = vmatpush2.xpose.msra.mxu0 0.0
  %4806 = vmatprep.subr.mxu0 0.0
  %4807 = vmatpush2.xpose.msra.mxu0 0.0
  %4808 = vmatprep.subr.mxu0 0.0
  %4809 = vmatpush2.xpose.msra.mxu0 0.0
  %4810 = vmatprep.subr.mxu0 0.0
  %4811 = vmatpush2.xpose.msra.mxu0 0.0
  %4812 = vmatprep.subr.mxu0 0.0
  %4813 = vmatpush2.xpose.msra.mxu0 0.0
  %4814 = vmatprep.subr.mxu0 0.0
  %4815 = vmatpush2.xpose.msra.mxu0 0.0
  %4816 = vmatprep.subr.mxu0 0.0
  %4817 = vmatpush2.xpose.msra.mxu0 0.0
  %4818 = vmatprep.subr.mxu0 0.0
  %4819 = vmatpush2.xpose.msra.mxu0 0.0
  %4820 = vmatprep.subr.mxu0 0.0
  %4821 = vmatpush2.xpose.msra.mxu0 0.0
  %4822 = vmatprep.subr.mxu0 0.0
  %4823 = vmatpush2.xpose.msra.mxu0 0.0
  %4824 = vmatprep.subr.mxu0 0.0
  %4825 = vmatpush2.xpose.msra.mxu0 0.0
  %4826 = vmatprep.subr.mxu0 0.0
  %4827 = vmatpush2.xpose.msra.mxu0 0.0
  %4828 = vmatprep.subr.mxu0 0.0
  %4829 = vmatpush2.xpose.msra.mxu0 0.0
  %4830 = vmatprep.subr.mxu0 0.0
  %4831 = vmatpush2.xpose.msra.mxu0 0.0
  %4832 = vmatprep.subr.mxu0 0.0
  %4833 = vmatpush2.xpose.msra.mxu0 0.0
  %4834 = vmatprep.subr.mxu0 0.0
  %4835 = vmatpush2.xpose.msra.mxu0 0.0
  %4836 = vmatprep.mubr.f32.mxu0 0.0
  %4837 = vmatmul.mubr.f32.gmra.mxu0 %v4768
  %v4838 = vpop.f32.mrf.mxu0
  %v4839 = vadd.f32 0.0, %v4838
  %v4840 = vpop.f32.mrf.mxu0
  %4841 = vdwg.mxu0
  %4842 = vrot.lane.b32.xlu0 %v195, 104
  %v4843 = vpop.permute.xlu0 %4842
  %4844 = vrot.lane.b32.xlu0 %v195, 72
  %v4845 = vpop.permute.xlu0 %4844
  %v4846 = vsel %vm242, %v4843, 0
  %v4848 = vsel %vm242, %v4845, 0
  %4850 = vmatprep.subr.mxu0 0.0
  %4851 = vmatpush1.xpose.msra.mxu0 0.0
  %4852 = vmatprep.subr.mxu0 0.0
  %4853 = vmatpush1.xpose.msra.mxu0 0.0
  %4854 = vmatprep.subr.mxu0 0.0
  %4855 = vmatpush1.xpose.msra.mxu0 0.0
  %4856 = vmatprep.subr.mxu0 0.0
  %4857 = vmatpush1.xpose.msra.mxu0 0.0
  %4858 = vmatprep.subr.mxu0 0.0
  %4859 = vmatpush1.xpose.msra.mxu0 0.0
  %4860 = vmatprep.subr.mxu0 0.0
  %4861 = vmatpush1.xpose.msra.mxu0 0.0
  %4862 = vmatprep.subr.mxu0 0.0
  %4863 = vmatpush1.xpose.msra.mxu0 0.0
  %4864 = vmatprep.subr.mxu0 0.0
  %4865 = vmatpush1.xpose.msra.mxu0 0.0
  %4866 = vmatprep.subr.mxu0 0.0
  %4867 = vmatpush1.xpose.msra.mxu0 0.0
  %4868 = vmatprep.subr.mxu0 0.0
  %4869 = vmatpush1.xpose.msra.mxu0 0.0
  %4870 = vmatprep.subr.mxu0 0.0
  %4871 = vmatpush1.xpose.msra.mxu0 0.0
  %4872 = vmatprep.subr.mxu0 0.0
  %4873 = vmatpush1.xpose.msra.mxu0 0.0
  %4874 = vmatprep.subr.mxu0 0.0
  %4875 = vmatpush1.xpose.msra.mxu0 0.0
  %4876 = vmatprep.subr.mxu0 0.0
  %4877 = vmatpush1.xpose.msra.mxu0 0.0
  %4878 = vmatprep.subr.mxu0 0.0
  %4879 = vmatpush1.xpose.msra.mxu0 0.0
  %4880 = vmatprep.subr.mxu0 0.0
  %4881 = vmatpush1.xpose.msra.mxu0 %v4848
  %4882 = vmatprep.subr.mxu0 0.0
  %4883 = vmatpush2.xpose.msra.mxu0 0.0
  %4884 = vmatprep.subr.mxu0 0.0
  %4885 = vmatpush2.xpose.msra.mxu0 0.0
  %4886 = vmatprep.subr.mxu0 0.0
  %4887 = vmatpush2.xpose.msra.mxu0 0.0
  %4888 = vmatprep.subr.mxu0 0.0
  %4889 = vmatpush2.xpose.msra.mxu0 0.0
  %4890 = vmatprep.subr.mxu0 0.0
  %4891 = vmatpush2.xpose.msra.mxu0 0.0
  %4892 = vmatprep.subr.mxu0 0.0
  %4893 = vmatpush2.xpose.msra.mxu0 0.0
  %4894 = vmatprep.subr.mxu0 0.0
  %4895 = vmatpush2.xpose.msra.mxu0 0.0
  %4896 = vmatprep.subr.mxu0 0.0
  %4897 = vmatpush2.xpose.msra.mxu0 0.0
  %4898 = vmatprep.subr.mxu0 0.0
  %4899 = vmatpush2.xpose.msra.mxu0 0.0
  %4900 = vmatprep.subr.mxu0 0.0
  %4901 = vmatpush2.xpose.msra.mxu0 0.0
  %4902 = vmatprep.subr.mxu0 0.0
  %4903 = vmatpush2.xpose.msra.mxu0 0.0
  %4904 = vmatprep.subr.mxu0 0.0
  %4905 = vmatpush2.xpose.msra.mxu0 0.0
  %4906 = vmatprep.subr.mxu0 0.0
  %4907 = vmatpush2.xpose.msra.mxu0 0.0
  %4908 = vmatprep.subr.mxu0 0.0
  %4909 = vmatpush2.xpose.msra.mxu0 0.0
  %4910 = vmatprep.subr.mxu0 0.0
  %4911 = vmatpush2.xpose.msra.mxu0 0.0
  %4912 = vmatprep.subr.mxu0 0.0
  %4913 = vmatpush2.xpose.msra.mxu0 0.0
  %4914 = vmatprep.mubr.f32.mxu0 0.0
  %4915 = vmatmul.mubr.f32.gmra.mxu0 %v4846
  %v4916 = vpop.f32.mrf.mxu0
  %v4917 = vadd.f32 0.0, %v4916
  %v4918 = vpop.f32.mrf.mxu0
  %4919 = vdwg.mxu0
  %4920 = vrot.lane.b32.xlu0 %v200, 104
  %v4921 = vpop.permute.xlu0 %4920
  %4922 = vrot.lane.b32.xlu0 %v200, 72
  %v4923 = vpop.permute.xlu0 %4922
  %v4924 = vsel %vm242, %v4921, 0
  %v4926 = vsel %vm242, %v4923, 0
  %4928 = vmatprep.subr.mxu0 0.0
  %4929 = vmatpush1.xpose.msra.mxu0 0.0
  %4930 = vmatprep.subr.mxu0 0.0
  %4931 = vmatpush1.xpose.msra.mxu0 0.0
  %4932 = vmatprep.subr.mxu0 0.0
  %4933 = vmatpush1.xpose.msra.mxu0 0.0
  %4934 = vmatprep.subr.mxu0 0.0
  %4935 = vmatpush1.xpose.msra.mxu0 0.0
  %4936 = vmatprep.subr.mxu0 0.0
  %4937 = vmatpush1.xpose.msra.mxu0 0.0
  %4938 = vmatprep.subr.mxu0 0.0
  %4939 = vmatpush1.xpose.msra.mxu0 0.0
  %4940 = vmatprep.subr.mxu0 0.0
  %4941 = vmatpush1.xpose.msra.mxu0 0.0
  %4942 = vmatprep.subr.mxu0 0.0
  %4943 = vmatpush1.xpose.msra.mxu0 0.0
  %4944 = vmatprep.subr.mxu0 0.0
  %4945 = vmatpush1.xpose.msra.mxu0 0.0
  %4946 = vmatprep.subr.mxu0 0.0
  %4947 = vmatpush1.xpose.msra.mxu0 0.0
  %4948 = vmatprep.subr.mxu0 0.0
  %4949 = vmatpush1.xpose.msra.mxu0 0.0
  %4950 = vmatprep.subr.mxu0 0.0
  %4951 = vmatpush1.xpose.msra.mxu0 0.0
  %4952 = vmatprep.subr.mxu0 0.0
  %4953 = vmatpush1.xpose.msra.mxu0 0.0
  %4954 = vmatprep.subr.mxu0 0.0
  %4955 = vmatpush1.xpose.msra.mxu0 0.0
  %4956 = vmatprep.subr.mxu0 0.0
  %4957 = vmatpush1.xpose.msra.mxu0 0.0
  %4958 = vmatprep.subr.mxu0 0.0
  %4959 = vmatpush1.xpose.msra.mxu0 %v4926
  %4960 = vmatprep.subr.mxu0 0.0
  %4961 = vmatpush2.xpose.msra.mxu0 0.0
  %4962 = vmatprep.subr.mxu0 0.0
  %4963 = vmatpush2.xpose.msra.mxu0 0.0
  %4964 = vmatprep.subr.mxu0 0.0
  %4965 = vmatpush2.xpose.msra.mxu0 0.0
  %4966 = vmatprep.subr.mxu0 0.0
  %4967 = vmatpush2.xpose.msra.mxu0 0.0
  %4968 = vmatprep.subr.mxu0 0.0
  %4969 = vmatpush2.xpose.msra.mxu0 0.0
  %4970 = vmatprep.subr.mxu0 0.0
  %4971 = vmatpush2.xpose.msra.mxu0 0.0
  %4972 = vmatprep.subr.mxu0 0.0
  %4973 = vmatpush2.xpose.msra.mxu0 0.0
  %4974 = vmatprep.subr.mxu0 0.0
  %4975 = vmatpush2.xpose.msra.mxu0 0.0
  %4976 = vmatprep.subr.mxu0 0.0
  %4977 = vmatpush2.xpose.msra.mxu0 0.0
  %4978 = vmatprep.subr.mxu0 0.0
  %4979 = vmatpush2.xpose.msra.mxu0 0.0
  %4980 = vmatprep.subr.mxu0 0.0
  %4981 = vmatpush2.xpose.msra.mxu0 0.0
  %4982 = vmatprep.subr.mxu0 0.0
  %4983 = vmatpush2.xpose.msra.mxu0 0.0
  %4984 = vmatprep.subr.mxu0 0.0
  %4985 = vmatpush2.xpose.msra.mxu0 0.0
  %4986 = vmatprep.subr.mxu0 0.0
  %4987 = vmatpush2.xpose.msra.mxu0 0.0
  %4988 = vmatprep.subr.mxu0 0.0
  %4989 = vmatpush2.xpose.msra.mxu0 0.0
  %4990 = vmatprep.subr.mxu0 0.0
  %4991 = vmatpush2.xpose.msra.mxu0 0.0
  %4992 = vmatprep.mubr.f32.mxu0 0.0
  %4993 = vmatmul.mubr.f32.gmra.mxu0 %v4924
  %v4994 = vpop.f32.mrf.mxu0
  %v4995 = vadd.f32 0.0, %v4994
  %v4996 = vpop.f32.mrf.mxu0
  %4997 = vdwg.mxu0
  %4998 = vrot.lane.b32.xlu0 %v205, 104
  %v4999 = vpop.permute.xlu0 %4998
  %5000 = vrot.lane.b32.xlu0 %v205, 72
  %v5001 = vpop.permute.xlu0 %5000
  %v5002 = vsel %vm242, %v4999, 0
  %v5004 = vsel %vm242, %v5001, 0
  %5006 = vmatprep.subr.mxu0 0.0
  %5007 = vmatpush1.xpose.msra.mxu0 0.0
  %5008 = vmatprep.subr.mxu0 0.0
  %5009 = vmatpush1.xpose.msra.mxu0 0.0
  %5010 = vmatprep.subr.mxu0 0.0
  %5011 = vmatpush1.xpose.msra.mxu0 0.0
  %5012 = vmatprep.subr.mxu0 0.0
  %5013 = vmatpush1.xpose.msra.mxu0 0.0
  %5014 = vmatprep.subr.mxu0 0.0
  %5015 = vmatpush1.xpose.msra.mxu0 0.0
  %5016 = vmatprep.subr.mxu0 0.0
  %5017 = vmatpush1.xpose.msra.mxu0 0.0
  %5018 = vmatprep.subr.mxu0 0.0
  %5019 = vmatpush1.xpose.msra.mxu0 0.0
  %5020 = vmatprep.subr.mxu0 0.0
  %5021 = vmatpush1.xpose.msra.mxu0 0.0
  %5022 = vmatprep.subr.mxu0 0.0
  %5023 = vmatpush1.xpose.msra.mxu0 0.0
  %5024 = vmatprep.subr.mxu0 0.0
  %5025 = vmatpush1.xpose.msra.mxu0 0.0
  %5026 = vmatprep.subr.mxu0 0.0
  %5027 = vmatpush1.xpose.msra.mxu0 0.0
  %5028 = vmatprep.subr.mxu0 0.0
  %5029 = vmatpush1.xpose.msra.mxu0 0.0
  %5030 = vmatprep.subr.mxu0 0.0
  %5031 = vmatpush1.xpose.msra.mxu0 0.0
  %5032 = vmatprep.subr.mxu0 0.0
  %5033 = vmatpush1.xpose.msra.mxu0 0.0
  %5034 = vmatprep.subr.mxu0 0.0
  %5035 = vmatpush1.xpose.msra.mxu0 0.0
  %5036 = vmatprep.subr.mxu0 0.0
  %5037 = vmatpush1.xpose.msra.mxu0 %v5004
  %5038 = vmatprep.subr.mxu0 0.0
  %5039 = vmatpush2.xpose.msra.mxu0 0.0
  %5040 = vmatprep.subr.mxu0 0.0
  %5041 = vmatpush2.xpose.msra.mxu0 0.0
  %5042 = vmatprep.subr.mxu0 0.0
  %5043 = vmatpush2.xpose.msra.mxu0 0.0
  %5044 = vmatprep.subr.mxu0 0.0
  %5045 = vmatpush2.xpose.msra.mxu0 0.0
  %5046 = vmatprep.subr.mxu0 0.0
  %5047 = vmatpush2.xpose.msra.mxu0 0.0
  %5048 = vmatprep.subr.mxu0 0.0
  %5049 = vmatpush2.xpose.msra.mxu0 0.0
  %5050 = vmatprep.subr.mxu0 0.0
  %5051 = vmatpush2.xpose.msra.mxu0 0.0
  %5052 = vmatprep.subr.mxu0 0.0
  %5053 = vmatpush2.xpose.msra.mxu0 0.0
  %5054 = vmatprep.subr.mxu0 0.0
  %5055 = vmatpush2.xpose.msra.mxu0 0.0
  %5056 = vmatprep.subr.mxu0 0.0
  %5057 = vmatpush2.xpose.msra.mxu0 0.0
  %5058 = vmatprep.subr.mxu0 0.0
  %5059 = vmatpush2.xpose.msra.mxu0 0.0
  %5060 = vmatprep.subr.mxu0 0.0
  %5061 = vmatpush2.xpose.msra.mxu0 0.0
  %5062 = vmatprep.subr.mxu0 0.0
  %5063 = vmatpush2.xpose.msra.mxu0 0.0
  %5064 = vmatprep.subr.mxu0 0.0
  %5065 = vmatpush2.xpose.msra.mxu0 0.0
  %5066 = vmatprep.subr.mxu0 0.0
  %5067 = vmatpush2.xpose.msra.mxu0 0.0
  %5068 = vmatprep.subr.mxu0 0.0
  %5069 = vmatpush2.xpose.msra.mxu0 0.0
  %5070 = vmatprep.mubr.f32.mxu0 0.0
  %5071 = vmatmul.mubr.f32.gmra.mxu0 %v5002
  %v5072 = vpop.f32.mrf.mxu0
  %v5073 = vadd.f32 0.0, %v5072
  %v5074 = vpop.f32.mrf.mxu0
  %5075 = vdwg.mxu0
  %5076 = vrot.lane.b32.xlu0 %v210, 104
  %v5077 = vpop.permute.xlu0 %5076
  %5078 = vrot.lane.b32.xlu0 %v210, 72
  %v5079 = vpop.permute.xlu0 %5078
  %v5080 = vsel %vm242, %v5077, 0
  %v5082 = vsel %vm242, %v5079, 0
  %5084 = vmatprep.subr.mxu0 0.0
  %5085 = vmatpush1.xpose.msra.mxu0 0.0
  %5086 = vmatprep.subr.mxu0 0.0
  %5087 = vmatpush1.xpose.msra.mxu0 0.0
  %5088 = vmatprep.subr.mxu0 0.0
  %5089 = vmatpush1.xpose.msra.mxu0 0.0
  %5090 = vmatprep.subr.mxu0 0.0
  %5091 = vmatpush1.xpose.msra.mxu0 0.0
  %5092 = vmatprep.subr.mxu0 0.0
  %5093 = vmatpush1.xpose.msra.mxu0 0.0
  %5094 = vmatprep.subr.mxu0 0.0
  %5095 = vmatpush1.xpose.msra.mxu0 0.0
  %5096 = vmatprep.subr.mxu0 0.0
  %5097 = vmatpush1.xpose.msra.mxu0 0.0
  %5098 = vmatprep.subr.mxu0 0.0
  %5099 = vmatpush1.xpose.msra.mxu0 0.0
  %5100 = vmatprep.subr.mxu0 0.0
  %5101 = vmatpush1.xpose.msra.mxu0 0.0
  %5102 = vmatprep.subr.mxu0 0.0
  %5103 = vmatpush1.xpose.msra.mxu0 0.0
  %5104 = vmatprep.subr.mxu0 0.0
  %5105 = vmatpush1.xpose.msra.mxu0 0.0
  %5106 = vmatprep.subr.mxu0 0.0
  %5107 = vmatpush1.xpose.msra.mxu0 0.0
  %5108 = vmatprep.subr.mxu0 0.0
  %5109 = vmatpush1.xpose.msra.mxu0 0.0
  %5110 = vmatprep.subr.mxu0 0.0
  %5111 = vmatpush1.xpose.msra.mxu0 0.0
  %5112 = vmatprep.subr.mxu0 0.0
  %5113 = vmatpush1.xpose.msra.mxu0 0.0
  %5114 = vmatprep.subr.mxu0 0.0
  %5115 = vmatpush1.xpose.msra.mxu0 %v5082
  %5116 = vmatprep.subr.mxu0 0.0
  %5117 = vmatpush2.xpose.msra.mxu0 0.0
  %5118 = vmatprep.subr.mxu0 0.0
  %5119 = vmatpush2.xpose.msra.mxu0 0.0
  %5120 = vmatprep.subr.mxu0 0.0
  %5121 = vmatpush2.xpose.msra.mxu0 0.0
  %5122 = vmatprep.subr.mxu0 0.0
  %5123 = vmatpush2.xpose.msra.mxu0 0.0
  %5124 = vmatprep.subr.mxu0 0.0
  %5125 = vmatpush2.xpose.msra.mxu0 0.0
  %5126 = vmatprep.subr.mxu0 0.0
  %5127 = vmatpush2.xpose.msra.mxu0 0.0
  %5128 = vmatprep.subr.mxu0 0.0
  %5129 = vmatpush2.xpose.msra.mxu0 0.0
  %5130 = vmatprep.subr.mxu0 0.0
  %5131 = vmatpush2.xpose.msra.mxu0 0.0
  %5132 = vmatprep.subr.mxu0 0.0
  %5133 = vmatpush2.xpose.msra.mxu0 0.0
  %5134 = vmatprep.subr.mxu0 0.0
  %5135 = vmatpush2.xpose.msra.mxu0 0.0
  %5136 = vmatprep.subr.mxu0 0.0
  %5137 = vmatpush2.xpose.msra.mxu0 0.0
  %5138 = vmatprep.subr.mxu0 0.0
  %5139 = vmatpush2.xpose.msra.mxu0 0.0
  %5140 = vmatprep.subr.mxu0 0.0
  %5141 = vmatpush2.xpose.msra.mxu0 0.0
  %5142 = vmatprep.subr.mxu0 0.0
  %5143 = vmatpush2.xpose.msra.mxu0 0.0
  %5144 = vmatprep.subr.mxu0 0.0
  %5145 = vmatpush2.xpose.msra.mxu0 0.0
  %5146 = vmatprep.subr.mxu0 0.0
  %5147 = vmatpush2.xpose.msra.mxu0 0.0
  %5148 = vmatprep.mubr.f32.mxu0 0.0
  %5149 = vmatmul.mubr.f32.gmra.mxu0 %v5080
  %v5150 = vpop.f32.mrf.mxu0
  %v5151 = vadd.f32 0.0, %v5150
  %v5152 = vpop.f32.mrf.mxu0
  %5153 = vdwg.mxu0
  %5154 = vrot.lane.b32.xlu0 %v215, 104
  %v5155 = vpop.permute.xlu0 %5154
  %5156 = vrot.lane.b32.xlu0 %v215, 72
  %v5157 = vpop.permute.xlu0 %5156
  %v5158 = vsel %vm242, %v5155, 0
  %v5160 = vsel %vm242, %v5157, 0
  %5162 = vmatprep.subr.mxu0 0.0
  %5163 = vmatpush1.xpose.msra.mxu0 0.0
  %5164 = vmatprep.subr.mxu0 0.0
  %5165 = vmatpush1.xpose.msra.mxu0 0.0
  %5166 = vmatprep.subr.mxu0 0.0
  %5167 = vmatpush1.xpose.msra.mxu0 0.0
  %5168 = vmatprep.subr.mxu0 0.0
  %5169 = vmatpush1.xpose.msra.mxu0 0.0
  %5170 = vmatprep.subr.mxu0 0.0
  %5171 = vmatpush1.xpose.msra.mxu0 0.0
  %5172 = vmatprep.subr.mxu0 0.0
  %5173 = vmatpush1.xpose.msra.mxu0 0.0
  %5174 = vmatprep.subr.mxu0 0.0
  %5175 = vmatpush1.xpose.msra.mxu0 0.0
  %5176 = vmatprep.subr.mxu0 0.0
  %5177 = vmatpush1.xpose.msra.mxu0 0.0
  %5178 = vmatprep.subr.mxu0 0.0
  %5179 = vmatpush1.xpose.msra.mxu0 0.0
  %5180 = vmatprep.subr.mxu0 0.0
  %5181 = vmatpush1.xpose.msra.mxu0 0.0
  %5182 = vmatprep.subr.mxu0 0.0
  %5183 = vmatpush1.xpose.msra.mxu0 0.0
  %5184 = vmatprep.subr.mxu0 0.0
  %5185 = vmatpush1.xpose.msra.mxu0 0.0
  %5186 = vmatprep.subr.mxu0 0.0
  %5187 = vmatpush1.xpose.msra.mxu0 0.0
  %5188 = vmatprep.subr.mxu0 0.0
  %5189 = vmatpush1.xpose.msra.mxu0 0.0
  %5190 = vmatprep.subr.mxu0 0.0
  %5191 = vmatpush1.xpose.msra.mxu0 0.0
  %5192 = vmatprep.subr.mxu0 0.0
  %5193 = vmatpush1.xpose.msra.mxu0 %v5160
  %5194 = vmatprep.subr.mxu0 0.0
  %5195 = vmatpush2.xpose.msra.mxu0 0.0
  %5196 = vmatprep.subr.mxu0 0.0
  %5197 = vmatpush2.xpose.msra.mxu0 0.0
  %5198 = vmatprep.subr.mxu0 0.0
  %5199 = vmatpush2.xpose.msra.mxu0 0.0
  %5200 = vmatprep.subr.mxu0 0.0
  %5201 = vmatpush2.xpose.msra.mxu0 0.0
  %5202 = vmatprep.subr.mxu0 0.0
  %5203 = vmatpush2.xpose.msra.mxu0 0.0
  %5204 = vmatprep.subr.mxu0 0.0
  %5205 = vmatpush2.xpose.msra.mxu0 0.0
  %5206 = vmatprep.subr.mxu0 0.0
  %5207 = vmatpush2.xpose.msra.mxu0 0.0
  %5208 = vmatprep.subr.mxu0 0.0
  %5209 = vmatpush2.xpose.msra.mxu0 0.0
  %5210 = vmatprep.subr.mxu0 0.0
  %5211 = vmatpush2.xpose.msra.mxu0 0.0
  %5212 = vmatprep.subr.mxu0 0.0
  %5213 = vmatpush2.xpose.msra.mxu0 0.0
  %5214 = vmatprep.subr.mxu0 0.0
  %5215 = vmatpush2.xpose.msra.mxu0 0.0
  %5216 = vmatprep.subr.mxu0 0.0
  %5217 = vmatpush2.xpose.msra.mxu0 0.0
  %5218 = vmatprep.subr.mxu0 0.0
  %5219 = vmatpush2.xpose.msra.mxu0 0.0
  %5220 = vmatprep.subr.mxu0 0.0
  %5221 = vmatpush2.xpose.msra.mxu0 0.0
  %5222 = vmatprep.subr.mxu0 0.0
  %5223 = vmatpush2.xpose.msra.mxu0 0.0
  %5224 = vmatprep.subr.mxu0 0.0
  %5225 = vmatpush2.xpose.msra.mxu0 0.0
  %5226 = vmatprep.mubr.f32.mxu0 0.0
  %5227 = vmatmul.mubr.f32.gmra.mxu0 %v5158
  %v5228 = vpop.f32.mrf.mxu0
  %v5229 = vadd.f32 0.0, %v5228
  %v5230 = vpop.f32.mrf.mxu0
  %5231 = vdwg.mxu0
  %5232 = vrot.lane.b32.xlu0 %v220, 104
  %v5233 = vpop.permute.xlu0 %5232
  %5234 = vrot.lane.b32.xlu0 %v220, 72
  %v5235 = vpop.permute.xlu0 %5234
  %v5236 = vsel %vm242, %v5233, 0
  %v5238 = vsel %vm242, %v5235, 0
  %5240 = vmatprep.subr.mxu0 0.0
  %5241 = vmatpush1.xpose.msra.mxu0 0.0
  %5242 = vmatprep.subr.mxu0 0.0
  %5243 = vmatpush1.xpose.msra.mxu0 0.0
  %5244 = vmatprep.subr.mxu0 0.0
  %5245 = vmatpush1.xpose.msra.mxu0 0.0
  %5246 = vmatprep.subr.mxu0 0.0
  %5247 = vmatpush1.xpose.msra.mxu0 0.0
  %5248 = vmatprep.subr.mxu0 0.0
  %5249 = vmatpush1.xpose.msra.mxu0 0.0
  %5250 = vmatprep.subr.mxu0 0.0
  %5251 = vmatpush1.xpose.msra.mxu0 0.0
  %5252 = vmatprep.subr.mxu0 0.0
  %5253 = vmatpush1.xpose.msra.mxu0 0.0
  %5254 = vmatprep.subr.mxu0 0.0
  %5255 = vmatpush1.xpose.msra.mxu0 0.0
  %5256 = vmatprep.subr.mxu0 0.0
  %5257 = vmatpush1.xpose.msra.mxu0 0.0
  %5258 = vmatprep.subr.mxu0 0.0
  %5259 = vmatpush1.xpose.msra.mxu0 0.0
  %5260 = vmatprep.subr.mxu0 0.0
  %5261 = vmatpush1.xpose.msra.mxu0 0.0
  %5262 = vmatprep.subr.mxu0 0.0
  %5263 = vmatpush1.xpose.msra.mxu0 0.0
  %5264 = vmatprep.subr.mxu0 0.0
  %5265 = vmatpush1.xpose.msra.mxu0 0.0
  %5266 = vmatprep.subr.mxu0 0.0
  %5267 = vmatpush1.xpose.msra.mxu0 0.0
  %5268 = vmatprep.subr.mxu0 0.0
  %5269 = vmatpush1.xpose.msra.mxu0 0.0
  %5270 = vmatprep.subr.mxu0 0.0
  %5271 = vmatpush1.xpose.msra.mxu0 %v5238
  %5272 = vmatprep.subr.mxu0 0.0
  %5273 = vmatpush2.xpose.msra.mxu0 0.0
  %5274 = vmatprep.subr.mxu0 0.0
  %5275 = vmatpush2.xpose.msra.mxu0 0.0
  %5276 = vmatprep.subr.mxu0 0.0
  %5277 = vmatpush2.xpose.msra.mxu0 0.0
  %5278 = vmatprep.subr.mxu0 0.0
  %5279 = vmatpush2.xpose.msra.mxu0 0.0
  %5280 = vmatprep.subr.mxu0 0.0
  %5281 = vmatpush2.xpose.msra.mxu0 0.0
  %5282 = vmatprep.subr.mxu0 0.0
  %5283 = vmatpush2.xpose.msra.mxu0 0.0
  %5284 = vmatprep.subr.mxu0 0.0
  %5285 = vmatpush2.xpose.msra.mxu0 0.0
  %5286 = vmatprep.subr.mxu0 0.0
  %5287 = vmatpush2.xpose.msra.mxu0 0.0
  %5288 = vmatprep.subr.mxu0 0.0
  %5289 = vmatpush2.xpose.msra.mxu0 0.0
  %5290 = vmatprep.subr.mxu0 0.0
  %5291 = vmatpush2.xpose.msra.mxu0 0.0
  %5292 = vmatprep.subr.mxu0 0.0
  %5293 = vmatpush2.xpose.msra.mxu0 0.0
  %5294 = vmatprep.subr.mxu0 0.0
  %5295 = vmatpush2.xpose.msra.mxu0 0.0
  %5296 = vmatprep.subr.mxu0 0.0
  %5297 = vmatpush2.xpose.msra.mxu0 0.0
  %5298 = vmatprep.subr.mxu0 0.0
  %5299 = vmatpush2.xpose.msra.mxu0 0.0
  %5300 = vmatprep.subr.mxu0 0.0
  %5301 = vmatpush2.xpose.msra.mxu0 0.0
  %5302 = vmatprep.subr.mxu0 0.0
  %5303 = vmatpush2.xpose.msra.mxu0 0.0
  %5304 = vmatprep.mubr.f32.mxu0 0.0
  %5305 = vmatmul.mubr.f32.gmra.mxu0 %v5236
  %v5306 = vpop.f32.mrf.mxu0
  %v5307 = vadd.f32 0.0, %v5306
  %v5308 = vpop.f32.mrf.mxu0
  %5309 = vdwg.mxu0
  %v5310 = vmul.f32 %v4761, 0.35355338
  %v5311 = vmul.f32 %v4839, 0.35355338
  %v5312 = vmul.f32 %v4917, 0.35355338
  %v5313 = vmul.f32 %v4995, 0.35355338
  %v5314 = vmul.f32 %v5073, 0.35355338
  %v5315 = vmul.f32 %v5151, 0.35355338
  %v5316 = vmul.f32 %v5229, 0.35355338
  %v5317 = vmul.f32 %v5307, 0.35355338
  %v5318 = vadd.f32 %v5310, %v875
  %v5319 = vadd.f32 %v5311, %v879
  %v5320 = vadd.f32 %v5312, %v883
  %v5321 = vadd.f32 %v5313, %v887
  %v5322 = vadd.f32 %v5314, %v891
  %v5323 = vadd.f32 %v5315, %v895
  %v5324 = vadd.f32 %v5316, %v899
  %v5325 = vadd.f32 %v5317, %v903
  %v5326 = vsel %vm242, %v5318, -inf
  %5327 = vmax.xlane.f32.xlu0 %v5326
  %v5328 = vpop.xlane.xlu0 %5327
  %v5329 = vsel %vm242, %v5319, -inf
  %5330 = vmax.xlane.f32.xlu0 %v5329
  %v5331 = vpop.xlane.xlu0 %5330
  %v5332 = vsel %vm242, %v5320, -inf
  %5333 = vmax.xlane.f32.xlu0 %v5332
  %v5334 = vpop.xlane.xlu0 %5333
  %v5335 = vsel %vm242, %v5321, -inf
  %5336 = vmax.xlane.f32.xlu0 %v5335
  %v5337 = vpop.xlane.xlu0 %5336
  %v5338 = vsel %vm242, %v5322, -inf
  %5339 = vmax.xlane.f32.xlu0 %v5338
  %v5340 = vpop.xlane.xlu0 %5339
  %v5341 = vsel %vm242, %v5323, -inf
  %5342 = vmax.xlane.f32.xlu0 %v5341
  %v5343 = vpop.xlane.xlu0 %5342
  %v5344 = vsel %vm242, %v5324, -inf
  %5345 = vmax.xlane.f32.xlu0 %v5344
  %v5346 = vpop.xlane.xlu0 %5345
  %v5347 = vsel %vm242, %v5325, -inf
  %5348 = vmax.xlane.f32.xlu0 %v5347
  %v5349 = vpop.xlane.xlu0 %5348
  %v5350 = vsub.f32 %v5318, %v5328
  %v5351 = vsub.f32 %v5319, %v5331
  %v5352 = vsub.f32 %v5320, %v5334
  %v5353 = vsub.f32 %v5321, %v5337
  %v5354 = vsub.f32 %v5322, %v5340
  %v5355 = vsub.f32 %v5323, %v5343
  %v5356 = vsub.f32 %v5324, %v5346
  %v5357 = vsub.f32 %v5325, %v5349
  %v5358 = vmul.f32 %v5350, 1.442695
  %v5359 = vpow.pop %v5358
  %v5360 = vmul.f32 %v5351, 1.442695
  %v5361 = vpow.pop %v5360
  %v5362 = vmul.f32 %v5352, 1.442695
  %v5363 = vpow.pop %v5362
  %v5364 = vmul.f32 %v5353, 1.442695
  %v5365 = vpow.pop %v5364
  %v5366 = vmul.f32 %v5354, 1.442695
  %v5367 = vpow.pop %v5366
  %v5368 = vmul.f32 %v5355, 1.442695
  %v5369 = vpow.pop %v5368
  %v5370 = vmul.f32 %v5356, 1.442695
  %v5371 = vpow.pop %v5370
  %v5372 = vmul.f32 %v5357, 1.442695
  %v5373 = vpow.pop %v5372
  %v5374 = vsel %vm242, %v5359, 0.0
  %5375 = vadd.xlane.f32.xlu0 %v5374
  %v5376 = vpop.xlane.xlu0 %5375
  %v5377 = vsel %vm242, %v5361, 0.0
  %5378 = vadd.xlane.f32.xlu0 %v5377
  %v5379 = vpop.xlane.xlu0 %5378
  %v5380 = vsel %vm242, %v5363, 0.0
  %5381 = vadd.xlane.f32.xlu0 %v5380
  %v5382 = vpop.xlane.xlu0 %5381
  %v5383 = vsel %vm242, %v5365, 0.0
  %5384 = vadd.xlane.f32.xlu0 %v5383
  %v5385 = vpop.xlane.xlu0 %5384
  %v5386 = vsel %vm242, %v5367, 0.0
  %5387 = vadd.xlane.f32.xlu0 %v5386
  %v5388 = vpop.xlane.xlu0 %5387
  %v5389 = vsel %vm242, %v5369, 0.0
  %5390 = vadd.xlane.f32.xlu0 %v5389
  %v5391 = vpop.xlane.xlu0 %5390
  %v5392 = vsel %vm242, %v5371, 0.0
  %5393 = vadd.xlane.f32.xlu0 %v5392
  %v5394 = vpop.xlane.xlu0 %5393
  %v5395 = vsel %vm242, %v5373, 0.0
  %5396 = vadd.xlane.f32.xlu0 %v5395
  %v5397 = vpop.xlane.xlu0 %5396
  %v5398 = vrcp.pop %v5376
  %v5399 = vrcp.pop %v5379
  %v5400 = vrcp.pop %v5382
  %v5401 = vrcp.pop %v5385
  %v5402 = vrcp.pop %v5388
  %v5403 = vrcp.pop %v5391
  %v5404 = vrcp.pop %v5394
  %v5405 = vrcp.pop %v5397
  %v5406 = vmul.f32 %v5359, %v5398
  %v5407 = vmul.f32 %v5361, %v5399
  %v5408 = vmul.f32 %v5363, %v5400
  %v5409 = vmul.f32 %v5365, %v5401
  %v5410 = vmul.f32 %v5367, %v5402
  %v5411 = vmul.f32 %v5369, %v5403
  %v5412 = vmul.f32 %v5371, %v5404
  %v5413 = vmul.f32 %v5373, %v5405
  %5414 = vrot.lane.b32.xlu0 %v185, 40
  %v5415 = vpop.permute.xlu0 %5414
  %v5418 = vsel %vm242, %v5406, 0
  %5420 = vmatprep.subr.mxu0 0.0
  %5421 = vmatpush1.msra.mxu0 0.0
  %5422 = vmatprep.subr.mxu0 0.0
  %5423 = vmatpush1.msra.mxu0 0.0
  %5424 = vmatprep.subr.mxu0 0.0
  %5425 = vmatpush1.msra.mxu0 0.0
  %5426 = vmatprep.subr.mxu0 0.0
  %5427 = vmatpush1.msra.mxu0 0.0
  %5428 = vmatprep.subr.mxu0 0.0
  %5429 = vmatpush1.msra.mxu0 0.0
  %5430 = vmatprep.subr.mxu0 0.0
  %5431 = vmatpush1.msra.mxu0 0.0
  %5432 = vmatprep.subr.mxu0 0.0
  %5433 = vmatpush1.msra.mxu0 0.0
  %5434 = vmatprep.subr.mxu0 0.0
  %5435 = vmatpush1.msra.mxu0 0.0
  %5436 = vmatprep.subr.mxu0 0.0
  %5437 = vmatpush1.msra.mxu0 0.0
  %5438 = vmatprep.subr.mxu0 0.0
  %5439 = vmatpush1.msra.mxu0 0.0
  %5440 = vmatprep.subr.mxu0 0.0
  %5441 = vmatpush1.msra.mxu0 0.0
  %5442 = vmatprep.subr.mxu0 0.0
  %5443 = vmatpush1.msra.mxu0 0.0
  %5444 = vmatprep.subr.mxu0 0.0
  %5445 = vmatpush1.msra.mxu0 0.0
  %5446 = vmatprep.subr.mxu0 0.0
  %5447 = vmatpush1.msra.mxu0 0.0
  %5448 = vmatprep.subr.mxu0 0.0
  %5449 = vmatpush1.msra.mxu0 0.0
  %5450 = vmatprep.subr.mxu0 0.0
  %5451 = vmatpush1.msra.mxu0 %v5415
  %5452 = vmatprep.subr.mxu0 0.0
  %5453 = vmatpush2.msra.mxu0 0.0
  %5454 = vmatprep.subr.mxu0 0.0
  %5455 = vmatpush2.msra.mxu0 0.0
  %5456 = vmatprep.subr.mxu0 0.0
  %5457 = vmatpush2.msra.mxu0 0.0
  %5458 = vmatprep.subr.mxu0 0.0
  %5459 = vmatpush2.msra.mxu0 0.0
  %5460 = vmatprep.subr.mxu0 0.0
  %5461 = vmatpush2.msra.mxu0 0.0
  %5462 = vmatprep.subr.mxu0 0.0
  %5463 = vmatpush2.msra.mxu0 0.0
  %5464 = vmatprep.subr.mxu0 0.0
  %5465 = vmatpush2.msra.mxu0 0.0
  %5466 = vmatprep.subr.mxu0 0.0
  %5467 = vmatpush2.msra.mxu0 0.0
  %5468 = vmatprep.subr.mxu0 0.0
  %5469 = vmatpush2.msra.mxu0 0.0
  %5470 = vmatprep.subr.mxu0 0.0
  %5471 = vmatpush2.msra.mxu0 0.0
  %5472 = vmatprep.subr.mxu0 0.0
  %5473 = vmatpush2.msra.mxu0 0.0
  %5474 = vmatprep.subr.mxu0 0.0
  %5475 = vmatpush2.msra.mxu0 0.0
  %5476 = vmatprep.subr.mxu0 0.0
  %5477 = vmatpush2.msra.mxu0 0.0
  %5478 = vmatprep.subr.mxu0 0.0
  %5479 = vmatpush2.msra.mxu0 0.0
  %5480 = vmatprep.subr.mxu0 0.0
  %5481 = vmatpush2.msra.mxu0 0.0
  %5482 = vmatprep.subr.mxu0 0.0
  %5483 = vmatpush2.msra.mxu0 0.0
  %5484 = vmatprep.mubr.f32.mxu0 0.0
  %5485 = vmatmul.mubr.f32.gmra.mxu0 %v5418
  %v5486 = vpop.f32.mrf.mxu0
  %v5487 = vadd.f32 0.0, %v5486
  %v5488 = vpop.f32.mrf.mxu0
  %5489 = vdwg.mxu0
  %5490 = vrot.lane.b32.xlu0 %v190, 40
  %v5491 = vpop.permute.xlu0 %5490
  %v5494 = vsel %vm242, %v5407, 0
  %5496 = vmatprep.subr.mxu0 0.0
  %5497 = vmatpush1.msra.mxu0 0.0
  %5498 = vmatprep.subr.mxu0 0.0
  %5499 = vmatpush1.msra.mxu0 0.0
  %5500 = vmatprep.subr.mxu0 0.0
  %5501 = vmatpush1.msra.mxu0 0.0
  %5502 = vmatprep.subr.mxu0 0.0
  %5503 = vmatpush1.msra.mxu0 0.0
  %5504 = vmatprep.subr.mxu0 0.0
  %5505 = vmatpush1.msra.mxu0 0.0
  %5506 = vmatprep.subr.mxu0 0.0
  %5507 = vmatpush1.msra.mxu0 0.0
  %5508 = vmatprep.subr.mxu0 0.0
  %5509 = vmatpush1.msra.mxu0 0.0
  %5510 = vmatprep.subr.mxu0 0.0
  %5511 = vmatpush1.msra.mxu0 0.0
  %5512 = vmatprep.subr.mxu0 0.0
  %5513 = vmatpush1.msra.mxu0 0.0
  %5514 = vmatprep.subr.mxu0 0.0
  %5515 = vmatpush1.msra.mxu0 0.0
  %5516 = vmatprep.subr.mxu0 0.0
  %5517 = vmatpush1.msra.mxu0 0.0
  %5518 = vmatprep.subr.mxu0 0.0
  %5519 = vmatpush1.msra.mxu0 0.0
  %5520 = vmatprep.subr.mxu0 0.0
  %5521 = vmatpush1.msra.mxu0 0.0
  %5522 = vmatprep.subr.mxu0 0.0
  %5523 = vmatpush1.msra.mxu0 0.0
  %5524 = vmatprep.subr.mxu0 0.0
  %5525 = vmatpush1.msra.mxu0 0.0
  %5526 = vmatprep.subr.mxu0 0.0
  %5527 = vmatpush1.msra.mxu0 %v5491
  %5528 = vmatprep.subr.mxu0 0.0
  %5529 = vmatpush2.msra.mxu0 0.0
  %5530 = vmatprep.subr.mxu0 0.0
  %5531 = vmatpush2.msra.mxu0 0.0
  %5532 = vmatprep.subr.mxu0 0.0
  %5533 = vmatpush2.msra.mxu0 0.0
  %5534 = vmatprep.subr.mxu0 0.0
  %5535 = vmatpush2.msra.mxu0 0.0
  %5536 = vmatprep.subr.mxu0 0.0
  %5537 = vmatpush2.msra.mxu0 0.0
  %5538 = vmatprep.subr.mxu0 0.0
  %5539 = vmatpush2.msra.mxu0 0.0
  %5540 = vmatprep.subr.mxu0 0.0
  %5541 = vmatpush2.msra.mxu0 0.0
  %5542 = vmatprep.subr.mxu0 0.0
  %5543 = vmatpush2.msra.mxu0 0.0
  %5544 = vmatprep.subr.mxu0 0.0
  %5545 = vmatpush2.msra.mxu0 0.0
  %5546 = vmatprep.subr.mxu0 0.0
  %5547 = vmatpush2.msra.mxu0 0.0
  %5548 = vmatprep.subr.mxu0 0.0
  %5549 = vmatpush2.msra.mxu0 0.0
  %5550 = vmatprep.subr.mxu0 0.0
  %5551 = vmatpush2.msra.mxu0 0.0
  %5552 = vmatprep.subr.mxu0 0.0
  %5553 = vmatpush2.msra.mxu0 0.0
  %5554 = vmatprep.subr.mxu0 0.0
  %5555 = vmatpush2.msra.mxu0 0.0
  %5556 = vmatprep.subr.mxu0 0.0
  %5557 = vmatpush2.msra.mxu0 0.0
  %5558 = vmatprep.subr.mxu0 0.0
  %5559 = vmatpush2.msra.mxu0 0.0
  %5560 = vmatprep.mubr.f32.mxu0 0.0
  %5561 = vmatmul.mubr.f32.gmra.mxu0 %v5494
  %v5562 = vpop.f32.mrf.mxu0
  %v5563 = vadd.f32 0.0, %v5562
  %v5564 = vpop.f32.mrf.mxu0
  %5565 = vdwg.mxu0
  %5566 = vrot.lane.b32.xlu0 %v195, 40
  %v5567 = vpop.permute.xlu0 %5566
  %v5570 = vsel %vm242, %v5408, 0
  %5572 = vmatprep.subr.mxu0 0.0
  %5573 = vmatpush1.msra.mxu0 0.0
  %5574 = vmatprep.subr.mxu0 0.0
  %5575 = vmatpush1.msra.mxu0 0.0
  %5576 = vmatprep.subr.mxu0 0.0
  %5577 = vmatpush1.msra.mxu0 0.0
  %5578 = vmatprep.subr.mxu0 0.0
  %5579 = vmatpush1.msra.mxu0 0.0
  %5580 = vmatprep.subr.mxu0 0.0
  %5581 = vmatpush1.msra.mxu0 0.0
  %5582 = vmatprep.subr.mxu0 0.0
  %5583 = vmatpush1.msra.mxu0 0.0
  %5584 = vmatprep.subr.mxu0 0.0
  %5585 = vmatpush1.msra.mxu0 0.0
  %5586 = vmatprep.subr.mxu0 0.0
  %5587 = vmatpush1.msra.mxu0 0.0
  %5588 = vmatprep.subr.mxu0 0.0
  %5589 = vmatpush1.msra.mxu0 0.0
  %5590 = vmatprep.subr.mxu0 0.0
  %5591 = vmatpush1.msra.mxu0 0.0
  %5592 = vmatprep.subr.mxu0 0.0
  %5593 = vmatpush1.msra.mxu0 0.0
  %5594 = vmatprep.subr.mxu0 0.0
  %5595 = vmatpush1.msra.mxu0 0.0
  %5596 = vmatprep.subr.mxu0 0.0
  %5597 = vmatpush1.msra.mxu0 0.0
  %5598 = vmatprep.subr.mxu0 0.0
  %5599 = vmatpush1.msra.mxu0 0.0
  %5600 = vmatprep.subr.mxu0 0.0
  %5601 = vmatpush1.msra.mxu0 0.0
  %5602 = vmatprep.subr.mxu0 0.0
  %5603 = vmatpush1.msra.mxu0 %v5567
  %5604 = vmatprep.subr.mxu0 0.0
  %5605 = vmatpush2.msra.mxu0 0.0
  %5606 = vmatprep.subr.mxu0 0.0
  %5607 = vmatpush2.msra.mxu0 0.0
  %5608 = vmatprep.subr.mxu0 0.0
  %5609 = vmatpush2.msra.mxu0 0.0
  %5610 = vmatprep.subr.mxu0 0.0
  %5611 = vmatpush2.msra.mxu0 0.0
  %5612 = vmatprep.subr.mxu0 0.0
  %5613 = vmatpush2.msra.mxu0 0.0
  %5614 = vmatprep.subr.mxu0 0.0
  %5615 = vmatpush2.msra.mxu0 0.0
  %5616 = vmatprep.subr.mxu0 0.0
  %5617 = vmatpush2.msra.mxu0 0.0
  %5618 = vmatprep.subr.mxu0 0.0
  %5619 = vmatpush2.msra.mxu0 0.0
  %5620 = vmatprep.subr.mxu0 0.0
  %5621 = vmatpush2.msra.mxu0 0.0
  %5622 = vmatprep.subr.mxu0 0.0
  %5623 = vmatpush2.msra.mxu0 0.0
  %5624 = vmatprep.subr.mxu0 0.0
  %5625 = vmatpush2.msra.mxu0 0.0
  %5626 = vmatprep.subr.mxu0 0.0
  %5627 = vmatpush2.msra.mxu0 0.0
  %5628 = vmatprep.subr.mxu0 0.0
  %5629 = vmatpush2.msra.mxu0 0.0
  %5630 = vmatprep.subr.mxu0 0.0
  %5631 = vmatpush2.msra.mxu0 0.0
  %5632 = vmatprep.subr.mxu0 0.0
  %5633 = vmatpush2.msra.mxu0 0.0
  %5634 = vmatprep.subr.mxu0 0.0
  %5635 = vmatpush2.msra.mxu0 0.0
  %5636 = vmatprep.mubr.f32.mxu0 0.0
  %5637 = vmatmul.mubr.f32.gmra.mxu0 %v5570
  %v5638 = vpop.f32.mrf.mxu0
  %v5639 = vadd.f32 0.0, %v5638
  %v5640 = vpop.f32.mrf.mxu0
  %5641 = vdwg.mxu0
  %5642 = vrot.lane.b32.xlu0 %v200, 40
  %v5643 = vpop.permute.xlu0 %5642
  %v5646 = vsel %vm242, %v5409, 0
  %5648 = vmatprep.subr.mxu0 0.0
  %5649 = vmatpush1.msra.mxu0 0.0
  %5650 = vmatprep.subr.mxu0 0.0
  %5651 = vmatpush1.msra.mxu0 0.0
  %5652 = vmatprep.subr.mxu0 0.0
  %5653 = vmatpush1.msra.mxu0 0.0
  %5654 = vmatprep.subr.mxu0 0.0
  %5655 = vmatpush1.msra.mxu0 0.0
  %5656 = vmatprep.subr.mxu0 0.0
  %5657 = vmatpush1.msra.mxu0 0.0
  %5658 = vmatprep.subr.mxu0 0.0
  %5659 = vmatpush1.msra.mxu0 0.0
  %5660 = vmatprep.subr.mxu0 0.0
  %5661 = vmatpush1.msra.mxu0 0.0
  %5662 = vmatprep.subr.mxu0 0.0
  %5663 = vmatpush1.msra.mxu0 0.0
  %5664 = vmatprep.subr.mxu0 0.0
  %5665 = vmatpush1.msra.mxu0 0.0
  %5666 = vmatprep.subr.mxu0 0.0
  %5667 = vmatpush1.msra.mxu0 0.0
  %5668 = vmatprep.subr.mxu0 0.0
  %5669 = vmatpush1.msra.mxu0 0.0
  %5670 = vmatprep.subr.mxu0 0.0
  %5671 = vmatpush1.msra.mxu0 0.0
  %5672 = vmatprep.subr.mxu0 0.0
  %5673 = vmatpush1.msra.mxu0 0.0
  %5674 = vmatprep.subr.mxu0 0.0
  %5675 = vmatpush1.msra.mxu0 0.0
  %5676 = vmatprep.subr.mxu0 0.0
  %5677 = vmatpush1.msra.mxu0 0.0
  %5678 = vmatprep.subr.mxu0 0.0
  %5679 = vmatpush1.msra.mxu0 %v5643
  %5680 = vmatprep.subr.mxu0 0.0
  %5681 = vmatpush2.msra.mxu0 0.0
  %5682 = vmatprep.subr.mxu0 0.0
  %5683 = vmatpush2.msra.mxu0 0.0
  %5684 = vmatprep.subr.mxu0 0.0
  %5685 = vmatpush2.msra.mxu0 0.0
  %5686 = vmatprep.subr.mxu0 0.0
  %5687 = vmatpush2.msra.mxu0 0.0
  %5688 = vmatprep.subr.mxu0 0.0
  %5689 = vmatpush2.msra.mxu0 0.0
  %5690 = vmatprep.subr.mxu0 0.0
  %5691 = vmatpush2.msra.mxu0 0.0
  %5692 = vmatprep.subr.mxu0 0.0
  %5693 = vmatpush2.msra.mxu0 0.0
  %5694 = vmatprep.subr.mxu0 0.0
  %5695 = vmatpush2.msra.mxu0 0.0
  %5696 = vmatprep.subr.mxu0 0.0
  %5697 = vmatpush2.msra.mxu0 0.0
  %5698 = vmatprep.subr.mxu0 0.0
  %5699 = vmatpush2.msra.mxu0 0.0
  %5700 = vmatprep.subr.mxu0 0.0
  %5701 = vmatpush2.msra.mxu0 0.0
  %5702 = vmatprep.subr.mxu0 0.0
  %5703 = vmatpush2.msra.mxu0 0.0
  %5704 = vmatprep.subr.mxu0 0.0
  %5705 = vmatpush2.msra.mxu0 0.0
  %5706 = vmatprep.subr.mxu0 0.0
  %5707 = vmatpush2.msra.mxu0 0.0
  %5708 = vmatprep.subr.mxu0 0.0
  %5709 = vmatpush2.msra.mxu0 0.0
  %5710 = vmatprep.subr.mxu0 0.0
  %5711 = vmatpush2.msra.mxu0 0.0
  %5712 = vmatprep.mubr.f32.mxu0 0.0
  %5713 = vmatmul.mubr.f32.gmra.mxu0 %v5646
  %v5714 = vpop.f32.mrf.mxu0
  %v5715 = vadd.f32 0.0, %v5714
  %v5716 = vpop.f32.mrf.mxu0
  %5717 = vdwg.mxu0
  %5718 = vrot.lane.b32.xlu0 %v205, 40
  %v5719 = vpop.permute.xlu0 %5718
  %v5722 = vsel %vm242, %v5410, 0
  %5724 = vmatprep.subr.mxu0 0.0
  %5725 = vmatpush1.msra.mxu0 0.0
  %5726 = vmatprep.subr.mxu0 0.0
  %5727 = vmatpush1.msra.mxu0 0.0
  %5728 = vmatprep.subr.mxu0 0.0
  %5729 = vmatpush1.msra.mxu0 0.0
  %5730 = vmatprep.subr.mxu0 0.0
  %5731 = vmatpush1.msra.mxu0 0.0
  %5732 = vmatprep.subr.mxu0 0.0
  %5733 = vmatpush1.msra.mxu0 0.0
  %5734 = vmatprep.subr.mxu0 0.0
  %5735 = vmatpush1.msra.mxu0 0.0
  %5736 = vmatprep.subr.mxu0 0.0
  %5737 = vmatpush1.msra.mxu0 0.0
  %5738 = vmatprep.subr.mxu0 0.0
  %5739 = vmatpush1.msra.mxu0 0.0
  %5740 = vmatprep.subr.mxu0 0.0
  %5741 = vmatpush1.msra.mxu0 0.0
  %5742 = vmatprep.subr.mxu0 0.0
  %5743 = vmatpush1.msra.mxu0 0.0
  %5744 = vmatprep.subr.mxu0 0.0
  %5745 = vmatpush1.msra.mxu0 0.0
  %5746 = vmatprep.subr.mxu0 0.0
  %5747 = vmatpush1.msra.mxu0 0.0
  %5748 = vmatprep.subr.mxu0 0.0
  %5749 = vmatpush1.msra.mxu0 0.0
  %5750 = vmatprep.subr.mxu0 0.0
  %5751 = vmatpush1.msra.mxu0 0.0
  %5752 = vmatprep.subr.mxu0 0.0
  %5753 = vmatpush1.msra.mxu0 0.0
  %5754 = vmatprep.subr.mxu0 0.0
  %5755 = vmatpush1.msra.mxu0 %v5719
  %5756 = vmatprep.subr.mxu0 0.0
  %5757 = vmatpush2.msra.mxu0 0.0
  %5758 = vmatprep.subr.mxu0 0.0
  %5759 = vmatpush2.msra.mxu0 0.0
  %5760 = vmatprep.subr.mxu0 0.0
  %5761 = vmatpush2.msra.mxu0 0.0
  %5762 = vmatprep.subr.mxu0 0.0
  %5763 = vmatpush2.msra.mxu0 0.0
  %5764 = vmatprep.subr.mxu0 0.0
  %5765 = vmatpush2.msra.mxu0 0.0
  %5766 = vmatprep.subr.mxu0 0.0
  %5767 = vmatpush2.msra.mxu0 0.0
  %5768 = vmatprep.subr.mxu0 0.0
  %5769 = vmatpush2.msra.mxu0 0.0
  %5770 = vmatprep.subr.mxu0 0.0
  %5771 = vmatpush2.msra.mxu0 0.0
  %5772 = vmatprep.subr.mxu0 0.0
  %5773 = vmatpush2.msra.mxu0 0.0
  %5774 = vmatprep.subr.mxu0 0.0
  %5775 = vmatpush2.msra.mxu0 0.0
  %5776 = vmatprep.subr.mxu0 0.0
  %5777 = vmatpush2.msra.mxu0 0.0
  %5778 = vmatprep.subr.mxu0 0.0
  %5779 = vmatpush2.msra.mxu0 0.0
  %5780 = vmatprep.subr.mxu0 0.0
  %5781 = vmatpush2.msra.mxu0 0.0
  %5782 = vmatprep.subr.mxu0 0.0
  %5783 = vmatpush2.msra.mxu0 0.0
  %5784 = vmatprep.subr.mxu0 0.0
  %5785 = vmatpush2.msra.mxu0 0.0
  %5786 = vmatprep.subr.mxu0 0.0
  %5787 = vmatpush2.msra.mxu0 0.0
  %5788 = vmatprep.mubr.f32.mxu0 0.0
  %5789 = vmatmul.mubr.f32.gmra.mxu0 %v5722
  %v5790 = vpop.f32.mrf.mxu0
  %v5791 = vadd.f32 0.0, %v5790
  %v5792 = vpop.f32.mrf.mxu0
  %5793 = vdwg.mxu0
  %5794 = vrot.lane.b32.xlu0 %v210, 40
  %v5795 = vpop.permute.xlu0 %5794
  %v5798 = vsel %vm242, %v5411, 0
  %5800 = vmatprep.subr.mxu0 0.0
  %5801 = vmatpush1.msra.mxu0 0.0
  %5802 = vmatprep.subr.mxu0 0.0
  %5803 = vmatpush1.msra.mxu0 0.0
  %5804 = vmatprep.subr.mxu0 0.0
  %5805 = vmatpush1.msra.mxu0 0.0
  %5806 = vmatprep.subr.mxu0 0.0
  %5807 = vmatpush1.msra.mxu0 0.0
  %5808 = vmatprep.subr.mxu0 0.0
  %5809 = vmatpush1.msra.mxu0 0.0
  %5810 = vmatprep.subr.mxu0 0.0
  %5811 = vmatpush1.msra.mxu0 0.0
  %5812 = vmatprep.subr.mxu0 0.0
  %5813 = vmatpush1.msra.mxu0 0.0
  %5814 = vmatprep.subr.mxu0 0.0
  %5815 = vmatpush1.msra.mxu0 0.0
  %5816 = vmatprep.subr.mxu0 0.0
  %5817 = vmatpush1.msra.mxu0 0.0
  %5818 = vmatprep.subr.mxu0 0.0
  %5819 = vmatpush1.msra.mxu0 0.0
  %5820 = vmatprep.subr.mxu0 0.0
  %5821 = vmatpush1.msra.mxu0 0.0
  %5822 = vmatprep.subr.mxu0 0.0
  %5823 = vmatpush1.msra.mxu0 0.0
  %5824 = vmatprep.subr.mxu0 0.0
  %5825 = vmatpush1.msra.mxu0 0.0
  %5826 = vmatprep.subr.mxu0 0.0
  %5827 = vmatpush1.msra.mxu0 0.0
  %5828 = vmatprep.subr.mxu0 0.0
  %5829 = vmatpush1.msra.mxu0 0.0
  %5830 = vmatprep.subr.mxu0 0.0
  %5831 = vmatpush1.msra.mxu0 %v5795
  %5832 = vmatprep.subr.mxu0 0.0
  %5833 = vmatpush2.msra.mxu0 0.0
  %5834 = vmatprep.subr.mxu0 0.0
  %5835 = vmatpush2.msra.mxu0 0.0
  %5836 = vmatprep.subr.mxu0 0.0
  %5837 = vmatpush2.msra.mxu0 0.0
  %5838 = vmatprep.subr.mxu0 0.0
  %5839 = vmatpush2.msra.mxu0 0.0
  %5840 = vmatprep.subr.mxu0 0.0
  %5841 = vmatpush2.msra.mxu0 0.0
  %5842 = vmatprep.subr.mxu0 0.0
  %5843 = vmatpush2.msra.mxu0 0.0
  %5844 = vmatprep.subr.mxu0 0.0
  %5845 = vmatpush2.msra.mxu0 0.0
  %5846 = vmatprep.subr.mxu0 0.0
  %5847 = vmatpush2.msra.mxu0 0.0
  %5848 = vmatprep.subr.mxu0 0.0
  %5849 = vmatpush2.msra.mxu0 0.0
  %5850 = vmatprep.subr.mxu0 0.0
  %5851 = vmatpush2.msra.mxu0 0.0
  %5852 = vmatprep.subr.mxu0 0.0
  %5853 = vmatpush2.msra.mxu0 0.0
  %5854 = vmatprep.subr.mxu0 0.0
  %5855 = vmatpush2.msra.mxu0 0.0
  %5856 = vmatprep.subr.mxu0 0.0
  %5857 = vmatpush2.msra.mxu0 0.0
  %5858 = vmatprep.subr.mxu0 0.0
  %5859 = vmatpush2.msra.mxu0 0.0
  %5860 = vmatprep.subr.mxu0 0.0
  %5861 = vmatpush2.msra.mxu0 0.0
  %5862 = vmatprep.subr.mxu0 0.0
  %5863 = vmatpush2.msra.mxu0 0.0
  %5864 = vmatprep.mubr.f32.mxu0 0.0
  %5865 = vmatmul.mubr.f32.gmra.mxu0 %v5798
  %v5866 = vpop.f32.mrf.mxu0
  %v5867 = vadd.f32 0.0, %v5866
  %v5868 = vpop.f32.mrf.mxu0
  %5869 = vdwg.mxu0
  %5870 = vrot.lane.b32.xlu0 %v215, 40
  %v5871 = vpop.permute.xlu0 %5870
  %v5874 = vsel %vm242, %v5412, 0
  %5876 = vmatprep.subr.mxu0 0.0
  %5877 = vmatpush1.msra.mxu0 0.0
  %5878 = vmatprep.subr.mxu0 0.0
  %5879 = vmatpush1.msra.mxu0 0.0
  %5880 = vmatprep.subr.mxu0 0.0
  %5881 = vmatpush1.msra.mxu0 0.0
  %5882 = vmatprep.subr.mxu0 0.0
  %5883 = vmatpush1.msra.mxu0 0.0
  %5884 = vmatprep.subr.mxu0 0.0
  %5885 = vmatpush1.msra.mxu0 0.0
  %5886 = vmatprep.subr.mxu0 0.0
  %5887 = vmatpush1.msra.mxu0 0.0
  %5888 = vmatprep.subr.mxu0 0.0
  %5889 = vmatpush1.msra.mxu0 0.0
  %5890 = vmatprep.subr.mxu0 0.0
  %5891 = vmatpush1.msra.mxu0 0.0
  %5892 = vmatprep.subr.mxu0 0.0
  %5893 = vmatpush1.msra.mxu0 0.0
  %5894 = vmatprep.subr.mxu0 0.0
  %5895 = vmatpush1.msra.mxu0 0.0
  %5896 = vmatprep.subr.mxu0 0.0
  %5897 = vmatpush1.msra.mxu0 0.0
  %5898 = vmatprep.subr.mxu0 0.0
  %5899 = vmatpush1.msra.mxu0 0.0
  %5900 = vmatprep.subr.mxu0 0.0
  %5901 = vmatpush1.msra.mxu0 0.0
  %5902 = vmatprep.subr.mxu0 0.0
  %5903 = vmatpush1.msra.mxu0 0.0
  %5904 = vmatprep.subr.mxu0 0.0
  %5905 = vmatpush1.msra.mxu0 0.0
  %5906 = vmatprep.subr.mxu0 0.0
  %5907 = vmatpush1.msra.mxu0 %v5871
  %5908 = vmatprep.subr.mxu0 0.0
  %5909 = vmatpush2.msra.mxu0 0.0
  %5910 = vmatprep.subr.mxu0 0.0
  %5911 = vmatpush2.msra.mxu0 0.0
  %5912 = vmatprep.subr.mxu0 0.0
  %5913 = vmatpush2.msra.mxu0 0.0
  %5914 = vmatprep.subr.mxu0 0.0
  %5915 = vmatpush2.msra.mxu0 0.0
  %5916 = vmatprep.subr.mxu0 0.0
  %5917 = vmatpush2.msra.mxu0 0.0
  %5918 = vmatprep.subr.mxu0 0.0
  %5919 = vmatpush2.msra.mxu0 0.0
  %5920 = vmatprep.subr.mxu0 0.0
  %5921 = vmatpush2.msra.mxu0 0.0
  %5922 = vmatprep.subr.mxu0 0.0
  %5923 = vmatpush2.msra.mxu0 0.0
  %5924 = vmatprep.subr.mxu0 0.0
  %5925 = vmatpush2.msra.mxu0 0.0
  %5926 = vmatprep.subr.mxu0 0.0
  %5927 = vmatpush2.msra.mxu0 0.0
  %5928 = vmatprep.subr.mxu0 0.0
  %5929 = vmatpush2.msra.mxu0 0.0
  %5930 = vmatprep.subr.mxu0 0.0
  %5931 = vmatpush2.msra.mxu0 0.0
  %5932 = vmatprep.subr.mxu0 0.0
  %5933 = vmatpush2.msra.mxu0 0.0
  %5934 = vmatprep.subr.mxu0 0.0
  %5935 = vmatpush2.msra.mxu0 0.0
  %5936 = vmatprep.subr.mxu0 0.0
  %5937 = vmatpush2.msra.mxu0 0.0
  %5938 = vmatprep.subr.mxu0 0.0
  %5939 = vmatpush2.msra.mxu0 0.0
  %5940 = vmatprep.mubr.f32.mxu0 0.0
  %5941 = vmatmul.mubr.f32.gmra.mxu0 %v5874
  %v5942 = vpop.f32.mrf.mxu0
  %v5943 = vadd.f32 0.0, %v5942
  %v5944 = vpop.f32.mrf.mxu0
  %5945 = vdwg.mxu0
  %5946 = vrot.lane.b32.xlu0 %v220, 40
  %v5947 = vpop.permute.xlu0 %5946
  %v5950 = vsel %vm242, %v5413, 0
  %5952 = vmatprep.subr.mxu0 0.0
  %5953 = vmatpush1.msra.mxu0 0.0
  %5954 = vmatprep.subr.mxu0 0.0
  %5955 = vmatpush1.msra.mxu0 0.0
  %5956 = vmatprep.subr.mxu0 0.0
  %5957 = vmatpush1.msra.mxu0 0.0
  %5958 = vmatprep.subr.mxu0 0.0
  %5959 = vmatpush1.msra.mxu0 0.0
  %5960 = vmatprep.subr.mxu0 0.0
  %5961 = vmatpush1.msra.mxu0 0.0
  %5962 = vmatprep.subr.mxu0 0.0
  %5963 = vmatpush1.msra.mxu0 0.0
  %5964 = vmatprep.subr.mxu0 0.0
  %5965 = vmatpush1.msra.mxu0 0.0
  %5966 = vmatprep.subr.mxu0 0.0
  %5967 = vmatpush1.msra.mxu0 0.0
  %5968 = vmatprep.subr.mxu0 0.0
  %5969 = vmatpush1.msra.mxu0 0.0
  %5970 = vmatprep.subr.mxu0 0.0
  %5971 = vmatpush1.msra.mxu0 0.0
  %5972 = vmatprep.subr.mxu0 0.0
  %5973 = vmatpush1.msra.mxu0 0.0
  %5974 = vmatprep.subr.mxu0 0.0
  %5975 = vmatpush1.msra.mxu0 0.0
  %5976 = vmatprep.subr.mxu0 0.0
  %5977 = vmatpush1.msra.mxu0 0.0
  %5978 = vmatprep.subr.mxu0 0.0
  %5979 = vmatpush1.msra.mxu0 0.0
  %5980 = vmatprep.subr.mxu0 0.0
  %5981 = vmatpush1.msra.mxu0 0.0
  %5982 = vmatprep.subr.mxu0 0.0
  %5983 = vmatpush1.msra.mxu0 %v5947
  %5984 = vmatprep.subr.mxu0 0.0
  %5985 = vmatpush2.msra.mxu0 0.0
  %5986 = vmatprep.subr.mxu0 0.0
  %5987 = vmatpush2.msra.mxu0 0.0
  %5988 = vmatprep.subr.mxu0 0.0
  %5989 = vmatpush2.msra.mxu0 0.0
  %5990 = vmatprep.subr.mxu0 0.0
  %5991 = vmatpush2.msra.mxu0 0.0
  %5992 = vmatprep.subr.mxu0 0.0
  %5993 = vmatpush2.msra.mxu0 0.0
  %5994 = vmatprep.subr.mxu0 0.0
  %5995 = vmatpush2.msra.mxu0 0.0
  %5996 = vmatprep.subr.mxu0 0.0
  %5997 = vmatpush2.msra.mxu0 0.0
  %5998 = vmatprep.subr.mxu0 0.0
  %5999 = vmatpush2.msra.mxu0 0.0
  %6000 = vmatprep.subr.mxu0 0.0
  %6001 = vmatpush2.msra.mxu0 0.0
  %6002 = vmatprep.subr.mxu0 0.0
  %6003 = vmatpush2.msra.mxu0 0.0
  %6004 = vmatprep.subr.mxu0 0.0
  %6005 = vmatpush2.msra.mxu0 0.0
  %6006 = vmatprep.subr.mxu0 0.0
  %6007 = vmatpush2.msra.mxu0 0.0
  %6008 = vmatprep.subr.mxu0 0.0
  %6009 = vmatpush2.msra.mxu0 0.0
  %6010 = vmatprep.subr.mxu0 0.0
  %6011 = vmatpush2.msra.mxu0 0.0
  %6012 = vmatprep.subr.mxu0 0.0
  %6013 = vmatpush2.msra.mxu0 0.0
  %6014 = vmatprep.subr.mxu0 0.0
  %6015 = vmatpush2.msra.mxu0 0.0
  %6016 = vmatprep.mubr.f32.mxu0 0.0
  %6017 = vmatmul.mubr.f32.gmra.mxu0 %v5950
  %v6018 = vpop.f32.mrf.mxu0
  %v6019 = vadd.f32 0.0, %v6018
  %v6020 = vpop.f32.mrf.mxu0
  %6021 = vdwg.mxu0
  %v6022 = vld [vmem:[%s5 + $0x18] sm:$0xff]
  %v6024 = vsel %vm242, %v5487, 0
  %v6027 = vsel %vm242, %v5563, 0
  %v6030 = vsel %vm242, %v5639, 0
  %v6033 = vsel %vm242, %v5715, 0
  %v6036 = vsel %vm242, %v5791, 0
  %v6039 = vsel %vm242, %v5867, 0
  %v6042 = vsel %vm242, %v5943, 0
  %v6045 = vsel %vm242, %v6019, 0
  %6047 = vmatprep.subr.mxu0 0.0
  %6048 = vmatpush1.msra.mxu0 0.0
  %6049 = vmatprep.subr.mxu0 0.0
  %6050 = vmatpush1.msra.mxu0 0.0
  %6051 = vmatprep.subr.mxu0 0.0
  %6052 = vmatpush1.msra.mxu0 0.0
  %6053 = vmatprep.subr.mxu0 0.0
  %6054 = vmatpush1.msra.mxu0 0.0
  %6055 = vmatprep.subr.mxu0 0.0
  %6056 = vmatpush1.msra.mxu0 0.0
  %6057 = vmatprep.subr.mxu0 0.0
  %6058 = vmatpush1.msra.mxu0 0.0
  %6059 = vmatprep.subr.mxu0 0.0
  %6060 = vmatpush1.msra.mxu0 0.0
  %6061 = vmatprep.subr.mxu0 0.0
  %6062 = vmatpush1.msra.mxu0 0.0
  %6063 = vmatprep.subr.mxu0 0.0
  %6064 = vmatpush1.msra.mxu0 0.0
  %6065 = vmatprep.subr.mxu0 0.0
  %6066 = vmatpush1.msra.mxu0 0.0
  %6067 = vmatprep.subr.mxu0 0.0
  %6068 = vmatpush1.msra.mxu0 0.0
  %6069 = vmatprep.subr.mxu0 0.0
  %6070 = vmatpush1.msra.mxu0 0.0
  %6071 = vmatprep.subr.mxu0 0.0
  %6072 = vmatpush1.msra.mxu0 0.0
  %6073 = vmatprep.subr.mxu0 0.0
  %6074 = vmatpush1.msra.mxu0 0.0
  %6075 = vmatprep.subr.mxu0 0.0
  %6076 = vmatpush1.msra.mxu0 0.0
  %6077 = vmatprep.subr.mxu0 0.0
  %6078 = vmatpush1.msra.mxu0 %v6022
  %6079 = vmatprep.subr.mxu0 0.0
  %6080 = vmatpush2.msra.mxu0 0.0
  %6081 = vmatprep.subr.mxu0 0.0
  %6082 = vmatpush2.msra.mxu0 0.0
  %6083 = vmatprep.subr.mxu0 0.0
  %6084 = vmatpush2.msra.mxu0 0.0
  %6085 = vmatprep.subr.mxu0 0.0
  %6086 = vmatpush2.msra.mxu0 0.0
  %6087 = vmatprep.subr.mxu0 0.0
  %6088 = vmatpush2.msra.mxu0 0.0
  %6089 = vmatprep.subr.mxu0 0.0
  %6090 = vmatpush2.msra.mxu0 0.0
  %6091 = vmatprep.subr.mxu0 0.0
  %6092 = vmatpush2.msra.mxu0 0.0
  %6093 = vmatprep.subr.mxu0 0.0
  %6094 = vmatpush2.msra.mxu0 0.0
  %6095 = vmatprep.subr.mxu0 0.0
  %6096 = vmatpush2.msra.mxu0 0.0
  %6097 = vmatprep.subr.mxu0 0.0
  %6098 = vmatpush2.msra.mxu0 0.0
  %6099 = vmatprep.subr.mxu0 0.0
  %6100 = vmatpush2.msra.mxu0 0.0
  %6101 = vmatprep.subr.mxu0 0.0
  %6102 = vmatpush2.msra.mxu0 0.0
  %6103 = vmatprep.subr.mxu0 0.0
  %6104 = vmatpush2.msra.mxu0 0.0
  %6105 = vmatprep.subr.mxu0 0.0
  %6106 = vmatpush2.msra.mxu0 0.0
  %6107 = vmatprep.subr.mxu0 0.0
  %6108 = vmatpush2.msra.mxu0 0.0
  %6109 = vmatprep.subr.mxu0 0.0
  %6110 = vmatpush2.msra.mxu0 0.0
  %6111 = vmatprep.mubr.f32.mxu0 0.0
  %6112 = vmatmul.mubr.f32.gmra.mxu0 %v6024
  %v6113 = vpop.f32.mrf.mxu0
  %v6114 = vadd.f32 0.0, %v6113
  %v6115 = vpop.f32.mrf.mxu0
  %6116 = vmatprep.mubr.f32.mxu0 0.0
  %6117 = vmatmul.mubr.f32.gmra.mxu0 %v6027
  %v6118 = vpop.f32.mrf.mxu0
  %v6119 = vadd.f32 0.0, %v6118
  %v6120 = vpop.f32.mrf.mxu0
  %6121 = vmatprep.mubr.f32.mxu0 0.0
  %6122 = vmatmul.mubr.f32.gmra.mxu0 %v6030
  %v6123 = vpop.f32.mrf.mxu0
  %v6124 = vadd.f32 0.0, %v6123
  %v6125 = vpop.f32.mrf.mxu0
  %6126 = vmatprep.mubr.f32.mxu0 0.0
  %6127 = vmatmul.mubr.f32.gmra.mxu0 %v6033
  %v6128 = vpop.f32.mrf.mxu0
  %v6129 = vadd.f32 0.0, %v6128
  %v6130 = vpop.f32.mrf.mxu0
  %6131 = vmatprep.mubr.f32.mxu0 0.0
  %6132 = vmatmul.mubr.f32.gmra.mxu0 %v6036
  %v6133 = vpop.f32.mrf.mxu0
  %v6134 = vadd.f32 0.0, %v6133
  %v6135 = vpop.f32.mrf.mxu0
  %6136 = vmatprep.mubr.f32.mxu0 0.0
  %6137 = vmatmul.mubr.f32.gmra.mxu0 %v6039
  %v6138 = vpop.f32.mrf.mxu0
  %v6139 = vadd.f32 0.0, %v6138
  %v6140 = vpop.f32.mrf.mxu0
  %6141 = vmatprep.mubr.f32.mxu0 0.0
  %6142 = vmatmul.mubr.f32.gmra.mxu0 %v6042
  %v6143 = vpop.f32.mrf.mxu0
  %v6144 = vadd.f32 0.0, %v6143
  %v6145 = vpop.f32.mrf.mxu0
  %6146 = vmatprep.mubr.f32.mxu0 0.0
  %6147 = vmatmul.mubr.f32.gmra.mxu0 %v6045
  %v6148 = vpop.f32.mrf.mxu0
  %v6149 = vadd.f32 0.0, %v6148
  %v6150 = vpop.f32.mrf.mxu0
  %6151 = vdwg.mxu0
  %v6152 = vadd.f32 %v4678, %v6114
  %v6153 = vadd.f32 %v4679, %v6119
  %v6154 = vadd.f32 %v4680, %v6124
  %v6155 = vadd.f32 %v4681, %v6129
  %v6156 = vadd.f32 %v4682, %v6134
  %v6157 = vadd.f32 %v4683, %v6139
  %v6158 = vadd.f32 %v4684, %v6144
  %v6159 = vadd.f32 %v4685, %v6149
  %v6160 = vld [vmem:[%s6] sm:$0x1]
  %v6162 = vlaneseq
  %v6163 = vshrl.u32 %v6162, 7
  %v6164 = vsub.s32 0, %v6163
  %v6165 = vrot.slane %v6160, %v6164
  %v6167 = vadd.f32 %v6152, %v6165
  %v6168 = vadd.f32 %v6153, %v6165
  %v6169 = vadd.f32 %v6154, %v6165
  %v6170 = vadd.f32 %v6155, %v6165
  %v6171 = vadd.f32 %v6156, %v6165
  %v6172 = vadd.f32 %v6157, %v6165
  %v6173 = vadd.f32 %v6158, %v6165
  %v6174 = vadd.f32 %v6159, %v6165
  %v6175 = vadd.f32 %v58, %v6167
  %v6176 = vadd.f32 %v59, %v6168
  %v6177 = vadd.f32 %v60, %v6169
  %v6178 = vadd.f32 %v61, %v6170
  %v6179 = vadd.f32 %v62, %v6171
  %v6180 = vadd.f32 %v63, %v6172
  %v6181 = vadd.f32 %v64, %v6173
  %v6182 = vadd.f32 %v65, %v6174
  %v6183 = vld [vmem:[%s7] sm:$0x1]
  %v6184 = vld [vmem:[%s8] sm:$0x1]
  %v6185 = vsel %vm93, %v6175, 0.0
  %6186 = vadd.xlane.f32.xlu0 %v6185
  %v6187 = vpop.xlane.xlu0 %6186
  %v6188 = vsel %vm93, %v6176, 0.0
  %6189 = vadd.xlane.f32.xlu0 %v6188
  %v6190 = vpop.xlane.xlu0 %6189
  %v6191 = vsel %vm93, %v6177, 0.0
  %6192 = vadd.xlane.f32.xlu0 %v6191
  %v6193 = vpop.xlane.xlu0 %6192
  %v6194 = vsel %vm93, %v6178, 0.0
  %6195 = vadd.xlane.f32.xlu0 %v6194
  %v6196 = vpop.xlane.xlu0 %6195
  %v6197 = vsel %vm93, %v6179, 0.0
  %6198 = vadd.xlane.f32.xlu0 %v6197
  %v6199 = vpop.xlane.xlu0 %6198
  %v6200 = vsel %vm93, %v6180, 0.0
  %6201 = vadd.xlane.f32.xlu0 %v6200
  %v6202 = vpop.xlane.xlu0 %6201
  %v6203 = vsel %vm93, %v6181, 0.0
  %6204 = vadd.xlane.f32.xlu0 %v6203
  %v6205 = vpop.xlane.xlu0 %6204
  %v6206 = vsel %vm93, %v6182, 0.0
  %6207 = vadd.xlane.f32.xlu0 %v6206
  %v6208 = vpop.xlane.xlu0 %6207
  %v6209 = vrcp.pop 32.0
  %v6210 = vmul.f32 %v6187, %v6209
  %v6211 = vmul.f32 %v6190, %v6209
  %v6212 = vmul.f32 %v6193, %v6209
  %v6213 = vmul.f32 %v6196, %v6209
  %v6214 = vmul.f32 %v6199, %v6209
  %v6215 = vmul.f32 %v6202, %v6209
  %v6216 = vmul.f32 %v6205, %v6209
  %v6217 = vmul.f32 %v6208, %v6209
  %v6218 = vsub.f32 %v6175, %v6210
  %v6219 = vsub.f32 %v6176, %v6211
  %v6220 = vsub.f32 %v6177, %v6212
  %v6221 = vsub.f32 %v6178, %v6213
  %v6222 = vsub.f32 %v6179, %v6214
  %v6223 = vsub.f32 %v6180, %v6215
  %v6224 = vsub.f32 %v6181, %v6216
  %v6225 = vsub.f32 %v6182, %v6217
  %v6226 = vmul.f32 %v6218, %v6218
  %v6227 = vmul.f32 %v6219, %v6219
  %v6228 = vmul.f32 %v6220, %v6220
  %v6229 = vmul.f32 %v6221, %v6221
  %v6230 = vmul.f32 %v6222, %v6222
  %v6231 = vmul.f32 %v6223, %v6223
  %v6232 = vmul.f32 %v6224, %v6224
  %v6233 = vmul.f32 %v6225, %v6225
  %v6234 = vsel %vm93, %v6226, 0.0
  %6235 = vadd.xlane.f32.xlu0 %v6234
  %v6236 = vpop.xlane.xlu0 %6235
  %v6237 = vsel %vm93, %v6227, 0.0
  %6238 = vadd.xlane.f32.xlu0 %v6237
  %v6239 = vpop.xlane.xlu0 %6238
  %v6240 = vsel %vm93, %v6228, 0.0
  %6241 = vadd.xlane.f32.xlu0 %v6240
  %v6242 = vpop.xlane.xlu0 %6241
  %v6243 = vsel %vm93, %v6229, 0.0
  %6244 = vadd.xlane.f32.xlu0 %v6243
  %v6245 = vpop.xlane.xlu0 %6244
  %v6246 = vsel %vm93, %v6230, 0.0
  %6247 = vadd.xlane.f32.xlu0 %v6246
  %v6248 = vpop.xlane.xlu0 %6247
  %v6249 = vsel %vm93, %v6231, 0.0
  %6250 = vadd.xlane.f32.xlu0 %v6249
  %v6251 = vpop.xlane.xlu0 %6250
  %v6252 = vsel %vm93, %v6232, 0.0
  %6253 = vadd.xlane.f32.xlu0 %v6252
  %v6254 = vpop.xlane.xlu0 %6253
  %v6255 = vsel %vm93, %v6233, 0.0
  %6256 = vadd.xlane.f32.xlu0 %v6255
  %v6257 = vpop.xlane.xlu0 %6256
  %v6258 = vmul.f32 %v6236, %v6209
  %v6259 = vmul.f32 %v6239, %v6209
  %v6260 = vmul.f32 %v6242, %v6209
  %v6261 = vmul.f32 %v6245, %v6209
  %v6262 = vmul.f32 %v6248, %v6209
  %v6263 = vmul.f32 %v6251, %v6209
  %v6264 = vmul.f32 %v6254, %v6209
  %v6265 = vmul.f32 %v6257, %v6209
  %v6266 = vadd.f32 %v6258, 1e-05
  %v6267 = vadd.f32 %v6259, 1e-05
  %v6268 = vadd.f32 %v6260, 1e-05
  %v6269 = vadd.f32 %v6261, 1e-05
  %v6270 = vadd.f32 %v6262, 1e-05
  %v6271 = vadd.f32 %v6263, 1e-05
  %v6272 = vadd.f32 %v6264, 1e-05
  %v6273 = vadd.f32 %v6265, 1e-05
  %v6274 = vrsqrt.pop %v6266
  %v6275 = vrsqrt.pop %v6267
  %v6276 = vrsqrt.pop %v6268
  %v6277 = vrsqrt.pop %v6269
  %v6278 = vrsqrt.pop %v6270
  %v6279 = vrsqrt.pop %v6271
  %v6280 = vrsqrt.pop %v6272
  %v6281 = vrsqrt.pop %v6273
  %v6282 = vmul.f32 %v6218, %v6274
  %v6283 = vmul.f32 %v6219, %v6275
  %v6284 = vmul.f32 %v6220, %v6276
  %v6285 = vmul.f32 %v6221, %v6277
  %v6286 = vmul.f32 %v6222, %v6278
  %v6287 = vmul.f32 %v6223, %v6279
  %v6288 = vmul.f32 %v6224, %v6280
  %v6289 = vmul.f32 %v6225, %v6281
  %v6291 = vlaneseq
  %v6292 = vshrl.u32 %v6291, 7
  %v6293 = vsub.s32 0, %v6292
  %v6294 = vrot.slane %v6183, %v6293
  %v6296 = vmul.f32 %v6282, %v6294
  %v6297 = vmul.f32 %v6283, %v6294
  %v6298 = vmul.f32 %v6284, %v6294
  %v6299 = vmul.f32 %v6285, %v6294
  %v6300 = vmul.f32 %v6286, %v6294
  %v6301 = vmul.f32 %v6287, %v6294
  %v6302 = vmul.f32 %v6288, %v6294
  %v6303 = vmul.f32 %v6289, %v6294
  %v6305 = vlaneseq
  %v6306 = vshrl.u32 %v6305, 7
  %v6307 = vsub.s32 0, %v6306
  %v6308 = vrot.slane %v6184, %v6307
  %v6310 = vadd.f32 %v6296, %v6308
  %v6311 = vadd.f32 %v6297, %v6308
  %v6312 = vadd.f32 %v6298, %v6308
  %v6313 = vadd.f32 %v6299, %v6308
  %v6314 = vadd.f32 %v6300, %v6308
  %v6315 = vadd.f32 %v6301, %v6308
  %v6316 = vadd.f32 %v6302, %v6308
  %v6317 = vadd.f32 %v6303, %v6308
  %v6318 = vld [vmem:[%s9] sm:$0xff]
  %v6319 = vld [vmem:[%s9 + $0x8] sm:$0xff]
  %v6320 = vld [vmem:[%s9 + $0x10] sm:$0xff]
  %v6321 = vld [vmem:[%s9 + $0x18] sm:$0xff]
  %v6322 = vld [vmem:[%s10] sm:$0x1]
  %v6324 = vlaneseq
  %v6325 = vshrl.u32 %v6324, 7
  %v6326 = vsub.s32 0, %v6325
  %v6327 = vrot.slane %v6322, %v6326
  %v6330 = vsel %vm93, %v6310, 0
  %v6333 = vsel %vm93, %v6311, 0
  %v6336 = vsel %vm93, %v6312, 0
  %v6339 = vsel %vm93, %v6313, 0
  %v6342 = vsel %vm93, %v6314, 0
  %v6345 = vsel %vm93, %v6315, 0
  %v6348 = vsel %vm93, %v6316, 0
  %v6351 = vsel %vm93, %v6317, 0
  %6353 = vmatprep.subr.mxu0 0.0
  %6354 = vmatpush1.msra.mxu0 0.0
  %6355 = vmatprep.subr.mxu0 0.0
  %6356 = vmatpush1.msra.mxu0 0.0
  %6357 = vmatprep.subr.mxu0 0.0
  %6358 = vmatpush1.msra.mxu0 0.0
  %6359 = vmatprep.subr.mxu0 0.0
  %6360 = vmatpush1.msra.mxu0 0.0
  %6361 = vmatprep.subr.mxu0 0.0
  %6362 = vmatpush1.msra.mxu0 0.0
  %6363 = vmatprep.subr.mxu0 0.0
  %6364 = vmatpush1.msra.mxu0 0.0
  %6365 = vmatprep.subr.mxu0 0.0
  %6366 = vmatpush1.msra.mxu0 0.0
  %6367 = vmatprep.subr.mxu0 0.0
  %6368 = vmatpush1.msra.mxu0 0.0
  %6369 = vmatprep.subr.mxu0 0.0
  %6370 = vmatpush1.msra.mxu0 0.0
  %6371 = vmatprep.subr.mxu0 0.0
  %6372 = vmatpush1.msra.mxu0 0.0
  %6373 = vmatprep.subr.mxu0 0.0
  %6374 = vmatpush1.msra.mxu0 0.0
  %6375 = vmatprep.subr.mxu0 0.0
  %6376 = vmatpush1.msra.mxu0 0.0
  %6377 = vmatprep.subr.mxu0 0.0
  %6378 = vmatpush1.msra.mxu0 %v6321
  %6379 = vmatprep.subr.mxu0 0.0
  %6380 = vmatpush1.msra.mxu0 %v6320
  %6381 = vmatprep.subr.mxu0 0.0
  %6382 = vmatpush1.msra.mxu0 %v6319
  %6383 = vmatprep.subr.mxu0 0.0
  %6384 = vmatpush1.msra.mxu0 %v6318
  %6385 = vmatprep.subr.mxu0 0.0
  %6386 = vmatpush2.msra.mxu0 0.0
  %6387 = vmatprep.subr.mxu0 0.0
  %6388 = vmatpush2.msra.mxu0 0.0
  %6389 = vmatprep.subr.mxu0 0.0
  %6390 = vmatpush2.msra.mxu0 0.0
  %6391 = vmatprep.subr.mxu0 0.0
  %6392 = vmatpush2.msra.mxu0 0.0
  %6393 = vmatprep.subr.mxu0 0.0
  %6394 = vmatpush2.msra.mxu0 0.0
  %6395 = vmatprep.subr.mxu0 0.0
  %6396 = vmatpush2.msra.mxu0 0.0
  %6397 = vmatprep.subr.mxu0 0.0
  %6398 = vmatpush2.msra.mxu0 0.0
  %6399 = vmatprep.subr.mxu0 0.0
  %6400 = vmatpush2.msra.mxu0 0.0
  %6401 = vmatprep.subr.mxu0 0.0
  %6402 = vmatpush2.msra.mxu0 0.0
  %6403 = vmatprep.subr.mxu0 0.0
  %6404 = vmatpush2.msra.mxu0 0.0
  %6405 = vmatprep.subr.mxu0 0.0
  %6406 = vmatpush2.msra.mxu0 0.0
  %6407 = vmatprep.subr.mxu0 0.0
  %6408 = vmatpush2.msra.mxu0 0.0
  %6409 = vmatprep.subr.mxu0 0.0
  %6410 = vmatpush2.msra.mxu0 0.0
  %6411 = vmatprep.subr.mxu0 0.0
  %6412 = vmatpush2.msra.mxu0 0.0
  %6413 = vmatprep.subr.mxu0 0.0
  %6414 = vmatpush2.msra.mxu0 0.0
  %6415 = vmatprep.subr.mxu0 0.0
  %6416 = vmatpush2.msra.mxu0 0.0
  %6417 = vmatprep.mubr.f32.mxu0 0.0
  %6418 = vmatmul.mubr.f32.gmra.mxu0 %v6330
  %v6419 = vpop.f32.mrf.mxu0
  %v6420 = vadd.f32 %v6327, %v6419
  %v6421 = vpop.f32.mrf.mxu0
  %6422 = vmatprep.mubr.f32.mxu0 0.0
  %6423 = vmatmul.mubr.f32.gmra.mxu0 %v6333
  %v6424 = vpop.f32.mrf.mxu0
  %v6425 = vadd.f32 %v6327, %v6424
  %v6426 = vpop.f32.mrf.mxu0
  %6427 = vmatprep.mubr.f32.mxu0 0.0
  %6428 = vmatmul.mubr.f32.gmra.mxu0 %v6336
  %v6429 = vpop.f32.mrf.mxu0
  %v6430 = vadd.f32 %v6327, %v6429
  %v6431 = vpop.f32.mrf.mxu0
  %6432 = vmatprep.mubr.f32.mxu0 0.0
  %6433 = vmatmul.mubr.f32.gmra.mxu0 %v6339
  %v6434 = vpop.f32.mrf.mxu0
  %v6435 = vadd.f32 %v6327, %v6434
  %v6436 = vpop.f32.mrf.mxu0
  %6437 = vmatprep.mubr.f32.mxu0 0.0
  %6438 = vmatmul.mubr.f32.gmra.mxu0 %v6342
  %v6439 = vpop.f32.mrf.mxu0
  %v6440 = vadd.f32 %v6327, %v6439
  %v6441 = vpop.f32.mrf.mxu0
  %6442 = vmatprep.mubr.f32.mxu0 0.0
  %6443 = vmatmul.mubr.f32.gmra.mxu0 %v6345
  %v6444 = vpop.f32.mrf.mxu0
  %v6445 = vadd.f32 %v6327, %v6444
  %v6446 = vpop.f32.mrf.mxu0
  %6447 = vmatprep.mubr.f32.mxu0 0.0
  %6448 = vmatmul.mubr.f32.gmra.mxu0 %v6348
  %v6449 = vpop.f32.mrf.mxu0
  %v6450 = vadd.f32 %v6327, %v6449
  %v6451 = vpop.f32.mrf.mxu0
  %6452 = vmatprep.mubr.f32.mxu0 0.0
  %6453 = vmatmul.mubr.f32.gmra.mxu0 %v6351
  %v6454 = vpop.f32.mrf.mxu0
  %v6455 = vadd.f32 %v6327, %v6454
  %v6456 = vpop.f32.mrf.mxu0
  %6457 = vdwg.mxu0
  %v6458 = vmax.f32 %v6420, 0.0
  %v6459 = vmax.f32 %v6425, 0.0
  %v6460 = vmax.f32 %v6430, 0.0
  %v6461 = vmax.f32 %v6435, 0.0
  %v6462 = vmax.f32 %v6440, 0.0
  %v6463 = vmax.f32 %v6445, 0.0
  %v6464 = vmax.f32 %v6450, 0.0
  %v6465 = vmax.f32 %v6455, 0.0
  %v6466 = vld [vmem:[%s11] sm:$0xff]
  %v6467 = vld [vmem:[%s11 + $0x8] sm:$0xff]
  %v6468 = vld [vmem:[%s11 + $0x10] sm:$0xff]
  %v6469 = vld [vmem:[%s11 + $0x18] sm:$0xff]
  %v6470 = vld [vmem:[%s11 + $0x20] sm:$0xff]
  %v6471 = vld [vmem:[%s11 + $0x28] sm:$0xff]
  %v6472 = vld [vmem:[%s11 + $0x30] sm:$0xff]
  %v6473 = vld [vmem:[%s11 + $0x38] sm:$0xff]
  %v6474 = vld [vmem:[%s11 + $0x40] sm:$0xff]
  %v6475 = vld [vmem:[%s11 + $0x48] sm:$0xff]
  %v6476 = vld [vmem:[%s11 + $0x50] sm:$0xff]
  %v6477 = vld [vmem:[%s11 + $0x58] sm:$0xff]
  %v6478 = vld [vmem:[%s11 + $0x60] sm:$0xff]
  %v6479 = vld [vmem:[%s11 + $0x68] sm:$0xff]
  %v6480 = vld [vmem:[%s11 + $0x70] sm:$0xff]
  %v6481 = vld [vmem:[%s11 + $0x78] sm:$0xff]
  %v6482 = vld [vmem:[%s12] sm:$0x1]
  %v6484 = vlaneseq
  %v6485 = vshrl.u32 %v6484, 7
  %v6486 = vsub.s32 0, %v6485
  %v6487 = vrot.slane %v6482, %v6486
  %6489 = vmatprep.subr.mxu0 0.0
  %6490 = vmatpush1.msra.mxu0 %v6481
  %6491 = vmatprep.subr.mxu0 0.0
  %6492 = vmatpush1.msra.mxu0 %v6480
  %6493 = vmatprep.subr.mxu0 0.0
  %6494 = vmatpush1.msra.mxu0 %v6479
  %6495 = vmatprep.subr.mxu0 0.0
  %6496 = vmatpush1.msra.mxu0 %v6478
  %6497 = vmatprep.subr.mxu0 0.0
  %6498 = vmatpush1.msra.mxu0 %v6477
  %6499 = vmatprep.subr.mxu0 0.0
  %6500 = vmatpush1.msra.mxu0 %v6476
  %6501 = vmatprep.subr.mxu0 0.0
  %6502 = vmatpush1.msra.mxu0 %v6475
  %6503 = vmatprep.subr.mxu0 0.0
  %6504 = vmatpush1.msra.mxu0 %v6474
  %6505 = vmatprep.subr.mxu0 0.0
  %6506 = vmatpush1.msra.mxu0 %v6473
  %6507 = vmatprep.subr.mxu0 0.0
  %6508 = vmatpush1.msra.mxu0 %v6472
  %6509 = vmatprep.subr.mxu0 0.0
  %6510 = vmatpush1.msra.mxu0 %v6471
  %6511 = vmatprep.subr.mxu0 0.0
  %6512 = vmatpush1.msra.mxu0 %v6470
  %6513 = vmatprep.subr.mxu0 0.0
  %6514 = vmatpush1.msra.mxu0 %v6469
  %6515 = vmatprep.subr.mxu0 0.0
  %6516 = vmatpush1.msra.mxu0 %v6468
  %6517 = vmatprep.subr.mxu0 0.0
  %6518 = vmatpush1.msra.mxu0 %v6467
  %6519 = vmatprep.subr.mxu0 0.0
  %6520 = vmatpush1.msra.mxu0 %v6466
  %6521 = vmatprep.subr.mxu0 0.0
  %6522 = vmatpush2.msra.mxu0 0.0
  %6523 = vmatprep.subr.mxu0 0.0
  %6524 = vmatpush2.msra.mxu0 0.0
  %6525 = vmatprep.subr.mxu0 0.0
  %6526 = vmatpush2.msra.mxu0 0.0
  %6527 = vmatprep.subr.mxu0 0.0
  %6528 = vmatpush2.msra.mxu0 0.0
  %6529 = vmatprep.subr.mxu0 0.0
  %6530 = vmatpush2.msra.mxu0 0.0
  %6531 = vmatprep.subr.mxu0 0.0
  %6532 = vmatpush2.msra.mxu0 0.0
  %6533 = vmatprep.subr.mxu0 0.0
  %6534 = vmatpush2.msra.mxu0 0.0
  %6535 = vmatprep.subr.mxu0 0.0
  %6536 = vmatpush2.msra.mxu0 0.0
  %6537 = vmatprep.subr.mxu0 0.0
  %6538 = vmatpush2.msra.mxu0 0.0
  %6539 = vmatprep.subr.mxu0 0.0
  %6540 = vmatpush2.msra.mxu0 0.0
  %6541 = vmatprep.subr.mxu0 0.0
  %6542 = vmatpush2.msra.mxu0 0.0
  %6543 = vmatprep.subr.mxu0 0.0
  %6544 = vmatpush2.msra.mxu0 0.0
  %6545 = vmatprep.subr.mxu0 0.0
  %6546 = vmatpush2.msra.mxu0 0.0
  %6547 = vmatprep.subr.mxu0 0.0
  %6548 = vmatpush2.msra.mxu0 0.0
  %6549 = vmatprep.subr.mxu0 0.0
  %6550 = vmatpush2.msra.mxu0 0.0
  %6551 = vmatprep.subr.mxu0 0.0
  %6552 = vmatpush2.msra.mxu0 0.0
  %6553 = vmatprep.mubr.f32.mxu0 0.0
  %6554 = vmatmul.mubr.f32.gmra.mxu0 %v6458
  %v6555 = vpop.f32.mrf.mxu0
  %v6556 = vadd.f32 %v6487, %v6555
  %v6557 = vpop.f32.mrf.mxu0
  %6558 = vmatprep.mubr.f32.mxu0 0.0
  %6559 = vmatmul.mubr.f32.gmra.mxu0 %v6459
  %v6560 = vpop.f32.mrf.mxu0
  %v6561 = vadd.f32 %v6487, %v6560
  %v6562 = vpop.f32.mrf.mxu0
  %6563 = vmatprep.mubr.f32.mxu0 0.0
  %6564 = vmatmul.mubr.f32.gmra.mxu0 %v6460
  %v6565 = vpop.f32.mrf.mxu0
  %v6566 = vadd.f32 %v6487, %v6565
  %v6567 = vpop.f32.mrf.mxu0
  %6568 = vmatprep.mubr.f32.mxu0 0.0
  %6569 = vmatmul.mubr.f32.gmra.mxu0 %v6461
  %v6570 = vpop.f32.mrf.mxu0
  %v6571 = vadd.f32 %v6487, %v6570
  %v6572 = vpop.f32.mrf.mxu0
  %6573 = vmatprep.mubr.f32.mxu0 0.0
  %6574 = vmatmul.mubr.f32.gmra.mxu0 %v6462
  %v6575 = vpop.f32.mrf.mxu0
  %v6576 = vadd.f32 %v6487, %v6575
  %v6577 = vpop.f32.mrf.mxu0
  %6578 = vmatprep.mubr.f32.mxu0 0.0
  %6579 = vmatmul.mubr.f32.gmra.mxu0 %v6463
  %v6580 = vpop.f32.mrf.mxu0
  %v6581 = vadd.f32 %v6487, %v6580
  %v6582 = vpop.f32.mrf.mxu0
  %6583 = vmatprep.mubr.f32.mxu0 0.0
  %6584 = vmatmul.mubr.f32.gmra.mxu0 %v6464
  %v6585 = vpop.f32.mrf.mxu0
  %v6586 = vadd.f32 %v6487, %v6585
  %v6587 = vpop.f32.mrf.mxu0
  %6588 = vmatprep.mubr.f32.mxu0 0.0
  %6589 = vmatmul.mubr.f32.gmra.mxu0 %v6465
  %v6590 = vpop.f32.mrf.mxu0
  %v6591 = vadd.f32 %v6487, %v6590
  %v6592 = vpop.f32.mrf.mxu0
  %6593 = vdwg.mxu0
  %v6594 = vadd.f32 %v6310, %v6556
  %v6595 = vadd.f32 %v6311, %v6561
  %v6596 = vadd.f32 %v6312, %v6566
  %v6597 = vadd.f32 %v6313, %v6571
  %v6598 = vadd.f32 %v6314, %v6576
  %v6599 = vadd.f32 %v6315, %v6581
  %v6600 = vadd.f32 %v6316, %v6586
  %v6601 = vadd.f32 %v6317, %v6591
  %v6602 = vld [vmem:[%s13] sm:$0x1]
  %v6603 = vld [vmem:[%s14] sm:$0x1]
  %v6604 = vsel %vm93, %v6594, 0.0
  %6605 = vadd.xlane.f32.xlu0 %v6604
  %v6606 = vpop.xlane.xlu0 %6605
  %v6607 = vsel %vm93, %v6595, 0.0
  %6608 = vadd.xlane.f32.xlu0 %v6607
  %v6609 = vpop.xlane.xlu0 %6608
  %v6610 = vsel %vm93, %v6596, 0.0
  %6611 = vadd.xlane.f32.xlu0 %v6610
  %v6612 = vpop.xlane.xlu0 %6611
  %v6613 = vsel %vm93, %v6597, 0.0
  %6614 = vadd.xlane.f32.xlu0 %v6613
  %v6615 = vpop.xlane.xlu0 %6614
  %v6616 = vsel %vm93, %v6598, 0.0
  %6617 = vadd.xlane.f32.xlu0 %v6616
  %v6618 = vpop.xlane.xlu0 %6617
  %v6619 = vsel %vm93, %v6599, 0.0
  %6620 = vadd.xlane.f32.xlu0 %v6619
  %v6621 = vpop.xlane.xlu0 %6620
  %v6622 = vsel %vm93, %v6600, 0.0
  %6623 = vadd.xlane.f32.xlu0 %v6622
  %v6624 = vpop.xlane.xlu0 %6623
  %v6625 = vsel %vm93, %v6601, 0.0
  %6626 = vadd.xlane.f32.xlu0 %v6625
  %v6627 = vpop.xlane.xlu0 %6626
  %v6628 = vmul.f32 %v6606, %v6209
  %v6629 = vmul.f32 %v6609, %v6209
  %v6630 = vmul.f32 %v6612, %v6209
  %v6631 = vmul.f32 %v6615, %v6209
  %v6632 = vmul.f32 %v6618, %v6209
  %v6633 = vmul.f32 %v6621, %v6209
  %v6634 = vmul.f32 %v6624, %v6209
  %v6635 = vmul.f32 %v6627, %v6209
  %v6636 = vsub.f32 %v6594, %v6628
  %v6637 = vsub.f32 %v6595, %v6629
  %v6638 = vsub.f32 %v6596, %v6630
  %v6639 = vsub.f32 %v6597, %v6631
  %v6640 = vsub.f32 %v6598, %v6632
  %v6641 = vsub.f32 %v6599, %v6633
  %v6642 = vsub.f32 %v6600, %v6634
  %v6643 = vsub.f32 %v6601, %v6635
  %v6644 = vmul.f32 %v6636, %v6636
  %v6645 = vmul.f32 %v6637, %v6637
  %v6646 = vmul.f32 %v6638, %v6638
  %v6647 = vmul.f32 %v6639, %v6639
  %v6648 = vmul.f32 %v6640, %v6640
  %v6649 = vmul.f32 %v6641, %v6641
  %v6650 = vmul.f32 %v6642, %v6642
  %v6651 = vmul.f32 %v6643, %v6643
  %v6652 = vsel %vm93, %v6644, 0.0
  %6653 = vadd.xlane.f32.xlu0 %v6652
  %v6654 = vpop.xlane.xlu0 %6653
  %v6655 = vsel %vm93, %v6645, 0.0
  %6656 = vadd.xlane.f32.xlu0 %v6655
  %v6657 = vpop.xlane.xlu0 %6656
  %v6658 = vsel %vm93, %v6646, 0.0
  %6659 = vadd.xlane.f32.xlu0 %v6658
  %v6660 = vpop.xlane.xlu0 %6659
  %v6661 = vsel %vm93, %v6647, 0.0
  %6662 = vadd.xlane.f32.xlu0 %v6661
  %v6663 = vpop.xlane.xlu0 %6662
  %v6664 = vsel %vm93, %v6648, 0.0
  %6665 = vadd.xlane.f32.xlu0 %v6664
  %v6666 = vpop.xlane.xlu0 %6665
  %v6667 = vsel %vm93, %v6649, 0.0
  %6668 = vadd.xlane.f32.xlu0 %v6667
  %v6669 = vpop.xlane.xlu0 %6668
  %v6670 = vsel %vm93, %v6650, 0.0
  %6671 = vadd.xlane.f32.xlu0 %v6670
  %v6672 = vpop.xlane.xlu0 %6671
  %v6673 = vsel %vm93, %v6651, 0.0
  %6674 = vadd.xlane.f32.xlu0 %v6673
  %v6675 = vpop.xlane.xlu0 %6674
  %v6676 = vmul.f32 %v6654, %v6209
  %v6677 = vmul.f32 %v6657, %v6209
  %v6678 = vmul.f32 %v6660, %v6209
  %v6679 = vmul.f32 %v6663, %v6209
  %v6680 = vmul.f32 %v6666, %v6209
  %v6681 = vmul.f32 %v6669, %v6209
  %v6682 = vmul.f32 %v6672, %v6209
  %v6683 = vmul.f32 %v6675, %v6209
  %v6684 = vadd.f32 %v6676, 1e-05
  %v6685 = vadd.f32 %v6677, 1e-05
  %v6686 = vadd.f32 %v6678, 1e-05
  %v6687 = vadd.f32 %v6679, 1e-05
  %v6688 = vadd.f32 %v6680, 1e-05
  %v6689 = vadd.f32 %v6681, 1e-05
  %v6690 = vadd.f32 %v6682, 1e-05
  %v6691 = vadd.f32 %v6683, 1e-05
  %v6692 = vrsqrt.pop %v6684
  %v6693 = vrsqrt.pop %v6685
  %v6694 = vrsqrt.pop %v6686
  %v6695 = vrsqrt.pop %v6687
  %v6696 = vrsqrt.pop %v6688
  %v6697 = vrsqrt.pop %v6689
  %v6698 = vrsqrt.pop %v6690
  %v6699 = vrsqrt.pop %v6691
  %v6700 = vmul.f32 %v6636, %v6692
  %v6701 = vmul.f32 %v6637, %v6693
  %v6702 = vmul.f32 %v6638, %v6694
  %v6703 = vmul.f32 %v6639, %v6695
  %v6704 = vmul.f32 %v6640, %v6696
  %v6705 = vmul.f32 %v6641, %v6697
  %v6706 = vmul.f32 %v6642, %v6698
  %v6707 = vmul.f32 %v6643, %v6699
  %v6709 = vlaneseq
  %v6710 = vshrl.u32 %v6709, 7
  %v6711 = vsub.s32 0, %v6710
  %v6712 = vrot.slane %v6602, %v6711
  %v6714 = vmul.f32 %v6700, %v6712
  %v6715 = vmul.f32 %v6701, %v6712
  %v6716 = vmul.f32 %v6702, %v6712
  %v6717 = vmul.f32 %v6703, %v6712
  %v6718 = vmul.f32 %v6704, %v6712
  %v6719 = vmul.f32 %v6705, %v6712
  %v6720 = vmul.f32 %v6706, %v6712
  %v6721 = vmul.f32 %v6707, %v6712
  %v6723 = vlaneseq
  %v6724 = vshrl.u32 %v6723, 7
  %v6725 = vsub.s32 0, %v6724
  %v6726 = vrot.slane %v6603, %v6725
  %v6728 = vadd.f32 %v6714, %v6726
  %v6729 = vadd.f32 %v6715, %v6726
  %v6730 = vadd.f32 %v6716, %v6726
  %v6731 = vadd.f32 %v6717, %v6726
  %v6732 = vadd.f32 %v6718, %v6726
  %v6733 = vadd.f32 %v6719, %v6726
  %v6734 = vadd.f32 %v6720, %v6726
  %v6735 = vadd.f32 %v6721, %v6726
  %6737 = vset.pattern.permute.xlu0 0
  %6738 = vperm.xlu0 %6737, %v74
  %v6739 = vpop.permute.xlu0 %6738
  %6742 = vset.pattern.permute.xlu0 0
  %6743 = vperm.xlu0 %6742, %v75
  %v6744 = vpop.permute.xlu0 %6743
  %6747 = vset.pattern.permute.xlu0 0
  %6748 = vperm.xlu0 %6747, %v76
  %v6749 = vpop.permute.xlu0 %6748
  %6752 = vset.pattern.permute.xlu0 0
  %6753 = vperm.xlu0 %6752, %v77
  %v6754 = vpop.permute.xlu0 %6753
  %6757 = vset.pattern.permute.xlu0 0
  %6758 = vperm.xlu0 %6757, %v78
  %v6759 = vpop.permute.xlu0 %6758
  %6762 = vset.pattern.permute.xlu0 0
  %6763 = vperm.xlu0 %6762, %v79
  %v6764 = vpop.permute.xlu0 %6763
  %6767 = vset.pattern.permute.xlu0 0
  %6768 = vperm.xlu0 %6767, %v80
  %v6769 = vpop.permute.xlu0 %6768
  %6772 = vset.pattern.permute.xlu0 0
  %6773 = vperm.xlu0 %6772, %v81
  %v6774 = vpop.permute.xlu0 %6773
  %v6776 = vmul.f32 %v6728, %v6739
  %v6777 = vmul.f32 %v6729, %v6744
  %v6778 = vmul.f32 %v6730, %v6749
  %v6779 = vmul.f32 %v6731, %v6754
  %v6780 = vmul.f32 %v6732, %v6759
  %v6781 = vmul.f32 %v6733, %v6764
  %v6782 = vmul.f32 %v6734, %v6769
  %v6783 = vmul.f32 %v6735, %v6774
  %v6784 = vsel %vm93, %v6776, 0.0
  %v6785 = vrot.slane %v6784, 4
  %v6786 = vadd.f32 %v6784, %v6785
  %v6787 = vrot.slane %v6786, 2
  %v6788 = vadd.f32 %v6786, %v6787
  %v6789 = vrot.slane %v6788, 1
  %v6790 = vadd.f32 %v6788, %v6789
  %v6791 = vsel %vm93, %v6777, 0.0
  %v6792 = vrot.slane %v6791, 4
  %v6793 = vadd.f32 %v6791, %v6792
  %v6794 = vrot.slane %v6793, 2
  %v6795 = vadd.f32 %v6793, %v6794
  %v6796 = vrot.slane %v6795, 1
  %v6797 = vadd.f32 %v6795, %v6796
  %v6798 = vsel %vm93, %v6778, 0.0
  %v6799 = vrot.slane %v6798, 4
  %v6800 = vadd.f32 %v6798, %v6799
  %v6801 = vrot.slane %v6800, 2
  %v6802 = vadd.f32 %v6800, %v6801
  %v6803 = vrot.slane %v6802, 1
  %v6804 = vadd.f32 %v6802, %v6803
  %v6805 = vsel %vm93, %v6779, 0.0
  %v6806 = vrot.slane %v6805, 4
  %v6807 = vadd.f32 %v6805, %v6806
  %v6808 = vrot.slane %v6807, 2
  %v6809 = vadd.f32 %v6807, %v6808
  %v6810 = vrot.slane %v6809, 1
  %v6811 = vadd.f32 %v6809, %v6810
  %v6812 = vsel %vm93, %v6780, 0.0
  %v6813 = vrot.slane %v6812, 4
  %v6814 = vadd.f32 %v6812, %v6813
  %v6815 = vrot.slane %v6814, 2
  %v6816 = vadd.f32 %v6814, %v6815
  %v6817 = vrot.slane %v6816, 1
  %v6818 = vadd.f32 %v6816, %v6817
  %v6819 = vsel %vm93, %v6781, 0.0
  %v6820 = vrot.slane %v6819, 4
  %v6821 = vadd.f32 %v6819, %v6820
  %v6822 = vrot.slane %v6821, 2
  %v6823 = vadd.f32 %v6821, %v6822
  %v6824 = vrot.slane %v6823, 1
  %v6825 = vadd.f32 %v6823, %v6824
  %v6826 = vsel %vm93, %v6782, 0.0
  %v6827 = vrot.slane %v6826, 4
  %v6828 = vadd.f32 %v6826, %v6827
  %v6829 = vrot.slane %v6828, 2
  %v6830 = vadd.f32 %v6828, %v6829
  %v6831 = vrot.slane %v6830, 1
  %v6832 = vadd.f32 %v6830, %v6831
  %v6833 = vsel %vm93, %v6783, 0.0
  %v6834 = vrot.slane %v6833, 4
  %v6835 = vadd.f32 %v6833, %v6834
  %v6836 = vrot.slane %v6835, 2
  %v6837 = vadd.f32 %v6835, %v6836
  %v6838 = vrot.slane %v6837, 1
  %v6839 = vadd.f32 %v6837, %v6838
  %vm6840 = vcmask 7168
  %v6841 = vsel %vm6840, %v74, 0.0
  %v6842 = vrot.slane %v6841, 4
  %v6843 = vadd.f32 %v6841, %v6842
  %v6844 = vrot.slane %v6843, 2
  %v6845 = vadd.f32 %v6843, %v6844
  %v6846 = vrot.slane %v6845, 1
  %v6847 = vadd.f32 %v6845, %v6846
  %v6848 = vsel %vm6840, %v75, 0.0
  %v6849 = vrot.slane %v6848, 4
  %v6850 = vadd.f32 %v6848, %v6849
  %v6851 = vrot.slane %v6850, 2
  %v6852 = vadd.f32 %v6850, %v6851
  %v6853 = vrot.slane %v6852, 1
  %v6854 = vadd.f32 %v6852, %v6853
  %v6855 = vsel %vm6840, %v76, 0.0
  %v6856 = vrot.slane %v6855, 4
  %v6857 = vadd.f32 %v6855, %v6856
  %v6858 = vrot.slane %v6857, 2
  %v6859 = vadd.f32 %v6857, %v6858
  %v6860 = vrot.slane %v6859, 1
  %v6861 = vadd.f32 %v6859, %v6860
  %v6862 = vsel %vm6840, %v77, 0.0
  %v6863 = vrot.slane %v6862, 4
  %v6864 = vadd.f32 %v6862, %v6863
  %v6865 = vrot.slane %v6864, 2
  %v6866 = vadd.f32 %v6864, %v6865
  %v6867 = vrot.slane %v6866, 1
  %v6868 = vadd.f32 %v6866, %v6867
  %v6869 = vsel %vm6840, %v78, 0.0
  %v6870 = vrot.slane %v6869, 4
  %v6871 = vadd.f32 %v6869, %v6870
  %v6872 = vrot.slane %v6871, 2
  %v6873 = vadd.f32 %v6871, %v6872
  %v6874 = vrot.slane %v6873, 1
  %v6875 = vadd.f32 %v6873, %v6874
  %v6876 = vsel %vm6840, %v79, 0.0
  %v6877 = vrot.slane %v6876, 4
  %v6878 = vadd.f32 %v6876, %v6877
  %v6879 = vrot.slane %v6878, 2
  %v6880 = vadd.f32 %v6878, %v6879
  %v6881 = vrot.slane %v6880, 1
  %v6882 = vadd.f32 %v6880, %v6881
  %v6883 = vsel %vm6840, %v80, 0.0
  %v6884 = vrot.slane %v6883, 4
  %v6885 = vadd.f32 %v6883, %v6884
  %v6886 = vrot.slane %v6885, 2
  %v6887 = vadd.f32 %v6885, %v6886
  %v6888 = vrot.slane %v6887, 1
  %v6889 = vadd.f32 %v6887, %v6888
  %v6890 = vsel %vm6840, %v81, 0.0
  %v6891 = vrot.slane %v6890, 4
  %v6892 = vadd.f32 %v6890, %v6891
  %v6893 = vrot.slane %v6892, 2
  %v6894 = vadd.f32 %v6892, %v6893
  %v6895 = vrot.slane %v6894, 1
  %v6896 = vadd.f32 %v6894, %v6895
  %v6897 = vmax.f32 %v6847, 1.0
  %v6898 = vmax.f32 %v6854, 1.0
  %v6899 = vmax.f32 %v6861, 1.0
  %v6900 = vmax.f32 %v6868, 1.0
  %v6901 = vmax.f32 %v6875, 1.0
  %v6902 = vmax.f32 %v6882, 1.0
  %v6903 = vmax.f32 %v6889, 1.0
  %v6904 = vmax.f32 %v6896, 1.0
  %v6905 = vrcp.pop %v6897
  %v6906 = vrcp.pop %v6898
  %v6907 = vrcp.pop %v6899
  %v6908 = vrcp.pop %v6900
  %v6909 = vrcp.pop %v6901
  %v6910 = vrcp.pop %v6902
  %v6911 = vrcp.pop %v6903
  %v6912 = vrcp.pop %v6904
  %6914 = vset.pattern.permute.xlu0 0
  %6915 = vperm.xlu0 %6914, %v6905
  %v6916 = vpop.permute.xlu0 %6915
  %6919 = vset.pattern.permute.xlu0 0
  %6920 = vperm.xlu0 %6919, %v6906
  %v6921 = vpop.permute.xlu0 %6920
  %6924 = vset.pattern.permute.xlu0 0
  %6925 = vperm.xlu0 %6924, %v6907
  %v6926 = vpop.permute.xlu0 %6925
  %6929 = vset.pattern.permute.xlu0 0
  %6930 = vperm.xlu0 %6929, %v6908
  %v6931 = vpop.permute.xlu0 %6930
  %6934 = vset.pattern.permute.xlu0 0
  %6935 = vperm.xlu0 %6934, %v6909
  %v6936 = vpop.permute.xlu0 %6935
  %6939 = vset.pattern.permute.xlu0 0
  %6940 = vperm.xlu0 %6939, %v6910
  %v6941 = vpop.permute.xlu0 %6940
  %6944 = vset.pattern.permute.xlu0 0
  %6945 = vperm.xlu0 %6944, %v6911
  %v6946 = vpop.permute.xlu0 %6945
  %6949 = vset.pattern.permute.xlu0 0
  %6950 = vperm.xlu0 %6949, %v6912
  %v6951 = vpop.permute.xlu0 %6950
  %v6953 = vmul.f32 %v6790, %v6916
  %v6954 = vmul.f32 %v6797, %v6921
  %v6955 = vmul.f32 %v6804, %v6926
  %v6956 = vmul.f32 %v6811, %v6931
  %v6957 = vmul.f32 %v6818, %v6936
  %v6958 = vmul.f32 %v6825, %v6941
  %v6959 = vmul.f32 %v6832, %v6946
  %v6960 = vmul.f32 %v6839, %v6951
  %vm6969 = vcmask 1041409
  %v6970 = vsel %vm6969, %v6954, %v6953
  %vm6971 = vcmask 1042434
  %v6972 = vsel %vm6971, %v6955, %v6970
  %vm6973 = vcmask 1043459
  %v6974 = vsel %vm6973, %v6956, %v6972
  %vm6975 = vcmask 1044484
  %v6976 = vsel %vm6975, %v6957, %v6974
  %vm6977 = vcmask 1045509
  %v6978 = vsel %vm6977, %v6958, %v6976
  %vm6979 = vcmask 1046534
  %v6980 = vsel %vm6979, %v6959, %v6978
  %vm6981 = vcmask 1047559
  %v6982 = vsel %vm6981, %v6960, %v6980
  %6984 = vst.msk [vmem:[%s15] sm:$0xff] %vm93, %v6982
  // Predicated region
  $region62: #{text_encoder_forward.1} parent=0 // pred_check
    _
  $region63: #{text_encoder_forward.1} parent=0 // pred_check_branch
    %6986 = sbr.rel (0) target = $region65
  $region64: #{text_encoder_forward.1} parent=0 // pred_region
    _
  $region65: #{text_encoder_forward.1} parent=0 // pred_fallthru
    _
  // Predicated region
  $region66: #{text_encoder_forward.1} parent=0 // pred_check
    _
  $region67: #{text_encoder_forward.1} parent=0 // pred_check_branch
    %6988 = sbr.rel (0) target = $region69
  $region68: #{text_encoder_forward.1} parent=0 // pred_region
    _
  $region69: #{text_encoder_forward.1} parent=0 // pred_fallthru
    _

</llo_original>
